<compile_context>
chip_gen: v7x
topology: tpu7x:2x2x1
jax: 0.10.0
libtpu: 0.0.40
codegen_flags: <defaults>
</compile_context>

<pallas_src>
import numpy as np
import jax
import jax.numpy as jnp
from jax.experimental import pallas as pl
from jax.experimental.pallas import tpu as pltpu

K = 5                    # conv kernel size
PAD = 2                  # "same" padding for 5x5
EPS = 1e-5               # nn.BatchNorm2d default eps

HIN = 28                 # input spatial size (Fashion-MNIST)
C1, C2 = 16, 32          # conv channel counts
HINP = HIN + 2 * PAD     # 32: zero-padded conv-1 input
HP1 = HIN // 2           # 14: pool-1 output spatial
HP1P = HP1 + 2 * PAD     # 18: zero-padded conv-2 input
HP2 = HP1 // 2           # 7 : pool-2 output spatial
NLANE = 128              # classes zero-padded to one full lane width

LANES_C1 = HIN * C1      # 448: conv-1 output lanes   [h, w*16+c]
LANES_P1 = HP1 * C1      # 224: pool-1 output lanes
LANES_I2 = HP1P * C1     # 288: padded conv-2 input lanes
LANES_C2 = HP1 * C2      # 448: conv-2 output lanes   [h, w*32+c]
LANES_P2 = HP2 * C2      # 224: pool-2 output lanes
LANES_FC = HP2 * NLANE   # 896: fc matmul output lanes


# ---------------------------------------------------------------------------
# Fused Pallas kernel (one grid step == one image, everything stays in VMEM)
# ---------------------------------------------------------------------------
def _fused_forward_kernel(
        x_ref,                                   # [1, 28, 28] f32 image
        g1_ref, sc1_ref, sh1_ref,                # conv1 weights / folded BN
        p1he_ref, p1ho_ref, p1we_ref, p1wo_ref,  # pool-1 selection matrices
        g2_ref, sc2_ref, sh2_ref,                # conv2 weights / folded BN
        p2he_ref, p2ho_ref, p2we_ref, p2wo_ref,  # pool-2 selection matrices
        wfc_ref, bfc_ref,                        # fc weight / bias (padded)
        out_ref,                                 # [1, 1, 128] logits
        xpad_ref, a1pad_ref):                    # VMEM scratch (padded acts)
    f32 = jnp.float32
    bf16 = jnp.bfloat16

    # ----- layer 1: conv(1->16, 5x5, pad=2) + BN + ReLU ---------------------
    xpad_ref[...] = jnp.zeros_like(xpad_ref)
    xpad_ref[pl.ds(PAD, HIN), pl.ds(PAD, HIN)] = x_ref[0].astype(bf16)

    acc1 = jnp.zeros((HIN, LANES_C1), f32)
    for di in range(K):                          # 5 height-shifted MXU matmuls
        acc1 = acc1 + jnp.dot(xpad_ref[pl.ds(di, HIN), :], g1_ref[di],
                              preferred_element_type=f32)
    y1 = jnp.maximum(acc1 * sc1_ref[...] + sh1_ref[...], 0.0)    # [28, 448]

    # ----- pool 1 (2x2 / stride 2) via exact 0/1 selection matmuls ----------
    m1 = jnp.maximum(jnp.dot(p1he_ref[...], y1, preferred_element_type=f32),
                     jnp.dot(p1ho_ref[...], y1, preferred_element_type=f32))
    a1 = jnp.maximum(jnp.dot(m1, p1we_ref[...], preferred_element_type=f32),
                     jnp.dot(m1, p1wo_ref[...], preferred_element_type=f32))
    # a1: [14, 224]

    # ----- layer 2: conv(16->32, 5x5, pad=2) + BN + ReLU --------------------
    a1pad_ref[...] = jnp.zeros_like(a1pad_ref)
    a1pad_ref[pl.ds(PAD, HP1), pl.ds(PAD * C1, LANES_P1)] = a1.astype(bf16)

    acc2 = jnp.zeros((HP1, LANES_C2), f32)
    for di in range(K):
        acc2 = acc2 + jnp.dot(a1pad_ref[pl.ds(di, HP1), :], g2_ref[di],
                              preferred_element_type=f32)
    y2 = jnp.maximum(acc2 * sc2_ref[...] + sh2_ref[...], 0.0)    # [14, 448]

    # ----- pool 2 ------------------------------------------------------------
    m2 = jnp.maximum(jnp.dot(p2he_ref[...], y2, preferred_element_type=f32),
                     jnp.dot(p2ho_ref[...], y2, preferred_element_type=f32))
    a2 = jnp.maximum(jnp.dot(m2, p2we_ref[...], preferred_element_type=f32),
                     jnp.dot(m2, p2wo_ref[...], preferred_element_type=f32))
    # a2: [7, 224]

    # ----- fc (classes zero-padded to 128 lanes -> unmasked store) -----------
    r = jnp.dot(a2.astype(bf16), wfc_ref[...], preferred_element_type=f32)
    logits = bfc_ref[...]                                        # [1, 128]
    for h in range(HP2):
        logits = logits + r[h:h + 1, h * NLANE:(h + 1) * NLANE]
    out_ref[0] = logits


# ---------------------------------------------------------------------------
# One-time weight re-layout (outside the forward pass)
# ---------------------------------------------------------------------------
def _fold_bn(conv_bias, gamma, beta, mean, var):
    scale = gamma / jnp.sqrt(var + EPS)
    shift = beta + (conv_bias - mean) * scale
    return scale.astype(jnp.float32), shift.astype(jnp.float32)


def _width_conv_matrix(w_oihw, w_out):
    """G[di, wp*Cin+ci, w*Cout+co] = w[co, ci, di, wp-w] for 0 <= wp-w < K."""
    cout, cin = w_oihw.shape[0], w_oihw.shape[1]
    w_pad = w_out + 2 * PAD
    p = np.zeros((K, w_pad, w_out), np.float32)          # P[dj, wp, w]
    for dj in range(K):
        p[dj, np.arange(w_out) + dj, np.arange(w_out)] = 1.0
    g = jnp.einsum("jpw,ocij->ipcwo", jnp.asarray(p), w_oihw)
    return g.reshape(K, w_pad * cin, w_out * cout).astype(jnp.bfloat16)


def _pool_selectors(h_in, w_in, c):
    """0/1 selection matrices implementing an exact 2x2 / stride-2 max pool."""
    h_out, w_out = h_in // 2, w_in // 2
    s_he = np.zeros((h_out, h_in), np.float32)
    s_ho = np.zeros((h_out, h_in), np.float32)
    s_he[np.arange(h_out), 2 * np.arange(h_out)] = 1.0
    s_ho[np.arange(h_out), 2 * np.arange(h_out) + 1] = 1.0
    s_we = np.zeros((w_in * c, w_out * c), np.float32)
    s_wo = np.zeros((w_in * c, w_out * c), np.float32)
    cols = (np.arange(w_out)[:, None] * c + np.arange(c)[None, :]).ravel()
    re = ((2 * np.arange(w_out))[:, None] * c + np.arange(c)[None, :]).ravel()
    ro = ((2 * np.arange(w_out) + 1)[:, None] * c + np.arange(c)[None, :]).ravel()
    s_we[re, cols] = 1.0
    s_wo[ro, cols] = 1.0
    return tuple(jnp.asarray(s) for s in (s_he, s_ho, s_we, s_wo))


def prepare_params(params):
    """Re-layout PyTorch-style weights into the kernel-ready format (once)."""
    num_classes = params["wfc"].shape[0]

    g1 = _width_conv_matrix(params["w1"], HIN)                   # [5, 32, 448]
    scale1, shift1 = _fold_bn(params["b1"], params["g1"], params["be1"],
                              params["m1"], params["v1"])
    sc1 = jnp.tile(scale1, HIN)[None, :]                         # [1, 448]
    sh1 = jnp.tile(shift1, HIN)[None, :]
    p1he, p1ho, p1we, p1wo = _pool_selectors(HIN, HIN, C1)

    g2 = _width_conv_matrix(params["w2"], HP1)                   # [5, 288, 448]
    scale2, shift2 = _fold_bn(params["b2"], params["g2"], params["be2"],
                              params["m2"], params["v2"])
    sc2 = jnp.tile(scale2, HP1)[None, :]                         # [1, 448]
    sh2 = jnp.tile(shift2, HP1)[None, :]
    p2he, p2ho, p2we, p2wo = _pool_selectors(HP1, HP1, C2)

    # fc: PyTorch flattens NCHW -> wfc[n, c*49 + h*7 + w]; kernel activation
    # layout is [h, w*32 + c].  Build W[w*32+c, h*128 + n] with classes padded.
    wfc = params["wfc"].reshape(num_classes, C2, HP2, HP2)       # [n, c, h, w]
    wk = jnp.transpose(wfc, (2, 3, 1, 0)).reshape(HP2, LANES_P2, num_classes)
    wk = jnp.pad(wk, ((0, 0), (0, 0), (0, NLANE - num_classes)))
    wfc_k = jnp.transpose(wk, (1, 0, 2)).reshape(LANES_P2, LANES_FC)
    wfc_k = wfc_k.astype(jnp.bfloat16)                           # [224, 896]
    bfc_k = jnp.pad(params["bfc"], (0, NLANE - num_classes))[None, :]
    bfc_k = bfc_k.astype(jnp.float32)                            # [1, 128]

    return {
        "g1": g1, "sc1": sc1, "sh1": sh1,
        "p1he": p1he, "p1ho": p1ho, "p1we": p1we, "p1wo": p1wo,
        "g2": g2, "sc2": sc2, "sh2": sh2,
        "p2he": p2he, "p2ho": p2ho, "p2we": p2we, "p2wo": p2wo,
        "wfc": wfc_k, "bfc": bfc_k,
    }


# ---------------------------------------------------------------------------
# Wrapper: one fused pallas_call for the whole network
# ---------------------------------------------------------------------------
def my_model_forward(x_nchw, prep, num_classes):
    B = x_nchw.shape[0]
    x = x_nchw[:, 0, :, :]                                       # [B, 28, 28]

    def wspec2(shape):
        return pl.BlockSpec(shape, lambda b: (0, 0))

    def wspec3(shape):
        return pl.BlockSpec(shape, lambda b: (0, 0, 0))

    out = pl.pallas_call(
        _fused_forward_kernel,
        out_shape=jax.ShapeDtypeStruct((B, 1, NLANE), jnp.float32),
        grid=(B,),
        in_specs=[
            pl.BlockSpec((1, HIN, HIN), lambda b: (b, 0, 0)),            # image
            wspec3((K, HINP, LANES_C1)),                                 # g1
            wspec2((1, LANES_C1)), wspec2((1, LANES_C1)),                # sc1, sh1
            wspec2((HP1, HIN)), wspec2((HP1, HIN)),                      # p1he, p1ho
            wspec2((LANES_C1, LANES_P1)), wspec2((LANES_C1, LANES_P1)),  # p1we, p1wo
            wspec3((K, LANES_I2, LANES_C2)),                             # g2
            wspec2((1, LANES_C2)), wspec2((1, LANES_C2)),                # sc2, sh2
            wspec2((HP2, HP1)), wspec2((HP2, HP1)),                      # p2he, p2ho
            wspec2((LANES_C2, LANES_P2)), wspec2((LANES_C2, LANES_P2)),  # p2we, p2wo
            wspec2((LANES_P2, LANES_FC)),                                # wfc
            wspec2((1, NLANE)),                                          # bfc
        ],
        out_specs=pl.BlockSpec((1, 1, NLANE), lambda b: (b, 0, 0)),
        scratch_shapes=[
            pltpu.VMEM((HINP, HINP), jnp.bfloat16),              # padded image
            pltpu.VMEM((HP1P, LANES_I2), jnp.bfloat16),          # padded pool-1
        ],
        compiler_params=pltpu.CompilerParams(
            dimension_semantics=("parallel",),
            vmem_limit_bytes=32 * 1024 * 1024),
    )(x, prep["g1"], prep["sc1"], prep["sh1"],
      prep["p1he"], prep["p1ho"], prep["p1we"], prep["p1wo"],
      prep["g2"], prep["sc2"], prep["sh2"],
      prep["p2he"], prep["p2ho"], prep["p2we"], prep["p2wo"],
      prep["wfc"], prep["bfc"])

    return out[:, 0, :num_classes]


# ---------------------------------------------------------------------------
# Pure-JAX reference (f32, highest precision) for sanity checking
# ---------------------------------------------------------------------------
def reference_forward(x_nchw, params):
    hi = jax.lax.Precision.HIGHEST

    def conv(x, w, b):
        y = jax.lax.conv_general_dilated(
            x, w, window_strides=(1, 1), padding=((PAD, PAD), (PAD, PAD)),
            dimension_numbers=("NCHW", "OIHW", "NCHW"), precision=hi)
        return y + b[None, :, None, None]

    def bn(x, g, be, m, v):
        return ((x - m[None, :, None, None])
                / jnp.sqrt(v[None, :, None, None] + EPS)
                * g[None, :, None, None] + be[None, :, None, None])

    def pool(x):
        return jax.lax.reduce_window(x, -jnp.inf, jax.lax.max,
                                     (1, 1, 2, 2), (1, 1, 2, 2), "VALID")

    y = pool(jnp.maximum(bn(conv(x_nchw, params["w1"], params["b1"]),
                            params["g1"], params["be1"],
                            params["m1"], params["v1"]), 0.0))
    y = pool(jnp.maximum(bn(conv(y, params["w2"], params["b2"]),
                            params["g2"], params["be2"],
                            params["m2"], params["v2"]), 0.0))
    flat = y.reshape(y.shape[0], -1)
    return jnp.dot(flat, params["wfc"].T, precision=hi) + params["bfc"]


# ---------------------------------------------------------------------------
if __name__ == "__main__":
    num_classes = 10
    B = 2
    key = jax.random.PRNGKey(0)
    ks = jax.random.split(key, 16)

    params = {
        # layer1
        "w1": 0.10 * jax.random.normal(ks[0], (16, 1, 5, 5), jnp.float32),
        "b1": 0.10 * jax.random.normal(ks[1], (16,), jnp.float32),
        "g1": 1.0 + 0.10 * jax.random.normal(ks[2], (16,), jnp.float32),
        "be1": 0.10 * jax.random.normal(ks[3], (16,), jnp.float32),
        "m1": 0.10 * jax.random.normal(ks[4], (16,), jnp.float32),
        "v1": 1.0 + 0.50 * jax.random.uniform(ks[5], (16,), jnp.float32),
        # layer2
        "w2": 0.05 * jax.random.normal(ks[6], (32, 16, 5, 5), jnp.float32),
        "b2": 0.10 * jax.random.normal(ks[7], (32,), jnp.float32),
        "g2": 1.0 + 0.10 * jax.random.normal(ks[8], (32,), jnp.float32),
        "be2": 0.10 * jax.random.normal(ks[9], (32,), jnp.float32),
        "m2": 0.10 * jax.random.normal(ks[10], (32,), jnp.float32),
        "v2": 1.0 + 0.50 * jax.random.uniform(ks[11], (32,), jnp.float32),
        # fc
        "wfc": 0.02 * jax.random.normal(ks[12], (num_classes, 7 * 7 * 32),
                                        jnp.float32),
        "bfc": 0.02 * jax.random.normal(ks[13], (num_classes,), jnp.float32),
    }

    # Fashion-MNIST shaped input (the fc layer requires 28x28 spatial).
    x = jax.random.normal(ks[15], (B, 1, 28, 28), jnp.float32)

    prep = prepare_params(params)                       # one-time weight prep
    fwd = jax.jit(lambda xx, pp: my_model_forward(xx, pp, num_classes))

    out = jax.block_until_ready(fwd(x, prep))
    assert out.shape == (B, num_classes)

    ref = reference_forward(x, params)
    max_diff = float(jnp.max(jnp.abs(out - ref)))
    assert jnp.allclose(out, ref, atol=5e-2, rtol=5e-2), max_diff

    print("KERNEL_OK")
</pallas_src>

<mosaic_0001>
module attributes {stable_mosaic.version = 11 : i64} {
  func.func @_fused_forward_kernel(%arg0: i32, %arg1: memref<1x28x28xf32, #tpu.memory_space<vmem>>, %arg2: memref<5x32x448xbf16, #tpu.memory_space<vmem>>, %arg3: memref<1x448xf32, #tpu.memory_space<vmem>>, %arg4: memref<1x448xf32, #tpu.memory_space<vmem>>, %arg5: memref<14x28xf32, #tpu.memory_space<vmem>>, %arg6: memref<14x28xf32, #tpu.memory_space<vmem>>, %arg7: memref<448x224xf32, #tpu.memory_space<vmem>>, %arg8: memref<448x224xf32, #tpu.memory_space<vmem>>, %arg9: memref<5x288x448xbf16, #tpu.memory_space<vmem>>, %arg10: memref<1x448xf32, #tpu.memory_space<vmem>>, %arg11: memref<1x448xf32, #tpu.memory_space<vmem>>, %arg12: memref<7x14xf32, #tpu.memory_space<vmem>>, %arg13: memref<7x14xf32, #tpu.memory_space<vmem>>, %arg14: memref<448x224xf32, #tpu.memory_space<vmem>>, %arg15: memref<448x224xf32, #tpu.memory_space<vmem>>, %arg16: memref<224x896xbf16, #tpu.memory_space<vmem>>, %arg17: memref<1x128xf32, #tpu.memory_space<vmem>>, %arg18: memref<1x1x128xf32, #tpu.memory_space<vmem>>, %arg19: memref<32x32xbf16, #tpu.memory_space<vmem>>, %arg20: memref<18x288xbf16, #tpu.memory_space<vmem>>) attributes {dimension_semantics = [#tpu.dimension_semantics<parallel>], iteration_bounds = array<i64: 2>, scalar_prefetch = 0 : i64, scratch_operands = 2 : i64, tpu.core_type = #tpu.core_type<tc>, window_params = [{transform_indices = @transform_0, window_bounds = array<i64: 1, 28, 28>}, {pipeline_mode = #tpu.pipeline_mode<synchronous>, transform_indices = @transform_1, window_bounds = array<i64: 5, 32, 448>}, {pipeline_mode = #tpu.pipeline_mode<synchronous>, transform_indices = @transform_2, window_bounds = array<i64: 1, 448>}, {pipeline_mode = #tpu.pipeline_mode<synchronous>, transform_indices = @transform_3, window_bounds = array<i64: 1, 448>}, {pipeline_mode = #tpu.pipeline_mode<synchronous>, transform_indices = @transform_4, window_bounds = array<i64: 14, 28>}, {pipeline_mode = #tpu.pipeline_mode<synchronous>, transform_indices = @transform_5, window_bounds = array<i64: 14, 28>}, {pipeline_mode = #tpu.pipeline_mode<synchronous>, transform_indices = @transform_6, window_bounds = array<i64: 448, 224>}, {pipeline_mode = #tpu.pipeline_mode<synchronous>, transform_indices = @transform_7, window_bounds = array<i64: 448, 224>}, {pipeline_mode = #tpu.pipeline_mode<synchronous>, transform_indices = @transform_8, window_bounds = array<i64: 5, 288, 448>}, {pipeline_mode = #tpu.pipeline_mode<synchronous>, transform_indices = @transform_9, window_bounds = array<i64: 1, 448>}, {pipeline_mode = #tpu.pipeline_mode<synchronous>, transform_indices = @transform_10, window_bounds = array<i64: 1, 448>}, {pipeline_mode = #tpu.pipeline_mode<synchronous>, transform_indices = @transform_11, window_bounds = array<i64: 7, 14>}, {pipeline_mode = #tpu.pipeline_mode<synchronous>, transform_indices = @transform_12, window_bounds = array<i64: 7, 14>}, {pipeline_mode = #tpu.pipeline_mode<synchronous>, transform_indices = @transform_13, window_bounds = array<i64: 448, 224>}, {pipeline_mode = #tpu.pipeline_mode<synchronous>, transform_indices = @transform_14, window_bounds = array<i64: 448, 224>}, {pipeline_mode = #tpu.pipeline_mode<synchronous>, transform_indices = @transform_15, window_bounds = array<i64: 224, 896>}, {pipeline_mode = #tpu.pipeline_mode<synchronous>, transform_indices = @transform_16, window_bounds = array<i64: 1, 128>}, {transform_indices = @transform_17, window_bounds = array<i64: 1, 1, 128>}]} {
    %cst = arith.constant 0.000000e+00 : bf16
    %0 = vector.broadcast %cst : bf16 to vector<32x32xbf16>
    %c0 = arith.constant 0 : index
    %c0_0 = arith.constant 0 : index
    %1 = vector.load %arg19[%c0, %c0_0] : memref<32x32xbf16, #tpu.memory_space<vmem>>, vector<32x32xbf16>
    tpu.vector_store %arg19[%c0, %c0_0], %0 {strides = array<i32>} : memref<32x32xbf16, #tpu.memory_space<vmem>>, vector<32x32xbf16>,
    %c0_1 = arith.constant 0 : index
    %c0_2 = arith.constant 0 : index
    %c0_3 = arith.constant 0 : index
    %2 = vector.load %arg1[%c0_1, %c0_2, %c0_3] : memref<1x28x28xf32, #tpu.memory_space<vmem>>, vector<1x28x28xf32>
    %3 = vector.shape_cast %2 : vector<1x28x28xf32> to vector<28x28xf32>
    %4 = arith.truncf %3 : vector<28x28xf32> to vector<28x28xbf16>
    %c2 = arith.constant 2 : index
    %c2_4 = arith.constant 2 : index
    %5 = vector.load %arg19[%c2, %c2_4] : memref<32x32xbf16, #tpu.memory_space<vmem>>, vector<28x28xbf16>
    tpu.vector_store %arg19[%c2, %c2_4], %4 {strides = array<i32>} : memref<32x32xbf16, #tpu.memory_space<vmem>>, vector<28x28xbf16>,
    %cst_5 = arith.constant 0.000000e+00 : f32
    %6 = vector.broadcast %cst_5 : f32 to vector<28x448xf32>
    %c0_6 = arith.constant 0 : index
    %c0_7 = arith.constant 0 : index
    %7 = vector.load %arg19[%c0_6, %c0_7] : memref<32x32xbf16, #tpu.memory_space<vmem>>, vector<28x32xbf16>
    %c0_8 = arith.constant 0 : index
    %c0_9 = arith.constant 0 : index
    %c0_10 = arith.constant 0 : index
    %8 = vector.load %arg2[%c0_8, %c0_9, %c0_10] : memref<5x32x448xbf16, #tpu.memory_space<vmem>>, vector<1x32x448xbf16>
    %9 = vector.shape_cast %8 : vector<1x32x448xbf16> to vector<32x448xbf16>
    %cst_11 = arith.constant dense<0.000000e+00> : vector<28x448xf32>
    %10 = tpu.matmul %7, %9, %cst_11 {dimension_numbers = #tpu.dot_dimension_numbers<[1], [0], [0], [1], [0, 0, 1, 1], [], []>} : vector<28x32xbf16>, vector<32x448xbf16>, vector<28x448xf32> -> vector<28x448xf32>
    %11 = arith.addf %6, %10 : vector<28x448xf32>
    %c1 = arith.constant 1 : index
    %c0_12 = arith.constant 0 : index
    %12 = vector.load %arg19[%c1, %c0_12] : memref<32x32xbf16, #tpu.memory_space<vmem>>, vector<28x32xbf16>
    %c1_13 = arith.constant 1 : index
    %c0_14 = arith.constant 0 : index
    %c0_15 = arith.constant 0 : index
    %13 = vector.load %arg2[%c1_13, %c0_14, %c0_15] : memref<5x32x448xbf16, #tpu.memory_space<vmem>>, vector<1x32x448xbf16>
    %14 = vector.shape_cast %13 : vector<1x32x448xbf16> to vector<32x448xbf16>
    %cst_16 = arith.constant dense<0.000000e+00> : vector<28x448xf32>
    %15 = tpu.matmul %12, %14, %cst_16 {dimension_numbers = #tpu.dot_dimension_numbers<[1], [0], [0], [1], [0, 0, 1, 1], [], []>} : vector<28x32xbf16>, vector<32x448xbf16>, vector<28x448xf32> -> vector<28x448xf32>
    %16 = arith.addf %11, %15 : vector<28x448xf32>
    %c2_17 = arith.constant 2 : index
    %c0_18 = arith.constant 0 : index
    %17 = vector.load %arg19[%c2_17, %c0_18] : memref<32x32xbf16, #tpu.memory_space<vmem>>, vector<28x32xbf16>
    %c2_19 = arith.constant 2 : index
    %c0_20 = arith.constant 0 : index
    %c0_21 = arith.constant 0 : index
    %18 = vector.load %arg2[%c2_19, %c0_20, %c0_21] : memref<5x32x448xbf16, #tpu.memory_space<vmem>>, vector<1x32x448xbf16>
    %19 = vector.shape_cast %18 : vector<1x32x448xbf16> to vector<32x448xbf16>
    %cst_22 = arith.constant dense<0.000000e+00> : vector<28x448xf32>
    %20 = tpu.matmul %17, %19, %cst_22 {dimension_numbers = #tpu.dot_dimension_numbers<[1], [0], [0], [1], [0, 0, 1, 1], [], []>} : vector<28x32xbf16>, vector<32x448xbf16>, vector<28x448xf32> -> vector<28x448xf32>
    %21 = arith.addf %16, %20 : vector<28x448xf32>
    %c3 = arith.constant 3 : index
    %c0_23 = arith.constant 0 : index
    %22 = vector.load %arg19[%c3, %c0_23] : memref<32x32xbf16, #tpu.memory_space<vmem>>, vector<28x32xbf16>
    %c3_24 = arith.constant 3 : index
    %c0_25 = arith.constant 0 : index
    %c0_26 = arith.constant 0 : index
    %23 = vector.load %arg2[%c3_24, %c0_25, %c0_26] : memref<5x32x448xbf16, #tpu.memory_space<vmem>>, vector<1x32x448xbf16>
    %24 = vector.shape_cast %23 : vector<1x32x448xbf16> to vector<32x448xbf16>
    %cst_27 = arith.constant dense<0.000000e+00> : vector<28x448xf32>
    %25 = tpu.matmul %22, %24, %cst_27 {dimension_numbers = #tpu.dot_dimension_numbers<[1], [0], [0], [1], [0, 0, 1, 1], [], []>} : vector<28x32xbf16>, vector<32x448xbf16>, vector<28x448xf32> -> vector<28x448xf32>
    %26 = arith.addf %21, %25 : vector<28x448xf32>
    %c4 = arith.constant 4 : index
    %c0_28 = arith.constant 0 : index
    %27 = vector.load %arg19[%c4, %c0_28] : memref<32x32xbf16, #tpu.memory_space<vmem>>, vector<28x32xbf16>
    %c4_29 = arith.constant 4 : index
    %c0_30 = arith.constant 0 : index
    %c0_31 = arith.constant 0 : index
    %28 = vector.load %arg2[%c4_29, %c0_30, %c0_31] : memref<5x32x448xbf16, #tpu.memory_space<vmem>>, vector<1x32x448xbf16>
    %29 = vector.shape_cast %28 : vector<1x32x448xbf16> to vector<32x448xbf16>
    %cst_32 = arith.constant dense<0.000000e+00> : vector<28x448xf32>
    %30 = tpu.matmul %27, %29, %cst_32 {dimension_numbers = #tpu.dot_dimension_numbers<[1], [0], [0], [1], [0, 0, 1, 1], [], []>} : vector<28x32xbf16>, vector<32x448xbf16>, vector<28x448xf32> -> vector<28x448xf32>
    %31 = arith.addf %26, %30 : vector<28x448xf32>
    %c0_33 = arith.constant 0 : index
    %c0_34 = arith.constant 0 : index
    %32 = vector.load %arg3[%c0_33, %c0_34] : memref<1x448xf32, #tpu.memory_space<vmem>>, vector<1x448xf32>
    %33 = vector.broadcast %32 : vector<1x448xf32> to vector<28x448xf32>
    %34 = arith.mulf %31, %33 : vector<28x448xf32>
    %c0_35 = arith.constant 0 : index
    %c0_36 = arith.constant 0 : index
    %35 = vector.load %arg4[%c0_35, %c0_36] : memref<1x448xf32, #tpu.memory_space<vmem>>, vector<1x448xf32>
    %36 = vector.broadcast %35 : vector<1x448xf32> to vector<28x448xf32>
    %37 = arith.addf %34, %36 : vector<28x448xf32>
    %cst_37 = arith.constant 0.000000e+00 : f32
    %38 = vector.broadcast %cst_37 : f32 to vector<28x448xf32>
    %39 = arith.maximumf %37, %38 : vector<28x448xf32>
    %c0_38 = arith.constant 0 : index
    %c0_39 = arith.constant 0 : index
    %40 = vector.load %arg5[%c0_38, %c0_39] : memref<14x28xf32, #tpu.memory_space<vmem>>, vector<14x28xf32>
    %cst_40 = arith.constant dense<0.000000e+00> : vector<14x448xf32>
    %41 = tpu.matmul %40, %39, %cst_40 {dimension_numbers = #tpu.dot_dimension_numbers<[1], [0], [0], [1], [0, 0, 1, 1], [], []>} : vector<14x28xf32>, vector<28x448xf32>, vector<14x448xf32> -> vector<14x448xf32>
    %c0_41 = arith.constant 0 : index
    %c0_42 = arith.constant 0 : index
    %42 = vector.load %arg6[%c0_41, %c0_42] : memref<14x28xf32, #tpu.memory_space<vmem>>, vector<14x28xf32>
    %cst_43 = arith.constant dense<0.000000e+00> : vector<14x448xf32>
    %43 = tpu.matmul %42, %39, %cst_43 {dimension_numbers = #tpu.dot_dimension_numbers<[1], [0], [0], [1], [0, 0, 1, 1], [], []>} : vector<14x28xf32>, vector<28x448xf32>, vector<14x448xf32> -> vector<14x448xf32>
    %44 = arith.maximumf %41, %43 : vector<14x448xf32>
    %c0_44 = arith.constant 0 : index
    %c0_45 = arith.constant 0 : index
    %45 = vector.load %arg7[%c0_44, %c0_45] : memref<448x224xf32, #tpu.memory_space<vmem>>, vector<448x224xf32>
    %cst_46 = arith.constant dense<0.000000e+00> : vector<14x224xf32>
    %46 = tpu.matmul %44, %45, %cst_46 {dimension_numbers = #tpu.dot_dimension_numbers<[1], [0], [0], [1], [0, 0, 1, 1], [], []>} : vector<14x448xf32>, vector<448x224xf32>, vector<14x224xf32> -> vector<14x224xf32>
    %c0_47 = arith.constant 0 : index
    %c0_48 = arith.constant 0 : index
    %47 = vector.load %arg8[%c0_47, %c0_48] : memref<448x224xf32, #tpu.memory_space<vmem>>, vector<448x224xf32>
    %cst_49 = arith.constant dense<0.000000e+00> : vector<14x224xf32>
    %48 = tpu.matmul %44, %47, %cst_49 {dimension_numbers = #tpu.dot_dimension_numbers<[1], [0], [0], [1], [0, 0, 1, 1], [], []>} : vector<14x448xf32>, vector<448x224xf32>, vector<14x224xf32> -> vector<14x224xf32>
    %49 = arith.maximumf %46, %48 : vector<14x224xf32>
    %cst_50 = arith.constant 0.000000e+00 : bf16
    %50 = vector.broadcast %cst_50 : bf16 to vector<18x288xbf16>
    %c0_51 = arith.constant 0 : index
    %c0_52 = arith.constant 0 : index
    %51 = vector.load %arg20[%c0_51, %c0_52] : memref<18x288xbf16, #tpu.memory_space<vmem>>, vector<18x288xbf16>
    tpu.vector_store %arg20[%c0_51, %c0_52], %50 {strides = array<i32>} : memref<18x288xbf16, #tpu.memory_space<vmem>>, vector<18x288xbf16>,
    %52 = arith.truncf %49 : vector<14x224xf32> to vector<14x224xbf16>
    %c2_53 = arith.constant 2 : index
    %c32 = arith.constant 32 : index
    %53 = vector.load %arg20[%c2_53, %c32] : memref<18x288xbf16, #tpu.memory_space<vmem>>, vector<14x224xbf16>
    tpu.vector_store %arg20[%c2_53, %c32], %52 {strides = array<i32>} : memref<18x288xbf16, #tpu.memory_space<vmem>>, vector<14x224xbf16>,
    %cst_54 = arith.constant 0.000000e+00 : f32
    %54 = vector.broadcast %cst_54 : f32 to vector<14x448xf32>
    %c0_55 = arith.constant 0 : index
    %c0_56 = arith.constant 0 : index
    %55 = vector.load %arg20[%c0_55, %c0_56] : memref<18x288xbf16, #tpu.memory_space<vmem>>, vector<14x288xbf16>
    %c0_57 = arith.constant 0 : index
    %c0_58 = arith.constant 0 : index
    %c0_59 = arith.constant 0 : index
    %56 = vector.load %arg9[%c0_57, %c0_58, %c0_59] : memref<5x288x448xbf16, #tpu.memory_space<vmem>>, vector<1x288x448xbf16>
    %57 = vector.shape_cast %56 : vector<1x288x448xbf16> to vector<288x448xbf16>
    %cst_60 = arith.constant dense<0.000000e+00> : vector<14x448xf32>
    %58 = tpu.matmul %55, %57, %cst_60 {dimension_numbers = #tpu.dot_dimension_numbers<[1], [0], [0], [1], [0, 0, 1, 1], [], []>} : vector<14x288xbf16>, vector<288x448xbf16>, vector<14x448xf32> -> vector<14x448xf32>
    %59 = arith.addf %54, %58 : vector<14x448xf32>
    %c1_61 = arith.constant 1 : index
    %c0_62 = arith.constant 0 : index
    %60 = vector.load %arg20[%c1_61, %c0_62] : memref<18x288xbf16, #tpu.memory_space<vmem>>, vector<14x288xbf16>
    %c1_63 = arith.constant 1 : index
    %c0_64 = arith.constant 0 : index
    %c0_65 = arith.constant 0 : index
    %61 = vector.load %arg9[%c1_63, %c0_64, %c0_65] : memref<5x288x448xbf16, #tpu.memory_space<vmem>>, vector<1x288x448xbf16>
    %62 = vector.shape_cast %61 : vector<1x288x448xbf16> to vector<288x448xbf16>
    %cst_66 = arith.constant dense<0.000000e+00> : vector<14x448xf32>
    %63 = tpu.matmul %60, %62, %cst_66 {dimension_numbers = #tpu.dot_dimension_numbers<[1], [0], [0], [1], [0, 0, 1, 1], [], []>} : vector<14x288xbf16>, vector<288x448xbf16>, vector<14x448xf32> -> vector<14x448xf32>
    %64 = arith.addf %59, %63 : vector<14x448xf32>
    %c2_67 = arith.constant 2 : index
    %c0_68 = arith.constant 0 : index
    %65 = vector.load %arg20[%c2_67, %c0_68] : memref<18x288xbf16, #tpu.memory_space<vmem>>, vector<14x288xbf16>
    %c2_69 = arith.constant 2 : index
    %c0_70 = arith.constant 0 : index
    %c0_71 = arith.constant 0 : index
    %66 = vector.load %arg9[%c2_69, %c0_70, %c0_71] : memref<5x288x448xbf16, #tpu.memory_space<vmem>>, vector<1x288x448xbf16>
    %67 = vector.shape_cast %66 : vector<1x288x448xbf16> to vector<288x448xbf16>
    %cst_72 = arith.constant dense<0.000000e+00> : vector<14x448xf32>
    %68 = tpu.matmul %65, %67, %cst_72 {dimension_numbers = #tpu.dot_dimension_numbers<[1], [0], [0], [1], [0, 0, 1, 1], [], []>} : vector<14x288xbf16>, vector<288x448xbf16>, vector<14x448xf32> -> vector<14x448xf32>
    %69 = arith.addf %64, %68 : vector<14x448xf32>
    %c3_73 = arith.constant 3 : index
    %c0_74 = arith.constant 0 : index
    %70 = vector.load %arg20[%c3_73, %c0_74] : memref<18x288xbf16, #tpu.memory_space<vmem>>, vector<14x288xbf16>
    %c3_75 = arith.constant 3 : index
    %c0_76 = arith.constant 0 : index
    %c0_77 = arith.constant 0 : index
    %71 = vector.load %arg9[%c3_75, %c0_76, %c0_77] : memref<5x288x448xbf16, #tpu.memory_space<vmem>>, vector<1x288x448xbf16>
    %72 = vector.shape_cast %71 : vector<1x288x448xbf16> to vector<288x448xbf16>
    %cst_78 = arith.constant dense<0.000000e+00> : vector<14x448xf32>
    %73 = tpu.matmul %70, %72, %cst_78 {dimension_numbers = #tpu.dot_dimension_numbers<[1], [0], [0], [1], [0, 0, 1, 1], [], []>} : vector<14x288xbf16>, vector<288x448xbf16>, vector<14x448xf32> -> vector<14x448xf32>
    %74 = arith.addf %69, %73 : vector<14x448xf32>
    %c4_79 = arith.constant 4 : index
    %c0_80 = arith.constant 0 : index
    %75 = vector.load %arg20[%c4_79, %c0_80] : memref<18x288xbf16, #tpu.memory_space<vmem>>, vector<14x288xbf16>
    %c4_81 = arith.constant 4 : index
    %c0_82 = arith.constant 0 : index
    %c0_83 = arith.constant 0 : index
    %76 = vector.load %arg9[%c4_81, %c0_82, %c0_83] : memref<5x288x448xbf16, #tpu.memory_space<vmem>>, vector<1x288x448xbf16>
    %77 = vector.shape_cast %76 : vector<1x288x448xbf16> to vector<288x448xbf16>
    %cst_84 = arith.constant dense<0.000000e+00> : vector<14x448xf32>
    %78 = tpu.matmul %75, %77, %cst_84 {dimension_numbers = #tpu.dot_dimension_numbers<[1], [0], [0], [1], [0, 0, 1, 1], [], []>} : vector<14x288xbf16>, vector<288x448xbf16>, vector<14x448xf32> -> vector<14x448xf32>
    %79 = arith.addf %74, %78 : vector<14x448xf32>
    %c0_85 = arith.constant 0 : index
    %c0_86 = arith.constant 0 : index
    %80 = vector.load %arg10[%c0_85, %c0_86] : memref<1x448xf32, #tpu.memory_space<vmem>>, vector<1x448xf32>
    %81 = vector.broadcast %80 : vector<1x448xf32> to vector<14x448xf32>
    %82 = arith.mulf %79, %81 : vector<14x448xf32>
    %c0_87 = arith.constant 0 : index
    %c0_88 = arith.constant 0 : index
    %83 = vector.load %arg11[%c0_87, %c0_88] : memref<1x448xf32, #tpu.memory_space<vmem>>, vector<1x448xf32>
    %84 = vector.broadcast %83 : vector<1x448xf32> to vector<14x448xf32>
    %85 = arith.addf %82, %84 : vector<14x448xf32>
    %cst_89 = arith.constant 0.000000e+00 : f32
    %86 = vector.broadcast %cst_89 : f32 to vector<14x448xf32>
    %87 = arith.maximumf %85, %86 : vector<14x448xf32>
    %c0_90 = arith.constant 0 : index
    %c0_91 = arith.constant 0 : index
    %88 = vector.load %arg12[%c0_90, %c0_91] : memref<7x14xf32, #tpu.memory_space<vmem>>, vector<7x14xf32>
    %cst_92 = arith.constant dense<0.000000e+00> : vector<7x448xf32>
    %89 = tpu.matmul %88, %87, %cst_92 {dimension_numbers = #tpu.dot_dimension_numbers<[1], [0], [0], [1], [0, 0, 1, 1], [], []>} : vector<7x14xf32>, vector<14x448xf32>, vector<7x448xf32> -> vector<7x448xf32>
    %c0_93 = arith.constant 0 : index
    %c0_94 = arith.constant 0 : index
    %90 = vector.load %arg13[%c0_93, %c0_94] : memref<7x14xf32, #tpu.memory_space<vmem>>, vector<7x14xf32>
    %cst_95 = arith.constant dense<0.000000e+00> : vector<7x448xf32>
    %91 = tpu.matmul %90, %87, %cst_95 {dimension_numbers = #tpu.dot_dimension_numbers<[1], [0], [0], [1], [0, 0, 1, 1], [], []>} : vector<7x14xf32>, vector<14x448xf32>, vector<7x448xf32> -> vector<7x448xf32>
    %92 = arith.maximumf %89, %91 : vector<7x448xf32>
    %c0_96 = arith.constant 0 : index
    %c0_97 = arith.constant 0 : index
    %93 = vector.load %arg14[%c0_96, %c0_97] : memref<448x224xf32, #tpu.memory_space<vmem>>, vector<448x224xf32>
    %cst_98 = arith.constant dense<0.000000e+00> : vector<7x224xf32>
    %94 = tpu.matmul %92, %93, %cst_98 {dimension_numbers = #tpu.dot_dimension_numbers<[1], [0], [0], [1], [0, 0, 1, 1], [], []>} : vector<7x448xf32>, vector<448x224xf32>, vector<7x224xf32> -> vector<7x224xf32>
    %c0_99 = arith.constant 0 : index
    %c0_100 = arith.constant 0 : index
    %95 = vector.load %arg15[%c0_99, %c0_100] : memref<448x224xf32, #tpu.memory_space<vmem>>, vector<448x224xf32>
    %cst_101 = arith.constant dense<0.000000e+00> : vector<7x224xf32>
    %96 = tpu.matmul %92, %95, %cst_101 {dimension_numbers = #tpu.dot_dimension_numbers<[1], [0], [0], [1], [0, 0, 1, 1], [], []>} : vector<7x448xf32>, vector<448x224xf32>, vector<7x224xf32> -> vector<7x224xf32>
    %97 = arith.maximumf %94, %96 : vector<7x224xf32>
    %98 = arith.truncf %97 : vector<7x224xf32> to vector<7x224xbf16>
    %c0_102 = arith.constant 0 : index
    %c0_103 = arith.constant 0 : index
    %99 = vector.load %arg16[%c0_102, %c0_103] : memref<224x896xbf16, #tpu.memory_space<vmem>>, vector<224x896xbf16>
    %cst_104 = arith.constant dense<0.000000e+00> : vector<7x896xf32>
    %100 = tpu.matmul %98, %99, %cst_104 {dimension_numbers = #tpu.dot_dimension_numbers<[1], [0], [0], [1], [0, 0, 1, 1], [], []>} : vector<7x224xbf16>, vector<224x896xbf16>, vector<7x896xf32> -> vector<7x896xf32>
    %c0_105 = arith.constant 0 : index
    %c0_106 = arith.constant 0 : index
    %101 = vector.load %arg17[%c0_105, %c0_106] : memref<1x128xf32, #tpu.memory_space<vmem>>, vector<1x128xf32>
    %102 = vector.extract_strided_slice %100 {offsets = [0, 0], sizes = [1, 128], strides = [1, 1]} : vector<7x896xf32> to vector<1x128xf32>
    %103 = arith.addf %101, %102 : vector<1x128xf32>
    %104 = vector.extract_strided_slice %100 {offsets = [1, 128], sizes = [1, 128], strides = [1, 1]} : vector<7x896xf32> to vector<1x128xf32>
    %105 = arith.addf %103, %104 : vector<1x128xf32>
    %106 = vector.extract_strided_slice %100 {offsets = [2, 256], sizes = [1, 128], strides = [1, 1]} : vector<7x896xf32> to vector<1x128xf32>
    %107 = arith.addf %105, %106 : vector<1x128xf32>
    %108 = vector.extract_strided_slice %100 {offsets = [3, 384], sizes = [1, 128], strides = [1, 1]} : vector<7x896xf32> to vector<1x128xf32>
    %109 = arith.addf %107, %108 : vector<1x128xf32>
    %110 = vector.extract_strided_slice %100 {offsets = [4, 512], sizes = [1, 128], strides = [1, 1]} : vector<7x896xf32> to vector<1x128xf32>
    %111 = arith.addf %109, %110 : vector<1x128xf32>
    %112 = vector.extract_strided_slice %100 {offsets = [5, 640], sizes = [1, 128], strides = [1, 1]} : vector<7x896xf32> to vector<1x128xf32>
    %113 = arith.addf %111, %112 : vector<1x128xf32>
    %114 = vector.extract_strided_slice %100 {offsets = [6, 768], sizes = [1, 128], strides = [1, 1]} : vector<7x896xf32> to vector<1x128xf32>
    %115 = arith.addf %113, %114 : vector<1x128xf32>
    %c0_107 = arith.constant 0 : index
    %c0_108 = arith.constant 0 : index
    %c0_109 = arith.constant 0 : index
    %116 = vector.load %arg18[%c0_107, %c0_108, %c0_109] : memref<1x1x128xf32, #tpu.memory_space<vmem>>, vector<1x1x128xf32>
    %117 = vector.shape_cast %116 : vector<1x1x128xf32> to vector<1x128xf32>
    %118 = vector.shape_cast %115 : vector<1x128xf32> to vector<1x1x128xf32>
    tpu.vector_store %arg18[%c0_107, %c0_108, %c0_109], %118 {strides = array<i32>} : memref<1x1x128xf32, #tpu.memory_space<vmem>>, vector<1x1x128xf32>,
    return
  }
  func.func @transform_0(%arg0: i32) -> (i32, i32, i32) {
    %c0_i32 = arith.constant 0 : i32
    %c0_i32_0 = arith.constant 0 : i32
    %c0_i32_1 = arith.constant 0 : i32
    return %arg0, %c0_i32, %c0_i32_0 : i32, i32, i32
  }
  func.func @transform_1(%arg0: i32) -> (i32, i32, i32) {
    %c0_i32 = arith.constant 0 : i32
    %c0_i32_0 = arith.constant 0 : i32
    %c0_i32_1 = arith.constant 0 : i32
    %c0_i32_2 = arith.constant 0 : i32
    return %c0_i32, %c0_i32_0, %c0_i32_1 : i32, i32, i32
  }
  func.func @transform_2(%arg0: i32) -> (i32, i32) {
    %c0_i32 = arith.constant 0 : i32
    %c0_i32_0 = arith.constant 0 : i32
    %c0_i32_1 = arith.constant 0 : i32
    return %c0_i32, %c0_i32_0 : i32, i32
  }
  func.func @transform_3(%arg0: i32) -> (i32, i32) {
    %c0_i32 = arith.constant 0 : i32
    %c0_i32_0 = arith.constant 0 : i32
    %c0_i32_1 = arith.constant 0 : i32
    return %c0_i32, %c0_i32_0 : i32, i32
  }
  func.func @transform_4(%arg0: i32) -> (i32, i32) {
    %c0_i32 = arith.constant 0 : i32
    %c0_i32_0 = arith.constant 0 : i32
    %c0_i32_1 = arith.constant 0 : i32
    return %c0_i32, %c0_i32_0 : i32, i32
  }
  func.func @transform_5(%arg0: i32) -> (i32, i32) {
    %c0_i32 = arith.constant 0 : i32
    %c0_i32_0 = arith.constant 0 : i32
    %c0_i32_1 = arith.constant 0 : i32
    return %c0_i32, %c0_i32_0 : i32, i32
  }
  func.func @transform_6(%arg0: i32) -> (i32, i32) {
    %c0_i32 = arith.constant 0 : i32
    %c0_i32_0 = arith.constant 0 : i32
    %c0_i32_1 = arith.constant 0 : i32
    return %c0_i32, %c0_i32_0 : i32, i32
  }
  func.func @transform_7(%arg0: i32) -> (i32, i32) {
    %c0_i32 = arith.constant 0 : i32
    %c0_i32_0 = arith.constant 0 : i32
    %c0_i32_1 = arith.constant 0 : i32
    return %c0_i32, %c0_i32_0 : i32, i32
  }
  func.func @transform_8(%arg0: i32) -> (i32, i32, i32) {
    %c0_i32 = arith.constant 0 : i32
    %c0_i32_0 = arith.constant 0 : i32
    %c0_i32_1 = arith.constant 0 : i32
    %c0_i32_2 = arith.constant 0 : i32
    return %c0_i32, %c0_i32_0, %c0_i32_1 : i32, i32, i32
  }
  func.func @transform_9(%arg0: i32) -> (i32, i32) {
    %c0_i32 = arith.constant 0 : i32
    %c0_i32_0 = arith.constant 0 : i32
    %c0_i32_1 = arith.constant 0 : i32
    return %c0_i32, %c0_i32_0 : i32, i32
  }
  func.func @transform_10(%arg0: i32) -> (i32, i32) {
    %c0_i32 = arith.constant 0 : i32
    %c0_i32_0 = arith.constant 0 : i32
    %c0_i32_1 = arith.constant 0 : i32
    return %c0_i32, %c0_i32_0 : i32, i32
  }
  func.func @transform_11(%arg0: i32) -> (i32, i32) {
    %c0_i32 = arith.constant 0 : i32
    %c0_i32_0 = arith.constant 0 : i32
    %c0_i32_1 = arith.constant 0 : i32
    return %c0_i32, %c0_i32_0 : i32, i32
  }
  func.func @transform_12(%arg0: i32) -> (i32, i32) {
    %c0_i32 = arith.constant 0 : i32
    %c0_i32_0 = arith.constant 0 : i32
    %c0_i32_1 = arith.constant 0 : i32
    return %c0_i32, %c0_i32_0 : i32, i32
  }
  func.func @transform_13(%arg0: i32) -> (i32, i32) {
    %c0_i32 = arith.constant 0 : i32
    %c0_i32_0 = arith.constant 0 : i32
    %c0_i32_1 = arith.constant 0 : i32
    return %c0_i32, %c0_i32_0 : i32, i32
  }
  func.func @transform_14(%arg0: i32) -> (i32, i32) {
    %c0_i32 = arith.constant 0 : i32
    %c0_i32_0 = arith.constant 0 : i32
    %c0_i32_1 = arith.constant 0 : i32
    return %c0_i32, %c0_i32_0 : i32, i32
  }
  func.func @transform_15(%arg0: i32) -> (i32, i32) {
    %c0_i32 = arith.constant 0 : i32
    %c0_i32_0 = arith.constant 0 : i32
    %c0_i32_1 = arith.constant 0 : i32
    return %c0_i32, %c0_i32_0 : i32, i32
  }
  func.func @transform_16(%arg0: i32) -> (i32, i32) {
    %c0_i32 = arith.constant 0 : i32
    %c0_i32_0 = arith.constant 0 : i32
    %c0_i32_1 = arith.constant 0 : i32
    return %c0_i32, %c0_i32_0 : i32, i32
  }
  func.func @transform_17(%arg0: i32) -> (i32, i32, i32) {
    %c0_i32 = arith.constant 0 : i32
    %c0_i32_0 = arith.constant 0 : i32
    %c0_i32_1 = arith.constant 0 : i32
    return %arg0, %c0_i32, %c0_i32_0 : i32, i32, i32
  }
}

</mosaic_0001>

<llo_original>
// kernel: _lambda_.1
$region0: #{_lambda_.1}
  #allocation0 [shape = 'u32[]', space=smem, size = 0x4, offset = 0x4, fixed_abs, tag = 'smem constant byte address 0x4 - core index']
  #allocation1 [shape = 'u32[144,128]{1,0:T(1,128)}', space=vmem, size = 0x12000, scoped, tag = 'internal scratch']
  #allocation2 [shape = 'bf16[32,32]{1,0:T(16,128)(2,1)}', space=vmem, size = 0x2000, scoped, tag = 'scratch operand']
  #allocation3 [shape = 'bf16[18,288]{1,0:T(8,128)(2,1)}', space=vmem, size = 0x4800, scoped, tag = 'scratch operand']
  %s0 = inlined_call_operand.vmem [shape: f32[2,28,28], index: 0, kind: input, shape index: {}]
  %s1 = inlined_call_operand.hbm [shape: bf16[5,32,448], index: 1, kind: input, shape index: {}]
  %s2 = inlined_call_operand.hbm [shape: f32[1,448], index: 2, kind: input, shape index: {}]
  %s3 = inlined_call_operand.hbm [shape: f32[1,448], index: 3, kind: input, shape index: {}]
  %s4 = inlined_call_operand.hbm [shape: f32[14,28], index: 4, kind: input, shape index: {}]
  %s5 = inlined_call_operand.hbm [shape: f32[14,28], index: 5, kind: input, shape index: {}]
  %s6 = inlined_call_operand.hbm [shape: f32[448,224], index: 6, kind: input, shape index: {}]
  %s7 = inlined_call_operand.hbm [shape: f32[448,224], index: 7, kind: input, shape index: {}]
  %s8 = inlined_call_operand.hbm [shape: bf16[5,288,448], index: 8, kind: input, shape index: {}]
  %s9 = inlined_call_operand.hbm [shape: f32[1,448], index: 9, kind: input, shape index: {}]
  %s10 = inlined_call_operand.hbm [shape: f32[1,448], index: 10, kind: input, shape index: {}]
  %s11 = inlined_call_operand.hbm [shape: f32[7,14], index: 11, kind: input, shape index: {}]
  %s12 = inlined_call_operand.hbm [shape: f32[7,14], index: 12, kind: input, shape index: {}]
  %s13 = inlined_call_operand.hbm [shape: f32[448,224], index: 13, kind: input, shape index: {}]
  %s14 = inlined_call_operand.hbm [shape: f32[448,224], index: 14, kind: input, shape index: {}]
  %s15 = inlined_call_operand.hbm [shape: bf16[224,896], index: 15, kind: input, shape index: {}]
  %s16 = inlined_call_operand.hbm [shape: f32[1,128], index: 16, kind: input, shape index: {}]
  %s17 = inlined_call_operand.hbm [shape: f32[2,1,128], index: 17, kind: output, shape index: {}]
  %s18 = sld [smem:[#allocation0]]
  $region165: #{_lambda_.1} parent=0
    _
  %s20 = ssub.s32 1, %s18
  %s21 = scalar_select 0, %s20, %s18
  $region1: #{_lambda_.1} parent=0
    #allocation4 [shape = 'u8[163840]{0}', space=vmem, size = 0x28000, scoped, tag = 'input window, operand 1, single buffered']
    #allocation5 [shape = 's32[2]{0}', space=sflag, size = 0x8, scoped, tag = 'scoped memory for _lambda_.1']
    #allocation6 [shape = 's32[2]{0}', space=sflag, size = 0x8, scoped, tag = 'scoped memory for _lambda_.1']
    #allocation7 [shape = 'u8[2048]{0}', space=vmem, size = 0x800, scoped, tag = 'input window, operand 2, single buffered']
    #allocation8 [shape = 's32[1]{0}', space=sflag, size = 0x4, scoped, tag = 'scoped memory for _lambda_.1']
    #allocation9 [shape = 'u8[2048]{0}', space=vmem, size = 0x800, scoped, tag = 'input window, operand 3, single buffered']
    #allocation10 [shape = 'u8[8192]{0}', space=vmem, size = 0x2000, scoped, tag = 'input window, operand 4, single buffered']
    #allocation11 [shape = 's32[1]{0}', space=sflag, size = 0x4, scoped, tag = 'scoped memory for _lambda_.1']
    #allocation12 [shape = 'u8[8192]{0}', space=vmem, size = 0x2000, scoped, tag = 'input window, operand 5, single buffered']
    #allocation13 [shape = 'u8[458752]{0}', space=vmem, size = 0x70000, scoped, tag = 'input window, operand 6, single buffered']
    #allocation14 [shape = 's32[1]{0}', space=sflag, size = 0x4, scoped, tag = 'scoped memory for _lambda_.1']
    #allocation15 [shape = 'u8[458752]{0}', space=vmem, size = 0x70000, scoped, tag = 'input window, operand 7, single buffered']
    #allocation16 [shape = 'u8[1474560]{0}', space=vmem, size = 0x168000, scoped, tag = 'input window, operand 8, single buffered']
    #allocation17 [shape = 's32[1]{0}', space=sflag, size = 0x4, scoped, tag = 'scoped memory for _lambda_.1']
    #allocation18 [shape = 'u8[2048]{0}', space=vmem, size = 0x800, scoped, tag = 'input window, operand 9, single buffered']
    #allocation19 [shape = 'u8[2048]{0}', space=vmem, size = 0x800, scoped, tag = 'input window, operand 10, single buffered']
    #allocation20 [shape = 's32[1]{0}', space=sflag, size = 0x4, scoped, tag = 'scoped memory for _lambda_.1']
    #allocation21 [shape = 'u8[4096]{0}', space=vmem, size = 0x1000, scoped, tag = 'input window, operand 11, single buffered']
    #allocation22 [shape = 'u8[4096]{0}', space=vmem, size = 0x1000, scoped, tag = 'input window, operand 12, single buffered']
    #allocation23 [shape = 's32[1]{0}', space=sflag, size = 0x4, scoped, tag = 'scoped memory for _lambda_.1']
    #allocation24 [shape = 'u8[458752]{0}', space=vmem, size = 0x70000, scoped, tag = 'input window, operand 13, single buffered']
    #allocation25 [shape = 'u8[458752]{0}', space=vmem, size = 0x70000, scoped, tag = 'input window, operand 14, single buffered']
    #allocation26 [shape = 's32[1]{0}', space=sflag, size = 0x4, scoped, tag = 'scoped memory for _lambda_.1']
    #allocation27 [shape = 'u8[401408]{0}', space=vmem, size = 0x62000, scoped, tag = 'input window, operand 15, single buffered']
    #allocation28 [shape = 'u8[512]{0}', space=vmem, size = 0x400, scoped, tag = 'input window, operand 16, single buffered']
    #allocation29 [shape = 's32[1]{0}', space=sflag, size = 0x4, scoped, tag = 'scoped memory for _lambda_.1']
    #allocation30 [shape = 'u8[1024]{0}', space=vmem, size = 0x400, scoped, tag = 'output window, operand 0']
    %22 = vsyncpa [#allocation5], 0
    %23 = vsyncpa [#allocation8], 0
    %24 = vsyncpa [#allocation11], 0
    %25 = vsyncpa [#allocation14], 0
    %26 = vsyncpa [#allocation17], 0
    %27 = vsyncpa [#allocation20], 0
    %28 = vsyncpa [#allocation23], 0
    %29 = vsyncpa [#allocation26], 0
    %30 = vsyncpa [#allocation29], 0
    %31 = vsyncpa [#allocation6], 0
    %s32 = scalar_lea.sflag [#allocation6], 1
    %33 = vsyncpa %s32, 0
    loop: start=0, step=1, limit=4
    $region2: #{_lambda_.1} parent=1 // loop_pre_header
      _
    $region3: #{_lambda_.1} parent=1 // loop_header
      %s35 = sphi 0, %s39
      %p36 = scmp.ge.s32.totalorder %s35, 4
      %s45 = sphi 0, %s47
      %s48 = sphi 0, %s45
      %s49 = sphi 0, %s48
      %s65 = sphi 0, %s49
      %s69 = sphi 0, %s69
      %s71 = sphi 0, %s69
      %s72 = sphi 0, %s71
      %s86 = sphi 0, %s72
      %s90 = sphi 0, %s90
      %s92 = sphi 0, %s90
      %s93 = sphi 0, %s92
      %s107 = sphi 0, %s93
      %s111 = sphi 0, %s111
      %s113 = sphi 0, %s111
      %s114 = sphi 0, %s113
      %s128 = sphi 0, %s114
      %s132 = sphi 0, %s132
      %s134 = sphi 0, %s132
      %s135 = sphi 0, %s134
      %s149 = sphi 0, %s135
      %s153 = sphi 0, %s153
      %s155 = sphi 0, %s153
      %s156 = sphi 0, %s155
      %s170 = sphi 0, %s156
      %s174 = sphi 0, %s174
      %s176 = sphi 0, %s174
      %s177 = sphi 0, %s176
      %s191 = sphi 0, %s177
      %s195 = sphi 0, %s195
      %s197 = sphi 0, %s195
      %s198 = sphi 0, %s197
      %s212 = sphi 0, %s198
      %s216 = sphi 0, %s216
      %s218 = sphi 0, %s216
      %s219 = sphi 0, %s218
      %s233 = sphi 0, %s219
      %s237 = sphi 0, %s237
      %s239 = sphi 0, %s237
      %s240 = sphi 0, %s239
      %s254 = sphi 0, %s240
      %s258 = sphi 0, %s258
      %s260 = sphi 0, %s258
      %s261 = sphi 0, %s260
      %s275 = sphi 0, %s261
      %s279 = sphi 0, %s279
      %s281 = sphi 0, %s279
      %s282 = sphi 0, %s281
      %s296 = sphi 0, %s282
      %s300 = sphi 0, %s300
      %s302 = sphi 0, %s300
      %s303 = sphi 0, %s302
      %s317 = sphi 0, %s303
      %s321 = sphi 0, %s321
      %s323 = sphi 0, %s321
      %s324 = sphi 0, %s323
      %s338 = sphi 0, %s324
      %s342 = sphi 0, %s342
      %s344 = sphi 0, %s342
      %s345 = sphi 0, %s344
      %s359 = sphi 0, %s345
      %s363 = sphi 0, %s363
      %s365 = sphi 0, %s363
      %s366 = sphi 0, %s365
      %s380 = sphi 0, %s366
      %s384 = sphi 0, %s384
      %s386 = sphi 0, %s384
      %s387 = sphi 0, %s386
      %s401 = sphi 0, %s387
      %s407 = sphi 0, %s409
      %s410 = sphi 0, %s407
      %s411 = sphi 0, %s410
      %s427 = sphi 0, %s411
    $region4: #{_lambda_.1} parent=1 // loop_header_branch
      %38 = sbr.rel (%p36) target = $region8
    $region5: #{_lambda_.1} parent=1 // loop_body
      %s40 = ssub.s32 %s35, 1
      %s41 = ssub.s32 %s35, 2
      %s42 = sadd.s32 %s35, 1
      %s43 = ssub.s32 %s35, %s42
      %p44 = scmp.eq.s32.totalorder %s43, 0
      %s46 = sadd.s32 %s45, 1
      %s47 = scalar_select %p44, %s45, %s46
      %p50 = pneg %p44
      %p51 = scmp.eq.s32.totalorder %s35, 1
      %p52 = por %p50, %p51
      %p53 = scmp.ne.s32.totalorder %s45, %s48
      %p54 = scmp.eq.s32.totalorder %s35, 0
      %p55 = por %p53, %p54
      %p56 = scmp.ne.s32.totalorder %s45, %s48
      %p57 = scmp.eq.s32.totalorder %s40, 1
      %p58 = por %p56, %p57
      %p59 = scmp.ne.s32.totalorder %s48, %s49
      %p60 = scmp.eq.s32.totalorder %s40, 0
      %p61 = por %p59, %p60
      %p62 = scmp.ne.s32.totalorder %s48, %s49
      %p63 = scmp.eq.s32.totalorder %s41, 1
      %p64 = por %p62, %p63
      %p66 = scmp.ne.s32.totalorder %s49, %s65
      %p67 = scmp.eq.s32.totalorder %s41, 0
      %p68 = por %p66, %p67
      %s70 = sadd.s32 %s69, 1
      %p73 = scmp.eq.s32.totalorder %s35, 1
      %p74 = scmp.ne.s32.totalorder %s69, %s71
      %p75 = scmp.eq.s32.totalorder %s35, 0
      %p76 = por %p74, %p75
      %p77 = scmp.ne.s32.totalorder %s69, %s71
      %p78 = scmp.eq.s32.totalorder %s40, 1
      %p79 = por %p77, %p78
      %p80 = scmp.ne.s32.totalorder %s71, %s72
      %p81 = scmp.eq.s32.totalorder %s40, 0
      %p82 = por %p80, %p81
      %p83 = scmp.ne.s32.totalorder %s71, %s72
      %p84 = scmp.eq.s32.totalorder %s41, 1
      %p85 = por %p83, %p84
      %p87 = scmp.ne.s32.totalorder %s72, %s86
      %p88 = scmp.eq.s32.totalorder %s41, 0
      %p89 = por %p87, %p88
      %s91 = sadd.s32 %s90, 1
      %p94 = scmp.eq.s32.totalorder %s35, 1
      %p95 = scmp.ne.s32.totalorder %s90, %s92
      %p96 = scmp.eq.s32.totalorder %s35, 0
      %p97 = por %p95, %p96
      %p98 = scmp.ne.s32.totalorder %s90, %s92
      %p99 = scmp.eq.s32.totalorder %s40, 1
      %p100 = por %p98, %p99
      %p101 = scmp.ne.s32.totalorder %s92, %s93
      %p102 = scmp.eq.s32.totalorder %s40, 0
      %p103 = por %p101, %p102
      %p104 = scmp.ne.s32.totalorder %s92, %s93
      %p105 = scmp.eq.s32.totalorder %s41, 1
      %p106 = por %p104, %p105
      %p108 = scmp.ne.s32.totalorder %s93, %s107
      %p109 = scmp.eq.s32.totalorder %s41, 0
      %p110 = por %p108, %p109
      %s112 = sadd.s32 %s111, 1
      %p115 = scmp.eq.s32.totalorder %s35, 1
      %p116 = scmp.ne.s32.totalorder %s111, %s113
      %p117 = scmp.eq.s32.totalorder %s35, 0
      %p118 = por %p116, %p117
      %p119 = scmp.ne.s32.totalorder %s111, %s113
      %p120 = scmp.eq.s32.totalorder %s40, 1
      %p121 = por %p119, %p120
      %p122 = scmp.ne.s32.totalorder %s113, %s114
      %p123 = scmp.eq.s32.totalorder %s40, 0
      %p124 = por %p122, %p123
      %p125 = scmp.ne.s32.totalorder %s113, %s114
      %p126 = scmp.eq.s32.totalorder %s41, 1
      %p127 = por %p125, %p126
      %p129 = scmp.ne.s32.totalorder %s114, %s128
      %p130 = scmp.eq.s32.totalorder %s41, 0
      %p131 = por %p129, %p130
      %s133 = sadd.s32 %s132, 1
      %p136 = scmp.eq.s32.totalorder %s35, 1
      %p137 = scmp.ne.s32.totalorder %s132, %s134
      %p138 = scmp.eq.s32.totalorder %s35, 0
      %p139 = por %p137, %p138
      %p140 = scmp.ne.s32.totalorder %s132, %s134
      %p141 = scmp.eq.s32.totalorder %s40, 1
      %p142 = por %p140, %p141
      %p143 = scmp.ne.s32.totalorder %s134, %s135
      %p144 = scmp.eq.s32.totalorder %s40, 0
      %p145 = por %p143, %p144
      %p146 = scmp.ne.s32.totalorder %s134, %s135
      %p147 = scmp.eq.s32.totalorder %s41, 1
      %p148 = por %p146, %p147
      %p150 = scmp.ne.s32.totalorder %s135, %s149
      %p151 = scmp.eq.s32.totalorder %s41, 0
      %p152 = por %p150, %p151
      %s154 = sadd.s32 %s153, 1
      %p157 = scmp.eq.s32.totalorder %s35, 1
      %p158 = scmp.ne.s32.totalorder %s153, %s155
      %p159 = scmp.eq.s32.totalorder %s35, 0
      %p160 = por %p158, %p159
      %p161 = scmp.ne.s32.totalorder %s153, %s155
      %p162 = scmp.eq.s32.totalorder %s40, 1
      %p163 = por %p161, %p162
      %p164 = scmp.ne.s32.totalorder %s155, %s156
      %p165 = scmp.eq.s32.totalorder %s40, 0
      %p166 = por %p164, %p165
      %p167 = scmp.ne.s32.totalorder %s155, %s156
      %p168 = scmp.eq.s32.totalorder %s41, 1
      %p169 = por %p167, %p168
      %p171 = scmp.ne.s32.totalorder %s156, %s170
      %p172 = scmp.eq.s32.totalorder %s41, 0
      %p173 = por %p171, %p172
      %s175 = sadd.s32 %s174, 1
      %p178 = scmp.eq.s32.totalorder %s35, 1
      %p179 = scmp.ne.s32.totalorder %s174, %s176
      %p180 = scmp.eq.s32.totalorder %s35, 0
      %p181 = por %p179, %p180
      %p182 = scmp.ne.s32.totalorder %s174, %s176
      %p183 = scmp.eq.s32.totalorder %s40, 1
      %p184 = por %p182, %p183
      %p185 = scmp.ne.s32.totalorder %s176, %s177
      %p186 = scmp.eq.s32.totalorder %s40, 0
      %p187 = por %p185, %p186
      %p188 = scmp.ne.s32.totalorder %s176, %s177
      %p189 = scmp.eq.s32.totalorder %s41, 1
      %p190 = por %p188, %p189
      %p192 = scmp.ne.s32.totalorder %s177, %s191
      %p193 = scmp.eq.s32.totalorder %s41, 0
      %p194 = por %p192, %p193
      %s196 = sadd.s32 %s195, 1
      %p199 = scmp.eq.s32.totalorder %s35, 1
      %p200 = scmp.ne.s32.totalorder %s195, %s197
      %p201 = scmp.eq.s32.totalorder %s35, 0
      %p202 = por %p200, %p201
      %p203 = scmp.ne.s32.totalorder %s195, %s197
      %p204 = scmp.eq.s32.totalorder %s40, 1
      %p205 = por %p203, %p204
      %p206 = scmp.ne.s32.totalorder %s197, %s198
      %p207 = scmp.eq.s32.totalorder %s40, 0
      %p208 = por %p206, %p207
      %p209 = scmp.ne.s32.totalorder %s197, %s198
      %p210 = scmp.eq.s32.totalorder %s41, 1
      %p211 = por %p209, %p210
      %p213 = scmp.ne.s32.totalorder %s198, %s212
      %p214 = scmp.eq.s32.totalorder %s41, 0
      %p215 = por %p213, %p214
      %s217 = sadd.s32 %s216, 1
      %p220 = scmp.eq.s32.totalorder %s35, 1
      %p221 = scmp.ne.s32.totalorder %s216, %s218
      %p222 = scmp.eq.s32.totalorder %s35, 0
      %p223 = por %p221, %p222
      %p224 = scmp.ne.s32.totalorder %s216, %s218
      %p225 = scmp.eq.s32.totalorder %s40, 1
      %p226 = por %p224, %p225
      %p227 = scmp.ne.s32.totalorder %s218, %s219
      %p228 = scmp.eq.s32.totalorder %s40, 0
      %p229 = por %p227, %p228
      %p230 = scmp.ne.s32.totalorder %s218, %s219
      %p231 = scmp.eq.s32.totalorder %s41, 1
      %p232 = por %p230, %p231
      %p234 = scmp.ne.s32.totalorder %s219, %s233
      %p235 = scmp.eq.s32.totalorder %s41, 0
      %p236 = por %p234, %p235
      %s238 = sadd.s32 %s237, 1
      %p241 = scmp.eq.s32.totalorder %s35, 1
      %p242 = scmp.ne.s32.totalorder %s237, %s239
      %p243 = scmp.eq.s32.totalorder %s35, 0
      %p244 = por %p242, %p243
      %p245 = scmp.ne.s32.totalorder %s237, %s239
      %p246 = scmp.eq.s32.totalorder %s40, 1
      %p247 = por %p245, %p246
      %p248 = scmp.ne.s32.totalorder %s239, %s240
      %p249 = scmp.eq.s32.totalorder %s40, 0
      %p250 = por %p248, %p249
      %p251 = scmp.ne.s32.totalorder %s239, %s240
      %p252 = scmp.eq.s32.totalorder %s41, 1
      %p253 = por %p251, %p252
      %p255 = scmp.ne.s32.totalorder %s240, %s254
      %p256 = scmp.eq.s32.totalorder %s41, 0
      %p257 = por %p255, %p256
      %s259 = sadd.s32 %s258, 1
      %p262 = scmp.eq.s32.totalorder %s35, 1
      %p263 = scmp.ne.s32.totalorder %s258, %s260
      %p264 = scmp.eq.s32.totalorder %s35, 0
      %p265 = por %p263, %p264
      %p266 = scmp.ne.s32.totalorder %s258, %s260
      %p267 = scmp.eq.s32.totalorder %s40, 1
      %p268 = por %p266, %p267
      %p269 = scmp.ne.s32.totalorder %s260, %s261
      %p270 = scmp.eq.s32.totalorder %s40, 0
      %p271 = por %p269, %p270
      %p272 = scmp.ne.s32.totalorder %s260, %s261
      %p273 = scmp.eq.s32.totalorder %s41, 1
      %p274 = por %p272, %p273
      %p276 = scmp.ne.s32.totalorder %s261, %s275
      %p277 = scmp.eq.s32.totalorder %s41, 0
      %p278 = por %p276, %p277
      %s280 = sadd.s32 %s279, 1
      %p283 = scmp.eq.s32.totalorder %s35, 1
      %p284 = scmp.ne.s32.totalorder %s279, %s281
      %p285 = scmp.eq.s32.totalorder %s35, 0
      %p286 = por %p284, %p285
      %p287 = scmp.ne.s32.totalorder %s279, %s281
      %p288 = scmp.eq.s32.totalorder %s40, 1
      %p289 = por %p287, %p288
      %p290 = scmp.ne.s32.totalorder %s281, %s282
      %p291 = scmp.eq.s32.totalorder %s40, 0
      %p292 = por %p290, %p291
      %p293 = scmp.ne.s32.totalorder %s281, %s282
      %p294 = scmp.eq.s32.totalorder %s41, 1
      %p295 = por %p293, %p294
      %p297 = scmp.ne.s32.totalorder %s282, %s296
      %p298 = scmp.eq.s32.totalorder %s41, 0
      %p299 = por %p297, %p298
      %s301 = sadd.s32 %s300, 1
      %p304 = scmp.eq.s32.totalorder %s35, 1
      %p305 = scmp.ne.s32.totalorder %s300, %s302
      %p306 = scmp.eq.s32.totalorder %s35, 0
      %p307 = por %p305, %p306
      %p308 = scmp.ne.s32.totalorder %s300, %s302
      %p309 = scmp.eq.s32.totalorder %s40, 1
      %p310 = por %p308, %p309
      %p311 = scmp.ne.s32.totalorder %s302, %s303
      %p312 = scmp.eq.s32.totalorder %s40, 0
      %p313 = por %p311, %p312
      %p314 = scmp.ne.s32.totalorder %s302, %s303
      %p315 = scmp.eq.s32.totalorder %s41, 1
      %p316 = por %p314, %p315
      %p318 = scmp.ne.s32.totalorder %s303, %s317
      %p319 = scmp.eq.s32.totalorder %s41, 0
      %p320 = por %p318, %p319
      %s322 = sadd.s32 %s321, 1
      %p325 = scmp.eq.s32.totalorder %s35, 1
      %p326 = scmp.ne.s32.totalorder %s321, %s323
      %p327 = scmp.eq.s32.totalorder %s35, 0
      %p328 = por %p326, %p327
      %p329 = scmp.ne.s32.totalorder %s321, %s323
      %p330 = scmp.eq.s32.totalorder %s40, 1
      %p331 = por %p329, %p330
      %p332 = scmp.ne.s32.totalorder %s323, %s324
      %p333 = scmp.eq.s32.totalorder %s40, 0
      %p334 = por %p332, %p333
      %p335 = scmp.ne.s32.totalorder %s323, %s324
      %p336 = scmp.eq.s32.totalorder %s41, 1
      %p337 = por %p335, %p336
      %p339 = scmp.ne.s32.totalorder %s324, %s338
      %p340 = scmp.eq.s32.totalorder %s41, 0
      %p341 = por %p339, %p340
      %s343 = sadd.s32 %s342, 1
      %p346 = scmp.eq.s32.totalorder %s35, 1
      %p347 = scmp.ne.s32.totalorder %s342, %s344
      %p348 = scmp.eq.s32.totalorder %s35, 0
      %p349 = por %p347, %p348
      %p350 = scmp.ne.s32.totalorder %s342, %s344
      %p351 = scmp.eq.s32.totalorder %s40, 1
      %p352 = por %p350, %p351
      %p353 = scmp.ne.s32.totalorder %s344, %s345
      %p354 = scmp.eq.s32.totalorder %s40, 0
      %p355 = por %p353, %p354
      %p356 = scmp.ne.s32.totalorder %s344, %s345
      %p357 = scmp.eq.s32.totalorder %s41, 1
      %p358 = por %p356, %p357
      %p360 = scmp.ne.s32.totalorder %s345, %s359
      %p361 = scmp.eq.s32.totalorder %s41, 0
      %p362 = por %p360, %p361
      %s364 = sadd.s32 %s363, 1
      %p367 = scmp.eq.s32.totalorder %s35, 1
      %p368 = scmp.ne.s32.totalorder %s363, %s365
      %p369 = scmp.eq.s32.totalorder %s35, 0
      %p370 = por %p368, %p369
      %p371 = scmp.ne.s32.totalorder %s363, %s365
      %p372 = scmp.eq.s32.totalorder %s40, 1
      %p373 = por %p371, %p372
      %p374 = scmp.ne.s32.totalorder %s365, %s366
      %p375 = scmp.eq.s32.totalorder %s40, 0
      %p376 = por %p374, %p375
      %p377 = scmp.ne.s32.totalorder %s365, %s366
      %p378 = scmp.eq.s32.totalorder %s41, 1
      %p379 = por %p377, %p378
      %p381 = scmp.ne.s32.totalorder %s366, %s380
      %p382 = scmp.eq.s32.totalorder %s41, 0
      %p383 = por %p381, %p382
      %s385 = sadd.s32 %s384, 1
      %p388 = scmp.eq.s32.totalorder %s35, 1
      %p389 = scmp.ne.s32.totalorder %s384, %s386
      %p390 = scmp.eq.s32.totalorder %s35, 0
      %p391 = por %p389, %p390
      %p392 = scmp.ne.s32.totalorder %s384, %s386
      %p393 = scmp.eq.s32.totalorder %s40, 1
      %p394 = por %p392, %p393
      %p395 = scmp.ne.s32.totalorder %s386, %s387
      %p396 = scmp.eq.s32.totalorder %s40, 0
      %p397 = por %p395, %p396
      %p398 = scmp.ne.s32.totalorder %s386, %s387
      %p399 = scmp.eq.s32.totalorder %s41, 1
      %p400 = por %p398, %p399
      %p402 = scmp.ne.s32.totalorder %s387, %s401
      %p403 = scmp.eq.s32.totalorder %s41, 0
      %p404 = por %p402, %p403
      %s405 = ssub.s32 %s35, %s42
      %p406 = scmp.eq.s32.totalorder %s405, 0
      %s408 = sadd.s32 %s407, 1
      %s409 = scalar_select %p406, %s407, %s408
      %p412 = pneg %p406
      %p413 = scmp.eq.s32.totalorder %s35, 1
      %p414 = por %p412, %p413
      %p415 = scmp.ne.s32.totalorder %s407, %s410
      %p416 = scmp.eq.s32.totalorder %s35, 0
      %p417 = por %p415, %p416
      %p418 = scmp.ne.s32.totalorder %s407, %s410
      %p419 = scmp.eq.s32.totalorder %s40, 1
      %p420 = por %p418, %p419
      %p421 = scmp.ne.s32.totalorder %s410, %s411
      %p422 = scmp.eq.s32.totalorder %s40, 0
      %p423 = por %p421, %p422
      %p424 = scmp.ne.s32.totalorder %s410, %s411
      %p425 = scmp.eq.s32.totalorder %s41, 1
      %p426 = por %p424, %p425
      %p428 = scmp.ne.s32.totalorder %s411, %s427
      %p429 = scmp.eq.s32.totalorder %s41, 0
      %p430 = por %p428, %p429
      %p431 = scmp.le.s32.totalorder 1, %s35
      %p432 = scmp.lt.s32.totalorder %s35, 3
      %p433 = pnand %p431, %p432
      %p434 = pneg %p433
      // Predicated region
      $region9: #{_lambda_.1} parent=5 // pred_check
        _
      $region10: #{_lambda_.1} parent=5 // pred_check_branch
        %436 = sbr.rel (%p433) target = $region12
      $region11: #{_lambda_.1} parent=5 // pred_region
        %s437 = ssub.s32 %s35, 1
        // Predicated region
        $region13: #{_lambda_.1} parent=11 // pred_check
          %p438 = pneg %p82
        $region14: #{_lambda_.1} parent=11 // pred_check_branch
          %440 = sbr.rel (%p438) target = $region16
        $region15: #{_lambda_.1} parent=11 // pred_region
          %s442 = ssub.s32 5120, 5120
          %443 = vsyncadd [#allocation5], %s442
          %s444 = sshll.u32 [#allocation4], 4
          %s445 = int_to_ptr.vmem [resolvable:$true] %s444
          %450 = dma.hbm_to_vmem [thread:$0]  %s1, 5120, %s445, [#allocation5], 256, 256, 16
        $region16: #{_lambda_.1} parent=11 // pred_fallthru
          _
        // Predicated region
        $region17: #{_lambda_.1} parent=11 // pred_check
          %p451 = pneg %p103
        $region18: #{_lambda_.1} parent=11 // pred_check_branch
          %453 = sbr.rel (%p451) target = $region20
        $region19: #{_lambda_.1} parent=11 // pred_region
          %s455 = ssub.s32 64, 64
          %456 = vsyncadd [#allocation8], %s455
          %s458 = sshll.u32 [#allocation7], 4
          %s459 = int_to_ptr.vmem [resolvable:$true] %s458
          %461 = dma.hbm_to_vmem [thread:$0]  %s2, 64, %s459, [#allocation8]
        $region20: #{_lambda_.1} parent=11 // pred_fallthru
          _
        // Predicated region
        $region21: #{_lambda_.1} parent=11 // pred_check
          %p462 = pneg %p124
        $region22: #{_lambda_.1} parent=11 // pred_check_branch
          %464 = sbr.rel (%p462) target = $region24
        $region23: #{_lambda_.1} parent=11 // pred_region
          %s466 = ssub.s32 64, 64
          %467 = vsyncadd [#allocation8], %s466
          %s469 = sshll.u32 [#allocation9], 4
          %s470 = int_to_ptr.vmem [resolvable:$true] %s469
          %472 = dma.hbm_to_vmem [thread:$0]  %s3, 64, %s470, [#allocation8]
        $region24: #{_lambda_.1} parent=11 // pred_fallthru
          _
        // Predicated region
        $region25: #{_lambda_.1} parent=11 // pred_check
          %p473 = pneg %p145
        $region26: #{_lambda_.1} parent=11 // pred_check_branch
          %475 = sbr.rel (%p473) target = $region28
        $region27: #{_lambda_.1} parent=11 // pred_region
          %s477 = ssub.s32 256, 256
          %478 = vsyncadd [#allocation11], %s477
          %s479 = sshll.u32 [#allocation10], 4
          %s480 = int_to_ptr.vmem [resolvable:$true] %s479
          %485 = dma.hbm_to_vmem [thread:$0]  %s4, 256, %s480, [#allocation11], 128, 128, 8
        $region28: #{_lambda_.1} parent=11 // pred_fallthru
          _
        // Predicated region
        $region29: #{_lambda_.1} parent=11 // pred_check
          %p486 = pneg %p166
        $region30: #{_lambda_.1} parent=11 // pred_check_branch
          %488 = sbr.rel (%p486) target = $region32
        $region31: #{_lambda_.1} parent=11 // pred_region
          %s490 = ssub.s32 256, 256
          %491 = vsyncadd [#allocation11], %s490
          %s492 = sshll.u32 [#allocation12], 4
          %s493 = int_to_ptr.vmem [resolvable:$true] %s492
          %498 = dma.hbm_to_vmem [thread:$0]  %s5, 256, %s493, [#allocation11], 128, 128, 8
        $region32: #{_lambda_.1} parent=11 // pred_fallthru
          _
        // Predicated region
        $region33: #{_lambda_.1} parent=11 // pred_check
          %p499 = pneg %p187
        $region34: #{_lambda_.1} parent=11 // pred_check_branch
          %501 = sbr.rel (%p499) target = $region36
        $region35: #{_lambda_.1} parent=11 // pred_region
          %s503 = ssub.s32 14336, 14336
          %504 = vsyncadd [#allocation14], %s503
          %s505 = sshll.u32 [#allocation13], 4
          %s506 = int_to_ptr.vmem [resolvable:$true] %s505
          %511 = dma.hbm_to_vmem [thread:$0]  %s6, 14336, %s506, [#allocation14], 256, 256, 16
        $region36: #{_lambda_.1} parent=11 // pred_fallthru
          _
        // Predicated region
        $region37: #{_lambda_.1} parent=11 // pred_check
          %p512 = pneg %p208
        $region38: #{_lambda_.1} parent=11 // pred_check_branch
          %514 = sbr.rel (%p512) target = $region40
        $region39: #{_lambda_.1} parent=11 // pred_region
          %s516 = ssub.s32 14336, 14336
          %517 = vsyncadd [#allocation14], %s516
          %s518 = sshll.u32 [#allocation15], 4
          %s519 = int_to_ptr.vmem [resolvable:$true] %s518
          %524 = dma.hbm_to_vmem [thread:$0]  %s7, 14336, %s519, [#allocation14], 256, 256, 16
        $region40: #{_lambda_.1} parent=11 // pred_fallthru
          _
        // Predicated region
        $region41: #{_lambda_.1} parent=11 // pred_check
          %p525 = pneg %p229
        $region42: #{_lambda_.1} parent=11 // pred_check_branch
          %527 = sbr.rel (%p525) target = $region44
        $region43: #{_lambda_.1} parent=11 // pred_region
          %s529 = ssub.s32 46080, 46080
          %530 = vsyncadd [#allocation17], %s529
          %s531 = sshll.u32 [#allocation16], 4
          %s532 = int_to_ptr.vmem [resolvable:$true] %s531
          %537 = dma.hbm_to_vmem [thread:$0]  %s8, 46080, %s532, [#allocation17], 256, 256, 16
        $region44: #{_lambda_.1} parent=11 // pred_fallthru
          _
        // Predicated region
        $region45: #{_lambda_.1} parent=11 // pred_check
          %p538 = pneg %p250
        $region46: #{_lambda_.1} parent=11 // pred_check_branch
          %540 = sbr.rel (%p538) target = $region48
        $region47: #{_lambda_.1} parent=11 // pred_region
          %s542 = ssub.s32 64, 64
          %543 = vsyncadd [#allocation17], %s542
          %s545 = sshll.u32 [#allocation18], 4
          %s546 = int_to_ptr.vmem [resolvable:$true] %s545
          %548 = dma.hbm_to_vmem [thread:$0]  %s9, 64, %s546, [#allocation17]
        $region48: #{_lambda_.1} parent=11 // pred_fallthru
          _
        // Predicated region
        $region49: #{_lambda_.1} parent=11 // pred_check
          %p549 = pneg %p271
        $region50: #{_lambda_.1} parent=11 // pred_check_branch
          %551 = sbr.rel (%p549) target = $region52
        $region51: #{_lambda_.1} parent=11 // pred_region
          %s553 = ssub.s32 64, 64
          %554 = vsyncadd [#allocation20], %s553
          %s556 = sshll.u32 [#allocation19], 4
          %s557 = int_to_ptr.vmem [resolvable:$true] %s556
          %559 = dma.hbm_to_vmem [thread:$0]  %s10, 64, %s557, [#allocation20]
        $region52: #{_lambda_.1} parent=11 // pred_fallthru
          _
        // Predicated region
        $region53: #{_lambda_.1} parent=11 // pred_check
          %p560 = pneg %p292
        $region54: #{_lambda_.1} parent=11 // pred_check_branch
          %562 = sbr.rel (%p560) target = $region56
        $region55: #{_lambda_.1} parent=11 // pred_region
          %s564 = ssub.s32 128, 128
          %565 = vsyncadd [#allocation20], %s564
          %s567 = sshll.u32 [#allocation21], 4
          %s568 = int_to_ptr.vmem [resolvable:$true] %s567
          %570 = dma.hbm_to_vmem [thread:$0]  %s11, 128, %s568, [#allocation20]
        $region56: #{_lambda_.1} parent=11 // pred_fallthru
          _
        // Predicated region
        $region57: #{_lambda_.1} parent=11 // pred_check
          %p571 = pneg %p313
        $region58: #{_lambda_.1} parent=11 // pred_check_branch
          %573 = sbr.rel (%p571) target = $region60
        $region59: #{_lambda_.1} parent=11 // pred_region
          %s575 = ssub.s32 128, 128
          %576 = vsyncadd [#allocation23], %s575
          %s578 = sshll.u32 [#allocation22], 4
          %s579 = int_to_ptr.vmem [resolvable:$true] %s578
          %581 = dma.hbm_to_vmem [thread:$0]  %s12, 128, %s579, [#allocation23]
        $region60: #{_lambda_.1} parent=11 // pred_fallthru
          _
        // Predicated region
        $region61: #{_lambda_.1} parent=11 // pred_check
          %p582 = pneg %p334
        $region62: #{_lambda_.1} parent=11 // pred_check_branch
          %584 = sbr.rel (%p582) target = $region64
        $region63: #{_lambda_.1} parent=11 // pred_region
          %s586 = ssub.s32 14336, 14336
          %587 = vsyncadd [#allocation23], %s586
          %s588 = sshll.u32 [#allocation24], 4
          %s589 = int_to_ptr.vmem [resolvable:$true] %s588
          %594 = dma.hbm_to_vmem [thread:$0]  %s13, 14336, %s589, [#allocation23], 256, 256, 16
        $region64: #{_lambda_.1} parent=11 // pred_fallthru
          _
        // Predicated region
        $region65: #{_lambda_.1} parent=11 // pred_check
          %p595 = pneg %p355
        $region66: #{_lambda_.1} parent=11 // pred_check_branch
          %597 = sbr.rel (%p595) target = $region68
        $region67: #{_lambda_.1} parent=11 // pred_region
          %s599 = ssub.s32 14336, 14336
          %600 = vsyncadd [#allocation26], %s599
          %s601 = sshll.u32 [#allocation25], 4
          %s602 = int_to_ptr.vmem [resolvable:$true] %s601
          %607 = dma.hbm_to_vmem [thread:$0]  %s14, 14336, %s602, [#allocation26], 256, 256, 16
        $region68: #{_lambda_.1} parent=11 // pred_fallthru
          _
        // Predicated region
        $region69: #{_lambda_.1} parent=11 // pred_check
          %p608 = pneg %p376
        $region70: #{_lambda_.1} parent=11 // pred_check_branch
          %610 = sbr.rel (%p608) target = $region72
        $region71: #{_lambda_.1} parent=11 // pred_region
          %s612 = ssub.s32 12544, 12544
          %613 = vsyncadd [#allocation26], %s612
          %s614 = sshll.u32 [#allocation27], 4
          %s615 = int_to_ptr.vmem [resolvable:$true] %s614
          %620 = dma.hbm_to_vmem [thread:$0]  %s15, 12544, %s615, [#allocation26], 448, 448, 28
        $region72: #{_lambda_.1} parent=11 // pred_fallthru
          _
        // Predicated region
        $region73: #{_lambda_.1} parent=11 // pred_check
          %p621 = pneg %p397
        $region74: #{_lambda_.1} parent=11 // pred_check_branch
          %623 = sbr.rel (%p621) target = $region76
        $region75: #{_lambda_.1} parent=11 // pred_region
          %s625 = ssub.s32 16, 16
          %626 = vsyncadd [#allocation29], %s625
          %s628 = sshll.u32 [#allocation28], 4
          %s629 = int_to_ptr.vmem [resolvable:$true] %s628
          %631 = dma.hbm_to_vmem [thread:$0]  %s16, 16, %s629, [#allocation29]
        $region76: #{_lambda_.1} parent=11 // pred_fallthru
          _
      $region12: #{_lambda_.1} parent=5 // pred_fallthru
        _
      %p632 = scmp.lt.s32.totalorder %s35, 2
      // Predicated region
      $region77: #{_lambda_.1} parent=5 // pred_check
        %p633 = pneg %p632
      $region78: #{_lambda_.1} parent=5 // pred_check_branch
        %635 = sbr.rel (%p633) target = $region80
      $region79: #{_lambda_.1} parent=5 // pred_region
        // Predicated region
        $region81: #{_lambda_.1} parent=79 // pred_check
          %p636 = pneg %p55
        $region82: #{_lambda_.1} parent=79 // pred_check_branch
          %638 = sbr.rel (%p636) target = $region84
        $region83: #{_lambda_.1} parent=79 // pred_region
          %p639 = scmp.lt.s32.totalorder %s35, 1
          %s640 = scalar_select %p639, %s35, 1
          %s641 = smul.addr %s640, 4
          %s642 = smul.addr %s641, 8
          %s643 = scalar_lea.vmem %s0, %s642
        $region84: #{_lambda_.1} parent=79 // pred_fallthru
          _
      $region80: #{_lambda_.1} parent=5 // pred_fallthru
        _
      %p644 = scmp.le.s32.totalorder 1, %s35
      %p645 = scmp.lt.s32.totalorder %s35, 3
      %p646 = pnand %p644, %p645
      %p647 = pneg %p646
      // Predicated region
      $region85: #{_lambda_.1} parent=5 // pred_check
        _
      $region86: #{_lambda_.1} parent=5 // pred_check_branch
        %649 = sbr.rel (%p646) target = $region88
      $region87: #{_lambda_.1} parent=5 // pred_region
        %s650 = ssub.s32 %s35, 1
        // Predicated region
        $region89: #{_lambda_.1} parent=87 // pred_check
          %p651 = pneg %p82
        $region90: #{_lambda_.1} parent=87 // pred_check_branch
          %653 = sbr.rel (%p651) target = $region92
        $region91: #{_lambda_.1} parent=87 // pred_region
          %654 = dma.done [#allocation5], 5120
        $region92: #{_lambda_.1} parent=87 // pred_fallthru
          _
        // Predicated region
        $region93: #{_lambda_.1} parent=87 // pred_check
          %p655 = pneg %p103
        $region94: #{_lambda_.1} parent=87 // pred_check_branch
          %657 = sbr.rel (%p655) target = $region96
        $region95: #{_lambda_.1} parent=87 // pred_region
          %658 = dma.done [#allocation8], 64
        $region96: #{_lambda_.1} parent=87 // pred_fallthru
          _
        // Predicated region
        $region97: #{_lambda_.1} parent=87 // pred_check
          %p659 = pneg %p124
        $region98: #{_lambda_.1} parent=87 // pred_check_branch
          %661 = sbr.rel (%p659) target = $region100
        $region99: #{_lambda_.1} parent=87 // pred_region
          %662 = dma.done [#allocation8], 64
        $region100: #{_lambda_.1} parent=87 // pred_fallthru
          _
        // Predicated region
        $region101: #{_lambda_.1} parent=87 // pred_check
          %p663 = pneg %p145
        $region102: #{_lambda_.1} parent=87 // pred_check_branch
          %665 = sbr.rel (%p663) target = $region104
        $region103: #{_lambda_.1} parent=87 // pred_region
          %666 = dma.done [#allocation11], 256
        $region104: #{_lambda_.1} parent=87 // pred_fallthru
          _
        // Predicated region
        $region105: #{_lambda_.1} parent=87 // pred_check
          %p667 = pneg %p166
        $region106: #{_lambda_.1} parent=87 // pred_check_branch
          %669 = sbr.rel (%p667) target = $region108
        $region107: #{_lambda_.1} parent=87 // pred_region
          %670 = dma.done [#allocation11], 256
        $region108: #{_lambda_.1} parent=87 // pred_fallthru
          _
        // Predicated region
        $region109: #{_lambda_.1} parent=87 // pred_check
          %p671 = pneg %p187
        $region110: #{_lambda_.1} parent=87 // pred_check_branch
          %673 = sbr.rel (%p671) target = $region112
        $region111: #{_lambda_.1} parent=87 // pred_region
          %674 = dma.done [#allocation14], 14336
        $region112: #{_lambda_.1} parent=87 // pred_fallthru
          _
        // Predicated region
        $region113: #{_lambda_.1} parent=87 // pred_check
          %p675 = pneg %p208
        $region114: #{_lambda_.1} parent=87 // pred_check_branch
          %677 = sbr.rel (%p675) target = $region116
        $region115: #{_lambda_.1} parent=87 // pred_region
          %678 = dma.done [#allocation14], 14336
        $region116: #{_lambda_.1} parent=87 // pred_fallthru
          _
        // Predicated region
        $region117: #{_lambda_.1} parent=87 // pred_check
          %p679 = pneg %p229
        $region118: #{_lambda_.1} parent=87 // pred_check_branch
          %681 = sbr.rel (%p679) target = $region120
        $region119: #{_lambda_.1} parent=87 // pred_region
          %682 = dma.done [#allocation17], 46080
        $region120: #{_lambda_.1} parent=87 // pred_fallthru
          _
        // Predicated region
        $region121: #{_lambda_.1} parent=87 // pred_check
          %p683 = pneg %p250
        $region122: #{_lambda_.1} parent=87 // pred_check_branch
          %685 = sbr.rel (%p683) target = $region124
        $region123: #{_lambda_.1} parent=87 // pred_region
          %686 = dma.done [#allocation17], 64
        $region124: #{_lambda_.1} parent=87 // pred_fallthru
          _
        // Predicated region
        $region125: #{_lambda_.1} parent=87 // pred_check
          %p687 = pneg %p271
        $region126: #{_lambda_.1} parent=87 // pred_check_branch
          %689 = sbr.rel (%p687) target = $region128
        $region127: #{_lambda_.1} parent=87 // pred_region
          %690 = dma.done [#allocation20], 64
        $region128: #{_lambda_.1} parent=87 // pred_fallthru
          _
        // Predicated region
        $region129: #{_lambda_.1} parent=87 // pred_check
          %p691 = pneg %p292
        $region130: #{_lambda_.1} parent=87 // pred_check_branch
          %693 = sbr.rel (%p691) target = $region132
        $region131: #{_lambda_.1} parent=87 // pred_region
          %694 = dma.done [#allocation20], 128
        $region132: #{_lambda_.1} parent=87 // pred_fallthru
          _
        // Predicated region
        $region133: #{_lambda_.1} parent=87 // pred_check
          %p695 = pneg %p313
        $region134: #{_lambda_.1} parent=87 // pred_check_branch
          %697 = sbr.rel (%p695) target = $region136
        $region135: #{_lambda_.1} parent=87 // pred_region
          %698 = dma.done [#allocation23], 128
        $region136: #{_lambda_.1} parent=87 // pred_fallthru
          _
        // Predicated region
        $region137: #{_lambda_.1} parent=87 // pred_check
          %p699 = pneg %p334
        $region138: #{_lambda_.1} parent=87 // pred_check_branch
          %701 = sbr.rel (%p699) target = $region140
        $region139: #{_lambda_.1} parent=87 // pred_region
          %702 = dma.done [#allocation23], 14336
        $region140: #{_lambda_.1} parent=87 // pred_fallthru
          _
        // Predicated region
        $region141: #{_lambda_.1} parent=87 // pred_check
          %p703 = pneg %p355
        $region142: #{_lambda_.1} parent=87 // pred_check_branch
          %705 = sbr.rel (%p703) target = $region144
        $region143: #{_lambda_.1} parent=87 // pred_region
          %706 = dma.done [#allocation26], 14336
        $region144: #{_lambda_.1} parent=87 // pred_fallthru
          _
        // Predicated region
        $region145: #{_lambda_.1} parent=87 // pred_check
          %p707 = pneg %p376
        $region146: #{_lambda_.1} parent=87 // pred_check_branch
          %709 = sbr.rel (%p707) target = $region148
        $region147: #{_lambda_.1} parent=87 // pred_region
          %710 = dma.done [#allocation26], 12544
        $region148: #{_lambda_.1} parent=87 // pred_fallthru
          _
        // Predicated region
        $region149: #{_lambda_.1} parent=87 // pred_check
          %p711 = pneg %p397
        $region150: #{_lambda_.1} parent=87 // pred_check_branch
          %713 = sbr.rel (%p711) target = $region152
        $region151: #{_lambda_.1} parent=87 // pred_region
          %714 = dma.done [#allocation29], 16
        $region152: #{_lambda_.1} parent=87 // pred_fallthru
          _
        %p715 = scmp.lt.s32.totalorder %s40, 1
        %s716 = scalar_select %p715, %s40, 1
        %s717 = smul.addr %s716, 4
        %s718 = smul.addr %s717, 8
        %s719 = scalar_lea.vmem %s0, %s718
        %p720 = pneg %p61
        %p721 = pneg %p58
        %p722 = pneg %p82
        %p723 = pneg %p79
        %p724 = pneg %p103
        %p725 = pneg %p100
        %p726 = pneg %p124
        %p727 = pneg %p121
        %p728 = pneg %p145
        %p729 = pneg %p142
        %p730 = pneg %p166
        %p731 = pneg %p163
        %p732 = pneg %p187
        %p733 = pneg %p184
        %p734 = pneg %p208
        %p735 = pneg %p205
        %p736 = pneg %p229
        %p737 = pneg %p226
        %p738 = pneg %p250
        %p739 = pneg %p247
        %p740 = pneg %p271
        %p741 = pneg %p268
        %p742 = pneg %p292
        %p743 = pneg %p289
        %p744 = pneg %p313
        %p745 = pneg %p310
        %p746 = pneg %p334
        %p747 = pneg %p331
        %p748 = pneg %p355
        %p749 = pneg %p352
        %p750 = pneg %p376
        %p751 = pneg %p373
        %p752 = pneg %p397
        %p753 = pneg %p394
        %p754 = pneg %p423
        %p755 = pneg %p420
        %s756 = sand.u32 %s410, 1
        %s757 = scalar_lea.sflag [#allocation6], %s756
        %s758 = sand.u32 %s410, 1
        %s759 = scalar_lea.vmem [#allocation30], %s758
        %p760 = scmp.lt.s32.totalorder %s40, 1
        %s761 = scalar_select %p760, %s40, 1
        %s762 = smul.addr %s761, 4
        %s763 = smul.addr %s762, 8
        %s764 = scalar_lea.vmem %s0, %s763
        %vm766 = vcmask 261120
        %767 = vst.msk [vmem:[#allocation2] sm:$0xff] %vm766, 0
        %768 = vst.msk [vmem:[#allocation2 + $0x8] sm:$0xff] %vm766, 0
        %v769 = vld [vmem:[%s764] sm:$0xff]
        %v770 = vld [vmem:[%s764 + $0x8] sm:$0xff]
        %v771 = vld [vmem:[%s764 + $0x10] sm:$0xff]
        %v772 = vld [vmem:[%s764 + $0x18] sm:$0xf]
        %v773 = vpack.c.bf16 %v770, %v769
        %v774 = vpack.c.bf16 %v772, %v771
        %vm777 = vcmask 1040384
        %v778 = vrot.slane %v773, 7
        %v779 = vrot.slane %v774, 7
        %v780 = vsel %vm777, %v778, %v779
        %781 = vrot.lane.b32.xlu0 %v778, 2
        %v782 = vpop.permute.xlu0 %781
        %783 = vrot.lane.b32.xlu0 %v780, 2
        %v784 = vpop.permute.xlu0 %783
        %vm787 = vcmask 244753
        %788 = vst.msk [vmem:[#allocation2] sm:$0xfe] %vm787, %v782
        %vm789 = vcmask 243728
        %790 = vst.msk [vmem:[#allocation2 + $0x8] sm:$0x7f] %vm789, %v784
        %v791 = vld [vmem:[#allocation2] sm:$0xff]
        %v792 = vld [vmem:[#allocation2 + $0x8] sm:$0x3f]
        %v793 = vld [vmem:[#allocation4] sm:$0xff]
        %v794 = vld [vmem:[#allocation4 + $0x8] sm:$0xff]
        %v795 = vld [vmem:[#allocation4 + $0x10] sm:$0xff]
        %v796 = vld [vmem:[#allocation4 + $0x18] sm:$0xff]
        %v797 = vld [vmem:[#allocation4 + $0x20] sm:$0xff]
        %v798 = vld [vmem:[#allocation4 + $0x28] sm:$0xff]
        %v799 = vld [vmem:[#allocation4 + $0x30] sm:$0xff]
        %v800 = vld [vmem:[#allocation4 + $0x38] sm:$0xff]
        %v801 = vld [vmem:[#allocation2 + $0x8] sm:$0x7f]
        %s802 = scalar_lea.vmem [#allocation4], 64
        %v803 = vld [vmem:[%s802] sm:$0xff]
        %v804 = vld [vmem:[%s802 + $0x8] sm:$0xff]
        %v805 = vld [vmem:[%s802 + $0x10] sm:$0xff]
        %v806 = vld [vmem:[%s802 + $0x18] sm:$0xff]
        %v807 = vld [vmem:[%s802 + $0x20] sm:$0xff]
        %v808 = vld [vmem:[%s802 + $0x28] sm:$0xff]
        %v809 = vld [vmem:[%s802 + $0x30] sm:$0xff]
        %v810 = vld [vmem:[%s802 + $0x38] sm:$0xff]
        %vm811 = vsmask.f32 7424
        %v813 = vshrl.u32 %v791, 16
        %v815 = vshll.u32 %v791, 16
        %v817 = vrot.slane %v815, 1
        %v818 = vor.u32 %v813, %v817
        %v820 = vshll.u32 %v801, 16
        %v822 = vrot.slane %v820, 1
        %v823 = vsel %vm811, %v818, %v822
        %v824 = vshrl.u32 %v801, 16
        %v826 = vor.u32 %v824, %v822
        %v835 = vunpack.c.l.b16 %v803
        %v836 = vunpack.c.h.b16 %v803
        %v837 = vunpack.c.l.b16 %v804
        %v838 = vunpack.c.h.b16 %v804
        %v839 = vunpack.c.l.b16 %v805
        %v840 = vunpack.c.h.b16 %v805
        %v841 = vunpack.c.l.b16 %v806
        %v842 = vunpack.c.h.b16 %v806
        %v843 = vunpack.c.l.b16 %v807
        %v844 = vunpack.c.h.b16 %v807
        %v845 = vunpack.c.l.b16 %v808
        %v846 = vunpack.c.h.b16 %v808
        %v847 = vunpack.c.l.b16 %v809
        %v848 = vunpack.c.h.b16 %v809
        %v849 = vunpack.c.l.b16 %v810
        %v850 = vunpack.c.h.b16 %v810
        %v851 = vpack.c.b16 %v839, %v835
        %v852 = vpack.c.b16 %v840, %v836
        %v853 = vpack.c.b16 %v841, %v837
        %v854 = vpack.c.b16 %v842, %v838
        %v855 = vpack.c.b16 %v847, %v843
        %v856 = vpack.c.b16 %v848, %v844
        %v857 = vpack.c.b16 %v849, %v845
        %v858 = vpack.c.b16 %v850, %v846
        %v868 = vsel %vm766, %v823, 0
        %v871 = vsel %vm766, %v826, 0
        %873 = vmatprep.subr.bf16.mxu0 %v852
        %874 = vmatpush1.bf16.msra.mxu0 %v851
        %875 = vmatprep.subr.bf16.mxu0 %v856
        %876 = vmatpush1.bf16.msra.mxu0 %v855
        %877 = vmatprep.subr.bf16.mxu0 0
        %878 = vmatpush1.bf16.msra.mxu0 0
        %879 = vmatprep.subr.bf16.mxu0 0
        %880 = vmatpush1.bf16.msra.mxu0 0
        %881 = vmatprep.subr.bf16.mxu0 0
        %882 = vmatpush1.bf16.msra.mxu0 0
        %883 = vmatprep.subr.bf16.mxu0 0
        %884 = vmatpush1.bf16.msra.mxu0 0
        %885 = vmatprep.subr.bf16.mxu0 0
        %886 = vmatpush1.bf16.msra.mxu0 0
        %887 = vmatprep.subr.bf16.mxu0 0
        %888 = vmatpush1.bf16.msra.mxu0 0
        %889 = vmatprep.subr.bf16.mxu0 0
        %890 = vmatpush1.bf16.msra.mxu0 0
        %891 = vmatprep.subr.bf16.mxu0 0
        %892 = vmatpush1.bf16.msra.mxu0 0
        %893 = vmatprep.subr.bf16.mxu0 0
        %894 = vmatpush1.bf16.msra.mxu0 0
        %895 = vmatprep.subr.bf16.mxu0 0
        %896 = vmatpush1.bf16.msra.mxu0 0
        %897 = vmatprep.subr.bf16.mxu0 0
        %898 = vmatpush1.bf16.msra.mxu0 0
        %899 = vmatprep.subr.bf16.mxu0 0
        %900 = vmatpush1.bf16.msra.mxu0 0
        %901 = vmatprep.subr.bf16.mxu0 0
        %902 = vmatpush1.bf16.msra.mxu0 0
        %903 = vmatprep.subr.bf16.mxu0 0
        %904 = vmatpush1.bf16.msra.mxu0 0
        %905 = vmatprep.mubr.bf16.mxu0 0
        %906 = vmatmul.mubr.bf16.gmra.mrb[0].mxu0 %v868
        %v907 = vpop.f32.mrb[0].mxu0
        %v908 = vadd.f32 0.0, %v907
        %v909 = vpop.f32.mrb[0].mxu0
        %v910 = vadd.f32 0.0, %v909
        %v911 = vpop.f32.mrb[0].mxu0
        %v912 = vadd.f32 0.0, %v911
        %v913 = vpop.f32.mrb[0].mxu0
        %v914 = vadd.f32 0.0, %v913
        %915 = vmatprep.mubr.bf16.mxu0 0
        %916 = vmatmul.mubr.bf16.gmra.mrb[0].mxu0 %v871
        %v917 = vpop.f32.mrb[0].mxu0
        %v918 = vadd.f32 0.0, %v917
        %v919 = vpop.f32.mrb[0].mxu0
        %v920 = vadd.f32 0.0, %v919
        %v921 = vpop.f32.mrb[0].mxu0
        %v922 = vadd.f32 0.0, %v921
        %v923 = vpop.f32.mrb[0].mxu0
        %v924 = vadd.f32 0.0, %v923
        %925 = vdwg.mxu0
        %926 = vmatprep.subr.bf16.mxu0 %v854
        %927 = vmatpush1.bf16.msra.mxu0 %v853
        %928 = vmatprep.subr.bf16.mxu0 %v858
        %929 = vmatpush1.bf16.msra.mxu0 %v857
        %930 = vmatprep.subr.bf16.mxu0 0
        %931 = vmatpush1.bf16.msra.mxu0 0
        %932 = vmatprep.subr.bf16.mxu0 0
        %933 = vmatpush1.bf16.msra.mxu0 0
        %934 = vmatprep.subr.bf16.mxu0 0
        %935 = vmatpush1.bf16.msra.mxu0 0
        %936 = vmatprep.subr.bf16.mxu0 0
        %937 = vmatpush1.bf16.msra.mxu0 0
        %938 = vmatprep.subr.bf16.mxu0 0
        %939 = vmatpush1.bf16.msra.mxu0 0
        %940 = vmatprep.subr.bf16.mxu0 0
        %941 = vmatpush1.bf16.msra.mxu0 0
        %942 = vmatprep.subr.bf16.mxu0 0
        %943 = vmatpush1.bf16.msra.mxu0 0
        %944 = vmatprep.subr.bf16.mxu0 0
        %945 = vmatpush1.bf16.msra.mxu0 0
        %946 = vmatprep.subr.bf16.mxu0 0
        %947 = vmatpush1.bf16.msra.mxu0 0
        %948 = vmatprep.subr.bf16.mxu0 0
        %949 = vmatpush1.bf16.msra.mxu0 0
        %950 = vmatprep.subr.bf16.mxu0 0
        %951 = vmatpush1.bf16.msra.mxu0 0
        %952 = vmatprep.subr.bf16.mxu0 0
        %953 = vmatpush1.bf16.msra.mxu0 0
        %954 = vmatprep.subr.bf16.mxu0 0
        %955 = vmatpush1.bf16.msra.mxu0 0
        %956 = vmatprep.subr.bf16.mxu0 0
        %957 = vmatpush1.bf16.msra.mxu0 0
        %958 = vmatprep.mubr.bf16.mxu0 0
        %959 = vmatmul.mubr.bf16.gmra.mrb[0].mxu0 %v868
        %v960 = vpop.f32.mrb[0].mxu0
        %v961 = vadd.f32 0.0, %v960
        %v962 = vpop.f32.mrb[0].mxu0
        %v963 = vadd.f32 0.0, %v962
        %v964 = vpop.f32.mrb[0].mxu0
        %v965 = vadd.f32 0.0, %v964
        %v966 = vpop.f32.mrb[0].mxu0
        %v967 = vadd.f32 0.0, %v966
        %968 = vmatprep.mubr.bf16.mxu0 0
        %969 = vmatmul.mubr.bf16.gmra.mrb[0].mxu0 %v871
        %v970 = vpop.f32.mrb[0].mxu0
        %v971 = vadd.f32 0.0, %v970
        %v972 = vpop.f32.mrb[0].mxu0
        %v973 = vadd.f32 0.0, %v972
        %v974 = vpop.f32.mrb[0].mxu0
        %v975 = vadd.f32 0.0, %v974
        %v976 = vpop.f32.mrb[0].mxu0
        %v977 = vadd.f32 0.0, %v976
        %978 = vdwg.mxu0
        %v987 = vunpack.c.l.b16 %v793
        %v988 = vunpack.c.h.b16 %v793
        %v989 = vunpack.c.l.b16 %v794
        %v990 = vunpack.c.h.b16 %v794
        %v991 = vunpack.c.l.b16 %v795
        %v992 = vunpack.c.h.b16 %v795
        %v993 = vunpack.c.l.b16 %v796
        %v994 = vunpack.c.h.b16 %v796
        %v995 = vunpack.c.l.b16 %v797
        %v996 = vunpack.c.h.b16 %v797
        %v997 = vunpack.c.l.b16 %v798
        %v998 = vunpack.c.h.b16 %v798
        %v999 = vunpack.c.l.b16 %v799
        %v1000 = vunpack.c.h.b16 %v799
        %v1001 = vunpack.c.l.b16 %v800
        %v1002 = vunpack.c.h.b16 %v800
        %v1003 = vpack.c.b16 %v991, %v987
        %v1004 = vpack.c.b16 %v992, %v988
        %v1005 = vpack.c.b16 %v993, %v989
        %v1006 = vpack.c.b16 %v994, %v990
        %v1007 = vpack.c.b16 %v999, %v995
        %v1008 = vpack.c.b16 %v1000, %v996
        %v1009 = vpack.c.b16 %v1001, %v997
        %v1010 = vpack.c.b16 %v1002, %v998
        %v1019 = vsel %vm766, %v791, 0
        %v1022 = vsel %vm766, %v792, 0
        %1024 = vmatprep.subr.bf16.mxu0 %v1004
        %1025 = vmatpush1.bf16.msra.mxu0 %v1003
        %1026 = vmatprep.subr.bf16.mxu0 %v1008
        %1027 = vmatpush1.bf16.msra.mxu0 %v1007
        %1028 = vmatprep.subr.bf16.mxu0 0
        %1029 = vmatpush1.bf16.msra.mxu0 0
        %1030 = vmatprep.subr.bf16.mxu0 0
        %1031 = vmatpush1.bf16.msra.mxu0 0
        %1032 = vmatprep.subr.bf16.mxu0 0
        %1033 = vmatpush1.bf16.msra.mxu0 0
        %1034 = vmatprep.subr.bf16.mxu0 0
        %1035 = vmatpush1.bf16.msra.mxu0 0
        %1036 = vmatprep.subr.bf16.mxu0 0
        %1037 = vmatpush1.bf16.msra.mxu0 0
        %1038 = vmatprep.subr.bf16.mxu0 0
        %1039 = vmatpush1.bf16.msra.mxu0 0
        %1040 = vmatprep.subr.bf16.mxu0 0
        %1041 = vmatpush1.bf16.msra.mxu0 0
        %1042 = vmatprep.subr.bf16.mxu0 0
        %1043 = vmatpush1.bf16.msra.mxu0 0
        %1044 = vmatprep.subr.bf16.mxu0 0
        %1045 = vmatpush1.bf16.msra.mxu0 0
        %1046 = vmatprep.subr.bf16.mxu0 0
        %1047 = vmatpush1.bf16.msra.mxu0 0
        %1048 = vmatprep.subr.bf16.mxu0 0
        %1049 = vmatpush1.bf16.msra.mxu0 0
        %1050 = vmatprep.subr.bf16.mxu0 0
        %1051 = vmatpush1.bf16.msra.mxu0 0
        %1052 = vmatprep.subr.bf16.mxu0 0
        %1053 = vmatpush1.bf16.msra.mxu0 0
        %1054 = vmatprep.subr.bf16.mxu0 0
        %1055 = vmatpush1.bf16.msra.mxu0 0
        %1056 = vmatprep.mubr.bf16.mxu0 0
        %1057 = vmatmul.mubr.bf16.gmra.mrb[0].mxu0 %v1019
        %v1058 = vpop.f32.mrb[0].mxu0
        %v1059 = vadd.f32 %v908, %v1058
        %v1060 = vpop.f32.mrb[0].mxu0
        %v1061 = vadd.f32 %v910, %v1060
        %v1062 = vpop.f32.mrb[0].mxu0
        %v1063 = vadd.f32 %v912, %v1062
        %v1064 = vpop.f32.mrb[0].mxu0
        %v1065 = vadd.f32 %v914, %v1064
        %1066 = vmatprep.mubr.bf16.mxu0 0
        %1067 = vmatmul.mubr.bf16.gmra.mrb[0].mxu0 %v1022
        %v1068 = vpop.f32.mrb[0].mxu0
        %v1069 = vadd.f32 %v918, %v1068
        %v1070 = vpop.f32.mrb[0].mxu0
        %v1071 = vadd.f32 %v920, %v1070
        %v1072 = vpop.f32.mrb[0].mxu0
        %v1073 = vadd.f32 %v922, %v1072
        %v1074 = vpop.f32.mrb[0].mxu0
        %v1075 = vadd.f32 %v924, %v1074
        %1076 = vdwg.mxu0
        %1077 = vmatprep.subr.bf16.mxu0 %v1006
        %1078 = vmatpush1.bf16.msra.mxu0 %v1005
        %1079 = vmatprep.subr.bf16.mxu0 %v1010
        %1080 = vmatpush1.bf16.msra.mxu0 %v1009
        %1081 = vmatprep.subr.bf16.mxu0 0
        %1082 = vmatpush1.bf16.msra.mxu0 0
        %1083 = vmatprep.subr.bf16.mxu0 0
        %1084 = vmatpush1.bf16.msra.mxu0 0
        %1085 = vmatprep.subr.bf16.mxu0 0
        %1086 = vmatpush1.bf16.msra.mxu0 0
        %1087 = vmatprep.subr.bf16.mxu0 0
        %1088 = vmatpush1.bf16.msra.mxu0 0
        %1089 = vmatprep.subr.bf16.mxu0 0
        %1090 = vmatpush1.bf16.msra.mxu0 0
        %1091 = vmatprep.subr.bf16.mxu0 0
        %1092 = vmatpush1.bf16.msra.mxu0 0
        %1093 = vmatprep.subr.bf16.mxu0 0
        %1094 = vmatpush1.bf16.msra.mxu0 0
        %1095 = vmatprep.subr.bf16.mxu0 0
        %1096 = vmatpush1.bf16.msra.mxu0 0
        %1097 = vmatprep.subr.bf16.mxu0 0
        %1098 = vmatpush1.bf16.msra.mxu0 0
        %1099 = vmatprep.subr.bf16.mxu0 0
        %1100 = vmatpush1.bf16.msra.mxu0 0
        %1101 = vmatprep.subr.bf16.mxu0 0
        %1102 = vmatpush1.bf16.msra.mxu0 0
        %1103 = vmatprep.subr.bf16.mxu0 0
        %1104 = vmatpush1.bf16.msra.mxu0 0
        %1105 = vmatprep.subr.bf16.mxu0 0
        %1106 = vmatpush1.bf16.msra.mxu0 0
        %1107 = vmatprep.subr.bf16.mxu0 0
        %1108 = vmatpush1.bf16.msra.mxu0 0
        %1109 = vmatprep.mubr.bf16.mxu0 0
        %1110 = vmatmul.mubr.bf16.gmra.mrb[0].mxu0 %v1019
        %v1111 = vpop.f32.mrb[0].mxu0
        %v1112 = vadd.f32 %v961, %v1111
        %v1113 = vpop.f32.mrb[0].mxu0
        %v1114 = vadd.f32 %v963, %v1113
        %v1115 = vpop.f32.mrb[0].mxu0
        %v1116 = vadd.f32 %v965, %v1115
        %v1117 = vpop.f32.mrb[0].mxu0
        %v1118 = vadd.f32 %v967, %v1117
        %1119 = vmatprep.mubr.bf16.mxu0 0
        %1120 = vmatmul.mubr.bf16.gmra.mrb[0].mxu0 %v1022
        %v1121 = vpop.f32.mrb[0].mxu0
        %v1122 = vadd.f32 %v971, %v1121
        %v1123 = vpop.f32.mrb[0].mxu0
        %v1124 = vadd.f32 %v973, %v1123
        %v1125 = vpop.f32.mrb[0].mxu0
        %v1126 = vadd.f32 %v975, %v1125
        %v1127 = vpop.f32.mrb[0].mxu0
        %v1128 = vadd.f32 %v977, %v1127
        %1129 = vdwg.mxu0
        %v1130 = vld [vmem:[#allocation2] sm:$0xfe]
        %s1131 = scalar_lea.vmem [#allocation4], 128
        %v1132 = vld [vmem:[%s1131] sm:$0xff]
        %v1133 = vld [vmem:[%s1131 + $0x8] sm:$0xff]
        %v1134 = vld [vmem:[%s1131 + $0x10] sm:$0xff]
        %v1135 = vld [vmem:[%s1131 + $0x18] sm:$0xff]
        %v1136 = vld [vmem:[%s1131 + $0x20] sm:$0xff]
        %v1137 = vld [vmem:[%s1131 + $0x28] sm:$0xff]
        %v1138 = vld [vmem:[%s1131 + $0x30] sm:$0xff]
        %v1139 = vld [vmem:[%s1131 + $0x38] sm:$0xff]
        %vm1142 = vcmask 1046528
        %v1143 = vrot.slane %v1130, 1
        %v1144 = vrot.slane %v801, 1
        %v1145 = vsel %vm1142, %v1143, %v1144
        %v1154 = vunpack.c.l.b16 %v1132
        %v1155 = vunpack.c.h.b16 %v1132
        %v1156 = vunpack.c.l.b16 %v1133
        %v1157 = vunpack.c.h.b16 %v1133
        %v1158 = vunpack.c.l.b16 %v1134
        %v1159 = vunpack.c.h.b16 %v1134
        %v1160 = vunpack.c.l.b16 %v1135
        %v1161 = vunpack.c.h.b16 %v1135
        %v1162 = vunpack.c.l.b16 %v1136
        %v1163 = vunpack.c.h.b16 %v1136
        %v1164 = vunpack.c.l.b16 %v1137
        %v1165 = vunpack.c.h.b16 %v1137
        %v1166 = vunpack.c.l.b16 %v1138
        %v1167 = vunpack.c.h.b16 %v1138
        %v1168 = vunpack.c.l.b16 %v1139
        %v1169 = vunpack.c.h.b16 %v1139
        %v1170 = vpack.c.b16 %v1158, %v1154
        %v1171 = vpack.c.b16 %v1159, %v1155
        %v1172 = vpack.c.b16 %v1160, %v1156
        %v1173 = vpack.c.b16 %v1161, %v1157
        %v1174 = vpack.c.b16 %v1166, %v1162
        %v1175 = vpack.c.b16 %v1167, %v1163
        %v1176 = vpack.c.b16 %v1168, %v1164
        %v1177 = vpack.c.b16 %v1169, %v1165
        %v1187 = vsel %vm766, %v1145, 0
        %v1190 = vsel %vm766, %v1144, 0
        %1192 = vmatprep.subr.bf16.mxu0 %v1171
        %1193 = vmatpush1.bf16.msra.mxu0 %v1170
        %1194 = vmatprep.subr.bf16.mxu0 %v1175
        %1195 = vmatpush1.bf16.msra.mxu0 %v1174
        %1196 = vmatprep.subr.bf16.mxu0 0
        %1197 = vmatpush1.bf16.msra.mxu0 0
        %1198 = vmatprep.subr.bf16.mxu0 0
        %1199 = vmatpush1.bf16.msra.mxu0 0
        %1200 = vmatprep.subr.bf16.mxu0 0
        %1201 = vmatpush1.bf16.msra.mxu0 0
        %1202 = vmatprep.subr.bf16.mxu0 0
        %1203 = vmatpush1.bf16.msra.mxu0 0
        %1204 = vmatprep.subr.bf16.mxu0 0
        %1205 = vmatpush1.bf16.msra.mxu0 0
        %1206 = vmatprep.subr.bf16.mxu0 0
        %1207 = vmatpush1.bf16.msra.mxu0 0
        %1208 = vmatprep.subr.bf16.mxu0 0
        %1209 = vmatpush1.bf16.msra.mxu0 0
        %1210 = vmatprep.subr.bf16.mxu0 0
        %1211 = vmatpush1.bf16.msra.mxu0 0
        %1212 = vmatprep.subr.bf16.mxu0 0
        %1213 = vmatpush1.bf16.msra.mxu0 0
        %1214 = vmatprep.subr.bf16.mxu0 0
        %1215 = vmatpush1.bf16.msra.mxu0 0
        %1216 = vmatprep.subr.bf16.mxu0 0
        %1217 = vmatpush1.bf16.msra.mxu0 0
        %1218 = vmatprep.subr.bf16.mxu0 0
        %1219 = vmatpush1.bf16.msra.mxu0 0
        %1220 = vmatprep.subr.bf16.mxu0 0
        %1221 = vmatpush1.bf16.msra.mxu0 0
        %1222 = vmatprep.subr.bf16.mxu0 0
        %1223 = vmatpush1.bf16.msra.mxu0 0
        %1224 = vmatprep.mubr.bf16.mxu0 0
        %1225 = vmatmul.mubr.bf16.gmra.mrb[0].mxu0 %v1187
        %v1226 = vpop.f32.mrb[0].mxu0
        %v1227 = vadd.f32 0.0, %v1226
        %v1228 = vpop.f32.mrb[0].mxu0
        %v1229 = vadd.f32 0.0, %v1228
        %v1230 = vpop.f32.mrb[0].mxu0
        %v1231 = vadd.f32 0.0, %v1230
        %v1232 = vpop.f32.mrb[0].mxu0
        %v1233 = vadd.f32 0.0, %v1232
        %1234 = vmatprep.mubr.bf16.mxu0 0
        %1235 = vmatmul.mubr.bf16.gmra.mrb[0].mxu0 %v1190
        %v1236 = vpop.f32.mrb[0].mxu0
        %v1237 = vadd.f32 0.0, %v1236
        %v1238 = vpop.f32.mrb[0].mxu0
        %v1239 = vadd.f32 0.0, %v1238
        %v1240 = vpop.f32.mrb[0].mxu0
        %v1241 = vadd.f32 0.0, %v1240
        %v1242 = vpop.f32.mrb[0].mxu0
        %v1243 = vadd.f32 0.0, %v1242
        %1244 = vdwg.mxu0
        %1245 = vmatprep.subr.bf16.mxu0 %v1173
        %1246 = vmatpush1.bf16.msra.mxu0 %v1172
        %1247 = vmatprep.subr.bf16.mxu0 %v1177
        %1248 = vmatpush1.bf16.msra.mxu0 %v1176
        %1249 = vmatprep.subr.bf16.mxu0 0
        %1250 = vmatpush1.bf16.msra.mxu0 0
        %1251 = vmatprep.subr.bf16.mxu0 0
        %1252 = vmatpush1.bf16.msra.mxu0 0
        %1253 = vmatprep.subr.bf16.mxu0 0
        %1254 = vmatpush1.bf16.msra.mxu0 0
        %1255 = vmatprep.subr.bf16.mxu0 0
        %1256 = vmatpush1.bf16.msra.mxu0 0
        %1257 = vmatprep.subr.bf16.mxu0 0
        %1258 = vmatpush1.bf16.msra.mxu0 0
        %1259 = vmatprep.subr.bf16.mxu0 0
        %1260 = vmatpush1.bf16.msra.mxu0 0
        %1261 = vmatprep.subr.bf16.mxu0 0
        %1262 = vmatpush1.bf16.msra.mxu0 0
        %1263 = vmatprep.subr.bf16.mxu0 0
        %1264 = vmatpush1.bf16.msra.mxu0 0
        %1265 = vmatprep.subr.bf16.mxu0 0
        %1266 = vmatpush1.bf16.msra.mxu0 0
        %1267 = vmatprep.subr.bf16.mxu0 0
        %1268 = vmatpush1.bf16.msra.mxu0 0
        %1269 = vmatprep.subr.bf16.mxu0 0
        %1270 = vmatpush1.bf16.msra.mxu0 0
        %1271 = vmatprep.subr.bf16.mxu0 0
        %1272 = vmatpush1.bf16.msra.mxu0 0
        %1273 = vmatprep.subr.bf16.mxu0 0
        %1274 = vmatpush1.bf16.msra.mxu0 0
        %1275 = vmatprep.subr.bf16.mxu0 0
        %1276 = vmatpush1.bf16.msra.mxu0 0
        %1277 = vmatprep.mubr.bf16.mxu0 0
        %1278 = vmatmul.mubr.bf16.gmra.mrb[0].mxu0 %v1187
        %v1279 = vpop.f32.mrb[0].mxu0
        %v1280 = vadd.f32 0.0, %v1279
        %v1281 = vpop.f32.mrb[0].mxu0
        %v1282 = vadd.f32 0.0, %v1281
        %v1283 = vpop.f32.mrb[0].mxu0
        %v1284 = vadd.f32 0.0, %v1283
        %v1285 = vpop.f32.mrb[0].mxu0
        %v1286 = vadd.f32 0.0, %v1285
        %1287 = vmatprep.mubr.bf16.mxu0 0
        %1288 = vmatmul.mubr.bf16.gmra.mrb[0].mxu0 %v1190
        %v1289 = vpop.f32.mrb[0].mxu0
        %v1290 = vadd.f32 0.0, %v1289
        %v1291 = vpop.f32.mrb[0].mxu0
        %v1292 = vadd.f32 0.0, %v1291
        %v1293 = vpop.f32.mrb[0].mxu0
        %v1294 = vadd.f32 0.0, %v1293
        %v1295 = vpop.f32.mrb[0].mxu0
        %v1296 = vadd.f32 0.0, %v1295
        %1297 = vdwg.mxu0
        %v1298 = vadd.f32 %v1059, %v1227
        %v1299 = vadd.f32 %v1061, %v1229
        %v1300 = vadd.f32 %v1112, %v1280
        %v1301 = vadd.f32 %v1114, %v1282
        %v1302 = vadd.f32 %v1063, %v1231
        %v1303 = vadd.f32 %v1065, %v1233
        %v1304 = vadd.f32 %v1116, %v1284
        %v1305 = vadd.f32 %v1118, %v1286
        %v1306 = vadd.f32 %v1069, %v1237
        %v1307 = vadd.f32 %v1071, %v1239
        %v1308 = vadd.f32 %v1122, %v1290
        %v1309 = vadd.f32 %v1124, %v1292
        %v1310 = vadd.f32 %v1073, %v1241
        %v1311 = vadd.f32 %v1075, %v1243
        %v1312 = vadd.f32 %v1126, %v1294
        %v1313 = vadd.f32 %v1128, %v1296
        %v1314 = vld [vmem:[#allocation2 + $0x8] sm:$0xff]
        %s1315 = scalar_lea.vmem [#allocation4], 192
        %v1316 = vld [vmem:[%s1315] sm:$0xff]
        %v1317 = vld [vmem:[%s1315 + $0x8] sm:$0xff]
        %v1318 = vld [vmem:[%s1315 + $0x10] sm:$0xff]
        %v1319 = vld [vmem:[%s1315 + $0x18] sm:$0xff]
        %v1320 = vld [vmem:[%s1315 + $0x20] sm:$0xff]
        %v1321 = vld [vmem:[%s1315 + $0x28] sm:$0xff]
        %v1322 = vld [vmem:[%s1315 + $0x30] sm:$0xff]
        %v1323 = vld [vmem:[%s1315 + $0x38] sm:$0xff]
        %vm1324 = vsmask.f32 6400
        %v1326 = vshrl.u32 %v1130, 16
        %v1328 = vrot.slane %v1326, 1
        %v1329 = vshll.u32 %v1130, 16
        %v1331 = vrot.slane %v1329, 2
        %v1332 = vor.u32 %v1328, %v1331
        %v1334 = vshrl.u32 %v1314, 16
        %v1336 = vrot.slane %v1334, 1
        %v1337 = vshll.u32 %v1314, 16
        %v1339 = vrot.slane %v1337, 2
        %v1340 = vor.u32 %v1336, %v1339
        %v1341 = vsel %vm1324, %v1332, %v1340
        %v1350 = vunpack.c.l.b16 %v1316
        %v1351 = vunpack.c.h.b16 %v1316
        %v1352 = vunpack.c.l.b16 %v1317
        %v1353 = vunpack.c.h.b16 %v1317
        %v1354 = vunpack.c.l.b16 %v1318
        %v1355 = vunpack.c.h.b16 %v1318
        %v1356 = vunpack.c.l.b16 %v1319
        %v1357 = vunpack.c.h.b16 %v1319
        %v1358 = vunpack.c.l.b16 %v1320
        %v1359 = vunpack.c.h.b16 %v1320
        %v1360 = vunpack.c.l.b16 %v1321
        %v1361 = vunpack.c.h.b16 %v1321
        %v1362 = vunpack.c.l.b16 %v1322
        %v1363 = vunpack.c.h.b16 %v1322
        %v1364 = vunpack.c.l.b16 %v1323
        %v1365 = vunpack.c.h.b16 %v1323
        %v1366 = vpack.c.b16 %v1354, %v1350
        %v1367 = vpack.c.b16 %v1355, %v1351
        %v1368 = vpack.c.b16 %v1356, %v1352
        %v1369 = vpack.c.b16 %v1357, %v1353
        %v1370 = vpack.c.b16 %v1362, %v1358
        %v1371 = vpack.c.b16 %v1363, %v1359
        %v1372 = vpack.c.b16 %v1364, %v1360
        %v1373 = vpack.c.b16 %v1365, %v1361
        %v1383 = vsel %vm766, %v1341, 0
        %v1386 = vsel %vm766, %v1340, 0
        %1388 = vmatprep.subr.bf16.mxu0 %v1367
        %1389 = vmatpush1.bf16.msra.mxu0 %v1366
        %1390 = vmatprep.subr.bf16.mxu0 %v1371
        %1391 = vmatpush1.bf16.msra.mxu0 %v1370
        %1392 = vmatprep.subr.bf16.mxu0 0
        %1393 = vmatpush1.bf16.msra.mxu0 0
        %1394 = vmatprep.subr.bf16.mxu0 0
        %1395 = vmatpush1.bf16.msra.mxu0 0
        %1396 = vmatprep.subr.bf16.mxu0 0
        %1397 = vmatpush1.bf16.msra.mxu0 0
        %1398 = vmatprep.subr.bf16.mxu0 0
        %1399 = vmatpush1.bf16.msra.mxu0 0
        %1400 = vmatprep.subr.bf16.mxu0 0
        %1401 = vmatpush1.bf16.msra.mxu0 0
        %1402 = vmatprep.subr.bf16.mxu0 0
        %1403 = vmatpush1.bf16.msra.mxu0 0
        %1404 = vmatprep.subr.bf16.mxu0 0
        %1405 = vmatpush1.bf16.msra.mxu0 0
        %1406 = vmatprep.subr.bf16.mxu0 0
        %1407 = vmatpush1.bf16.msra.mxu0 0
        %1408 = vmatprep.subr.bf16.mxu0 0
        %1409 = vmatpush1.bf16.msra.mxu0 0
        %1410 = vmatprep.subr.bf16.mxu0 0
        %1411 = vmatpush1.bf16.msra.mxu0 0
        %1412 = vmatprep.subr.bf16.mxu0 0
        %1413 = vmatpush1.bf16.msra.mxu0 0
        %1414 = vmatprep.subr.bf16.mxu0 0
        %1415 = vmatpush1.bf16.msra.mxu0 0
        %1416 = vmatprep.subr.bf16.mxu0 0
        %1417 = vmatpush1.bf16.msra.mxu0 0
        %1418 = vmatprep.subr.bf16.mxu0 0
        %1419 = vmatpush1.bf16.msra.mxu0 0
        %1420 = vmatprep.mubr.bf16.mxu0 0
        %1421 = vmatmul.mubr.bf16.gmra.mrb[0].mxu0 %v1383
        %v1422 = vpop.f32.mrb[0].mxu0
        %v1423 = vadd.f32 0.0, %v1422
        %v1424 = vpop.f32.mrb[0].mxu0
        %v1425 = vadd.f32 0.0, %v1424
        %v1426 = vpop.f32.mrb[0].mxu0
        %v1427 = vadd.f32 0.0, %v1426
        %v1428 = vpop.f32.mrb[0].mxu0
        %v1429 = vadd.f32 0.0, %v1428
        %1430 = vmatprep.mubr.bf16.mxu0 0
        %1431 = vmatmul.mubr.bf16.gmra.mrb[0].mxu0 %v1386
        %v1432 = vpop.f32.mrb[0].mxu0
        %v1433 = vadd.f32 0.0, %v1432
        %v1434 = vpop.f32.mrb[0].mxu0
        %v1435 = vadd.f32 0.0, %v1434
        %v1436 = vpop.f32.mrb[0].mxu0
        %v1437 = vadd.f32 0.0, %v1436
        %v1438 = vpop.f32.mrb[0].mxu0
        %v1439 = vadd.f32 0.0, %v1438
        %1440 = vdwg.mxu0
        %1441 = vmatprep.subr.bf16.mxu0 %v1369
        %1442 = vmatpush1.bf16.msra.mxu0 %v1368
        %1443 = vmatprep.subr.bf16.mxu0 %v1373
        %1444 = vmatpush1.bf16.msra.mxu0 %v1372
        %1445 = vmatprep.subr.bf16.mxu0 0
        %1446 = vmatpush1.bf16.msra.mxu0 0
        %1447 = vmatprep.subr.bf16.mxu0 0
        %1448 = vmatpush1.bf16.msra.mxu0 0
        %1449 = vmatprep.subr.bf16.mxu0 0
        %1450 = vmatpush1.bf16.msra.mxu0 0
        %1451 = vmatprep.subr.bf16.mxu0 0
        %1452 = vmatpush1.bf16.msra.mxu0 0
        %1453 = vmatprep.subr.bf16.mxu0 0
        %1454 = vmatpush1.bf16.msra.mxu0 0
        %1455 = vmatprep.subr.bf16.mxu0 0
        %1456 = vmatpush1.bf16.msra.mxu0 0
        %1457 = vmatprep.subr.bf16.mxu0 0
        %1458 = vmatpush1.bf16.msra.mxu0 0
        %1459 = vmatprep.subr.bf16.mxu0 0
        %1460 = vmatpush1.bf16.msra.mxu0 0
        %1461 = vmatprep.subr.bf16.mxu0 0
        %1462 = vmatpush1.bf16.msra.mxu0 0
        %1463 = vmatprep.subr.bf16.mxu0 0
        %1464 = vmatpush1.bf16.msra.mxu0 0
        %1465 = vmatprep.subr.bf16.mxu0 0
        %1466 = vmatpush1.bf16.msra.mxu0 0
        %1467 = vmatprep.subr.bf16.mxu0 0
        %1468 = vmatpush1.bf16.msra.mxu0 0
        %1469 = vmatprep.subr.bf16.mxu0 0
        %1470 = vmatpush1.bf16.msra.mxu0 0
        %1471 = vmatprep.subr.bf16.mxu0 0
        %1472 = vmatpush1.bf16.msra.mxu0 0
        %1473 = vmatprep.mubr.bf16.mxu0 0
        %1474 = vmatmul.mubr.bf16.gmra.mrb[0].mxu0 %v1383
        %v1475 = vpop.f32.mrb[0].mxu0
        %v1476 = vadd.f32 0.0, %v1475
        %v1477 = vpop.f32.mrb[0].mxu0
        %v1478 = vadd.f32 0.0, %v1477
        %v1479 = vpop.f32.mrb[0].mxu0
        %v1480 = vadd.f32 0.0, %v1479
        %v1481 = vpop.f32.mrb[0].mxu0
        %v1482 = vadd.f32 0.0, %v1481
        %1483 = vmatprep.mubr.bf16.mxu0 0
        %1484 = vmatmul.mubr.bf16.gmra.mrb[0].mxu0 %v1386
        %v1485 = vpop.f32.mrb[0].mxu0
        %v1486 = vadd.f32 0.0, %v1485
        %v1487 = vpop.f32.mrb[0].mxu0
        %v1488 = vadd.f32 0.0, %v1487
        %v1489 = vpop.f32.mrb[0].mxu0
        %v1490 = vadd.f32 0.0, %v1489
        %v1491 = vpop.f32.mrb[0].mxu0
        %v1492 = vadd.f32 0.0, %v1491
        %1493 = vdwg.mxu0
        %v1494 = vadd.f32 %v1298, %v1423
        %v1495 = vadd.f32 %v1299, %v1425
        %v1496 = vadd.f32 %v1300, %v1476
        %v1497 = vadd.f32 %v1301, %v1478
        %v1498 = vadd.f32 %v1302, %v1427
        %v1499 = vadd.f32 %v1303, %v1429
        %v1500 = vadd.f32 %v1304, %v1480
        %v1501 = vadd.f32 %v1305, %v1482
        %v1502 = vadd.f32 %v1306, %v1433
        %v1503 = vadd.f32 %v1307, %v1435
        %v1504 = vadd.f32 %v1308, %v1486
        %v1505 = vadd.f32 %v1309, %v1488
        %v1506 = vadd.f32 %v1310, %v1437
        %v1507 = vadd.f32 %v1311, %v1439
        %v1508 = vadd.f32 %v1312, %v1490
        %v1509 = vadd.f32 %v1313, %v1492
        %v1510 = vld [vmem:[#allocation2] sm:$0xfc]
        %s1511 = scalar_lea.vmem [#allocation4], 256
        %v1512 = vld [vmem:[%s1511] sm:$0xff]
        %v1513 = vld [vmem:[%s1511 + $0x8] sm:$0xff]
        %v1514 = vld [vmem:[%s1511 + $0x10] sm:$0xff]
        %v1515 = vld [vmem:[%s1511 + $0x18] sm:$0xff]
        %v1516 = vld [vmem:[%s1511 + $0x20] sm:$0xff]
        %v1517 = vld [vmem:[%s1511 + $0x28] sm:$0xff]
        %v1518 = vld [vmem:[%s1511 + $0x30] sm:$0xff]
        %v1519 = vld [vmem:[%s1511 + $0x38] sm:$0xff]
        %vm1522 = vcmask 1045504
        %v1523 = vrot.slane %v1510, 2
        %v1524 = vrot.slane %v1314, 2
        %v1525 = vsel %vm1522, %v1523, %v1524
        %v1534 = vunpack.c.l.b16 %v1512
        %v1535 = vunpack.c.h.b16 %v1512
        %v1536 = vunpack.c.l.b16 %v1513
        %v1537 = vunpack.c.h.b16 %v1513
        %v1538 = vunpack.c.l.b16 %v1514
        %v1539 = vunpack.c.h.b16 %v1514
        %v1540 = vunpack.c.l.b16 %v1515
        %v1541 = vunpack.c.h.b16 %v1515
        %v1542 = vunpack.c.l.b16 %v1516
        %v1543 = vunpack.c.h.b16 %v1516
        %v1544 = vunpack.c.l.b16 %v1517
        %v1545 = vunpack.c.h.b16 %v1517
        %v1546 = vunpack.c.l.b16 %v1518
        %v1547 = vunpack.c.h.b16 %v1518
        %v1548 = vunpack.c.l.b16 %v1519
        %v1549 = vunpack.c.h.b16 %v1519
        %v1550 = vpack.c.b16 %v1538, %v1534
        %v1551 = vpack.c.b16 %v1539, %v1535
        %v1552 = vpack.c.b16 %v1540, %v1536
        %v1553 = vpack.c.b16 %v1541, %v1537
        %v1554 = vpack.c.b16 %v1546, %v1542
        %v1555 = vpack.c.b16 %v1547, %v1543
        %v1556 = vpack.c.b16 %v1548, %v1544
        %v1557 = vpack.c.b16 %v1549, %v1545
        %v1567 = vsel %vm766, %v1525, 0
        %v1570 = vsel %vm766, %v1524, 0
        %1572 = vmatprep.subr.bf16.mxu0 %v1551
        %1573 = vmatpush1.bf16.msra.mxu0 %v1550
        %1574 = vmatprep.subr.bf16.mxu0 %v1555
        %1575 = vmatpush1.bf16.msra.mxu0 %v1554
        %1576 = vmatprep.subr.bf16.mxu0 0
        %1577 = vmatpush1.bf16.msra.mxu0 0
        %1578 = vmatprep.subr.bf16.mxu0 0
        %1579 = vmatpush1.bf16.msra.mxu0 0
        %1580 = vmatprep.subr.bf16.mxu0 0
        %1581 = vmatpush1.bf16.msra.mxu0 0
        %1582 = vmatprep.subr.bf16.mxu0 0
        %1583 = vmatpush1.bf16.msra.mxu0 0
        %1584 = vmatprep.subr.bf16.mxu0 0
        %1585 = vmatpush1.bf16.msra.mxu0 0
        %1586 = vmatprep.subr.bf16.mxu0 0
        %1587 = vmatpush1.bf16.msra.mxu0 0
        %1588 = vmatprep.subr.bf16.mxu0 0
        %1589 = vmatpush1.bf16.msra.mxu0 0
        %1590 = vmatprep.subr.bf16.mxu0 0
        %1591 = vmatpush1.bf16.msra.mxu0 0
        %1592 = vmatprep.subr.bf16.mxu0 0
        %1593 = vmatpush1.bf16.msra.mxu0 0
        %1594 = vmatprep.subr.bf16.mxu0 0
        %1595 = vmatpush1.bf16.msra.mxu0 0
        %1596 = vmatprep.subr.bf16.mxu0 0
        %1597 = vmatpush1.bf16.msra.mxu0 0
        %1598 = vmatprep.subr.bf16.mxu0 0
        %1599 = vmatpush1.bf16.msra.mxu0 0
        %1600 = vmatprep.subr.bf16.mxu0 0
        %1601 = vmatpush1.bf16.msra.mxu0 0
        %1602 = vmatprep.subr.bf16.mxu0 0
        %1603 = vmatpush1.bf16.msra.mxu0 0
        %1604 = vmatprep.mubr.bf16.mxu0 0
        %1605 = vmatmul.mubr.bf16.gmra.mrb[0].mxu0 %v1567
        %v1606 = vpop.f32.mrb[0].mxu0
        %v1607 = vadd.f32 0.0, %v1606
        %v1608 = vpop.f32.mrb[0].mxu0
        %v1609 = vadd.f32 0.0, %v1608
        %v1610 = vpop.f32.mrb[0].mxu0
        %v1611 = vadd.f32 0.0, %v1610
        %v1612 = vpop.f32.mrb[0].mxu0
        %v1613 = vadd.f32 0.0, %v1612
        %1614 = vmatprep.mubr.bf16.mxu0 0
        %1615 = vmatmul.mubr.bf16.gmra.mrb[0].mxu0 %v1570
        %v1616 = vpop.f32.mrb[0].mxu0
        %v1617 = vadd.f32 0.0, %v1616
        %v1618 = vpop.f32.mrb[0].mxu0
        %v1619 = vadd.f32 0.0, %v1618
        %v1620 = vpop.f32.mrb[0].mxu0
        %v1621 = vadd.f32 0.0, %v1620
        %v1622 = vpop.f32.mrb[0].mxu0
        %v1623 = vadd.f32 0.0, %v1622
        %1624 = vdwg.mxu0
        %1625 = vmatprep.subr.bf16.mxu0 %v1553
        %1626 = vmatpush1.bf16.msra.mxu0 %v1552
        %1627 = vmatprep.subr.bf16.mxu0 %v1557
        %1628 = vmatpush1.bf16.msra.mxu0 %v1556
        %1629 = vmatprep.subr.bf16.mxu0 0
        %1630 = vmatpush1.bf16.msra.mxu0 0
        %1631 = vmatprep.subr.bf16.mxu0 0
        %1632 = vmatpush1.bf16.msra.mxu0 0
        %1633 = vmatprep.subr.bf16.mxu0 0
        %1634 = vmatpush1.bf16.msra.mxu0 0
        %1635 = vmatprep.subr.bf16.mxu0 0
        %1636 = vmatpush1.bf16.msra.mxu0 0
        %1637 = vmatprep.subr.bf16.mxu0 0
        %1638 = vmatpush1.bf16.msra.mxu0 0
        %1639 = vmatprep.subr.bf16.mxu0 0
        %1640 = vmatpush1.bf16.msra.mxu0 0
        %1641 = vmatprep.subr.bf16.mxu0 0
        %1642 = vmatpush1.bf16.msra.mxu0 0
        %1643 = vmatprep.subr.bf16.mxu0 0
        %1644 = vmatpush1.bf16.msra.mxu0 0
        %1645 = vmatprep.subr.bf16.mxu0 0
        %1646 = vmatpush1.bf16.msra.mxu0 0
        %1647 = vmatprep.subr.bf16.mxu0 0
        %1648 = vmatpush1.bf16.msra.mxu0 0
        %1649 = vmatprep.subr.bf16.mxu0 0
        %1650 = vmatpush1.bf16.msra.mxu0 0
        %1651 = vmatprep.subr.bf16.mxu0 0
        %1652 = vmatpush1.bf16.msra.mxu0 0
        %1653 = vmatprep.subr.bf16.mxu0 0
        %1654 = vmatpush1.bf16.msra.mxu0 0
        %1655 = vmatprep.subr.bf16.mxu0 0
        %1656 = vmatpush1.bf16.msra.mxu0 0
        %1657 = vmatprep.mubr.bf16.mxu0 0
        %1658 = vmatmul.mubr.bf16.gmra.mrb[0].mxu0 %v1567
        %v1659 = vpop.f32.mrb[0].mxu0
        %v1660 = vadd.f32 0.0, %v1659
        %v1661 = vpop.f32.mrb[0].mxu0
        %v1662 = vadd.f32 0.0, %v1661
        %v1663 = vpop.f32.mrb[0].mxu0
        %v1664 = vadd.f32 0.0, %v1663
        %v1665 = vpop.f32.mrb[0].mxu0
        %v1666 = vadd.f32 0.0, %v1665
        %1667 = vmatprep.mubr.bf16.mxu0 0
        %1668 = vmatmul.mubr.bf16.gmra.mrb[0].mxu0 %v1570
        %v1669 = vpop.f32.mrb[0].mxu0
        %v1670 = vadd.f32 0.0, %v1669
        %v1671 = vpop.f32.mrb[0].mxu0
        %v1672 = vadd.f32 0.0, %v1671
        %v1673 = vpop.f32.mrb[0].mxu0
        %v1674 = vadd.f32 0.0, %v1673
        %v1675 = vpop.f32.mrb[0].mxu0
        %v1676 = vadd.f32 0.0, %v1675
        %1677 = vdwg.mxu0
        %v1678 = vadd.f32 %v1494, %v1607
        %v1679 = vadd.f32 %v1495, %v1609
        %v1680 = vadd.f32 %v1496, %v1660
        %v1681 = vadd.f32 %v1497, %v1662
        %v1682 = vadd.f32 %v1498, %v1611
        %v1683 = vadd.f32 %v1499, %v1613
        %v1684 = vadd.f32 %v1500, %v1664
        %v1685 = vadd.f32 %v1501, %v1666
        %v1686 = vadd.f32 %v1502, %v1617
        %v1687 = vadd.f32 %v1503, %v1619
        %v1688 = vadd.f32 %v1504, %v1670
        %v1689 = vadd.f32 %v1505, %v1672
        %v1690 = vadd.f32 %v1506, %v1621
        %v1691 = vadd.f32 %v1507, %v1623
        %v1692 = vadd.f32 %v1508, %v1674
        %v1693 = vadd.f32 %v1509, %v1676
        %v1694 = vld [vmem:[#allocation7] sm:$0xf]
        %v1696 = vlaneseq
        %v1697 = vshrl.u32 %v1696, 7
        %v1698 = vsub.s32 0, %v1697
        %v1699 = vrot.slane %v1694, %v1698
        %v1700 = vlaneseq
        %v1701 = vshrl.u32 %v1700, 7
        %v1702 = vsub.s32 1, %v1701
        %v1703 = vrot.slane %v1694, %v1702
        %v1704 = vlaneseq
        %v1705 = vshrl.u32 %v1704, 7
        %v1706 = vsub.s32 2, %v1705
        %v1707 = vrot.slane %v1694, %v1706
        %v1708 = vlaneseq
        %v1709 = vshrl.u32 %v1708, 7
        %v1710 = vsub.s32 3, %v1709
        %v1711 = vrot.slane %v1694, %v1710
        %v1716 = vmul.f32 %v1678, %v1699
        %v1717 = vmul.f32 %v1679, %v1703
        %v1718 = vmul.f32 %v1680, %v1707
        %v1719 = vmul.f32 %v1681, %v1711
        %v1720 = vmul.f32 %v1682, %v1699
        %v1721 = vmul.f32 %v1683, %v1703
        %v1722 = vmul.f32 %v1684, %v1707
        %v1723 = vmul.f32 %v1685, %v1711
        %v1724 = vmul.f32 %v1686, %v1699
        %v1725 = vmul.f32 %v1687, %v1703
        %v1726 = vmul.f32 %v1688, %v1707
        %v1727 = vmul.f32 %v1689, %v1711
        %v1728 = vmul.f32 %v1690, %v1699
        %v1729 = vmul.f32 %v1691, %v1703
        %v1730 = vmul.f32 %v1692, %v1707
        %v1731 = vmul.f32 %v1693, %v1711
        %v1732 = vld [vmem:[#allocation9] sm:$0xf]
        %v1734 = vlaneseq
        %v1735 = vshrl.u32 %v1734, 7
        %v1736 = vsub.s32 0, %v1735
        %v1737 = vrot.slane %v1732, %v1736
        %v1738 = vlaneseq
        %v1739 = vshrl.u32 %v1738, 7
        %v1740 = vsub.s32 1, %v1739
        %v1741 = vrot.slane %v1732, %v1740
        %v1742 = vlaneseq
        %v1743 = vshrl.u32 %v1742, 7
        %v1744 = vsub.s32 2, %v1743
        %v1745 = vrot.slane %v1732, %v1744
        %v1746 = vlaneseq
        %v1747 = vshrl.u32 %v1746, 7
        %v1748 = vsub.s32 3, %v1747
        %v1749 = vrot.slane %v1732, %v1748
        %v1754 = vadd.f32 %v1716, %v1737
        %v1755 = vadd.f32 %v1717, %v1741
        %v1756 = vadd.f32 %v1718, %v1745
        %v1757 = vadd.f32 %v1719, %v1749
        %v1758 = vadd.f32 %v1720, %v1737
        %v1759 = vadd.f32 %v1721, %v1741
        %v1760 = vadd.f32 %v1722, %v1745
        %v1761 = vadd.f32 %v1723, %v1749
        %v1762 = vadd.f32 %v1724, %v1737
        %v1763 = vadd.f32 %v1725, %v1741
        %v1764 = vadd.f32 %v1726, %v1745
        %v1765 = vadd.f32 %v1727, %v1749
        %v1766 = vadd.f32 %v1728, %v1737
        %v1767 = vadd.f32 %v1729, %v1741
        %v1768 = vadd.f32 %v1730, %v1745
        %v1769 = vadd.f32 %v1731, %v1749
        %v1770 = vmax.f32 %v1754, 0.0
        %v1771 = vmax.f32 %v1755, 0.0
        %v1772 = vmax.f32 %v1756, 0.0
        %v1773 = vmax.f32 %v1757, 0.0
        %v1774 = vmax.f32 %v1758, 0.0
        %v1775 = vmax.f32 %v1759, 0.0
        %v1776 = vmax.f32 %v1760, 0.0
        %v1777 = vmax.f32 %v1761, 0.0
        %v1778 = vmax.f32 %v1762, 0.0
        %v1779 = vmax.f32 %v1763, 0.0
        %v1780 = vmax.f32 %v1764, 0.0
        %v1781 = vmax.f32 %v1765, 0.0
        %v1782 = vmax.f32 %v1766, 0.0
        %v1783 = vmax.f32 %v1767, 0.0
        %v1784 = vmax.f32 %v1768, 0.0
        %v1785 = vmax.f32 %v1769, 0.0
        %v1786 = vld [vmem:[#allocation10] sm:$0xff]
        %v1787 = vld [vmem:[#allocation10 + $0x8] sm:$0x3f]
        %vm1788 = vcmask 228352
        %v1790 = vsel %vm1788, %v1786, 0
        %v1793 = vsel %vm1788, %v1787, 0
        %vm1795 = vcmask 1043456
        %v1797 = vsel %vm1795, %v1782, 0
        %v1800 = vsel %vm1795, %v1783, 0
        %v1803 = vsel %vm1795, %v1784, 0
        %v1806 = vsel %vm1795, %v1785, 0
        %1808 = vmatprep.subr.mxu0 %v1771
        %1809 = vmatpush1.msra.mxu0 %v1770
        %1810 = vmatprep.subr.mxu0 %v1775
        %1811 = vmatpush1.msra.mxu0 %v1774
        %1812 = vmatprep.subr.mxu0 %v1779
        %1813 = vmatpush1.msra.mxu0 %v1778
        %1814 = vmatprep.subr.mxu0 %v1800
        %1815 = vmatpush1.msra.mxu0 %v1797
        %1816 = vmatprep.subr.mxu0 0.0
        %1817 = vmatpush1.msra.mxu0 0.0
        %1818 = vmatprep.subr.mxu0 0.0
        %1819 = vmatpush1.msra.mxu0 0.0
        %1820 = vmatprep.subr.mxu0 0.0
        %1821 = vmatpush1.msra.mxu0 0.0
        %1822 = vmatprep.subr.mxu0 0.0
        %1823 = vmatpush1.msra.mxu0 0.0
        %1824 = vmatprep.subr.mxu0 0.0
        %1825 = vmatpush1.msra.mxu0 0.0
        %1826 = vmatprep.subr.mxu0 0.0
        %1827 = vmatpush1.msra.mxu0 0.0
        %1828 = vmatprep.subr.mxu0 0.0
        %1829 = vmatpush1.msra.mxu0 0.0
        %1830 = vmatprep.subr.mxu0 0.0
        %1831 = vmatpush1.msra.mxu0 0.0
        %1832 = vmatprep.subr.mxu0 0.0
        %1833 = vmatpush1.msra.mxu0 0.0
        %1834 = vmatprep.subr.mxu0 0.0
        %1835 = vmatpush1.msra.mxu0 0.0
        %1836 = vmatprep.subr.mxu0 0.0
        %1837 = vmatpush1.msra.mxu0 0.0
        %1838 = vmatprep.subr.mxu0 0.0
        %1839 = vmatpush1.msra.mxu0 0.0
        %1840 = vmatprep.subr.mxu0 0.0
        %1841 = vmatpush1.msra.mxu0 0.0
        %1842 = vmatprep.subr.mxu0 0.0
        %1843 = vmatpush1.msra.mxu0 0.0
        %1844 = vmatprep.subr.mxu0 0.0
        %1845 = vmatpush1.msra.mxu0 0.0
        %1846 = vmatprep.subr.mxu0 0.0
        %1847 = vmatpush1.msra.mxu0 0.0
        %1848 = vmatprep.subr.mxu0 0.0
        %1849 = vmatpush1.msra.mxu0 0.0
        %1850 = vmatprep.subr.mxu0 0.0
        %1851 = vmatpush1.msra.mxu0 0.0
        %1852 = vmatprep.subr.mxu0 0.0
        %1853 = vmatpush1.msra.mxu0 0.0
        %1854 = vmatprep.subr.mxu0 0.0
        %1855 = vmatpush1.msra.mxu0 0.0
        %1856 = vmatprep.subr.mxu0 0.0
        %1857 = vmatpush1.msra.mxu0 0.0
        %1858 = vmatprep.subr.mxu0 0.0
        %1859 = vmatpush1.msra.mxu0 0.0
        %1860 = vmatprep.subr.mxu0 0.0
        %1861 = vmatpush1.msra.mxu0 0.0
        %1862 = vmatprep.subr.mxu0 0.0
        %1863 = vmatpush1.msra.mxu0 0.0
        %1864 = vmatprep.subr.mxu0 0.0
        %1865 = vmatpush1.msra.mxu0 0.0
        %1866 = vmatprep.subr.mxu0 0.0
        %1867 = vmatpush1.msra.mxu0 0.0
        %1868 = vmatprep.subr.mxu0 0.0
        %1869 = vmatpush1.msra.mxu0 0.0
        %1870 = vmatprep.subr.mxu0 0.0
        %1871 = vmatpush1.msra.mxu0 0.0
        %1872 = vmatprep.mubr.f32.mxu0 0.0
        %1873 = vmatmul.mubr.f32.gmra.mrb[0].mxu0 %v1790
        %v1874 = vpop.f32.mrb[0].mxu0
        %v1875 = vadd.f32 0.0, %v1874
        %v1876 = vpop.f32.mrb[0].mxu0
        %v1877 = vadd.f32 0.0, %v1876
        %1878 = vmatprep.mubr.f32.mxu0 0.0
        %1879 = vmatmul.mubr.f32.gmra.mrb[0].mxu0 %v1793
        %v1880 = vpop.f32.mrb[0].mxu0
        %v1881 = vadd.f32 0.0, %v1880
        %v1882 = vpop.f32.mrb[0].mxu0
        %v1883 = vadd.f32 0.0, %v1882
        %1884 = vdwg.mxu0
        %1885 = vmatprep.subr.mxu0 %v1773
        %1886 = vmatpush1.msra.mxu0 %v1772
        %1887 = vmatprep.subr.mxu0 %v1777
        %1888 = vmatpush1.msra.mxu0 %v1776
        %1889 = vmatprep.subr.mxu0 %v1781
        %1890 = vmatpush1.msra.mxu0 %v1780
        %1891 = vmatprep.subr.mxu0 %v1806
        %1892 = vmatpush1.msra.mxu0 %v1803
        %1893 = vmatprep.subr.mxu0 0.0
        %1894 = vmatpush1.msra.mxu0 0.0
        %1895 = vmatprep.subr.mxu0 0.0
        %1896 = vmatpush1.msra.mxu0 0.0
        %1897 = vmatprep.subr.mxu0 0.0
        %1898 = vmatpush1.msra.mxu0 0.0
        %1899 = vmatprep.subr.mxu0 0.0
        %1900 = vmatpush1.msra.mxu0 0.0
        %1901 = vmatprep.subr.mxu0 0.0
        %1902 = vmatpush1.msra.mxu0 0.0
        %1903 = vmatprep.subr.mxu0 0.0
        %1904 = vmatpush1.msra.mxu0 0.0
        %1905 = vmatprep.subr.mxu0 0.0
        %1906 = vmatpush1.msra.mxu0 0.0
        %1907 = vmatprep.subr.mxu0 0.0
        %1908 = vmatpush1.msra.mxu0 0.0
        %1909 = vmatprep.subr.mxu0 0.0
        %1910 = vmatpush1.msra.mxu0 0.0
        %1911 = vmatprep.subr.mxu0 0.0
        %1912 = vmatpush1.msra.mxu0 0.0
        %1913 = vmatprep.subr.mxu0 0.0
        %1914 = vmatpush1.msra.mxu0 0.0
        %1915 = vmatprep.subr.mxu0 0.0
        %1916 = vmatpush1.msra.mxu0 0.0
        %1917 = vmatprep.subr.mxu0 0.0
        %1918 = vmatpush1.msra.mxu0 0.0
        %1919 = vmatprep.subr.mxu0 0.0
        %1920 = vmatpush1.msra.mxu0 0.0
        %1921 = vmatprep.subr.mxu0 0.0
        %1922 = vmatpush1.msra.mxu0 0.0
        %1923 = vmatprep.subr.mxu0 0.0
        %1924 = vmatpush1.msra.mxu0 0.0
        %1925 = vmatprep.subr.mxu0 0.0
        %1926 = vmatpush1.msra.mxu0 0.0
        %1927 = vmatprep.subr.mxu0 0.0
        %1928 = vmatpush1.msra.mxu0 0.0
        %1929 = vmatprep.subr.mxu0 0.0
        %1930 = vmatpush1.msra.mxu0 0.0
        %1931 = vmatprep.subr.mxu0 0.0
        %1932 = vmatpush1.msra.mxu0 0.0
        %1933 = vmatprep.subr.mxu0 0.0
        %1934 = vmatpush1.msra.mxu0 0.0
        %1935 = vmatprep.subr.mxu0 0.0
        %1936 = vmatpush1.msra.mxu0 0.0
        %1937 = vmatprep.subr.mxu0 0.0
        %1938 = vmatpush1.msra.mxu0 0.0
        %1939 = vmatprep.subr.mxu0 0.0
        %1940 = vmatpush1.msra.mxu0 0.0
        %1941 = vmatprep.subr.mxu0 0.0
        %1942 = vmatpush1.msra.mxu0 0.0
        %1943 = vmatprep.subr.mxu0 0.0
        %1944 = vmatpush1.msra.mxu0 0.0
        %1945 = vmatprep.subr.mxu0 0.0
        %1946 = vmatpush1.msra.mxu0 0.0
        %1947 = vmatprep.subr.mxu0 0.0
        %1948 = vmatpush1.msra.mxu0 0.0
        %1949 = vmatprep.mubr.f32.mxu0 0.0
        %1950 = vmatmul.mubr.f32.gmra.mrb[0].mxu0 %v1790
        %v1951 = vpop.f32.mrb[0].mxu0
        %v1952 = vadd.f32 0.0, %v1951
        %v1953 = vpop.f32.mrb[0].mxu0
        %v1954 = vadd.f32 0.0, %v1953
        %1955 = vmatprep.mubr.f32.mxu0 0.0
        %1956 = vmatmul.mubr.f32.gmra.mrb[0].mxu0 %v1793
        %v1957 = vpop.f32.mrb[0].mxu0
        %v1958 = vadd.f32 0.0, %v1957
        %v1959 = vpop.f32.mrb[0].mxu0
        %v1960 = vadd.f32 0.0, %v1959
        %1961 = vdwg.mxu0
        %v1962 = vld [vmem:[#allocation12] sm:$0xff]
        %v1963 = vld [vmem:[#allocation12 + $0x8] sm:$0x3f]
        %v1965 = vsel %vm1788, %v1962, 0
        %v1968 = vsel %vm1788, %v1963, 0
        %1970 = vmatprep.subr.mxu0 %v1771
        %1971 = vmatpush1.msra.mxu0 %v1770
        %1972 = vmatprep.subr.mxu0 %v1775
        %1973 = vmatpush1.msra.mxu0 %v1774
        %1974 = vmatprep.subr.mxu0 %v1779
        %1975 = vmatpush1.msra.mxu0 %v1778
        %1976 = vmatprep.subr.mxu0 %v1800
        %1977 = vmatpush1.msra.mxu0 %v1797
        %1978 = vmatprep.subr.mxu0 0.0
        %1979 = vmatpush1.msra.mxu0 0.0
        %1980 = vmatprep.subr.mxu0 0.0
        %1981 = vmatpush1.msra.mxu0 0.0
        %1982 = vmatprep.subr.mxu0 0.0
        %1983 = vmatpush1.msra.mxu0 0.0
        %1984 = vmatprep.subr.mxu0 0.0
        %1985 = vmatpush1.msra.mxu0 0.0
        %1986 = vmatprep.subr.mxu0 0.0
        %1987 = vmatpush1.msra.mxu0 0.0
        %1988 = vmatprep.subr.mxu0 0.0
        %1989 = vmatpush1.msra.mxu0 0.0
        %1990 = vmatprep.subr.mxu0 0.0
        %1991 = vmatpush1.msra.mxu0 0.0
        %1992 = vmatprep.subr.mxu0 0.0
        %1993 = vmatpush1.msra.mxu0 0.0
        %1994 = vmatprep.subr.mxu0 0.0
        %1995 = vmatpush1.msra.mxu0 0.0
        %1996 = vmatprep.subr.mxu0 0.0
        %1997 = vmatpush1.msra.mxu0 0.0
        %1998 = vmatprep.subr.mxu0 0.0
        %1999 = vmatpush1.msra.mxu0 0.0
        %2000 = vmatprep.subr.mxu0 0.0
        %2001 = vmatpush1.msra.mxu0 0.0
        %2002 = vmatprep.subr.mxu0 0.0
        %2003 = vmatpush1.msra.mxu0 0.0
        %2004 = vmatprep.subr.mxu0 0.0
        %2005 = vmatpush1.msra.mxu0 0.0
        %2006 = vmatprep.subr.mxu0 0.0
        %2007 = vmatpush1.msra.mxu0 0.0
        %2008 = vmatprep.subr.mxu0 0.0
        %2009 = vmatpush1.msra.mxu0 0.0
        %2010 = vmatprep.subr.mxu0 0.0
        %2011 = vmatpush1.msra.mxu0 0.0
        %2012 = vmatprep.subr.mxu0 0.0
        %2013 = vmatpush1.msra.mxu0 0.0
        %2014 = vmatprep.subr.mxu0 0.0
        %2015 = vmatpush1.msra.mxu0 0.0
        %2016 = vmatprep.subr.mxu0 0.0
        %2017 = vmatpush1.msra.mxu0 0.0
        %2018 = vmatprep.subr.mxu0 0.0
        %2019 = vmatpush1.msra.mxu0 0.0
        %2020 = vmatprep.subr.mxu0 0.0
        %2021 = vmatpush1.msra.mxu0 0.0
        %2022 = vmatprep.subr.mxu0 0.0
        %2023 = vmatpush1.msra.mxu0 0.0
        %2024 = vmatprep.subr.mxu0 0.0
        %2025 = vmatpush1.msra.mxu0 0.0
        %2026 = vmatprep.subr.mxu0 0.0
        %2027 = vmatpush1.msra.mxu0 0.0
        %2028 = vmatprep.subr.mxu0 0.0
        %2029 = vmatpush1.msra.mxu0 0.0
        %2030 = vmatprep.subr.mxu0 0.0
        %2031 = vmatpush1.msra.mxu0 0.0
        %2032 = vmatprep.subr.mxu0 0.0
        %2033 = vmatpush1.msra.mxu0 0.0
        %2034 = vmatprep.mubr.f32.mxu0 0.0
        %2035 = vmatmul.mubr.f32.gmra.mrb[0].mxu0 %v1965
        %v2036 = vpop.f32.mrb[0].mxu0
        %v2037 = vadd.f32 0.0, %v2036
        %v2038 = vpop.f32.mrb[0].mxu0
        %v2039 = vadd.f32 0.0, %v2038
        %2040 = vmatprep.mubr.f32.mxu0 0.0
        %2041 = vmatmul.mubr.f32.gmra.mrb[0].mxu0 %v1968
        %v2042 = vpop.f32.mrb[0].mxu0
        %v2043 = vadd.f32 0.0, %v2042
        %v2044 = vpop.f32.mrb[0].mxu0
        %v2045 = vadd.f32 0.0, %v2044
        %2046 = vdwg.mxu0
        %2047 = vmatprep.subr.mxu0 %v1773
        %2048 = vmatpush1.msra.mxu0 %v1772
        %2049 = vmatprep.subr.mxu0 %v1777
        %2050 = vmatpush1.msra.mxu0 %v1776
        %2051 = vmatprep.subr.mxu0 %v1781
        %2052 = vmatpush1.msra.mxu0 %v1780
        %2053 = vmatprep.subr.mxu0 %v1806
        %2054 = vmatpush1.msra.mxu0 %v1803
        %2055 = vmatprep.subr.mxu0 0.0
        %2056 = vmatpush1.msra.mxu0 0.0
        %2057 = vmatprep.subr.mxu0 0.0
        %2058 = vmatpush1.msra.mxu0 0.0
        %2059 = vmatprep.subr.mxu0 0.0
        %2060 = vmatpush1.msra.mxu0 0.0
        %2061 = vmatprep.subr.mxu0 0.0
        %2062 = vmatpush1.msra.mxu0 0.0
        %2063 = vmatprep.subr.mxu0 0.0
        %2064 = vmatpush1.msra.mxu0 0.0
        %2065 = vmatprep.subr.mxu0 0.0
        %2066 = vmatpush1.msra.mxu0 0.0
        %2067 = vmatprep.subr.mxu0 0.0
        %2068 = vmatpush1.msra.mxu0 0.0
        %2069 = vmatprep.subr.mxu0 0.0
        %2070 = vmatpush1.msra.mxu0 0.0
        %2071 = vmatprep.subr.mxu0 0.0
        %2072 = vmatpush1.msra.mxu0 0.0
        %2073 = vmatprep.subr.mxu0 0.0
        %2074 = vmatpush1.msra.mxu0 0.0
        %2075 = vmatprep.subr.mxu0 0.0
        %2076 = vmatpush1.msra.mxu0 0.0
        %2077 = vmatprep.subr.mxu0 0.0
        %2078 = vmatpush1.msra.mxu0 0.0
        %2079 = vmatprep.subr.mxu0 0.0
        %2080 = vmatpush1.msra.mxu0 0.0
        %2081 = vmatprep.subr.mxu0 0.0
        %2082 = vmatpush1.msra.mxu0 0.0
        %2083 = vmatprep.subr.mxu0 0.0
        %2084 = vmatpush1.msra.mxu0 0.0
        %2085 = vmatprep.subr.mxu0 0.0
        %2086 = vmatpush1.msra.mxu0 0.0
        %2087 = vmatprep.subr.mxu0 0.0
        %2088 = vmatpush1.msra.mxu0 0.0
        %2089 = vmatprep.subr.mxu0 0.0
        %2090 = vmatpush1.msra.mxu0 0.0
        %2091 = vmatprep.subr.mxu0 0.0
        %2092 = vmatpush1.msra.mxu0 0.0
        %2093 = vmatprep.subr.mxu0 0.0
        %2094 = vmatpush1.msra.mxu0 0.0
        %2095 = vmatprep.subr.mxu0 0.0
        %2096 = vmatpush1.msra.mxu0 0.0
        %2097 = vmatprep.subr.mxu0 0.0
        %2098 = vmatpush1.msra.mxu0 0.0
        %2099 = vmatprep.subr.mxu0 0.0
        %2100 = vmatpush1.msra.mxu0 0.0
        %2101 = vmatprep.subr.mxu0 0.0
        %2102 = vmatpush1.msra.mxu0 0.0
        %2103 = vmatprep.subr.mxu0 0.0
        %2104 = vmatpush1.msra.mxu0 0.0
        %2105 = vmatprep.subr.mxu0 0.0
        %2106 = vmatpush1.msra.mxu0 0.0
        %2107 = vmatprep.subr.mxu0 0.0
        %2108 = vmatpush1.msra.mxu0 0.0
        %2109 = vmatprep.subr.mxu0 0.0
        %2110 = vmatpush1.msra.mxu0 0.0
        %2111 = vmatprep.mubr.f32.mxu0 0.0
        %2112 = vmatmul.mubr.f32.gmra.mrb[0].mxu0 %v1965
        %v2113 = vpop.f32.mrb[0].mxu0
        %v2114 = vadd.f32 0.0, %v2113
        %v2115 = vpop.f32.mrb[0].mxu0
        %v2116 = vadd.f32 0.0, %v2115
        %2117 = vmatprep.mubr.f32.mxu0 0.0
        %2118 = vmatmul.mubr.f32.gmra.mrb[0].mxu0 %v1968
        %v2119 = vpop.f32.mrb[0].mxu0
        %v2120 = vadd.f32 0.0, %v2119
        %v2121 = vpop.f32.mrb[0].mxu0
        %v2122 = vadd.f32 0.0, %v2121
        %2123 = vdwg.mxu0
        %v2124 = vmax.f32 %v1875, %v2037
        %v2125 = vmax.f32 %v1877, %v2039
        %v2126 = vmax.f32 %v1952, %v2114
        %v2127 = vmax.f32 %v1954, %v2116
        %v2128 = vmax.f32 %v1881, %v2043
        %v2129 = vmax.f32 %v1883, %v2045
        %v2130 = vmax.f32 %v1958, %v2120
        %v2131 = vmax.f32 %v1960, %v2122
        %v2132 = vld [vmem:[#allocation13] sm:$0xff]
        %v2133 = vld [vmem:[#allocation13 + $0x8] sm:$0xff]
        %v2134 = vld [vmem:[#allocation13 + $0x10] sm:$0xff]
        %v2135 = vld [vmem:[#allocation13 + $0x18] sm:$0xff]
        %v2136 = vld [vmem:[#allocation13 + $0x20] sm:$0xff]
        %v2137 = vld [vmem:[#allocation13 + $0x28] sm:$0xff]
        %v2138 = vld [vmem:[#allocation13 + $0x30] sm:$0xff]
        %v2139 = vld [vmem:[#allocation13 + $0x38] sm:$0xff]
        %v2140 = vld [vmem:[#allocation13 + $0x40] sm:$0xff]
        %v2141 = vld [vmem:[#allocation13 + $0x48] sm:$0xff]
        %v2142 = vld [vmem:[#allocation13 + $0x50] sm:$0xff]
        %v2143 = vld [vmem:[#allocation13 + $0x58] sm:$0xff]
        %v2144 = vld [vmem:[#allocation13 + $0x60] sm:$0xff]
        %v2145 = vld [vmem:[#allocation13 + $0x68] sm:$0xff]
        %v2146 = vld [vmem:[#allocation13 + $0x70] sm:$0xff]
        %v2147 = vld [vmem:[#allocation13 + $0x78] sm:$0xff]
        %v2148 = vld [vmem:[#allocation13 + $0x80] sm:$0xff]
        %v2149 = vld [vmem:[#allocation13 + $0x88] sm:$0xff]
        %v2150 = vld [vmem:[#allocation13 + $0x90] sm:$0xff]
        %v2151 = vld [vmem:[#allocation13 + $0x98] sm:$0xff]
        %v2152 = vld [vmem:[#allocation13 + $0xa0] sm:$0xff]
        %v2153 = vld [vmem:[#allocation13 + $0xa8] sm:$0xff]
        %v2154 = vld [vmem:[#allocation13 + $0xb0] sm:$0xff]
        %v2155 = vld [vmem:[#allocation13 + $0xb8] sm:$0xff]
        %v2156 = vld [vmem:[#allocation13 + $0xc0] sm:$0xff]
        %v2157 = vld [vmem:[#allocation13 + $0xc8] sm:$0xff]
        %v2158 = vld [vmem:[#allocation13 + $0xd0] sm:$0xff]
        %v2159 = vld [vmem:[#allocation13 + $0xd8] sm:$0xff]
        %v2160 = vld [vmem:[#allocation13 + $0xe0] sm:$0xff]
        %v2161 = vld [vmem:[#allocation13 + $0xe8] sm:$0xff]
        %v2162 = vld [vmem:[#allocation13 + $0xf0] sm:$0xff]
        %v2163 = vld [vmem:[#allocation13 + $0xf8] sm:$0xff]
        %v2164 = vld [vmem:[#allocation13 + $0x100] sm:$0xff]
        %v2165 = vld [vmem:[#allocation13 + $0x108] sm:$0xff]
        %v2166 = vld [vmem:[#allocation13 + $0x110] sm:$0xff]
        %v2167 = vld [vmem:[#allocation13 + $0x118] sm:$0xff]
        %v2168 = vld [vmem:[#allocation13 + $0x120] sm:$0xff]
        %v2169 = vld [vmem:[#allocation13 + $0x128] sm:$0xff]
        %v2170 = vld [vmem:[#allocation13 + $0x130] sm:$0xff]
        %v2171 = vld [vmem:[#allocation13 + $0x138] sm:$0xff]
        %v2172 = vld [vmem:[#allocation13 + $0x140] sm:$0xff]
        %v2173 = vld [vmem:[#allocation13 + $0x148] sm:$0xff]
        %v2174 = vld [vmem:[#allocation13 + $0x150] sm:$0xff]
        %v2175 = vld [vmem:[#allocation13 + $0x158] sm:$0xff]
        %v2176 = vld [vmem:[#allocation13 + $0x160] sm:$0xff]
        %v2177 = vld [vmem:[#allocation13 + $0x168] sm:$0xff]
        %v2178 = vld [vmem:[#allocation13 + $0x170] sm:$0xff]
        %v2179 = vld [vmem:[#allocation13 + $0x178] sm:$0xff]
        %v2180 = vld [vmem:[#allocation13 + $0x180] sm:$0xff]
        %v2181 = vld [vmem:[#allocation13 + $0x188] sm:$0xff]
        %v2182 = vld [vmem:[#allocation13 + $0x190] sm:$0xff]
        %v2183 = vld [vmem:[#allocation13 + $0x198] sm:$0xff]
        %v2184 = vld [vmem:[#allocation13 + $0x1a0] sm:$0xff]
        %v2185 = vld [vmem:[#allocation13 + $0x1a8] sm:$0xff]
        %v2186 = vld [vmem:[#allocation13 + $0x1b0] sm:$0xff]
        %v2187 = vld [vmem:[#allocation13 + $0x1b8] sm:$0xff]
        %v2188 = vld [vmem:[#allocation13 + $0x1c0] sm:$0xff]
        %v2189 = vld [vmem:[#allocation13 + $0x1c8] sm:$0xff]
        %v2190 = vld [vmem:[#allocation13 + $0x1d0] sm:$0xff]
        %v2191 = vld [vmem:[#allocation13 + $0x1d8] sm:$0xff]
        %v2192 = vld [vmem:[#allocation13 + $0x1e0] sm:$0xff]
        %v2193 = vld [vmem:[#allocation13 + $0x1e8] sm:$0xff]
        %v2194 = vld [vmem:[#allocation13 + $0x1f0] sm:$0xff]
        %v2195 = vld [vmem:[#allocation13 + $0x1f8] sm:$0xff]
        %v2196 = vld [vmem:[#allocation13 + $0x200] sm:$0xff]
        %v2197 = vld [vmem:[#allocation13 + $0x208] sm:$0xff]
        %v2198 = vld [vmem:[#allocation13 + $0x210] sm:$0xff]
        %v2199 = vld [vmem:[#allocation13 + $0x218] sm:$0xff]
        %v2200 = vld [vmem:[#allocation13 + $0x220] sm:$0xff]
        %v2201 = vld [vmem:[#allocation13 + $0x228] sm:$0xff]
        %v2202 = vld [vmem:[#allocation13 + $0x230] sm:$0xff]
        %v2203 = vld [vmem:[#allocation13 + $0x238] sm:$0xff]
        %v2204 = vld [vmem:[#allocation13 + $0x240] sm:$0xff]
        %v2205 = vld [vmem:[#allocation13 + $0x248] sm:$0xff]
        %v2206 = vld [vmem:[#allocation13 + $0x250] sm:$0xff]
        %v2207 = vld [vmem:[#allocation13 + $0x258] sm:$0xff]
        %v2208 = vld [vmem:[#allocation13 + $0x260] sm:$0xff]
        %v2209 = vld [vmem:[#allocation13 + $0x268] sm:$0xff]
        %v2210 = vld [vmem:[#allocation13 + $0x270] sm:$0xff]
        %v2211 = vld [vmem:[#allocation13 + $0x278] sm:$0xff]
        %v2212 = vld [vmem:[#allocation13 + $0x280] sm:$0xff]
        %v2213 = vld [vmem:[#allocation13 + $0x288] sm:$0xff]
        %v2214 = vld [vmem:[#allocation13 + $0x290] sm:$0xff]
        %v2215 = vld [vmem:[#allocation13 + $0x298] sm:$0xff]
        %v2216 = vld [vmem:[#allocation13 + $0x2a0] sm:$0xff]
        %v2217 = vld [vmem:[#allocation13 + $0x2a8] sm:$0xff]
        %v2218 = vld [vmem:[#allocation13 + $0x2b0] sm:$0xff]
        %v2219 = vld [vmem:[#allocation13 + $0x2b8] sm:$0xff]
        %v2220 = vld [vmem:[#allocation13 + $0x2c0] sm:$0xff]
        %v2221 = vld [vmem:[#allocation13 + $0x2c8] sm:$0xff]
        %v2222 = vld [vmem:[#allocation13 + $0x2d0] sm:$0xff]
        %v2223 = vld [vmem:[#allocation13 + $0x2d8] sm:$0xff]
        %v2224 = vld [vmem:[#allocation13 + $0x2e0] sm:$0xff]
        %v2225 = vld [vmem:[#allocation13 + $0x2e8] sm:$0xff]
        %v2226 = vld [vmem:[#allocation13 + $0x2f0] sm:$0xff]
        %v2227 = vld [vmem:[#allocation13 + $0x2f8] sm:$0xff]
        %v2228 = vld [vmem:[#allocation13 + $0x300] sm:$0xff]
        %v2229 = vld [vmem:[#allocation13 + $0x308] sm:$0xff]
        %v2230 = vld [vmem:[#allocation13 + $0x310] sm:$0xff]
        %v2231 = vld [vmem:[#allocation13 + $0x318] sm:$0xff]
        %v2232 = vld [vmem:[#allocation13 + $0x320] sm:$0xff]
        %v2233 = vld [vmem:[#allocation13 + $0x328] sm:$0xff]
        %v2234 = vld [vmem:[#allocation13 + $0x330] sm:$0xff]
        %v2235 = vld [vmem:[#allocation13 + $0x338] sm:$0xff]
        %v2236 = vld [vmem:[#allocation13 + $0x340] sm:$0xff]
        %v2237 = vld [vmem:[#allocation13 + $0x348] sm:$0xff]
        %v2238 = vld [vmem:[#allocation13 + $0x350] sm:$0xff]
        %v2239 = vld [vmem:[#allocation13 + $0x358] sm:$0xff]
        %v2240 = vld [vmem:[#allocation13 + $0x360] sm:$0xff]
        %v2241 = vld [vmem:[#allocation13 + $0x368] sm:$0xff]
        %v2242 = vld [vmem:[#allocation13 + $0x370] sm:$0xff]
        %v2243 = vld [vmem:[#allocation13 + $0x378] sm:$0xff]
        %vm2244 = vcmask 523264
        %v2246 = vsel %vm2244, %v2127, 0
        %v2249 = vsel %vm2244, %v2131, 0
        %2251 = vmatprep.subr.mxu0 %v2133
        %2252 = vmatpush1.msra.mxu0 %v2132
        %2253 = vmatprep.subr.mxu0 %v2135
        %2254 = vmatpush1.msra.mxu0 %v2134
        %2255 = vmatprep.subr.mxu0 %v2137
        %2256 = vmatpush1.msra.mxu0 %v2136
        %2257 = vmatprep.subr.mxu0 %v2139
        %2258 = vmatpush1.msra.mxu0 %v2138
        %2259 = vmatprep.subr.mxu0 %v2141
        %2260 = vmatpush1.msra.mxu0 %v2140
        %2261 = vmatprep.subr.mxu0 %v2143
        %2262 = vmatpush1.msra.mxu0 %v2142
        %2263 = vmatprep.subr.mxu0 %v2145
        %2264 = vmatpush1.msra.mxu0 %v2144
        %2265 = vmatprep.subr.mxu0 %v2147
        %2266 = vmatpush1.msra.mxu0 %v2146
        %2267 = vmatprep.subr.mxu0 %v2149
        %2268 = vmatpush1.msra.mxu0 %v2148
        %2269 = vmatprep.subr.mxu0 %v2151
        %2270 = vmatpush1.msra.mxu0 %v2150
        %2271 = vmatprep.subr.mxu0 %v2153
        %2272 = vmatpush1.msra.mxu0 %v2152
        %2273 = vmatprep.subr.mxu0 %v2155
        %2274 = vmatpush1.msra.mxu0 %v2154
        %2275 = vmatprep.subr.mxu0 %v2157
        %2276 = vmatpush1.msra.mxu0 %v2156
        %2277 = vmatprep.subr.mxu0 %v2159
        %2278 = vmatpush1.msra.mxu0 %v2158
        %2279 = vmatprep.subr.mxu0 %v2161
        %2280 = vmatpush1.msra.mxu0 %v2160
        %2281 = vmatprep.subr.mxu0 %v2163
        %2282 = vmatpush1.msra.mxu0 %v2162
        %2283 = vmatprep.subr.mxu0 %v2165
        %2284 = vmatpush1.msra.mxu0 %v2164
        %2285 = vmatprep.subr.mxu0 %v2167
        %2286 = vmatpush1.msra.mxu0 %v2166
        %2287 = vmatprep.subr.mxu0 %v2169
        %2288 = vmatpush1.msra.mxu0 %v2168
        %2289 = vmatprep.subr.mxu0 %v2171
        %2290 = vmatpush1.msra.mxu0 %v2170
        %2291 = vmatprep.subr.mxu0 %v2173
        %2292 = vmatpush1.msra.mxu0 %v2172
        %2293 = vmatprep.subr.mxu0 %v2175
        %2294 = vmatpush1.msra.mxu0 %v2174
        %2295 = vmatprep.subr.mxu0 %v2177
        %2296 = vmatpush1.msra.mxu0 %v2176
        %2297 = vmatprep.subr.mxu0 %v2179
        %2298 = vmatpush1.msra.mxu0 %v2178
        %2299 = vmatprep.subr.mxu0 %v2181
        %2300 = vmatpush1.msra.mxu0 %v2180
        %2301 = vmatprep.subr.mxu0 %v2183
        %2302 = vmatpush1.msra.mxu0 %v2182
        %2303 = vmatprep.subr.mxu0 %v2185
        %2304 = vmatpush1.msra.mxu0 %v2184
        %2305 = vmatprep.subr.mxu0 %v2187
        %2306 = vmatpush1.msra.mxu0 %v2186
        %2307 = vmatprep.subr.mxu0 %v2189
        %2308 = vmatpush1.msra.mxu0 %v2188
        %2309 = vmatprep.subr.mxu0 %v2191
        %2310 = vmatpush1.msra.mxu0 %v2190
        %2311 = vmatprep.subr.mxu0 %v2193
        %2312 = vmatpush1.msra.mxu0 %v2192
        %2313 = vmatprep.subr.mxu0 %v2195
        %2314 = vmatpush1.msra.mxu0 %v2194
        %2315 = vmatprep.mubr.f32.mxu0 %v2125
        %2316 = vmatmul.mubr.f32.gmra.mrb[0].mxu0 %v2124
        %v2317 = vpop.f32.mrb[0].mxu0
        %v2318 = vadd.f32 0.0, %v2317
        %v2319 = vpop.f32.mrb[0].mxu0
        %v2320 = vadd.f32 0.0, %v2319
        %2321 = vmatprep.mubr.f32.mxu0 %v2129
        %2322 = vmatmul.mubr.f32.gmra.mrb[0].mxu0 %v2128
        %v2323 = vpop.f32.mrb[0].mxu0
        %v2324 = vadd.f32 0.0, %v2323
        %v2325 = vpop.f32.mrb[0].mxu0
        %v2326 = vadd.f32 0.0, %v2325
        %2327 = vdwg.mxu0
        %2328 = vmatprep.subr.mxu0 %v2197
        %2329 = vmatpush1.msra.mxu0 %v2196
        %2330 = vmatprep.subr.mxu0 %v2199
        %2331 = vmatpush1.msra.mxu0 %v2198
        %2332 = vmatprep.subr.mxu0 %v2201
        %2333 = vmatpush1.msra.mxu0 %v2200
        %2334 = vmatprep.subr.mxu0 %v2203
        %2335 = vmatpush1.msra.mxu0 %v2202
        %2336 = vmatprep.subr.mxu0 %v2205
        %2337 = vmatpush1.msra.mxu0 %v2204
        %2338 = vmatprep.subr.mxu0 %v2207
        %2339 = vmatpush1.msra.mxu0 %v2206
        %2340 = vmatprep.subr.mxu0 %v2209
        %2341 = vmatpush1.msra.mxu0 %v2208
        %2342 = vmatprep.subr.mxu0 %v2211
        %2343 = vmatpush1.msra.mxu0 %v2210
        %2344 = vmatprep.subr.mxu0 %v2213
        %2345 = vmatpush1.msra.mxu0 %v2212
        %2346 = vmatprep.subr.mxu0 %v2215
        %2347 = vmatpush1.msra.mxu0 %v2214
        %2348 = vmatprep.subr.mxu0 %v2217
        %2349 = vmatpush1.msra.mxu0 %v2216
        %2350 = vmatprep.subr.mxu0 %v2219
        %2351 = vmatpush1.msra.mxu0 %v2218
        %2352 = vmatprep.subr.mxu0 %v2221
        %2353 = vmatpush1.msra.mxu0 %v2220
        %2354 = vmatprep.subr.mxu0 %v2223
        %2355 = vmatpush1.msra.mxu0 %v2222
        %2356 = vmatprep.subr.mxu0 %v2225
        %2357 = vmatpush1.msra.mxu0 %v2224
        %2358 = vmatprep.subr.mxu0 %v2227
        %2359 = vmatpush1.msra.mxu0 %v2226
        %2360 = vmatprep.subr.mxu0 %v2229
        %2361 = vmatpush1.msra.mxu0 %v2228
        %2362 = vmatprep.subr.mxu0 %v2231
        %2363 = vmatpush1.msra.mxu0 %v2230
        %2364 = vmatprep.subr.mxu0 %v2233
        %2365 = vmatpush1.msra.mxu0 %v2232
        %2366 = vmatprep.subr.mxu0 %v2235
        %2367 = vmatpush1.msra.mxu0 %v2234
        %2368 = vmatprep.subr.mxu0 %v2237
        %2369 = vmatpush1.msra.mxu0 %v2236
        %2370 = vmatprep.subr.mxu0 %v2239
        %2371 = vmatpush1.msra.mxu0 %v2238
        %2372 = vmatprep.subr.mxu0 %v2241
        %2373 = vmatpush1.msra.mxu0 %v2240
        %2374 = vmatprep.subr.mxu0 %v2243
        %2375 = vmatpush1.msra.mxu0 %v2242
        %2376 = vmatprep.subr.mxu0 0.0
        %2377 = vmatpush1.msra.mxu0 0.0
        %2378 = vmatprep.subr.mxu0 0.0
        %2379 = vmatpush1.msra.mxu0 0.0
        %2380 = vmatprep.subr.mxu0 0.0
        %2381 = vmatpush1.msra.mxu0 0.0
        %2382 = vmatprep.subr.mxu0 0.0
        %2383 = vmatpush1.msra.mxu0 0.0
        %2384 = vmatprep.subr.mxu0 0.0
        %2385 = vmatpush1.msra.mxu0 0.0
        %2386 = vmatprep.subr.mxu0 0.0
        %2387 = vmatpush1.msra.mxu0 0.0
        %2388 = vmatprep.subr.mxu0 0.0
        %2389 = vmatpush1.msra.mxu0 0.0
        %2390 = vmatprep.subr.mxu0 0.0
        %2391 = vmatpush1.msra.mxu0 0.0
        %2392 = vmatprep.mubr.f32.mxu0 %v2246
        %2393 = vmatmul.mubr.f32.gmra.mrb[0].mxu0 %v2126
        %v2394 = vpop.f32.mrb[0].mxu0
        %v2395 = vadd.f32 %v2318, %v2394
        %v2396 = vpop.f32.mrb[0].mxu0
        %v2397 = vadd.f32 %v2320, %v2396
        %2398 = vmatprep.mubr.f32.mxu0 %v2249
        %2399 = vmatmul.mubr.f32.gmra.mrb[0].mxu0 %v2130
        %v2400 = vpop.f32.mrb[0].mxu0
        %v2401 = vadd.f32 %v2324, %v2400
        %v2402 = vpop.f32.mrb[0].mxu0
        %v2403 = vadd.f32 %v2326, %v2402
        %2404 = vdwg.mxu0
        %v2405 = vld [vmem:[#allocation15] sm:$0xff]
        %v2406 = vld [vmem:[#allocation15 + $0x8] sm:$0xff]
        %v2407 = vld [vmem:[#allocation15 + $0x10] sm:$0xff]
        %v2408 = vld [vmem:[#allocation15 + $0x18] sm:$0xff]
        %v2409 = vld [vmem:[#allocation15 + $0x20] sm:$0xff]
        %v2410 = vld [vmem:[#allocation15 + $0x28] sm:$0xff]
        %v2411 = vld [vmem:[#allocation15 + $0x30] sm:$0xff]
        %v2412 = vld [vmem:[#allocation15 + $0x38] sm:$0xff]
        %v2413 = vld [vmem:[#allocation15 + $0x40] sm:$0xff]
        %v2414 = vld [vmem:[#allocation15 + $0x48] sm:$0xff]
        %v2415 = vld [vmem:[#allocation15 + $0x50] sm:$0xff]
        %v2416 = vld [vmem:[#allocation15 + $0x58] sm:$0xff]
        %v2417 = vld [vmem:[#allocation15 + $0x60] sm:$0xff]
        %v2418 = vld [vmem:[#allocation15 + $0x68] sm:$0xff]
        %v2419 = vld [vmem:[#allocation15 + $0x70] sm:$0xff]
        %v2420 = vld [vmem:[#allocation15 + $0x78] sm:$0xff]
        %v2421 = vld [vmem:[#allocation15 + $0x80] sm:$0xff]
        %v2422 = vld [vmem:[#allocation15 + $0x88] sm:$0xff]
        %v2423 = vld [vmem:[#allocation15 + $0x90] sm:$0xff]
        %v2424 = vld [vmem:[#allocation15 + $0x98] sm:$0xff]
        %v2425 = vld [vmem:[#allocation15 + $0xa0] sm:$0xff]
        %v2426 = vld [vmem:[#allocation15 + $0xa8] sm:$0xff]
        %v2427 = vld [vmem:[#allocation15 + $0xb0] sm:$0xff]
        %v2428 = vld [vmem:[#allocation15 + $0xb8] sm:$0xff]
        %v2429 = vld [vmem:[#allocation15 + $0xc0] sm:$0xff]
        %v2430 = vld [vmem:[#allocation15 + $0xc8] sm:$0xff]
        %v2431 = vld [vmem:[#allocation15 + $0xd0] sm:$0xff]
        %v2432 = vld [vmem:[#allocation15 + $0xd8] sm:$0xff]
        %v2433 = vld [vmem:[#allocation15 + $0xe0] sm:$0xff]
        %v2434 = vld [vmem:[#allocation15 + $0xe8] sm:$0xff]
        %v2435 = vld [vmem:[#allocation15 + $0xf0] sm:$0xff]
        %v2436 = vld [vmem:[#allocation15 + $0xf8] sm:$0xff]
        %v2437 = vld [vmem:[#allocation15 + $0x100] sm:$0xff]
        %v2438 = vld [vmem:[#allocation15 + $0x108] sm:$0xff]
        %v2439 = vld [vmem:[#allocation15 + $0x110] sm:$0xff]
        %v2440 = vld [vmem:[#allocation15 + $0x118] sm:$0xff]
        %v2441 = vld [vmem:[#allocation15 + $0x120] sm:$0xff]
        %v2442 = vld [vmem:[#allocation15 + $0x128] sm:$0xff]
        %v2443 = vld [vmem:[#allocation15 + $0x130] sm:$0xff]
        %v2444 = vld [vmem:[#allocation15 + $0x138] sm:$0xff]
        %v2445 = vld [vmem:[#allocation15 + $0x140] sm:$0xff]
        %v2446 = vld [vmem:[#allocation15 + $0x148] sm:$0xff]
        %v2447 = vld [vmem:[#allocation15 + $0x150] sm:$0xff]
        %v2448 = vld [vmem:[#allocation15 + $0x158] sm:$0xff]
        %v2449 = vld [vmem:[#allocation15 + $0x160] sm:$0xff]
        %v2450 = vld [vmem:[#allocation15 + $0x168] sm:$0xff]
        %v2451 = vld [vmem:[#allocation15 + $0x170] sm:$0xff]
        %v2452 = vld [vmem:[#allocation15 + $0x178] sm:$0xff]
        %v2453 = vld [vmem:[#allocation15 + $0x180] sm:$0xff]
        %v2454 = vld [vmem:[#allocation15 + $0x188] sm:$0xff]
        %v2455 = vld [vmem:[#allocation15 + $0x190] sm:$0xff]
        %v2456 = vld [vmem:[#allocation15 + $0x198] sm:$0xff]
        %v2457 = vld [vmem:[#allocation15 + $0x1a0] sm:$0xff]
        %v2458 = vld [vmem:[#allocation15 + $0x1a8] sm:$0xff]
        %v2459 = vld [vmem:[#allocation15 + $0x1b0] sm:$0xff]
        %v2460 = vld [vmem:[#allocation15 + $0x1b8] sm:$0xff]
        %v2461 = vld [vmem:[#allocation15 + $0x1c0] sm:$0xff]
        %v2462 = vld [vmem:[#allocation15 + $0x1c8] sm:$0xff]
        %v2463 = vld [vmem:[#allocation15 + $0x1d0] sm:$0xff]
        %v2464 = vld [vmem:[#allocation15 + $0x1d8] sm:$0xff]
        %v2465 = vld [vmem:[#allocation15 + $0x1e0] sm:$0xff]
        %v2466 = vld [vmem:[#allocation15 + $0x1e8] sm:$0xff]
        %v2467 = vld [vmem:[#allocation15 + $0x1f0] sm:$0xff]
        %v2468 = vld [vmem:[#allocation15 + $0x1f8] sm:$0xff]
        %v2469 = vld [vmem:[#allocation15 + $0x200] sm:$0xff]
        %v2470 = vld [vmem:[#allocation15 + $0x208] sm:$0xff]
        %v2471 = vld [vmem:[#allocation15 + $0x210] sm:$0xff]
        %v2472 = vld [vmem:[#allocation15 + $0x218] sm:$0xff]
        %v2473 = vld [vmem:[#allocation15 + $0x220] sm:$0xff]
        %v2474 = vld [vmem:[#allocation15 + $0x228] sm:$0xff]
        %v2475 = vld [vmem:[#allocation15 + $0x230] sm:$0xff]
        %v2476 = vld [vmem:[#allocation15 + $0x238] sm:$0xff]
        %v2477 = vld [vmem:[#allocation15 + $0x240] sm:$0xff]
        %v2478 = vld [vmem:[#allocation15 + $0x248] sm:$0xff]
        %v2479 = vld [vmem:[#allocation15 + $0x250] sm:$0xff]
        %v2480 = vld [vmem:[#allocation15 + $0x258] sm:$0xff]
        %v2481 = vld [vmem:[#allocation15 + $0x260] sm:$0xff]
        %v2482 = vld [vmem:[#allocation15 + $0x268] sm:$0xff]
        %v2483 = vld [vmem:[#allocation15 + $0x270] sm:$0xff]
        %v2484 = vld [vmem:[#allocation15 + $0x278] sm:$0xff]
        %v2485 = vld [vmem:[#allocation15 + $0x280] sm:$0xff]
        %v2486 = vld [vmem:[#allocation15 + $0x288] sm:$0xff]
        %v2487 = vld [vmem:[#allocation15 + $0x290] sm:$0xff]
        %v2488 = vld [vmem:[#allocation15 + $0x298] sm:$0xff]
        %v2489 = vld [vmem:[#allocation15 + $0x2a0] sm:$0xff]
        %v2490 = vld [vmem:[#allocation15 + $0x2a8] sm:$0xff]
        %v2491 = vld [vmem:[#allocation15 + $0x2b0] sm:$0xff]
        %v2492 = vld [vmem:[#allocation15 + $0x2b8] sm:$0xff]
        %v2493 = vld [vmem:[#allocation15 + $0x2c0] sm:$0xff]
        %v2494 = vld [vmem:[#allocation15 + $0x2c8] sm:$0xff]
        %v2495 = vld [vmem:[#allocation15 + $0x2d0] sm:$0xff]
        %v2496 = vld [vmem:[#allocation15 + $0x2d8] sm:$0xff]
        %v2497 = vld [vmem:[#allocation15 + $0x2e0] sm:$0xff]
        %v2498 = vld [vmem:[#allocation15 + $0x2e8] sm:$0xff]
        %v2499 = vld [vmem:[#allocation15 + $0x2f0] sm:$0xff]
        %v2500 = vld [vmem:[#allocation15 + $0x2f8] sm:$0xff]
        %v2501 = vld [vmem:[#allocation15 + $0x300] sm:$0xff]
        %v2502 = vld [vmem:[#allocation15 + $0x308] sm:$0xff]
        %v2503 = vld [vmem:[#allocation15 + $0x310] sm:$0xff]
        %v2504 = vld [vmem:[#allocation15 + $0x318] sm:$0xff]
        %v2505 = vld [vmem:[#allocation15 + $0x320] sm:$0xff]
        %v2506 = vld [vmem:[#allocation15 + $0x328] sm:$0xff]
        %v2507 = vld [vmem:[#allocation15 + $0x330] sm:$0xff]
        %v2508 = vld [vmem:[#allocation15 + $0x338] sm:$0xff]
        %v2509 = vld [vmem:[#allocation15 + $0x340] sm:$0xff]
        %v2510 = vld [vmem:[#allocation15 + $0x348] sm:$0xff]
        %v2511 = vld [vmem:[#allocation15 + $0x350] sm:$0xff]
        %v2512 = vld [vmem:[#allocation15 + $0x358] sm:$0xff]
        %v2513 = vld [vmem:[#allocation15 + $0x360] sm:$0xff]
        %v2514 = vld [vmem:[#allocation15 + $0x368] sm:$0xff]
        %v2515 = vld [vmem:[#allocation15 + $0x370] sm:$0xff]
        %v2516 = vld [vmem:[#allocation15 + $0x378] sm:$0xff]
        %2517 = vmatprep.subr.mxu0 %v2406
        %2518 = vmatpush1.msra.mxu0 %v2405
        %2519 = vmatprep.subr.mxu0 %v2408
        %2520 = vmatpush1.msra.mxu0 %v2407
        %2521 = vmatprep.subr.mxu0 %v2410
        %2522 = vmatpush1.msra.mxu0 %v2409
        %2523 = vmatprep.subr.mxu0 %v2412
        %2524 = vmatpush1.msra.mxu0 %v2411
        %2525 = vmatprep.subr.mxu0 %v2414
        %2526 = vmatpush1.msra.mxu0 %v2413
        %2527 = vmatprep.subr.mxu0 %v2416
        %2528 = vmatpush1.msra.mxu0 %v2415
        %2529 = vmatprep.subr.mxu0 %v2418
        %2530 = vmatpush1.msra.mxu0 %v2417
        %2531 = vmatprep.subr.mxu0 %v2420
        %2532 = vmatpush1.msra.mxu0 %v2419
        %2533 = vmatprep.subr.mxu0 %v2422
        %2534 = vmatpush1.msra.mxu0 %v2421
        %2535 = vmatprep.subr.mxu0 %v2424
        %2536 = vmatpush1.msra.mxu0 %v2423
        %2537 = vmatprep.subr.mxu0 %v2426
        %2538 = vmatpush1.msra.mxu0 %v2425
        %2539 = vmatprep.subr.mxu0 %v2428
        %2540 = vmatpush1.msra.mxu0 %v2427
        %2541 = vmatprep.subr.mxu0 %v2430
        %2542 = vmatpush1.msra.mxu0 %v2429
        %2543 = vmatprep.subr.mxu0 %v2432
        %2544 = vmatpush1.msra.mxu0 %v2431
        %2545 = vmatprep.subr.mxu0 %v2434
        %2546 = vmatpush1.msra.mxu0 %v2433
        %2547 = vmatprep.subr.mxu0 %v2436
        %2548 = vmatpush1.msra.mxu0 %v2435
        %2549 = vmatprep.subr.mxu0 %v2438
        %2550 = vmatpush1.msra.mxu0 %v2437
        %2551 = vmatprep.subr.mxu0 %v2440
        %2552 = vmatpush1.msra.mxu0 %v2439
        %2553 = vmatprep.subr.mxu0 %v2442
        %2554 = vmatpush1.msra.mxu0 %v2441
        %2555 = vmatprep.subr.mxu0 %v2444
        %2556 = vmatpush1.msra.mxu0 %v2443
        %2557 = vmatprep.subr.mxu0 %v2446
        %2558 = vmatpush1.msra.mxu0 %v2445
        %2559 = vmatprep.subr.mxu0 %v2448
        %2560 = vmatpush1.msra.mxu0 %v2447
        %2561 = vmatprep.subr.mxu0 %v2450
        %2562 = vmatpush1.msra.mxu0 %v2449
        %2563 = vmatprep.subr.mxu0 %v2452
        %2564 = vmatpush1.msra.mxu0 %v2451
        %2565 = vmatprep.subr.mxu0 %v2454
        %2566 = vmatpush1.msra.mxu0 %v2453
        %2567 = vmatprep.subr.mxu0 %v2456
        %2568 = vmatpush1.msra.mxu0 %v2455
        %2569 = vmatprep.subr.mxu0 %v2458
        %2570 = vmatpush1.msra.mxu0 %v2457
        %2571 = vmatprep.subr.mxu0 %v2460
        %2572 = vmatpush1.msra.mxu0 %v2459
        %2573 = vmatprep.subr.mxu0 %v2462
        %2574 = vmatpush1.msra.mxu0 %v2461
        %2575 = vmatprep.subr.mxu0 %v2464
        %2576 = vmatpush1.msra.mxu0 %v2463
        %2577 = vmatprep.subr.mxu0 %v2466
        %2578 = vmatpush1.msra.mxu0 %v2465
        %2579 = vmatprep.subr.mxu0 %v2468
        %2580 = vmatpush1.msra.mxu0 %v2467
        %2581 = vmatprep.mubr.f32.mxu0 %v2125
        %2582 = vmatmul.mubr.f32.gmra.mrb[0].mxu0 %v2124
        %v2583 = vpop.f32.mrb[0].mxu0
        %v2584 = vadd.f32 0.0, %v2583
        %v2585 = vpop.f32.mrb[0].mxu0
        %v2586 = vadd.f32 0.0, %v2585
        %2587 = vmatprep.mubr.f32.mxu0 %v2129
        %2588 = vmatmul.mubr.f32.gmra.mrb[0].mxu0 %v2128
        %v2589 = vpop.f32.mrb[0].mxu0
        %v2590 = vadd.f32 0.0, %v2589
        %v2591 = vpop.f32.mrb[0].mxu0
        %v2592 = vadd.f32 0.0, %v2591
        %2593 = vdwg.mxu0
        %2594 = vmatprep.subr.mxu0 %v2470
        %2595 = vmatpush1.msra.mxu0 %v2469
        %2596 = vmatprep.subr.mxu0 %v2472
        %2597 = vmatpush1.msra.mxu0 %v2471
        %2598 = vmatprep.subr.mxu0 %v2474
        %2599 = vmatpush1.msra.mxu0 %v2473
        %2600 = vmatprep.subr.mxu0 %v2476
        %2601 = vmatpush1.msra.mxu0 %v2475
        %2602 = vmatprep.subr.mxu0 %v2478
        %2603 = vmatpush1.msra.mxu0 %v2477
        %2604 = vmatprep.subr.mxu0 %v2480
        %2605 = vmatpush1.msra.mxu0 %v2479
        %2606 = vmatprep.subr.mxu0 %v2482
        %2607 = vmatpush1.msra.mxu0 %v2481
        %2608 = vmatprep.subr.mxu0 %v2484
        %2609 = vmatpush1.msra.mxu0 %v2483
        %2610 = vmatprep.subr.mxu0 %v2486
        %2611 = vmatpush1.msra.mxu0 %v2485
        %2612 = vmatprep.subr.mxu0 %v2488
        %2613 = vmatpush1.msra.mxu0 %v2487
        %2614 = vmatprep.subr.mxu0 %v2490
        %2615 = vmatpush1.msra.mxu0 %v2489
        %2616 = vmatprep.subr.mxu0 %v2492
        %2617 = vmatpush1.msra.mxu0 %v2491
        %2618 = vmatprep.subr.mxu0 %v2494
        %2619 = vmatpush1.msra.mxu0 %v2493
        %2620 = vmatprep.subr.mxu0 %v2496
        %2621 = vmatpush1.msra.mxu0 %v2495
        %2622 = vmatprep.subr.mxu0 %v2498
        %2623 = vmatpush1.msra.mxu0 %v2497
        %2624 = vmatprep.subr.mxu0 %v2500
        %2625 = vmatpush1.msra.mxu0 %v2499
        %2626 = vmatprep.subr.mxu0 %v2502
        %2627 = vmatpush1.msra.mxu0 %v2501
        %2628 = vmatprep.subr.mxu0 %v2504
        %2629 = vmatpush1.msra.mxu0 %v2503
        %2630 = vmatprep.subr.mxu0 %v2506
        %2631 = vmatpush1.msra.mxu0 %v2505
        %2632 = vmatprep.subr.mxu0 %v2508
        %2633 = vmatpush1.msra.mxu0 %v2507
        %2634 = vmatprep.subr.mxu0 %v2510
        %2635 = vmatpush1.msra.mxu0 %v2509
        %2636 = vmatprep.subr.mxu0 %v2512
        %2637 = vmatpush1.msra.mxu0 %v2511
        %2638 = vmatprep.subr.mxu0 %v2514
        %2639 = vmatpush1.msra.mxu0 %v2513
        %2640 = vmatprep.subr.mxu0 %v2516
        %2641 = vmatpush1.msra.mxu0 %v2515
        %2642 = vmatprep.subr.mxu0 0.0
        %2643 = vmatpush1.msra.mxu0 0.0
        %2644 = vmatprep.subr.mxu0 0.0
        %2645 = vmatpush1.msra.mxu0 0.0
        %2646 = vmatprep.subr.mxu0 0.0
        %2647 = vmatpush1.msra.mxu0 0.0
        %2648 = vmatprep.subr.mxu0 0.0
        %2649 = vmatpush1.msra.mxu0 0.0
        %2650 = vmatprep.subr.mxu0 0.0
        %2651 = vmatpush1.msra.mxu0 0.0
        %2652 = vmatprep.subr.mxu0 0.0
        %2653 = vmatpush1.msra.mxu0 0.0
        %2654 = vmatprep.subr.mxu0 0.0
        %2655 = vmatpush1.msra.mxu0 0.0
        %2656 = vmatprep.subr.mxu0 0.0
        %2657 = vmatpush1.msra.mxu0 0.0
        %2658 = vmatprep.mubr.f32.mxu0 %v2246
        %2659 = vmatmul.mubr.f32.gmra.mrb[0].mxu0 %v2126
        %v2660 = vpop.f32.mrb[0].mxu0
        %v2661 = vadd.f32 %v2584, %v2660
        %v2662 = vpop.f32.mrb[0].mxu0
        %v2663 = vadd.f32 %v2586, %v2662
        %2664 = vmatprep.mubr.f32.mxu0 %v2249
        %2665 = vmatmul.mubr.f32.gmra.mrb[0].mxu0 %v2130
        %v2666 = vpop.f32.mrb[0].mxu0
        %v2667 = vadd.f32 %v2590, %v2666
        %v2668 = vpop.f32.mrb[0].mxu0
        %v2669 = vadd.f32 %v2592, %v2668
        %2670 = vdwg.mxu0
        %v2671 = vmax.f32 %v2395, %v2661
        %v2672 = vmax.f32 %v2397, %v2663
        %v2673 = vmax.f32 %v2401, %v2667
        %v2674 = vmax.f32 %v2403, %v2669
        %2675 = vst [vmem:[#allocation3] sm:$0xff] 0
        %vm2676 = vcmask 257024
        %2677 = vst.msk [vmem:[#allocation3 + $0x8] sm:$0xf] %vm2676, 0
        %2678 = vst [vmem:[#allocation3 + $0xc] sm:$0xff] 0
        %2679 = vst.msk [vmem:[#allocation3 + $0x14] sm:$0xf] %vm2676, 0
        %2680 = vst [vmem:[#allocation3 + $0x18] sm:$0x11] 0
        %vm2681 = vcmask 253952
        %2682 = vst.msk [vmem:[#allocation3 + $0x20] sm:$0x1] %vm2681, 0
        %v2683 = vpack.c.bf16 %v2673, %v2671
        %v2684 = vpack.c.bf16 %v2674, %v2672
        %v2687 = vunpack.c.l.b16 %v2683
        %v2688 = vunpack.c.l.b16 %v2684
        %v2689 = vunpack.c.h.b16 %v2683
        %v2690 = vunpack.c.h.b16 %v2684
        %v2691 = vpack.c.b16 %v2688, %v2687
        %v2692 = vpack.c.b16 %v2690, %v2689
        %vm2693 = vcmask 1044484
        %vm2694 = vmor %vm777, %vm2693
        %v2695 = vrot.slane %v2691, 7
        %v2696 = vrot.slane %v2695, 4
        %v2697 = vrot.slane %v2692, 7
        %v2698 = vsel %vm2694, %v2696, %v2697
        %2699 = vrot.lane.b32.xlu0 %v2695, 32
        %v2700 = vpop.permute.xlu0 %2699
        %2701 = vrot.lane.b32.xlu0 %v2698, 32
        %v2702 = vpop.permute.xlu0 %2701
        %v2703 = vrot.slane %v2700, 4
        %v2704 = vrot.slane %v2702, 4
        %vm2705 = vcmask 261120
        %v2706 = vsel %vm2705, %v2703, %v2700
        %v2707 = vsel %vm2705, %v2704, %v2702
        %vm2710 = vcmask 1043713
        %vm2711 = vcmask 1047557
        %vm2712 = vmor %vm2711, %vm2710
        %2713 = vst.msk [vmem:[#allocation3] sm:$0xee] %vm2712, %v2706
        %vm2714 = vcmask 1043712
        %vm2715 = vcmask 1047556
        %vm2716 = vmor %vm2715, %vm2714
        %2717 = vst.msk [vmem:[#allocation3 + $0xc] sm:$0xff] %vm2716, %v2707
        %v2718 = vld [vmem:[#allocation3] sm:$0xff]
        %v2719 = vld [vmem:[#allocation3 + $0x8] sm:$0xf]
        %v2720 = vld [vmem:[#allocation3 + $0xc] sm:$0x77]
        %v2721 = vld [vmem:[#allocation3 + $0x14] sm:$0x7]
        %v2722 = vld [vmem:[#allocation16] sm:$0xff]
        %v2723 = vld [vmem:[#allocation16 + $0x8] sm:$0xff]
        %v2724 = vld [vmem:[#allocation16 + $0x10] sm:$0xff]
        %v2725 = vld [vmem:[#allocation16 + $0x18] sm:$0xff]
        %v2726 = vld [vmem:[#allocation16 + $0x20] sm:$0xff]
        %v2727 = vld [vmem:[#allocation16 + $0x28] sm:$0xff]
        %v2728 = vld [vmem:[#allocation16 + $0x30] sm:$0xff]
        %v2729 = vld [vmem:[#allocation16 + $0x38] sm:$0xff]
        %v2730 = vld [vmem:[#allocation16 + $0x40] sm:$0xff]
        %v2731 = vld [vmem:[#allocation16 + $0x48] sm:$0xff]
        %v2732 = vld [vmem:[#allocation16 + $0x50] sm:$0xff]
        %v2733 = vld [vmem:[#allocation16 + $0x58] sm:$0xff]
        %v2734 = vld [vmem:[#allocation16 + $0x60] sm:$0xff]
        %v2735 = vld [vmem:[#allocation16 + $0x68] sm:$0xff]
        %v2736 = vld [vmem:[#allocation16 + $0x70] sm:$0xff]
        %v2737 = vld [vmem:[#allocation16 + $0x78] sm:$0xff]
        %v2738 = vld [vmem:[#allocation16 + $0x80] sm:$0xff]
        %v2739 = vld [vmem:[#allocation16 + $0x88] sm:$0xff]
        %v2740 = vld [vmem:[#allocation16 + $0x90] sm:$0xff]
        %v2741 = vld [vmem:[#allocation16 + $0x98] sm:$0xff]
        %v2742 = vld [vmem:[#allocation16 + $0xa0] sm:$0xff]
        %v2743 = vld [vmem:[#allocation16 + $0xa8] sm:$0xff]
        %v2744 = vld [vmem:[#allocation16 + $0xb0] sm:$0xff]
        %v2745 = vld [vmem:[#allocation16 + $0xb8] sm:$0xff]
        %v2746 = vld [vmem:[#allocation16 + $0xc0] sm:$0xff]
        %v2747 = vld [vmem:[#allocation16 + $0xc8] sm:$0xff]
        %v2748 = vld [vmem:[#allocation16 + $0xd0] sm:$0xff]
        %v2749 = vld [vmem:[#allocation16 + $0xd8] sm:$0xff]
        %v2750 = vld [vmem:[#allocation16 + $0xe0] sm:$0xff]
        %v2751 = vld [vmem:[#allocation16 + $0xe8] sm:$0xff]
        %v2752 = vld [vmem:[#allocation16 + $0xf0] sm:$0xff]
        %v2753 = vld [vmem:[#allocation16 + $0xf8] sm:$0xff]
        %v2754 = vld [vmem:[#allocation16 + $0x100] sm:$0xff]
        %v2755 = vld [vmem:[#allocation16 + $0x108] sm:$0xff]
        %v2756 = vld [vmem:[#allocation16 + $0x110] sm:$0xff]
        %v2757 = vld [vmem:[#allocation16 + $0x118] sm:$0xff]
        %v2758 = vld [vmem:[#allocation16 + $0x120] sm:$0xff]
        %v2759 = vld [vmem:[#allocation16 + $0x128] sm:$0xff]
        %v2760 = vld [vmem:[#allocation16 + $0x130] sm:$0xff]
        %v2761 = vld [vmem:[#allocation16 + $0x138] sm:$0xff]
        %v2762 = vld [vmem:[#allocation16 + $0x140] sm:$0xff]
        %v2763 = vld [vmem:[#allocation16 + $0x148] sm:$0xff]
        %v2764 = vld [vmem:[#allocation16 + $0x150] sm:$0xff]
        %v2765 = vld [vmem:[#allocation16 + $0x158] sm:$0xff]
        %v2766 = vld [vmem:[#allocation16 + $0x160] sm:$0xff]
        %v2767 = vld [vmem:[#allocation16 + $0x168] sm:$0xff]
        %v2768 = vld [vmem:[#allocation16 + $0x170] sm:$0xff]
        %v2769 = vld [vmem:[#allocation16 + $0x178] sm:$0xff]
        %v2770 = vld [vmem:[#allocation16 + $0x180] sm:$0xff]
        %v2771 = vld [vmem:[#allocation16 + $0x188] sm:$0xff]
        %v2772 = vld [vmem:[#allocation16 + $0x190] sm:$0xff]
        %v2773 = vld [vmem:[#allocation16 + $0x198] sm:$0xff]
        %v2774 = vld [vmem:[#allocation16 + $0x1a0] sm:$0xff]
        %v2775 = vld [vmem:[#allocation16 + $0x1a8] sm:$0xff]
        %v2776 = vld [vmem:[#allocation16 + $0x1b0] sm:$0xff]
        %v2777 = vld [vmem:[#allocation16 + $0x1b8] sm:$0xff]
        %v2778 = vld [vmem:[#allocation16 + $0x1c0] sm:$0xff]
        %v2779 = vld [vmem:[#allocation16 + $0x1c8] sm:$0xff]
        %v2780 = vld [vmem:[#allocation16 + $0x1d0] sm:$0xff]
        %v2781 = vld [vmem:[#allocation16 + $0x1d8] sm:$0xff]
        %v2782 = vld [vmem:[#allocation16 + $0x1e0] sm:$0xff]
        %v2783 = vld [vmem:[#allocation16 + $0x1e8] sm:$0xff]
        %v2784 = vld [vmem:[#allocation16 + $0x1f0] sm:$0xff]
        %v2785 = vld [vmem:[#allocation16 + $0x1f8] sm:$0xff]
        %v2786 = vld [vmem:[#allocation16 + $0x200] sm:$0xff]
        %v2787 = vld [vmem:[#allocation16 + $0x208] sm:$0xff]
        %v2788 = vld [vmem:[#allocation16 + $0x210] sm:$0xff]
        %v2789 = vld [vmem:[#allocation16 + $0x218] sm:$0xff]
        %v2790 = vld [vmem:[#allocation16 + $0x220] sm:$0xff]
        %v2791 = vld [vmem:[#allocation16 + $0x228] sm:$0xff]
        %v2792 = vld [vmem:[#allocation16 + $0x230] sm:$0xff]
        %v2793 = vld [vmem:[#allocation16 + $0x238] sm:$0xff]
        %v2794 = vld [vmem:[#allocation3 + $0xc] sm:$0xff]
        %v2795 = vld [vmem:[#allocation3 + $0x14] sm:$0xf]
        %s2796 = scalar_lea.vmem [#allocation16], 576
        %v2797 = vld [vmem:[%s2796] sm:$0xff]
        %v2798 = vld [vmem:[%s2796 + $0x8] sm:$0xff]
        %v2799 = vld [vmem:[%s2796 + $0x10] sm:$0xff]
        %v2800 = vld [vmem:[%s2796 + $0x18] sm:$0xff]
        %v2801 = vld [vmem:[%s2796 + $0x20] sm:$0xff]
        %v2802 = vld [vmem:[%s2796 + $0x28] sm:$0xff]
        %v2803 = vld [vmem:[%s2796 + $0x30] sm:$0xff]
        %v2804 = vld [vmem:[%s2796 + $0x38] sm:$0xff]
        %v2805 = vld [vmem:[%s2796 + $0x40] sm:$0xff]
        %v2806 = vld [vmem:[%s2796 + $0x48] sm:$0xff]
        %v2807 = vld [vmem:[%s2796 + $0x50] sm:$0xff]
        %v2808 = vld [vmem:[%s2796 + $0x58] sm:$0xff]
        %v2809 = vld [vmem:[%s2796 + $0x60] sm:$0xff]
        %v2810 = vld [vmem:[%s2796 + $0x68] sm:$0xff]
        %v2811 = vld [vmem:[%s2796 + $0x70] sm:$0xff]
        %v2812 = vld [vmem:[%s2796 + $0x78] sm:$0xff]
        %v2813 = vld [vmem:[%s2796 + $0x80] sm:$0xff]
        %v2814 = vld [vmem:[%s2796 + $0x88] sm:$0xff]
        %v2815 = vld [vmem:[%s2796 + $0x90] sm:$0xff]
        %v2816 = vld [vmem:[%s2796 + $0x98] sm:$0xff]
        %v2817 = vld [vmem:[%s2796 + $0xa0] sm:$0xff]
        %v2818 = vld [vmem:[%s2796 + $0xa8] sm:$0xff]
        %v2819 = vld [vmem:[%s2796 + $0xb0] sm:$0xff]
        %v2820 = vld [vmem:[%s2796 + $0xb8] sm:$0xff]
        %v2821 = vld [vmem:[%s2796 + $0xc0] sm:$0xff]
        %v2822 = vld [vmem:[%s2796 + $0xc8] sm:$0xff]
        %v2823 = vld [vmem:[%s2796 + $0xd0] sm:$0xff]
        %v2824 = vld [vmem:[%s2796 + $0xd8] sm:$0xff]
        %v2825 = vld [vmem:[%s2796 + $0xe0] sm:$0xff]
        %v2826 = vld [vmem:[%s2796 + $0xe8] sm:$0xff]
        %v2827 = vld [vmem:[%s2796 + $0xf0] sm:$0xff]
        %v2828 = vld [vmem:[%s2796 + $0xf8] sm:$0xff]
        %v2829 = vld [vmem:[%s2796 + $0x100] sm:$0xff]
        %v2830 = vld [vmem:[%s2796 + $0x108] sm:$0xff]
        %v2831 = vld [vmem:[%s2796 + $0x110] sm:$0xff]
        %v2832 = vld [vmem:[%s2796 + $0x118] sm:$0xff]
        %v2833 = vld [vmem:[%s2796 + $0x120] sm:$0xff]
        %v2834 = vld [vmem:[%s2796 + $0x128] sm:$0xff]
        %v2835 = vld [vmem:[%s2796 + $0x130] sm:$0xff]
        %v2836 = vld [vmem:[%s2796 + $0x138] sm:$0xff]
        %v2837 = vld [vmem:[%s2796 + $0x140] sm:$0xff]
        %v2838 = vld [vmem:[%s2796 + $0x148] sm:$0xff]
        %v2839 = vld [vmem:[%s2796 + $0x150] sm:$0xff]
        %v2840 = vld [vmem:[%s2796 + $0x158] sm:$0xff]
        %v2841 = vld [vmem:[%s2796 + $0x160] sm:$0xff]
        %v2842 = vld [vmem:[%s2796 + $0x168] sm:$0xff]
        %v2843 = vld [vmem:[%s2796 + $0x170] sm:$0xff]
        %v2844 = vld [vmem:[%s2796 + $0x178] sm:$0xff]
        %v2845 = vld [vmem:[%s2796 + $0x180] sm:$0xff]
        %v2846 = vld [vmem:[%s2796 + $0x188] sm:$0xff]
        %v2847 = vld [vmem:[%s2796 + $0x190] sm:$0xff]
        %v2848 = vld [vmem:[%s2796 + $0x198] sm:$0xff]
        %v2849 = vld [vmem:[%s2796 + $0x1a0] sm:$0xff]
        %v2850 = vld [vmem:[%s2796 + $0x1a8] sm:$0xff]
        %v2851 = vld [vmem:[%s2796 + $0x1b0] sm:$0xff]
        %v2852 = vld [vmem:[%s2796 + $0x1b8] sm:$0xff]
        %v2853 = vld [vmem:[%s2796 + $0x1c0] sm:$0xff]
        %v2854 = vld [vmem:[%s2796 + $0x1c8] sm:$0xff]
        %v2855 = vld [vmem:[%s2796 + $0x1d0] sm:$0xff]
        %v2856 = vld [vmem:[%s2796 + $0x1d8] sm:$0xff]
        %v2857 = vld [vmem:[%s2796 + $0x1e0] sm:$0xff]
        %v2858 = vld [vmem:[%s2796 + $0x1e8] sm:$0xff]
        %v2859 = vld [vmem:[%s2796 + $0x1f0] sm:$0xff]
        %v2860 = vld [vmem:[%s2796 + $0x1f8] sm:$0xff]
        %v2861 = vld [vmem:[%s2796 + $0x200] sm:$0xff]
        %v2862 = vld [vmem:[%s2796 + $0x208] sm:$0xff]
        %v2863 = vld [vmem:[%s2796 + $0x210] sm:$0xff]
        %v2864 = vld [vmem:[%s2796 + $0x218] sm:$0xff]
        %v2865 = vld [vmem:[%s2796 + $0x220] sm:$0xff]
        %v2866 = vld [vmem:[%s2796 + $0x228] sm:$0xff]
        %v2867 = vld [vmem:[%s2796 + $0x230] sm:$0xff]
        %v2868 = vld [vmem:[%s2796 + $0x238] sm:$0xff]
        %v2873 = vunpack.c.l.b16 %v2718
        %v2874 = vunpack.c.h.b16 %v2718
        %v2875 = vunpack.c.l.b16 %v2719
        %v2876 = vunpack.c.l.b16 %v2794
        %v2877 = vunpack.c.h.b16 %v2794
        %v2878 = vunpack.c.l.b16 %v2795
        %v2879 = vpack.c.b16 %v2876, %v2873
        %v2880 = vpack.c.b16 %v2877, %v2874
        %v2881 = vpack.c.b16 %v2878, %v2875
        %v2883 = vshrl.u32 %v2879, 16
        %v2885 = vshll.u32 %v2879, 16
        %v2887 = vrot.slane %v2885, 1
        %v2888 = vor.u32 %v2883, %v2887
        %v2890 = vshrl.u32 %v2880, 16
        %v2892 = vshll.u32 %v2880, 16
        %v2894 = vrot.slane %v2892, 1
        %v2895 = vor.u32 %v2890, %v2894
        %v2897 = vshrl.u32 %v2881, 16
        %v2899 = vshll.u32 %v2881, 16
        %v2901 = vrot.slane %v2899, 1
        %v2902 = vor.u32 %v2897, %v2901
        %v2977 = vunpack.c.l.b16 %v2797
        %v2978 = vunpack.c.h.b16 %v2797
        %v2979 = vunpack.c.l.b16 %v2798
        %v2980 = vunpack.c.h.b16 %v2798
        %v2981 = vunpack.c.l.b16 %v2799
        %v2982 = vunpack.c.h.b16 %v2799
        %v2983 = vunpack.c.l.b16 %v2800
        %v2984 = vunpack.c.h.b16 %v2800
        %v2985 = vunpack.c.l.b16 %v2801
        %v2986 = vunpack.c.h.b16 %v2801
        %v2987 = vunpack.c.l.b16 %v2802
        %v2988 = vunpack.c.h.b16 %v2802
        %v2989 = vunpack.c.l.b16 %v2803
        %v2990 = vunpack.c.h.b16 %v2803
        %v2991 = vunpack.c.l.b16 %v2804
        %v2992 = vunpack.c.h.b16 %v2804
        %v2993 = vunpack.c.l.b16 %v2805
        %v2994 = vunpack.c.h.b16 %v2805
        %v2995 = vunpack.c.l.b16 %v2806
        %v2996 = vunpack.c.h.b16 %v2806
        %v2997 = vunpack.c.l.b16 %v2807
        %v2998 = vunpack.c.h.b16 %v2807
        %v2999 = vunpack.c.l.b16 %v2808
        %v3000 = vunpack.c.h.b16 %v2808
        %v3001 = vunpack.c.l.b16 %v2809
        %v3002 = vunpack.c.h.b16 %v2809
        %v3003 = vunpack.c.l.b16 %v2810
        %v3004 = vunpack.c.h.b16 %v2810
        %v3005 = vunpack.c.l.b16 %v2811
        %v3006 = vunpack.c.h.b16 %v2811
        %v3007 = vunpack.c.l.b16 %v2812
        %v3008 = vunpack.c.h.b16 %v2812
        %v3009 = vunpack.c.l.b16 %v2813
        %v3010 = vunpack.c.h.b16 %v2813
        %v3011 = vunpack.c.l.b16 %v2814
        %v3012 = vunpack.c.h.b16 %v2814
        %v3013 = vunpack.c.l.b16 %v2815
        %v3014 = vunpack.c.h.b16 %v2815
        %v3015 = vunpack.c.l.b16 %v2816
        %v3016 = vunpack.c.h.b16 %v2816
        %v3017 = vunpack.c.l.b16 %v2817
        %v3018 = vunpack.c.h.b16 %v2817
        %v3019 = vunpack.c.l.b16 %v2818
        %v3020 = vunpack.c.h.b16 %v2818
        %v3021 = vunpack.c.l.b16 %v2819
        %v3022 = vunpack.c.h.b16 %v2819
        %v3023 = vunpack.c.l.b16 %v2820
        %v3024 = vunpack.c.h.b16 %v2820
        %v3025 = vunpack.c.l.b16 %v2821
        %v3026 = vunpack.c.h.b16 %v2821
        %v3027 = vunpack.c.l.b16 %v2822
        %v3028 = vunpack.c.h.b16 %v2822
        %v3029 = vunpack.c.l.b16 %v2823
        %v3030 = vunpack.c.h.b16 %v2823
        %v3031 = vunpack.c.l.b16 %v2824
        %v3032 = vunpack.c.h.b16 %v2824
        %v3033 = vunpack.c.l.b16 %v2825
        %v3034 = vunpack.c.h.b16 %v2825
        %v3035 = vunpack.c.l.b16 %v2826
        %v3036 = vunpack.c.h.b16 %v2826
        %v3037 = vunpack.c.l.b16 %v2827
        %v3038 = vunpack.c.h.b16 %v2827
        %v3039 = vunpack.c.l.b16 %v2828
        %v3040 = vunpack.c.h.b16 %v2828
        %v3041 = vunpack.c.l.b16 %v2829
        %v3042 = vunpack.c.h.b16 %v2829
        %v3043 = vunpack.c.l.b16 %v2830
        %v3044 = vunpack.c.h.b16 %v2830
        %v3045 = vunpack.c.l.b16 %v2831
        %v3046 = vunpack.c.h.b16 %v2831
        %v3047 = vunpack.c.l.b16 %v2832
        %v3048 = vunpack.c.h.b16 %v2832
        %v3049 = vunpack.c.l.b16 %v2833
        %v3050 = vunpack.c.h.b16 %v2833
        %v3051 = vunpack.c.l.b16 %v2834
        %v3052 = vunpack.c.h.b16 %v2834
        %v3053 = vunpack.c.l.b16 %v2835
        %v3054 = vunpack.c.h.b16 %v2835
        %v3055 = vunpack.c.l.b16 %v2836
        %v3056 = vunpack.c.h.b16 %v2836
        %v3057 = vunpack.c.l.b16 %v2837
        %v3058 = vunpack.c.h.b16 %v2837
        %v3059 = vunpack.c.l.b16 %v2838
        %v3060 = vunpack.c.h.b16 %v2838
        %v3061 = vunpack.c.l.b16 %v2839
        %v3062 = vunpack.c.h.b16 %v2839
        %v3063 = vunpack.c.l.b16 %v2840
        %v3064 = vunpack.c.h.b16 %v2840
        %v3065 = vunpack.c.l.b16 %v2841
        %v3066 = vunpack.c.h.b16 %v2841
        %v3067 = vunpack.c.l.b16 %v2842
        %v3068 = vunpack.c.h.b16 %v2842
        %v3069 = vunpack.c.l.b16 %v2843
        %v3070 = vunpack.c.h.b16 %v2843
        %v3071 = vunpack.c.l.b16 %v2844
        %v3072 = vunpack.c.h.b16 %v2844
        %v3073 = vunpack.c.l.b16 %v2845
        %v3074 = vunpack.c.h.b16 %v2845
        %v3075 = vunpack.c.l.b16 %v2846
        %v3076 = vunpack.c.h.b16 %v2846
        %v3077 = vunpack.c.l.b16 %v2847
        %v3078 = vunpack.c.h.b16 %v2847
        %v3079 = vunpack.c.l.b16 %v2848
        %v3080 = vunpack.c.h.b16 %v2848
        %v3081 = vunpack.c.l.b16 %v2849
        %v3082 = vunpack.c.h.b16 %v2849
        %v3083 = vunpack.c.l.b16 %v2850
        %v3084 = vunpack.c.h.b16 %v2850
        %v3085 = vunpack.c.l.b16 %v2851
        %v3086 = vunpack.c.h.b16 %v2851
        %v3087 = vunpack.c.l.b16 %v2852
        %v3088 = vunpack.c.h.b16 %v2852
        %v3089 = vunpack.c.l.b16 %v2853
        %v3090 = vunpack.c.h.b16 %v2853
        %v3091 = vunpack.c.l.b16 %v2854
        %v3092 = vunpack.c.h.b16 %v2854
        %v3093 = vunpack.c.l.b16 %v2855
        %v3094 = vunpack.c.h.b16 %v2855
        %v3095 = vunpack.c.l.b16 %v2856
        %v3096 = vunpack.c.h.b16 %v2856
        %v3097 = vunpack.c.l.b16 %v2857
        %v3098 = vunpack.c.h.b16 %v2857
        %v3099 = vunpack.c.l.b16 %v2858
        %v3100 = vunpack.c.h.b16 %v2858
        %v3101 = vunpack.c.l.b16 %v2859
        %v3102 = vunpack.c.h.b16 %v2859
        %v3103 = vunpack.c.l.b16 %v2860
        %v3104 = vunpack.c.h.b16 %v2860
        %v3105 = vunpack.c.l.b16 %v2861
        %v3106 = vunpack.c.h.b16 %v2861
        %v3107 = vunpack.c.l.b16 %v2862
        %v3108 = vunpack.c.h.b16 %v2862
        %v3109 = vunpack.c.l.b16 %v2863
        %v3110 = vunpack.c.h.b16 %v2863
        %v3111 = vunpack.c.l.b16 %v2864
        %v3112 = vunpack.c.h.b16 %v2864
        %v3113 = vunpack.c.l.b16 %v2865
        %v3114 = vunpack.c.h.b16 %v2865
        %v3115 = vunpack.c.l.b16 %v2866
        %v3116 = vunpack.c.h.b16 %v2866
        %v3117 = vunpack.c.l.b16 %v2867
        %v3118 = vunpack.c.h.b16 %v2867
        %v3119 = vunpack.c.l.b16 %v2868
        %v3120 = vunpack.c.h.b16 %v2868
        %v3121 = vpack.c.b16 %v2981, %v2977
        %v3122 = vpack.c.b16 %v2982, %v2978
        %v3123 = vpack.c.b16 %v2983, %v2979
        %v3124 = vpack.c.b16 %v2984, %v2980
        %v3125 = vpack.c.b16 %v2989, %v2985
        %v3126 = vpack.c.b16 %v2990, %v2986
        %v3127 = vpack.c.b16 %v2991, %v2987
        %v3128 = vpack.c.b16 %v2992, %v2988
        %v3129 = vpack.c.b16 %v2997, %v2993
        %v3130 = vpack.c.b16 %v2998, %v2994
        %v3131 = vpack.c.b16 %v2999, %v2995
        %v3132 = vpack.c.b16 %v3000, %v2996
        %v3133 = vpack.c.b16 %v3005, %v3001
        %v3134 = vpack.c.b16 %v3006, %v3002
        %v3135 = vpack.c.b16 %v3007, %v3003
        %v3136 = vpack.c.b16 %v3008, %v3004
        %v3137 = vpack.c.b16 %v3013, %v3009
        %v3138 = vpack.c.b16 %v3014, %v3010
        %v3139 = vpack.c.b16 %v3015, %v3011
        %v3140 = vpack.c.b16 %v3016, %v3012
        %v3141 = vpack.c.b16 %v3021, %v3017
        %v3142 = vpack.c.b16 %v3022, %v3018
        %v3143 = vpack.c.b16 %v3023, %v3019
        %v3144 = vpack.c.b16 %v3024, %v3020
        %v3145 = vpack.c.b16 %v3029, %v3025
        %v3146 = vpack.c.b16 %v3030, %v3026
        %v3147 = vpack.c.b16 %v3031, %v3027
        %v3148 = vpack.c.b16 %v3032, %v3028
        %v3149 = vpack.c.b16 %v3037, %v3033
        %v3150 = vpack.c.b16 %v3038, %v3034
        %v3151 = vpack.c.b16 %v3039, %v3035
        %v3152 = vpack.c.b16 %v3040, %v3036
        %v3153 = vpack.c.b16 %v3045, %v3041
        %v3154 = vpack.c.b16 %v3046, %v3042
        %v3155 = vpack.c.b16 %v3047, %v3043
        %v3156 = vpack.c.b16 %v3048, %v3044
        %v3157 = vpack.c.b16 %v3053, %v3049
        %v3158 = vpack.c.b16 %v3054, %v3050
        %v3159 = vpack.c.b16 %v3055, %v3051
        %v3160 = vpack.c.b16 %v3056, %v3052
        %v3161 = vpack.c.b16 %v3061, %v3057
        %v3162 = vpack.c.b16 %v3062, %v3058
        %v3163 = vpack.c.b16 %v3063, %v3059
        %v3164 = vpack.c.b16 %v3064, %v3060
        %v3165 = vpack.c.b16 %v3069, %v3065
        %v3166 = vpack.c.b16 %v3070, %v3066
        %v3167 = vpack.c.b16 %v3071, %v3067
        %v3168 = vpack.c.b16 %v3072, %v3068
        %v3169 = vpack.c.b16 %v3077, %v3073
        %v3170 = vpack.c.b16 %v3078, %v3074
        %v3171 = vpack.c.b16 %v3079, %v3075
        %v3172 = vpack.c.b16 %v3080, %v3076
        %v3173 = vpack.c.b16 %v3085, %v3081
        %v3174 = vpack.c.b16 %v3086, %v3082
        %v3175 = vpack.c.b16 %v3087, %v3083
        %v3176 = vpack.c.b16 %v3088, %v3084
        %v3177 = vpack.c.b16 %v3093, %v3089
        %v3178 = vpack.c.b16 %v3094, %v3090
        %v3179 = vpack.c.b16 %v3095, %v3091
        %v3180 = vpack.c.b16 %v3096, %v3092
        %v3181 = vpack.c.b16 %v3101, %v3097
        %v3182 = vpack.c.b16 %v3102, %v3098
        %v3183 = vpack.c.b16 %v3103, %v3099
        %v3184 = vpack.c.b16 %v3104, %v3100
        %v3185 = vpack.c.b16 %v3109, %v3105
        %v3186 = vpack.c.b16 %v3110, %v3106
        %v3187 = vpack.c.b16 %v3111, %v3107
        %v3188 = vpack.c.b16 %v3112, %v3108
        %v3189 = vpack.c.b16 %v3117, %v3113
        %v3190 = vpack.c.b16 %v3118, %v3114
        %v3191 = vpack.c.b16 %v3119, %v3115
        %v3192 = vpack.c.b16 %v3120, %v3116
        %v3266 = vsel %vm766, %v2902, 0
        %3268 = vmatprep.subr.bf16.mxu0 %v3122
        %3269 = vmatpush1.bf16.msra.mxu0 %v3121
        %3270 = vmatprep.subr.bf16.mxu0 %v3126
        %3271 = vmatpush1.bf16.msra.mxu0 %v3125
        %3272 = vmatprep.subr.bf16.mxu0 %v3130
        %3273 = vmatpush1.bf16.msra.mxu0 %v3129
        %3274 = vmatprep.subr.bf16.mxu0 %v3134
        %3275 = vmatpush1.bf16.msra.mxu0 %v3133
        %3276 = vmatprep.subr.bf16.mxu0 %v3138
        %3277 = vmatpush1.bf16.msra.mxu0 %v3137
        %3278 = vmatprep.subr.bf16.mxu0 %v3142
        %3279 = vmatpush1.bf16.msra.mxu0 %v3141
        %3280 = vmatprep.subr.bf16.mxu0 %v3146
        %3281 = vmatpush1.bf16.msra.mxu0 %v3145
        %3282 = vmatprep.subr.bf16.mxu0 %v3150
        %3283 = vmatpush1.bf16.msra.mxu0 %v3149
        %3284 = vmatprep.subr.bf16.mxu0 %v3154
        %3285 = vmatpush1.bf16.msra.mxu0 %v3153
        %3286 = vmatprep.subr.bf16.mxu0 %v3158
        %3287 = vmatpush1.bf16.msra.mxu0 %v3157
        %3288 = vmatprep.subr.bf16.mxu0 %v3162
        %3289 = vmatpush1.bf16.msra.mxu0 %v3161
        %3290 = vmatprep.subr.bf16.mxu0 %v3166
        %3291 = vmatpush1.bf16.msra.mxu0 %v3165
        %3292 = vmatprep.subr.bf16.mxu0 %v3170
        %3293 = vmatpush1.bf16.msra.mxu0 %v3169
        %3294 = vmatprep.subr.bf16.mxu0 %v3174
        %3295 = vmatpush1.bf16.msra.mxu0 %v3173
        %3296 = vmatprep.subr.bf16.mxu0 %v3178
        %3297 = vmatpush1.bf16.msra.mxu0 %v3177
        %3298 = vmatprep.subr.bf16.mxu0 %v3182
        %3299 = vmatpush1.bf16.msra.mxu0 %v3181
        %3300 = vmatprep.mubr.bf16.mxu0 %v2895
        %3301 = vmatmul.mubr.bf16.gmra.mrb[0].mxu0 %v2888
        %v3302 = vpop.f32.mrb[0].mxu0
        %v3303 = vadd.f32 0.0, %v3302
        %v3304 = vpop.f32.mrb[0].mxu0
        %v3305 = vadd.f32 0.0, %v3304
        %v3306 = vpop.f32.mrb[0].mxu0
        %v3307 = vadd.f32 0.0, %v3306
        %v3308 = vpop.f32.mrb[0].mxu0
        %v3309 = vadd.f32 0.0, %v3308
        %3310 = vdwg.mxu0
        %3311 = vmatprep.subr.bf16.mxu0 %v3186
        %3312 = vmatpush1.bf16.msra.mxu0 %v3185
        %3313 = vmatprep.subr.bf16.mxu0 %v3190
        %3314 = vmatpush1.bf16.msra.mxu0 %v3189
        %3315 = vmatprep.subr.bf16.mxu0 0
        %3316 = vmatpush1.bf16.msra.mxu0 0
        %3317 = vmatprep.subr.bf16.mxu0 0
        %3318 = vmatpush1.bf16.msra.mxu0 0
        %3319 = vmatprep.subr.bf16.mxu0 0
        %3320 = vmatpush1.bf16.msra.mxu0 0
        %3321 = vmatprep.subr.bf16.mxu0 0
        %3322 = vmatpush1.bf16.msra.mxu0 0
        %3323 = vmatprep.subr.bf16.mxu0 0
        %3324 = vmatpush1.bf16.msra.mxu0 0
        %3325 = vmatprep.subr.bf16.mxu0 0
        %3326 = vmatpush1.bf16.msra.mxu0 0
        %3327 = vmatprep.subr.bf16.mxu0 0
        %3328 = vmatpush1.bf16.msra.mxu0 0
        %3329 = vmatprep.subr.bf16.mxu0 0
        %3330 = vmatpush1.bf16.msra.mxu0 0
        %3331 = vmatprep.subr.bf16.mxu0 0
        %3332 = vmatpush1.bf16.msra.mxu0 0
        %3333 = vmatprep.subr.bf16.mxu0 0
        %3334 = vmatpush1.bf16.msra.mxu0 0
        %3335 = vmatprep.subr.bf16.mxu0 0
        %3336 = vmatpush1.bf16.msra.mxu0 0
        %3337 = vmatprep.subr.bf16.mxu0 0
        %3338 = vmatpush1.bf16.msra.mxu0 0
        %3339 = vmatprep.subr.bf16.mxu0 0
        %3340 = vmatpush1.bf16.msra.mxu0 0
        %3341 = vmatprep.subr.bf16.mxu0 0
        %3342 = vmatpush1.bf16.msra.mxu0 0
        %3343 = vmatprep.mubr.bf16.mxu0 0
        %3344 = vmatmul.mubr.bf16.gmra.mrb[0].mxu0 %v3266
        %v3345 = vpop.f32.mrb[0].mxu0
        %v3346 = vadd.f32 %v3303, %v3345
        %v3347 = vpop.f32.mrb[0].mxu0
        %v3348 = vadd.f32 %v3305, %v3347
        %v3349 = vpop.f32.mrb[0].mxu0
        %v3350 = vadd.f32 %v3307, %v3349
        %v3351 = vpop.f32.mrb[0].mxu0
        %v3352 = vadd.f32 %v3309, %v3351
        %3353 = vdwg.mxu0
        %3354 = vmatprep.subr.bf16.mxu0 %v3124
        %3355 = vmatpush1.bf16.msra.mxu0 %v3123
        %3356 = vmatprep.subr.bf16.mxu0 %v3128
        %3357 = vmatpush1.bf16.msra.mxu0 %v3127
        %3358 = vmatprep.subr.bf16.mxu0 %v3132
        %3359 = vmatpush1.bf16.msra.mxu0 %v3131
        %3360 = vmatprep.subr.bf16.mxu0 %v3136
        %3361 = vmatpush1.bf16.msra.mxu0 %v3135
        %3362 = vmatprep.subr.bf16.mxu0 %v3140
        %3363 = vmatpush1.bf16.msra.mxu0 %v3139
        %3364 = vmatprep.subr.bf16.mxu0 %v3144
        %3365 = vmatpush1.bf16.msra.mxu0 %v3143
        %3366 = vmatprep.subr.bf16.mxu0 %v3148
        %3367 = vmatpush1.bf16.msra.mxu0 %v3147
        %3368 = vmatprep.subr.bf16.mxu0 %v3152
        %3369 = vmatpush1.bf16.msra.mxu0 %v3151
        %3370 = vmatprep.subr.bf16.mxu0 %v3156
        %3371 = vmatpush1.bf16.msra.mxu0 %v3155
        %3372 = vmatprep.subr.bf16.mxu0 %v3160
        %3373 = vmatpush1.bf16.msra.mxu0 %v3159
        %3374 = vmatprep.subr.bf16.mxu0 %v3164
        %3375 = vmatpush1.bf16.msra.mxu0 %v3163
        %3376 = vmatprep.subr.bf16.mxu0 %v3168
        %3377 = vmatpush1.bf16.msra.mxu0 %v3167
        %3378 = vmatprep.subr.bf16.mxu0 %v3172
        %3379 = vmatpush1.bf16.msra.mxu0 %v3171
        %3380 = vmatprep.subr.bf16.mxu0 %v3176
        %3381 = vmatpush1.bf16.msra.mxu0 %v3175
        %3382 = vmatprep.subr.bf16.mxu0 %v3180
        %3383 = vmatpush1.bf16.msra.mxu0 %v3179
        %3384 = vmatprep.subr.bf16.mxu0 %v3184
        %3385 = vmatpush1.bf16.msra.mxu0 %v3183
        %3386 = vmatprep.mubr.bf16.mxu0 %v2895
        %3387 = vmatmul.mubr.bf16.gmra.mrb[0].mxu0 %v2888
        %v3388 = vpop.f32.mrb[0].mxu0
        %v3389 = vadd.f32 0.0, %v3388
        %v3390 = vpop.f32.mrb[0].mxu0
        %v3391 = vadd.f32 0.0, %v3390
        %v3392 = vpop.f32.mrb[0].mxu0
        %v3393 = vadd.f32 0.0, %v3392
        %v3394 = vpop.f32.mrb[0].mxu0
        %v3395 = vadd.f32 0.0, %v3394
        %3396 = vdwg.mxu0
        %3397 = vmatprep.subr.bf16.mxu0 %v3188
        %3398 = vmatpush1.bf16.msra.mxu0 %v3187
        %3399 = vmatprep.subr.bf16.mxu0 %v3192
        %3400 = vmatpush1.bf16.msra.mxu0 %v3191
        %3401 = vmatprep.subr.bf16.mxu0 0
        %3402 = vmatpush1.bf16.msra.mxu0 0
        %3403 = vmatprep.subr.bf16.mxu0 0
        %3404 = vmatpush1.bf16.msra.mxu0 0
        %3405 = vmatprep.subr.bf16.mxu0 0
        %3406 = vmatpush1.bf16.msra.mxu0 0
        %3407 = vmatprep.subr.bf16.mxu0 0
        %3408 = vmatpush1.bf16.msra.mxu0 0
        %3409 = vmatprep.subr.bf16.mxu0 0
        %3410 = vmatpush1.bf16.msra.mxu0 0
        %3411 = vmatprep.subr.bf16.mxu0 0
        %3412 = vmatpush1.bf16.msra.mxu0 0
        %3413 = vmatprep.subr.bf16.mxu0 0
        %3414 = vmatpush1.bf16.msra.mxu0 0
        %3415 = vmatprep.subr.bf16.mxu0 0
        %3416 = vmatpush1.bf16.msra.mxu0 0
        %3417 = vmatprep.subr.bf16.mxu0 0
        %3418 = vmatpush1.bf16.msra.mxu0 0
        %3419 = vmatprep.subr.bf16.mxu0 0
        %3420 = vmatpush1.bf16.msra.mxu0 0
        %3421 = vmatprep.subr.bf16.mxu0 0
        %3422 = vmatpush1.bf16.msra.mxu0 0
        %3423 = vmatprep.subr.bf16.mxu0 0
        %3424 = vmatpush1.bf16.msra.mxu0 0
        %3425 = vmatprep.subr.bf16.mxu0 0
        %3426 = vmatpush1.bf16.msra.mxu0 0
        %3427 = vmatprep.subr.bf16.mxu0 0
        %3428 = vmatpush1.bf16.msra.mxu0 0
        %3429 = vmatprep.mubr.bf16.mxu0 0
        %3430 = vmatmul.mubr.bf16.gmra.mrb[0].mxu0 %v3266
        %v3431 = vpop.f32.mrb[0].mxu0
        %v3432 = vadd.f32 %v3389, %v3431
        %v3433 = vpop.f32.mrb[0].mxu0
        %v3434 = vadd.f32 %v3391, %v3433
        %v3435 = vpop.f32.mrb[0].mxu0
        %v3436 = vadd.f32 %v3393, %v3435
        %v3437 = vpop.f32.mrb[0].mxu0
        %v3438 = vadd.f32 %v3395, %v3437
        %3439 = vdwg.mxu0
        %v3442 = vunpack.c.l.b16 %v2720
        %v3443 = vunpack.c.h.b16 %v2720
        %v3444 = vunpack.c.l.b16 %v2721
        %v3445 = vpack.c.b16 %v3442, %v2873
        %v3446 = vpack.c.b16 %v3443, %v2874
        %v3447 = vpack.c.b16 %v3444, %v2875
        %v3522 = vunpack.c.l.b16 %v2722
        %v3523 = vunpack.c.h.b16 %v2722
        %v3524 = vunpack.c.l.b16 %v2723
        %v3525 = vunpack.c.h.b16 %v2723
        %v3526 = vunpack.c.l.b16 %v2724
        %v3527 = vunpack.c.h.b16 %v2724
        %v3528 = vunpack.c.l.b16 %v2725
        %v3529 = vunpack.c.h.b16 %v2725
        %v3530 = vunpack.c.l.b16 %v2726
        %v3531 = vunpack.c.h.b16 %v2726
        %v3532 = vunpack.c.l.b16 %v2727
        %v3533 = vunpack.c.h.b16 %v2727
        %v3534 = vunpack.c.l.b16 %v2728
        %v3535 = vunpack.c.h.b16 %v2728
        %v3536 = vunpack.c.l.b16 %v2729
        %v3537 = vunpack.c.h.b16 %v2729
        %v3538 = vunpack.c.l.b16 %v2730
        %v3539 = vunpack.c.h.b16 %v2730
        %v3540 = vunpack.c.l.b16 %v2731
        %v3541 = vunpack.c.h.b16 %v2731
        %v3542 = vunpack.c.l.b16 %v2732
        %v3543 = vunpack.c.h.b16 %v2732
        %v3544 = vunpack.c.l.b16 %v2733
        %v3545 = vunpack.c.h.b16 %v2733
        %v3546 = vunpack.c.l.b16 %v2734
        %v3547 = vunpack.c.h.b16 %v2734
        %v3548 = vunpack.c.l.b16 %v2735
        %v3549 = vunpack.c.h.b16 %v2735
        %v3550 = vunpack.c.l.b16 %v2736
        %v3551 = vunpack.c.h.b16 %v2736
        %v3552 = vunpack.c.l.b16 %v2737
        %v3553 = vunpack.c.h.b16 %v2737
        %v3554 = vunpack.c.l.b16 %v2738
        %v3555 = vunpack.c.h.b16 %v2738
        %v3556 = vunpack.c.l.b16 %v2739
        %v3557 = vunpack.c.h.b16 %v2739
        %v3558 = vunpack.c.l.b16 %v2740
        %v3559 = vunpack.c.h.b16 %v2740
        %v3560 = vunpack.c.l.b16 %v2741
        %v3561 = vunpack.c.h.b16 %v2741
        %v3562 = vunpack.c.l.b16 %v2742
        %v3563 = vunpack.c.h.b16 %v2742
        %v3564 = vunpack.c.l.b16 %v2743
        %v3565 = vunpack.c.h.b16 %v2743
        %v3566 = vunpack.c.l.b16 %v2744
        %v3567 = vunpack.c.h.b16 %v2744
        %v3568 = vunpack.c.l.b16 %v2745
        %v3569 = vunpack.c.h.b16 %v2745
        %v3570 = vunpack.c.l.b16 %v2746
        %v3571 = vunpack.c.h.b16 %v2746
        %v3572 = vunpack.c.l.b16 %v2747
        %v3573 = vunpack.c.h.b16 %v2747
        %v3574 = vunpack.c.l.b16 %v2748
        %v3575 = vunpack.c.h.b16 %v2748
        %v3576 = vunpack.c.l.b16 %v2749
        %v3577 = vunpack.c.h.b16 %v2749
        %v3578 = vunpack.c.l.b16 %v2750
        %v3579 = vunpack.c.h.b16 %v2750
        %v3580 = vunpack.c.l.b16 %v2751
        %v3581 = vunpack.c.h.b16 %v2751
        %v3582 = vunpack.c.l.b16 %v2752
        %v3583 = vunpack.c.h.b16 %v2752
        %v3584 = vunpack.c.l.b16 %v2753
        %v3585 = vunpack.c.h.b16 %v2753
        %v3586 = vunpack.c.l.b16 %v2754
        %v3587 = vunpack.c.h.b16 %v2754
        %v3588 = vunpack.c.l.b16 %v2755
        %v3589 = vunpack.c.h.b16 %v2755
        %v3590 = vunpack.c.l.b16 %v2756
        %v3591 = vunpack.c.h.b16 %v2756
        %v3592 = vunpack.c.l.b16 %v2757
        %v3593 = vunpack.c.h.b16 %v2757
        %v3594 = vunpack.c.l.b16 %v2758
        %v3595 = vunpack.c.h.b16 %v2758
        %v3596 = vunpack.c.l.b16 %v2759
        %v3597 = vunpack.c.h.b16 %v2759
        %v3598 = vunpack.c.l.b16 %v2760
        %v3599 = vunpack.c.h.b16 %v2760
        %v3600 = vunpack.c.l.b16 %v2761
        %v3601 = vunpack.c.h.b16 %v2761
        %v3602 = vunpack.c.l.b16 %v2762
        %v3603 = vunpack.c.h.b16 %v2762
        %v3604 = vunpack.c.l.b16 %v2763
        %v3605 = vunpack.c.h.b16 %v2763
        %v3606 = vunpack.c.l.b16 %v2764
        %v3607 = vunpack.c.h.b16 %v2764
        %v3608 = vunpack.c.l.b16 %v2765
        %v3609 = vunpack.c.h.b16 %v2765
        %v3610 = vunpack.c.l.b16 %v2766
        %v3611 = vunpack.c.h.b16 %v2766
        %v3612 = vunpack.c.l.b16 %v2767
        %v3613 = vunpack.c.h.b16 %v2767
        %v3614 = vunpack.c.l.b16 %v2768
        %v3615 = vunpack.c.h.b16 %v2768
        %v3616 = vunpack.c.l.b16 %v2769
        %v3617 = vunpack.c.h.b16 %v2769
        %v3618 = vunpack.c.l.b16 %v2770
        %v3619 = vunpack.c.h.b16 %v2770
        %v3620 = vunpack.c.l.b16 %v2771
        %v3621 = vunpack.c.h.b16 %v2771
        %v3622 = vunpack.c.l.b16 %v2772
        %v3623 = vunpack.c.h.b16 %v2772
        %v3624 = vunpack.c.l.b16 %v2773
        %v3625 = vunpack.c.h.b16 %v2773
        %v3626 = vunpack.c.l.b16 %v2774
        %v3627 = vunpack.c.h.b16 %v2774
        %v3628 = vunpack.c.l.b16 %v2775
        %v3629 = vunpack.c.h.b16 %v2775
        %v3630 = vunpack.c.l.b16 %v2776
        %v3631 = vunpack.c.h.b16 %v2776
        %v3632 = vunpack.c.l.b16 %v2777
        %v3633 = vunpack.c.h.b16 %v2777
        %v3634 = vunpack.c.l.b16 %v2778
        %v3635 = vunpack.c.h.b16 %v2778
        %v3636 = vunpack.c.l.b16 %v2779
        %v3637 = vunpack.c.h.b16 %v2779
        %v3638 = vunpack.c.l.b16 %v2780
        %v3639 = vunpack.c.h.b16 %v2780
        %v3640 = vunpack.c.l.b16 %v2781
        %v3641 = vunpack.c.h.b16 %v2781
        %v3642 = vunpack.c.l.b16 %v2782
        %v3643 = vunpack.c.h.b16 %v2782
        %v3644 = vunpack.c.l.b16 %v2783
        %v3645 = vunpack.c.h.b16 %v2783
        %v3646 = vunpack.c.l.b16 %v2784
        %v3647 = vunpack.c.h.b16 %v2784
        %v3648 = vunpack.c.l.b16 %v2785
        %v3649 = vunpack.c.h.b16 %v2785
        %v3650 = vunpack.c.l.b16 %v2786
        %v3651 = vunpack.c.h.b16 %v2786
        %v3652 = vunpack.c.l.b16 %v2787
        %v3653 = vunpack.c.h.b16 %v2787
        %v3654 = vunpack.c.l.b16 %v2788
        %v3655 = vunpack.c.h.b16 %v2788
        %v3656 = vunpack.c.l.b16 %v2789
        %v3657 = vunpack.c.h.b16 %v2789
        %v3658 = vunpack.c.l.b16 %v2790
        %v3659 = vunpack.c.h.b16 %v2790
        %v3660 = vunpack.c.l.b16 %v2791
        %v3661 = vunpack.c.h.b16 %v2791
        %v3662 = vunpack.c.l.b16 %v2792
        %v3663 = vunpack.c.h.b16 %v2792
        %v3664 = vunpack.c.l.b16 %v2793
        %v3665 = vunpack.c.h.b16 %v2793
        %v3666 = vpack.c.b16 %v3526, %v3522
        %v3667 = vpack.c.b16 %v3527, %v3523
        %v3668 = vpack.c.b16 %v3528, %v3524
        %v3669 = vpack.c.b16 %v3529, %v3525
        %v3670 = vpack.c.b16 %v3534, %v3530
        %v3671 = vpack.c.b16 %v3535, %v3531
        %v3672 = vpack.c.b16 %v3536, %v3532
        %v3673 = vpack.c.b16 %v3537, %v3533
        %v3674 = vpack.c.b16 %v3542, %v3538
        %v3675 = vpack.c.b16 %v3543, %v3539
        %v3676 = vpack.c.b16 %v3544, %v3540
        %v3677 = vpack.c.b16 %v3545, %v3541
        %v3678 = vpack.c.b16 %v3550, %v3546
        %v3679 = vpack.c.b16 %v3551, %v3547
        %v3680 = vpack.c.b16 %v3552, %v3548
        %v3681 = vpack.c.b16 %v3553, %v3549
        %v3682 = vpack.c.b16 %v3558, %v3554
        %v3683 = vpack.c.b16 %v3559, %v3555
        %v3684 = vpack.c.b16 %v3560, %v3556
        %v3685 = vpack.c.b16 %v3561, %v3557
        %v3686 = vpack.c.b16 %v3566, %v3562
        %v3687 = vpack.c.b16 %v3567, %v3563
        %v3688 = vpack.c.b16 %v3568, %v3564
        %v3689 = vpack.c.b16 %v3569, %v3565
        %v3690 = vpack.c.b16 %v3574, %v3570
        %v3691 = vpack.c.b16 %v3575, %v3571
        %v3692 = vpack.c.b16 %v3576, %v3572
        %v3693 = vpack.c.b16 %v3577, %v3573
        %v3694 = vpack.c.b16 %v3582, %v3578
        %v3695 = vpack.c.b16 %v3583, %v3579
        %v3696 = vpack.c.b16 %v3584, %v3580
        %v3697 = vpack.c.b16 %v3585, %v3581
        %v3698 = vpack.c.b16 %v3590, %v3586
        %v3699 = vpack.c.b16 %v3591, %v3587
        %v3700 = vpack.c.b16 %v3592, %v3588
        %v3701 = vpack.c.b16 %v3593, %v3589
        %v3702 = vpack.c.b16 %v3598, %v3594
        %v3703 = vpack.c.b16 %v3599, %v3595
        %v3704 = vpack.c.b16 %v3600, %v3596
        %v3705 = vpack.c.b16 %v3601, %v3597
        %v3706 = vpack.c.b16 %v3606, %v3602
        %v3707 = vpack.c.b16 %v3607, %v3603
        %v3708 = vpack.c.b16 %v3608, %v3604
        %v3709 = vpack.c.b16 %v3609, %v3605
        %v3710 = vpack.c.b16 %v3614, %v3610
        %v3711 = vpack.c.b16 %v3615, %v3611
        %v3712 = vpack.c.b16 %v3616, %v3612
        %v3713 = vpack.c.b16 %v3617, %v3613
        %v3714 = vpack.c.b16 %v3622, %v3618
        %v3715 = vpack.c.b16 %v3623, %v3619
        %v3716 = vpack.c.b16 %v3624, %v3620
        %v3717 = vpack.c.b16 %v3625, %v3621
        %v3718 = vpack.c.b16 %v3630, %v3626
        %v3719 = vpack.c.b16 %v3631, %v3627
        %v3720 = vpack.c.b16 %v3632, %v3628
        %v3721 = vpack.c.b16 %v3633, %v3629
        %v3722 = vpack.c.b16 %v3638, %v3634
        %v3723 = vpack.c.b16 %v3639, %v3635
        %v3724 = vpack.c.b16 %v3640, %v3636
        %v3725 = vpack.c.b16 %v3641, %v3637
        %v3726 = vpack.c.b16 %v3646, %v3642
        %v3727 = vpack.c.b16 %v3647, %v3643
        %v3728 = vpack.c.b16 %v3648, %v3644
        %v3729 = vpack.c.b16 %v3649, %v3645
        %v3730 = vpack.c.b16 %v3654, %v3650
        %v3731 = vpack.c.b16 %v3655, %v3651
        %v3732 = vpack.c.b16 %v3656, %v3652
        %v3733 = vpack.c.b16 %v3657, %v3653
        %v3734 = vpack.c.b16 %v3662, %v3658
        %v3735 = vpack.c.b16 %v3663, %v3659
        %v3736 = vpack.c.b16 %v3664, %v3660
        %v3737 = vpack.c.b16 %v3665, %v3661
        %v3811 = vsel %vm766, %v3447, 0
        %3813 = vmatprep.subr.bf16.mxu0 %v3667
        %3814 = vmatpush1.bf16.msra.mxu0 %v3666
        %3815 = vmatprep.subr.bf16.mxu0 %v3671
        %3816 = vmatpush1.bf16.msra.mxu0 %v3670
        %3817 = vmatprep.subr.bf16.mxu0 %v3675
        %3818 = vmatpush1.bf16.msra.mxu0 %v3674
        %3819 = vmatprep.subr.bf16.mxu0 %v3679
        %3820 = vmatpush1.bf16.msra.mxu0 %v3678
        %3821 = vmatprep.subr.bf16.mxu0 %v3683
        %3822 = vmatpush1.bf16.msra.mxu0 %v3682
        %3823 = vmatprep.subr.bf16.mxu0 %v3687
        %3824 = vmatpush1.bf16.msra.mxu0 %v3686
        %3825 = vmatprep.subr.bf16.mxu0 %v3691
        %3826 = vmatpush1.bf16.msra.mxu0 %v3690
        %3827 = vmatprep.subr.bf16.mxu0 %v3695
        %3828 = vmatpush1.bf16.msra.mxu0 %v3694
        %3829 = vmatprep.subr.bf16.mxu0 %v3699
        %3830 = vmatpush1.bf16.msra.mxu0 %v3698
        %3831 = vmatprep.subr.bf16.mxu0 %v3703
        %3832 = vmatpush1.bf16.msra.mxu0 %v3702
        %3833 = vmatprep.subr.bf16.mxu0 %v3707
        %3834 = vmatpush1.bf16.msra.mxu0 %v3706
        %3835 = vmatprep.subr.bf16.mxu0 %v3711
        %3836 = vmatpush1.bf16.msra.mxu0 %v3710
        %3837 = vmatprep.subr.bf16.mxu0 %v3715
        %3838 = vmatpush1.bf16.msra.mxu0 %v3714
        %3839 = vmatprep.subr.bf16.mxu0 %v3719
        %3840 = vmatpush1.bf16.msra.mxu0 %v3718
        %3841 = vmatprep.subr.bf16.mxu0 %v3723
        %3842 = vmatpush1.bf16.msra.mxu0 %v3722
        %3843 = vmatprep.subr.bf16.mxu0 %v3727
        %3844 = vmatpush1.bf16.msra.mxu0 %v3726
        %3845 = vmatprep.mubr.bf16.mxu0 %v3446
        %3846 = vmatmul.mubr.bf16.gmra.mrb[0].mxu0 %v3445
        %v3847 = vpop.f32.mrb[0].mxu0
        %v3848 = vadd.f32 %v3346, %v3847
        %v3849 = vpop.f32.mrb[0].mxu0
        %v3850 = vadd.f32 %v3348, %v3849
        %v3851 = vpop.f32.mrb[0].mxu0
        %v3852 = vadd.f32 %v3350, %v3851
        %v3853 = vpop.f32.mrb[0].mxu0
        %v3854 = vadd.f32 %v3352, %v3853
        %3855 = vdwg.mxu0
        %3856 = vmatprep.subr.bf16.mxu0 %v3731
        %3857 = vmatpush1.bf16.msra.mxu0 %v3730
        %3858 = vmatprep.subr.bf16.mxu0 %v3735
        %3859 = vmatpush1.bf16.msra.mxu0 %v3734
        %3860 = vmatprep.subr.bf16.mxu0 0
        %3861 = vmatpush1.bf16.msra.mxu0 0
        %3862 = vmatprep.subr.bf16.mxu0 0
        %3863 = vmatpush1.bf16.msra.mxu0 0
        %3864 = vmatprep.subr.bf16.mxu0 0
        %3865 = vmatpush1.bf16.msra.mxu0 0
        %3866 = vmatprep.subr.bf16.mxu0 0
        %3867 = vmatpush1.bf16.msra.mxu0 0
        %3868 = vmatprep.subr.bf16.mxu0 0
        %3869 = vmatpush1.bf16.msra.mxu0 0
        %3870 = vmatprep.subr.bf16.mxu0 0
        %3871 = vmatpush1.bf16.msra.mxu0 0
        %3872 = vmatprep.subr.bf16.mxu0 0
        %3873 = vmatpush1.bf16.msra.mxu0 0
        %3874 = vmatprep.subr.bf16.mxu0 0
        %3875 = vmatpush1.bf16.msra.mxu0 0
        %3876 = vmatprep.subr.bf16.mxu0 0
        %3877 = vmatpush1.bf16.msra.mxu0 0
        %3878 = vmatprep.subr.bf16.mxu0 0
        %3879 = vmatpush1.bf16.msra.mxu0 0
        %3880 = vmatprep.subr.bf16.mxu0 0
        %3881 = vmatpush1.bf16.msra.mxu0 0
        %3882 = vmatprep.subr.bf16.mxu0 0
        %3883 = vmatpush1.bf16.msra.mxu0 0
        %3884 = vmatprep.subr.bf16.mxu0 0
        %3885 = vmatpush1.bf16.msra.mxu0 0
        %3886 = vmatprep.subr.bf16.mxu0 0
        %3887 = vmatpush1.bf16.msra.mxu0 0
        %3888 = vmatprep.mubr.bf16.mxu0 0
        %3889 = vmatmul.mubr.bf16.gmra.mrb[0].mxu0 %v3811
        %v3890 = vpop.f32.mrb[0].mxu0
        %v3891 = vadd.f32 %v3848, %v3890
        %v3892 = vpop.f32.mrb[0].mxu0
        %v3893 = vadd.f32 %v3850, %v3892
        %v3894 = vpop.f32.mrb[0].mxu0
        %v3895 = vadd.f32 %v3852, %v3894
        %v3896 = vpop.f32.mrb[0].mxu0
        %v3897 = vadd.f32 %v3854, %v3896
        %3898 = vdwg.mxu0
        %3899 = vmatprep.subr.bf16.mxu0 %v3669
        %3900 = vmatpush1.bf16.msra.mxu0 %v3668
        %3901 = vmatprep.subr.bf16.mxu0 %v3673
        %3902 = vmatpush1.bf16.msra.mxu0 %v3672
        %3903 = vmatprep.subr.bf16.mxu0 %v3677
        %3904 = vmatpush1.bf16.msra.mxu0 %v3676
        %3905 = vmatprep.subr.bf16.mxu0 %v3681
        %3906 = vmatpush1.bf16.msra.mxu0 %v3680
        %3907 = vmatprep.subr.bf16.mxu0 %v3685
        %3908 = vmatpush1.bf16.msra.mxu0 %v3684
        %3909 = vmatprep.subr.bf16.mxu0 %v3689
        %3910 = vmatpush1.bf16.msra.mxu0 %v3688
        %3911 = vmatprep.subr.bf16.mxu0 %v3693
        %3912 = vmatpush1.bf16.msra.mxu0 %v3692
        %3913 = vmatprep.subr.bf16.mxu0 %v3697
        %3914 = vmatpush1.bf16.msra.mxu0 %v3696
        %3915 = vmatprep.subr.bf16.mxu0 %v3701
        %3916 = vmatpush1.bf16.msra.mxu0 %v3700
        %3917 = vmatprep.subr.bf16.mxu0 %v3705
        %3918 = vmatpush1.bf16.msra.mxu0 %v3704
        %3919 = vmatprep.subr.bf16.mxu0 %v3709
        %3920 = vmatpush1.bf16.msra.mxu0 %v3708
        %3921 = vmatprep.subr.bf16.mxu0 %v3713
        %3922 = vmatpush1.bf16.msra.mxu0 %v3712
        %3923 = vmatprep.subr.bf16.mxu0 %v3717
        %3924 = vmatpush1.bf16.msra.mxu0 %v3716
        %3925 = vmatprep.subr.bf16.mxu0 %v3721
        %3926 = vmatpush1.bf16.msra.mxu0 %v3720
        %3927 = vmatprep.subr.bf16.mxu0 %v3725
        %3928 = vmatpush1.bf16.msra.mxu0 %v3724
        %3929 = vmatprep.subr.bf16.mxu0 %v3729
        %3930 = vmatpush1.bf16.msra.mxu0 %v3728
        %3931 = vmatprep.mubr.bf16.mxu0 %v3446
        %3932 = vmatmul.mubr.bf16.gmra.mrb[0].mxu0 %v3445
        %v3933 = vpop.f32.mrb[0].mxu0
        %v3934 = vadd.f32 %v3432, %v3933
        %v3935 = vpop.f32.mrb[0].mxu0
        %v3936 = vadd.f32 %v3434, %v3935
        %v3937 = vpop.f32.mrb[0].mxu0
        %v3938 = vadd.f32 %v3436, %v3937
        %v3939 = vpop.f32.mrb[0].mxu0
        %v3940 = vadd.f32 %v3438, %v3939
        %3941 = vdwg.mxu0
        %3942 = vmatprep.subr.bf16.mxu0 %v3733
        %3943 = vmatpush1.bf16.msra.mxu0 %v3732
        %3944 = vmatprep.subr.bf16.mxu0 %v3737
        %3945 = vmatpush1.bf16.msra.mxu0 %v3736
        %3946 = vmatprep.subr.bf16.mxu0 0
        %3947 = vmatpush1.bf16.msra.mxu0 0
        %3948 = vmatprep.subr.bf16.mxu0 0
        %3949 = vmatpush1.bf16.msra.mxu0 0
        %3950 = vmatprep.subr.bf16.mxu0 0
        %3951 = vmatpush1.bf16.msra.mxu0 0
        %3952 = vmatprep.subr.bf16.mxu0 0
        %3953 = vmatpush1.bf16.msra.mxu0 0
        %3954 = vmatprep.subr.bf16.mxu0 0
        %3955 = vmatpush1.bf16.msra.mxu0 0
        %3956 = vmatprep.subr.bf16.mxu0 0
        %3957 = vmatpush1.bf16.msra.mxu0 0
        %3958 = vmatprep.subr.bf16.mxu0 0
        %3959 = vmatpush1.bf16.msra.mxu0 0
        %3960 = vmatprep.subr.bf16.mxu0 0
        %3961 = vmatpush1.bf16.msra.mxu0 0
        %3962 = vmatprep.subr.bf16.mxu0 0
        %3963 = vmatpush1.bf16.msra.mxu0 0
        %3964 = vmatprep.subr.bf16.mxu0 0
        %3965 = vmatpush1.bf16.msra.mxu0 0
        %3966 = vmatprep.subr.bf16.mxu0 0
        %3967 = vmatpush1.bf16.msra.mxu0 0
        %3968 = vmatprep.subr.bf16.mxu0 0
        %3969 = vmatpush1.bf16.msra.mxu0 0
        %3970 = vmatprep.subr.bf16.mxu0 0
        %3971 = vmatpush1.bf16.msra.mxu0 0
        %3972 = vmatprep.subr.bf16.mxu0 0
        %3973 = vmatpush1.bf16.msra.mxu0 0
        %3974 = vmatprep.mubr.bf16.mxu0 0
        %3975 = vmatmul.mubr.bf16.gmra.mrb[0].mxu0 %v3811
        %v3976 = vpop.f32.mrb[0].mxu0
        %v3977 = vadd.f32 %v3934, %v3976
        %v3978 = vpop.f32.mrb[0].mxu0
        %v3979 = vadd.f32 %v3936, %v3978
        %v3980 = vpop.f32.mrb[0].mxu0
        %v3981 = vadd.f32 %v3938, %v3980
        %v3982 = vpop.f32.mrb[0].mxu0
        %v3983 = vadd.f32 %v3940, %v3982
        %3984 = vdwg.mxu0
        %v3985 = vld [vmem:[#allocation3] sm:$0xee]
        %v3986 = vld [vmem:[#allocation3 + $0x8] sm:$0xe]
        %s3987 = scalar_lea.vmem [#allocation16], 1152
        %v3988 = vld [vmem:[%s3987] sm:$0xff]
        %v3989 = vld [vmem:[%s3987 + $0x8] sm:$0xff]
        %v3990 = vld [vmem:[%s3987 + $0x10] sm:$0xff]
        %v3991 = vld [vmem:[%s3987 + $0x18] sm:$0xff]
        %v3992 = vld [vmem:[%s3987 + $0x20] sm:$0xff]
        %v3993 = vld [vmem:[%s3987 + $0x28] sm:$0xff]
        %v3994 = vld [vmem:[%s3987 + $0x30] sm:$0xff]
        %v3995 = vld [vmem:[%s3987 + $0x38] sm:$0xff]
        %v3996 = vld [vmem:[%s3987 + $0x40] sm:$0xff]
        %v3997 = vld [vmem:[%s3987 + $0x48] sm:$0xff]
        %v3998 = vld [vmem:[%s3987 + $0x50] sm:$0xff]
        %v3999 = vld [vmem:[%s3987 + $0x58] sm:$0xff]
        %v4000 = vld [vmem:[%s3987 + $0x60] sm:$0xff]
        %v4001 = vld [vmem:[%s3987 + $0x68] sm:$0xff]
        %v4002 = vld [vmem:[%s3987 + $0x70] sm:$0xff]
        %v4003 = vld [vmem:[%s3987 + $0x78] sm:$0xff]
        %v4004 = vld [vmem:[%s3987 + $0x80] sm:$0xff]
        %v4005 = vld [vmem:[%s3987 + $0x88] sm:$0xff]
        %v4006 = vld [vmem:[%s3987 + $0x90] sm:$0xff]
        %v4007 = vld [vmem:[%s3987 + $0x98] sm:$0xff]
        %v4008 = vld [vmem:[%s3987 + $0xa0] sm:$0xff]
        %v4009 = vld [vmem:[%s3987 + $0xa8] sm:$0xff]
        %v4010 = vld [vmem:[%s3987 + $0xb0] sm:$0xff]
        %v4011 = vld [vmem:[%s3987 + $0xb8] sm:$0xff]
        %v4012 = vld [vmem:[%s3987 + $0xc0] sm:$0xff]
        %v4013 = vld [vmem:[%s3987 + $0xc8] sm:$0xff]
        %v4014 = vld [vmem:[%s3987 + $0xd0] sm:$0xff]
        %v4015 = vld [vmem:[%s3987 + $0xd8] sm:$0xff]
        %v4016 = vld [vmem:[%s3987 + $0xe0] sm:$0xff]
        %v4017 = vld [vmem:[%s3987 + $0xe8] sm:$0xff]
        %v4018 = vld [vmem:[%s3987 + $0xf0] sm:$0xff]
        %v4019 = vld [vmem:[%s3987 + $0xf8] sm:$0xff]
        %v4020 = vld [vmem:[%s3987 + $0x100] sm:$0xff]
        %v4021 = vld [vmem:[%s3987 + $0x108] sm:$0xff]
        %v4022 = vld [vmem:[%s3987 + $0x110] sm:$0xff]
        %v4023 = vld [vmem:[%s3987 + $0x118] sm:$0xff]
        %v4024 = vld [vmem:[%s3987 + $0x120] sm:$0xff]
        %v4025 = vld [vmem:[%s3987 + $0x128] sm:$0xff]
        %v4026 = vld [vmem:[%s3987 + $0x130] sm:$0xff]
        %v4027 = vld [vmem:[%s3987 + $0x138] sm:$0xff]
        %v4028 = vld [vmem:[%s3987 + $0x140] sm:$0xff]
        %v4029 = vld [vmem:[%s3987 + $0x148] sm:$0xff]
        %v4030 = vld [vmem:[%s3987 + $0x150] sm:$0xff]
        %v4031 = vld [vmem:[%s3987 + $0x158] sm:$0xff]
        %v4032 = vld [vmem:[%s3987 + $0x160] sm:$0xff]
        %v4033 = vld [vmem:[%s3987 + $0x168] sm:$0xff]
        %v4034 = vld [vmem:[%s3987 + $0x170] sm:$0xff]
        %v4035 = vld [vmem:[%s3987 + $0x178] sm:$0xff]
        %v4036 = vld [vmem:[%s3987 + $0x180] sm:$0xff]
        %v4037 = vld [vmem:[%s3987 + $0x188] sm:$0xff]
        %v4038 = vld [vmem:[%s3987 + $0x190] sm:$0xff]
        %v4039 = vld [vmem:[%s3987 + $0x198] sm:$0xff]
        %v4040 = vld [vmem:[%s3987 + $0x1a0] sm:$0xff]
        %v4041 = vld [vmem:[%s3987 + $0x1a8] sm:$0xff]
        %v4042 = vld [vmem:[%s3987 + $0x1b0] sm:$0xff]
        %v4043 = vld [vmem:[%s3987 + $0x1b8] sm:$0xff]
        %v4044 = vld [vmem:[%s3987 + $0x1c0] sm:$0xff]
        %v4045 = vld [vmem:[%s3987 + $0x1c8] sm:$0xff]
        %v4046 = vld [vmem:[%s3987 + $0x1d0] sm:$0xff]
        %v4047 = vld [vmem:[%s3987 + $0x1d8] sm:$0xff]
        %v4048 = vld [vmem:[%s3987 + $0x1e0] sm:$0xff]
        %v4049 = vld [vmem:[%s3987 + $0x1e8] sm:$0xff]
        %v4050 = vld [vmem:[%s3987 + $0x1f0] sm:$0xff]
        %v4051 = vld [vmem:[%s3987 + $0x1f8] sm:$0xff]
        %v4052 = vld [vmem:[%s3987 + $0x200] sm:$0xff]
        %v4053 = vld [vmem:[%s3987 + $0x208] sm:$0xff]
        %v4054 = vld [vmem:[%s3987 + $0x210] sm:$0xff]
        %v4055 = vld [vmem:[%s3987 + $0x218] sm:$0xff]
        %v4056 = vld [vmem:[%s3987 + $0x220] sm:$0xff]
        %v4057 = vld [vmem:[%s3987 + $0x228] sm:$0xff]
        %v4058 = vld [vmem:[%s3987 + $0x230] sm:$0xff]
        %v4059 = vld [vmem:[%s3987 + $0x238] sm:$0xff]
        %v4062 = vunpack.c.l.b16 %v3985
        %v4063 = vunpack.c.h.b16 %v3985
        %v4064 = vunpack.c.l.b16 %v3986
        %v4065 = vpack.c.b16 %v2876, %v4062
        %v4066 = vpack.c.b16 %v2877, %v4063
        %v4067 = vpack.c.b16 %v2878, %v4064
        %v4068 = vrot.slane %v4065, 1
        %v4069 = vrot.slane %v4066, 1
        %v4070 = vrot.slane %v4067, 1
        %v4145 = vunpack.c.l.b16 %v3988
        %v4146 = vunpack.c.h.b16 %v3988
        %v4147 = vunpack.c.l.b16 %v3989
        %v4148 = vunpack.c.h.b16 %v3989
        %v4149 = vunpack.c.l.b16 %v3990
        %v4150 = vunpack.c.h.b16 %v3990
        %v4151 = vunpack.c.l.b16 %v3991
        %v4152 = vunpack.c.h.b16 %v3991
        %v4153 = vunpack.c.l.b16 %v3992
        %v4154 = vunpack.c.h.b16 %v3992
        %v4155 = vunpack.c.l.b16 %v3993
        %v4156 = vunpack.c.h.b16 %v3993
        %v4157 = vunpack.c.l.b16 %v3994
        %v4158 = vunpack.c.h.b16 %v3994
        %v4159 = vunpack.c.l.b16 %v3995
        %v4160 = vunpack.c.h.b16 %v3995
        %v4161 = vunpack.c.l.b16 %v3996
        %v4162 = vunpack.c.h.b16 %v3996
        %v4163 = vunpack.c.l.b16 %v3997
        %v4164 = vunpack.c.h.b16 %v3997
        %v4165 = vunpack.c.l.b16 %v3998
        %v4166 = vunpack.c.h.b16 %v3998
        %v4167 = vunpack.c.l.b16 %v3999
        %v4168 = vunpack.c.h.b16 %v3999
        %v4169 = vunpack.c.l.b16 %v4000
        %v4170 = vunpack.c.h.b16 %v4000
        %v4171 = vunpack.c.l.b16 %v4001
        %v4172 = vunpack.c.h.b16 %v4001
        %v4173 = vunpack.c.l.b16 %v4002
        %v4174 = vunpack.c.h.b16 %v4002
        %v4175 = vunpack.c.l.b16 %v4003
        %v4176 = vunpack.c.h.b16 %v4003
        %v4177 = vunpack.c.l.b16 %v4004
        %v4178 = vunpack.c.h.b16 %v4004
        %v4179 = vunpack.c.l.b16 %v4005
        %v4180 = vunpack.c.h.b16 %v4005
        %v4181 = vunpack.c.l.b16 %v4006
        %v4182 = vunpack.c.h.b16 %v4006
        %v4183 = vunpack.c.l.b16 %v4007
        %v4184 = vunpack.c.h.b16 %v4007
        %v4185 = vunpack.c.l.b16 %v4008
        %v4186 = vunpack.c.h.b16 %v4008
        %v4187 = vunpack.c.l.b16 %v4009
        %v4188 = vunpack.c.h.b16 %v4009
        %v4189 = vunpack.c.l.b16 %v4010
        %v4190 = vunpack.c.h.b16 %v4010
        %v4191 = vunpack.c.l.b16 %v4011
        %v4192 = vunpack.c.h.b16 %v4011
        %v4193 = vunpack.c.l.b16 %v4012
        %v4194 = vunpack.c.h.b16 %v4012
        %v4195 = vunpack.c.l.b16 %v4013
        %v4196 = vunpack.c.h.b16 %v4013
        %v4197 = vunpack.c.l.b16 %v4014
        %v4198 = vunpack.c.h.b16 %v4014
        %v4199 = vunpack.c.l.b16 %v4015
        %v4200 = vunpack.c.h.b16 %v4015
        %v4201 = vunpack.c.l.b16 %v4016
        %v4202 = vunpack.c.h.b16 %v4016
        %v4203 = vunpack.c.l.b16 %v4017
        %v4204 = vunpack.c.h.b16 %v4017
        %v4205 = vunpack.c.l.b16 %v4018
        %v4206 = vunpack.c.h.b16 %v4018
        %v4207 = vunpack.c.l.b16 %v4019
        %v4208 = vunpack.c.h.b16 %v4019
        %v4209 = vunpack.c.l.b16 %v4020
        %v4210 = vunpack.c.h.b16 %v4020
        %v4211 = vunpack.c.l.b16 %v4021
        %v4212 = vunpack.c.h.b16 %v4021
        %v4213 = vunpack.c.l.b16 %v4022
        %v4214 = vunpack.c.h.b16 %v4022
        %v4215 = vunpack.c.l.b16 %v4023
        %v4216 = vunpack.c.h.b16 %v4023
        %v4217 = vunpack.c.l.b16 %v4024
        %v4218 = vunpack.c.h.b16 %v4024
        %v4219 = vunpack.c.l.b16 %v4025
        %v4220 = vunpack.c.h.b16 %v4025
        %v4221 = vunpack.c.l.b16 %v4026
        %v4222 = vunpack.c.h.b16 %v4026
        %v4223 = vunpack.c.l.b16 %v4027
        %v4224 = vunpack.c.h.b16 %v4027
        %v4225 = vunpack.c.l.b16 %v4028
        %v4226 = vunpack.c.h.b16 %v4028
        %v4227 = vunpack.c.l.b16 %v4029
        %v4228 = vunpack.c.h.b16 %v4029
        %v4229 = vunpack.c.l.b16 %v4030
        %v4230 = vunpack.c.h.b16 %v4030
        %v4231 = vunpack.c.l.b16 %v4031
        %v4232 = vunpack.c.h.b16 %v4031
        %v4233 = vunpack.c.l.b16 %v4032
        %v4234 = vunpack.c.h.b16 %v4032
        %v4235 = vunpack.c.l.b16 %v4033
        %v4236 = vunpack.c.h.b16 %v4033
        %v4237 = vunpack.c.l.b16 %v4034
        %v4238 = vunpack.c.h.b16 %v4034
        %v4239 = vunpack.c.l.b16 %v4035
        %v4240 = vunpack.c.h.b16 %v4035
        %v4241 = vunpack.c.l.b16 %v4036
        %v4242 = vunpack.c.h.b16 %v4036
        %v4243 = vunpack.c.l.b16 %v4037
        %v4244 = vunpack.c.h.b16 %v4037
        %v4245 = vunpack.c.l.b16 %v4038
        %v4246 = vunpack.c.h.b16 %v4038
        %v4247 = vunpack.c.l.b16 %v4039
        %v4248 = vunpack.c.h.b16 %v4039
        %v4249 = vunpack.c.l.b16 %v4040
        %v4250 = vunpack.c.h.b16 %v4040
        %v4251 = vunpack.c.l.b16 %v4041
        %v4252 = vunpack.c.h.b16 %v4041
        %v4253 = vunpack.c.l.b16 %v4042
        %v4254 = vunpack.c.h.b16 %v4042
        %v4255 = vunpack.c.l.b16 %v4043
        %v4256 = vunpack.c.h.b16 %v4043
        %v4257 = vunpack.c.l.b16 %v4044
        %v4258 = vunpack.c.h.b16 %v4044
        %v4259 = vunpack.c.l.b16 %v4045
        %v4260 = vunpack.c.h.b16 %v4045
        %v4261 = vunpack.c.l.b16 %v4046
        %v4262 = vunpack.c.h.b16 %v4046
        %v4263 = vunpack.c.l.b16 %v4047
        %v4264 = vunpack.c.h.b16 %v4047
        %v4265 = vunpack.c.l.b16 %v4048
        %v4266 = vunpack.c.h.b16 %v4048
        %v4267 = vunpack.c.l.b16 %v4049
        %v4268 = vunpack.c.h.b16 %v4049
        %v4269 = vunpack.c.l.b16 %v4050
        %v4270 = vunpack.c.h.b16 %v4050
        %v4271 = vunpack.c.l.b16 %v4051
        %v4272 = vunpack.c.h.b16 %v4051
        %v4273 = vunpack.c.l.b16 %v4052
        %v4274 = vunpack.c.h.b16 %v4052
        %v4275 = vunpack.c.l.b16 %v4053
        %v4276 = vunpack.c.h.b16 %v4053
        %v4277 = vunpack.c.l.b16 %v4054
        %v4278 = vunpack.c.h.b16 %v4054
        %v4279 = vunpack.c.l.b16 %v4055
        %v4280 = vunpack.c.h.b16 %v4055
        %v4281 = vunpack.c.l.b16 %v4056
        %v4282 = vunpack.c.h.b16 %v4056
        %v4283 = vunpack.c.l.b16 %v4057
        %v4284 = vunpack.c.h.b16 %v4057
        %v4285 = vunpack.c.l.b16 %v4058
        %v4286 = vunpack.c.h.b16 %v4058
        %v4287 = vunpack.c.l.b16 %v4059
        %v4288 = vunpack.c.h.b16 %v4059
        %v4289 = vpack.c.b16 %v4149, %v4145
        %v4290 = vpack.c.b16 %v4150, %v4146
        %v4291 = vpack.c.b16 %v4151, %v4147
        %v4292 = vpack.c.b16 %v4152, %v4148
        %v4293 = vpack.c.b16 %v4157, %v4153
        %v4294 = vpack.c.b16 %v4158, %v4154
        %v4295 = vpack.c.b16 %v4159, %v4155
        %v4296 = vpack.c.b16 %v4160, %v4156
        %v4297 = vpack.c.b16 %v4165, %v4161
        %v4298 = vpack.c.b16 %v4166, %v4162
        %v4299 = vpack.c.b16 %v4167, %v4163
        %v4300 = vpack.c.b16 %v4168, %v4164
        %v4301 = vpack.c.b16 %v4173, %v4169
        %v4302 = vpack.c.b16 %v4174, %v4170
        %v4303 = vpack.c.b16 %v4175, %v4171
        %v4304 = vpack.c.b16 %v4176, %v4172
        %v4305 = vpack.c.b16 %v4181, %v4177
        %v4306 = vpack.c.b16 %v4182, %v4178
        %v4307 = vpack.c.b16 %v4183, %v4179
        %v4308 = vpack.c.b16 %v4184, %v4180
        %v4309 = vpack.c.b16 %v4189, %v4185
        %v4310 = vpack.c.b16 %v4190, %v4186
        %v4311 = vpack.c.b16 %v4191, %v4187
        %v4312 = vpack.c.b16 %v4192, %v4188
        %v4313 = vpack.c.b16 %v4197, %v4193
        %v4314 = vpack.c.b16 %v4198, %v4194
        %v4315 = vpack.c.b16 %v4199, %v4195
        %v4316 = vpack.c.b16 %v4200, %v4196
        %v4317 = vpack.c.b16 %v4205, %v4201
        %v4318 = vpack.c.b16 %v4206, %v4202
        %v4319 = vpack.c.b16 %v4207, %v4203
        %v4320 = vpack.c.b16 %v4208, %v4204
        %v4321 = vpack.c.b16 %v4213, %v4209
        %v4322 = vpack.c.b16 %v4214, %v4210
        %v4323 = vpack.c.b16 %v4215, %v4211
        %v4324 = vpack.c.b16 %v4216, %v4212
        %v4325 = vpack.c.b16 %v4221, %v4217
        %v4326 = vpack.c.b16 %v4222, %v4218
        %v4327 = vpack.c.b16 %v4223, %v4219
        %v4328 = vpack.c.b16 %v4224, %v4220
        %v4329 = vpack.c.b16 %v4229, %v4225
        %v4330 = vpack.c.b16 %v4230, %v4226
        %v4331 = vpack.c.b16 %v4231, %v4227
        %v4332 = vpack.c.b16 %v4232, %v4228
        %v4333 = vpack.c.b16 %v4237, %v4233
        %v4334 = vpack.c.b16 %v4238, %v4234
        %v4335 = vpack.c.b16 %v4239, %v4235
        %v4336 = vpack.c.b16 %v4240, %v4236
        %v4337 = vpack.c.b16 %v4245, %v4241
        %v4338 = vpack.c.b16 %v4246, %v4242
        %v4339 = vpack.c.b16 %v4247, %v4243
        %v4340 = vpack.c.b16 %v4248, %v4244
        %v4341 = vpack.c.b16 %v4253, %v4249
        %v4342 = vpack.c.b16 %v4254, %v4250
        %v4343 = vpack.c.b16 %v4255, %v4251
        %v4344 = vpack.c.b16 %v4256, %v4252
        %v4345 = vpack.c.b16 %v4261, %v4257
        %v4346 = vpack.c.b16 %v4262, %v4258
        %v4347 = vpack.c.b16 %v4263, %v4259
        %v4348 = vpack.c.b16 %v4264, %v4260
        %v4349 = vpack.c.b16 %v4269, %v4265
        %v4350 = vpack.c.b16 %v4270, %v4266
        %v4351 = vpack.c.b16 %v4271, %v4267
        %v4352 = vpack.c.b16 %v4272, %v4268
        %v4353 = vpack.c.b16 %v4277, %v4273
        %v4354 = vpack.c.b16 %v4278, %v4274
        %v4355 = vpack.c.b16 %v4279, %v4275
        %v4356 = vpack.c.b16 %v4280, %v4276
        %v4357 = vpack.c.b16 %v4285, %v4281
        %v4358 = vpack.c.b16 %v4286, %v4282
        %v4359 = vpack.c.b16 %v4287, %v4283
        %v4360 = vpack.c.b16 %v4288, %v4284
        %v4434 = vsel %vm766, %v4070, 0
        %4436 = vmatprep.subr.bf16.mxu0 %v4290
        %4437 = vmatpush1.bf16.msra.mxu0 %v4289
        %4438 = vmatprep.subr.bf16.mxu0 %v4294
        %4439 = vmatpush1.bf16.msra.mxu0 %v4293
        %4440 = vmatprep.subr.bf16.mxu0 %v4298
        %4441 = vmatpush1.bf16.msra.mxu0 %v4297
        %4442 = vmatprep.subr.bf16.mxu0 %v4302
        %4443 = vmatpush1.bf16.msra.mxu0 %v4301
        %4444 = vmatprep.subr.bf16.mxu0 %v4306
        %4445 = vmatpush1.bf16.msra.mxu0 %v4305
        %4446 = vmatprep.subr.bf16.mxu0 %v4310
        %4447 = vmatpush1.bf16.msra.mxu0 %v4309
        %4448 = vmatprep.subr.bf16.mxu0 %v4314
        %4449 = vmatpush1.bf16.msra.mxu0 %v4313
        %4450 = vmatprep.subr.bf16.mxu0 %v4318
        %4451 = vmatpush1.bf16.msra.mxu0 %v4317
        %4452 = vmatprep.subr.bf16.mxu0 %v4322
        %4453 = vmatpush1.bf16.msra.mxu0 %v4321
        %4454 = vmatprep.subr.bf16.mxu0 %v4326
        %4455 = vmatpush1.bf16.msra.mxu0 %v4325
        %4456 = vmatprep.subr.bf16.mxu0 %v4330
        %4457 = vmatpush1.bf16.msra.mxu0 %v4329
        %4458 = vmatprep.subr.bf16.mxu0 %v4334
        %4459 = vmatpush1.bf16.msra.mxu0 %v4333
        %4460 = vmatprep.subr.bf16.mxu0 %v4338
        %4461 = vmatpush1.bf16.msra.mxu0 %v4337
        %4462 = vmatprep.subr.bf16.mxu0 %v4342
        %4463 = vmatpush1.bf16.msra.mxu0 %v4341
        %4464 = vmatprep.subr.bf16.mxu0 %v4346
        %4465 = vmatpush1.bf16.msra.mxu0 %v4345
        %4466 = vmatprep.subr.bf16.mxu0 %v4350
        %4467 = vmatpush1.bf16.msra.mxu0 %v4349
        %4468 = vmatprep.mubr.bf16.mxu0 %v4069
        %4469 = vmatmul.mubr.bf16.gmra.mrb[0].mxu0 %v4068
        %v4470 = vpop.f32.mrb[0].mxu0
        %v4471 = vadd.f32 0.0, %v4470
        %v4472 = vpop.f32.mrb[0].mxu0
        %v4473 = vadd.f32 0.0, %v4472
        %v4474 = vpop.f32.mrb[0].mxu0
        %v4475 = vadd.f32 0.0, %v4474
        %v4476 = vpop.f32.mrb[0].mxu0
        %v4477 = vadd.f32 0.0, %v4476
        %4478 = vdwg.mxu0
        %4479 = vmatprep.subr.bf16.mxu0 %v4354
        %4480 = vmatpush1.bf16.msra.mxu0 %v4353
        %4481 = vmatprep.subr.bf16.mxu0 %v4358
        %4482 = vmatpush1.bf16.msra.mxu0 %v4357
        %4483 = vmatprep.subr.bf16.mxu0 0
        %4484 = vmatpush1.bf16.msra.mxu0 0
        %4485 = vmatprep.subr.bf16.mxu0 0
        %4486 = vmatpush1.bf16.msra.mxu0 0
        %4487 = vmatprep.subr.bf16.mxu0 0
        %4488 = vmatpush1.bf16.msra.mxu0 0
        %4489 = vmatprep.subr.bf16.mxu0 0
        %4490 = vmatpush1.bf16.msra.mxu0 0
        %4491 = vmatprep.subr.bf16.mxu0 0
        %4492 = vmatpush1.bf16.msra.mxu0 0
        %4493 = vmatprep.subr.bf16.mxu0 0
        %4494 = vmatpush1.bf16.msra.mxu0 0
        %4495 = vmatprep.subr.bf16.mxu0 0
        %4496 = vmatpush1.bf16.msra.mxu0 0
        %4497 = vmatprep.subr.bf16.mxu0 0
        %4498 = vmatpush1.bf16.msra.mxu0 0
        %4499 = vmatprep.subr.bf16.mxu0 0
        %4500 = vmatpush1.bf16.msra.mxu0 0
        %4501 = vmatprep.subr.bf16.mxu0 0
        %4502 = vmatpush1.bf16.msra.mxu0 0
        %4503 = vmatprep.subr.bf16.mxu0 0
        %4504 = vmatpush1.bf16.msra.mxu0 0
        %4505 = vmatprep.subr.bf16.mxu0 0
        %4506 = vmatpush1.bf16.msra.mxu0 0
        %4507 = vmatprep.subr.bf16.mxu0 0
        %4508 = vmatpush1.bf16.msra.mxu0 0
        %4509 = vmatprep.subr.bf16.mxu0 0
        %4510 = vmatpush1.bf16.msra.mxu0 0
        %4511 = vmatprep.mubr.bf16.mxu0 0
        %4512 = vmatmul.mubr.bf16.gmra.mrb[0].mxu0 %v4434
        %v4513 = vpop.f32.mrb[0].mxu0
        %v4514 = vadd.f32 %v4471, %v4513
        %v4515 = vpop.f32.mrb[0].mxu0
        %v4516 = vadd.f32 %v4473, %v4515
        %v4517 = vpop.f32.mrb[0].mxu0
        %v4518 = vadd.f32 %v4475, %v4517
        %v4519 = vpop.f32.mrb[0].mxu0
        %v4520 = vadd.f32 %v4477, %v4519
        %4521 = vdwg.mxu0
        %4522 = vmatprep.subr.bf16.mxu0 %v4292
        %4523 = vmatpush1.bf16.msra.mxu0 %v4291
        %4524 = vmatprep.subr.bf16.mxu0 %v4296
        %4525 = vmatpush1.bf16.msra.mxu0 %v4295
        %4526 = vmatprep.subr.bf16.mxu0 %v4300
        %4527 = vmatpush1.bf16.msra.mxu0 %v4299
        %4528 = vmatprep.subr.bf16.mxu0 %v4304
        %4529 = vmatpush1.bf16.msra.mxu0 %v4303
        %4530 = vmatprep.subr.bf16.mxu0 %v4308
        %4531 = vmatpush1.bf16.msra.mxu0 %v4307
        %4532 = vmatprep.subr.bf16.mxu0 %v4312
        %4533 = vmatpush1.bf16.msra.mxu0 %v4311
        %4534 = vmatprep.subr.bf16.mxu0 %v4316
        %4535 = vmatpush1.bf16.msra.mxu0 %v4315
        %4536 = vmatprep.subr.bf16.mxu0 %v4320
        %4537 = vmatpush1.bf16.msra.mxu0 %v4319
        %4538 = vmatprep.subr.bf16.mxu0 %v4324
        %4539 = vmatpush1.bf16.msra.mxu0 %v4323
        %4540 = vmatprep.subr.bf16.mxu0 %v4328
        %4541 = vmatpush1.bf16.msra.mxu0 %v4327
        %4542 = vmatprep.subr.bf16.mxu0 %v4332
        %4543 = vmatpush1.bf16.msra.mxu0 %v4331
        %4544 = vmatprep.subr.bf16.mxu0 %v4336
        %4545 = vmatpush1.bf16.msra.mxu0 %v4335
        %4546 = vmatprep.subr.bf16.mxu0 %v4340
        %4547 = vmatpush1.bf16.msra.mxu0 %v4339
        %4548 = vmatprep.subr.bf16.mxu0 %v4344
        %4549 = vmatpush1.bf16.msra.mxu0 %v4343
        %4550 = vmatprep.subr.bf16.mxu0 %v4348
        %4551 = vmatpush1.bf16.msra.mxu0 %v4347
        %4552 = vmatprep.subr.bf16.mxu0 %v4352
        %4553 = vmatpush1.bf16.msra.mxu0 %v4351
        %4554 = vmatprep.mubr.bf16.mxu0 %v4069
        %4555 = vmatmul.mubr.bf16.gmra.mrb[0].mxu0 %v4068
        %v4556 = vpop.f32.mrb[0].mxu0
        %v4557 = vadd.f32 0.0, %v4556
        %v4558 = vpop.f32.mrb[0].mxu0
        %v4559 = vadd.f32 0.0, %v4558
        %v4560 = vpop.f32.mrb[0].mxu0
        %v4561 = vadd.f32 0.0, %v4560
        %v4562 = vpop.f32.mrb[0].mxu0
        %v4563 = vadd.f32 0.0, %v4562
        %4564 = vdwg.mxu0
        %4565 = vmatprep.subr.bf16.mxu0 %v4356
        %4566 = vmatpush1.bf16.msra.mxu0 %v4355
        %4567 = vmatprep.subr.bf16.mxu0 %v4360
        %4568 = vmatpush1.bf16.msra.mxu0 %v4359
        %4569 = vmatprep.subr.bf16.mxu0 0
        %4570 = vmatpush1.bf16.msra.mxu0 0
        %4571 = vmatprep.subr.bf16.mxu0 0
        %4572 = vmatpush1.bf16.msra.mxu0 0
        %4573 = vmatprep.subr.bf16.mxu0 0
        %4574 = vmatpush1.bf16.msra.mxu0 0
        %4575 = vmatprep.subr.bf16.mxu0 0
        %4576 = vmatpush1.bf16.msra.mxu0 0
        %4577 = vmatprep.subr.bf16.mxu0 0
        %4578 = vmatpush1.bf16.msra.mxu0 0
        %4579 = vmatprep.subr.bf16.mxu0 0
        %4580 = vmatpush1.bf16.msra.mxu0 0
        %4581 = vmatprep.subr.bf16.mxu0 0
        %4582 = vmatpush1.bf16.msra.mxu0 0
        %4583 = vmatprep.subr.bf16.mxu0 0
        %4584 = vmatpush1.bf16.msra.mxu0 0
        %4585 = vmatprep.subr.bf16.mxu0 0
        %4586 = vmatpush1.bf16.msra.mxu0 0
        %4587 = vmatprep.subr.bf16.mxu0 0
        %4588 = vmatpush1.bf16.msra.mxu0 0
        %4589 = vmatprep.subr.bf16.mxu0 0
        %4590 = vmatpush1.bf16.msra.mxu0 0
        %4591 = vmatprep.subr.bf16.mxu0 0
        %4592 = vmatpush1.bf16.msra.mxu0 0
        %4593 = vmatprep.subr.bf16.mxu0 0
        %4594 = vmatpush1.bf16.msra.mxu0 0
        %4595 = vmatprep.subr.bf16.mxu0 0
        %4596 = vmatpush1.bf16.msra.mxu0 0
        %4597 = vmatprep.mubr.bf16.mxu0 0
        %4598 = vmatmul.mubr.bf16.gmra.mrb[0].mxu0 %v4434
        %v4599 = vpop.f32.mrb[0].mxu0
        %v4600 = vadd.f32 %v4557, %v4599
        %v4601 = vpop.f32.mrb[0].mxu0
        %v4602 = vadd.f32 %v4559, %v4601
        %v4603 = vpop.f32.mrb[0].mxu0
        %v4604 = vadd.f32 %v4561, %v4603
        %v4605 = vpop.f32.mrb[0].mxu0
        %v4606 = vadd.f32 %v4563, %v4605
        %4607 = vdwg.mxu0
        %v4608 = vadd.f32 %v3891, %v4514
        %v4609 = vadd.f32 %v3893, %v4516
        %v4610 = vadd.f32 %v3977, %v4600
        %v4611 = vadd.f32 %v3979, %v4602
        %v4612 = vadd.f32 %v3895, %v4518
        %v4613 = vadd.f32 %v3897, %v4520
        %v4614 = vadd.f32 %v3981, %v4604
        %v4615 = vadd.f32 %v3983, %v4606
        %v4616 = vld [vmem:[#allocation3] sm:$0xee]
        %v4617 = vld [vmem:[#allocation3 + $0x8] sm:$0xe]
        %v4618 = vld [vmem:[#allocation3 + $0xc] sm:$0xff]
        %v4619 = vld [vmem:[#allocation3 + $0x14] sm:$0xf]
        %v4620 = vld [vmem:[#allocation3 + $0x18] sm:$0x11]
        %v4621 = vld [vmem:[#allocation3 + $0x20] sm:$0x1]
        %s4622 = scalar_lea.vmem [#allocation16], 1728
        %v4623 = vld [vmem:[%s4622] sm:$0xff]
        %v4624 = vld [vmem:[%s4622 + $0x8] sm:$0xff]
        %v4625 = vld [vmem:[%s4622 + $0x10] sm:$0xff]
        %v4626 = vld [vmem:[%s4622 + $0x18] sm:$0xff]
        %v4627 = vld [vmem:[%s4622 + $0x20] sm:$0xff]
        %v4628 = vld [vmem:[%s4622 + $0x28] sm:$0xff]
        %v4629 = vld [vmem:[%s4622 + $0x30] sm:$0xff]
        %v4630 = vld [vmem:[%s4622 + $0x38] sm:$0xff]
        %v4631 = vld [vmem:[%s4622 + $0x40] sm:$0xff]
        %v4632 = vld [vmem:[%s4622 + $0x48] sm:$0xff]
        %v4633 = vld [vmem:[%s4622 + $0x50] sm:$0xff]
        %v4634 = vld [vmem:[%s4622 + $0x58] sm:$0xff]
        %v4635 = vld [vmem:[%s4622 + $0x60] sm:$0xff]
        %v4636 = vld [vmem:[%s4622 + $0x68] sm:$0xff]
        %v4637 = vld [vmem:[%s4622 + $0x70] sm:$0xff]
        %v4638 = vld [vmem:[%s4622 + $0x78] sm:$0xff]
        %v4639 = vld [vmem:[%s4622 + $0x80] sm:$0xff]
        %v4640 = vld [vmem:[%s4622 + $0x88] sm:$0xff]
        %v4641 = vld [vmem:[%s4622 + $0x90] sm:$0xff]
        %v4642 = vld [vmem:[%s4622 + $0x98] sm:$0xff]
        %v4643 = vld [vmem:[%s4622 + $0xa0] sm:$0xff]
        %v4644 = vld [vmem:[%s4622 + $0xa8] sm:$0xff]
        %v4645 = vld [vmem:[%s4622 + $0xb0] sm:$0xff]
        %v4646 = vld [vmem:[%s4622 + $0xb8] sm:$0xff]
        %v4647 = vld [vmem:[%s4622 + $0xc0] sm:$0xff]
        %v4648 = vld [vmem:[%s4622 + $0xc8] sm:$0xff]
        %v4649 = vld [vmem:[%s4622 + $0xd0] sm:$0xff]
        %v4650 = vld [vmem:[%s4622 + $0xd8] sm:$0xff]
        %v4651 = vld [vmem:[%s4622 + $0xe0] sm:$0xff]
        %v4652 = vld [vmem:[%s4622 + $0xe8] sm:$0xff]
        %v4653 = vld [vmem:[%s4622 + $0xf0] sm:$0xff]
        %v4654 = vld [vmem:[%s4622 + $0xf8] sm:$0xff]
        %v4655 = vld [vmem:[%s4622 + $0x100] sm:$0xff]
        %v4656 = vld [vmem:[%s4622 + $0x108] sm:$0xff]
        %v4657 = vld [vmem:[%s4622 + $0x110] sm:$0xff]
        %v4658 = vld [vmem:[%s4622 + $0x118] sm:$0xff]
        %v4659 = vld [vmem:[%s4622 + $0x120] sm:$0xff]
        %v4660 = vld [vmem:[%s4622 + $0x128] sm:$0xff]
        %v4661 = vld [vmem:[%s4622 + $0x130] sm:$0xff]
        %v4662 = vld [vmem:[%s4622 + $0x138] sm:$0xff]
        %v4663 = vld [vmem:[%s4622 + $0x140] sm:$0xff]
        %v4664 = vld [vmem:[%s4622 + $0x148] sm:$0xff]
        %v4665 = vld [vmem:[%s4622 + $0x150] sm:$0xff]
        %v4666 = vld [vmem:[%s4622 + $0x158] sm:$0xff]
        %v4667 = vld [vmem:[%s4622 + $0x160] sm:$0xff]
        %v4668 = vld [vmem:[%s4622 + $0x168] sm:$0xff]
        %v4669 = vld [vmem:[%s4622 + $0x170] sm:$0xff]
        %v4670 = vld [vmem:[%s4622 + $0x178] sm:$0xff]
        %v4671 = vld [vmem:[%s4622 + $0x180] sm:$0xff]
        %v4672 = vld [vmem:[%s4622 + $0x188] sm:$0xff]
        %v4673 = vld [vmem:[%s4622 + $0x190] sm:$0xff]
        %v4674 = vld [vmem:[%s4622 + $0x198] sm:$0xff]
        %v4675 = vld [vmem:[%s4622 + $0x1a0] sm:$0xff]
        %v4676 = vld [vmem:[%s4622 + $0x1a8] sm:$0xff]
        %v4677 = vld [vmem:[%s4622 + $0x1b0] sm:$0xff]
        %v4678 = vld [vmem:[%s4622 + $0x1b8] sm:$0xff]
        %v4679 = vld [vmem:[%s4622 + $0x1c0] sm:$0xff]
        %v4680 = vld [vmem:[%s4622 + $0x1c8] sm:$0xff]
        %v4681 = vld [vmem:[%s4622 + $0x1d0] sm:$0xff]
        %v4682 = vld [vmem:[%s4622 + $0x1d8] sm:$0xff]
        %v4683 = vld [vmem:[%s4622 + $0x1e0] sm:$0xff]
        %v4684 = vld [vmem:[%s4622 + $0x1e8] sm:$0xff]
        %v4685 = vld [vmem:[%s4622 + $0x1f0] sm:$0xff]
        %v4686 = vld [vmem:[%s4622 + $0x1f8] sm:$0xff]
        %v4687 = vld [vmem:[%s4622 + $0x200] sm:$0xff]
        %v4688 = vld [vmem:[%s4622 + $0x208] sm:$0xff]
        %v4689 = vld [vmem:[%s4622 + $0x210] sm:$0xff]
        %v4690 = vld [vmem:[%s4622 + $0x218] sm:$0xff]
        %v4691 = vld [vmem:[%s4622 + $0x220] sm:$0xff]
        %v4692 = vld [vmem:[%s4622 + $0x228] sm:$0xff]
        %v4693 = vld [vmem:[%s4622 + $0x230] sm:$0xff]
        %v4694 = vld [vmem:[%s4622 + $0x238] sm:$0xff]
        %v4701 = vunpack.c.l.b16 %v4616
        %v4702 = vunpack.c.h.b16 %v4616
        %v4703 = vunpack.c.l.b16 %v4617
        %v4704 = vunpack.c.l.b16 %v4618
        %v4705 = vunpack.c.h.b16 %v4618
        %v4706 = vunpack.c.l.b16 %v4619
        %v4707 = vunpack.c.l.b16 %v4620
        %v4708 = vunpack.c.h.b16 %v4620
        %v4709 = vunpack.c.l.b16 %v4621
        %v4710 = vpack.c.b16 %v4704, %v4701
        %v4711 = vpack.c.b16 %v4705, %v4702
        %v4712 = vpack.c.b16 %v4706, %v4703
        %v4713 = vpack.c.b16 %v4707, %v4707
        %v4714 = vpack.c.b16 %v4708, %v4708
        %v4715 = vpack.c.b16 %v4709, %v4709
        %v4717 = vshrl.u32 %v4710, 16
        %v4719 = vrot.slane %v4717, 1
        %v4720 = vshll.u32 %v4710, 16
        %v4722 = vrot.slane %v4720, 2
        %v4723 = vor.u32 %v4719, %v4722
        %v4725 = vshll.u32 %v4713, 16
        %v4727 = vrot.slane %v4725, 2
        %v4728 = vsel %vm1324, %v4723, %v4727
        %v4730 = vshrl.u32 %v4711, 16
        %v4732 = vrot.slane %v4730, 1
        %v4733 = vshll.u32 %v4711, 16
        %v4735 = vrot.slane %v4733, 2
        %v4736 = vor.u32 %v4732, %v4735
        %v4738 = vshll.u32 %v4714, 16
        %v4740 = vrot.slane %v4738, 2
        %v4741 = vsel %vm1324, %v4736, %v4740
        %v4743 = vshrl.u32 %v4712, 16
        %v4745 = vrot.slane %v4743, 1
        %v4746 = vshll.u32 %v4712, 16
        %v4748 = vrot.slane %v4746, 2
        %v4749 = vor.u32 %v4745, %v4748
        %v4751 = vshll.u32 %v4715, 16
        %v4753 = vrot.slane %v4751, 2
        %v4754 = vsel %vm1324, %v4749, %v4753
        %v4829 = vunpack.c.l.b16 %v4623
        %v4830 = vunpack.c.h.b16 %v4623
        %v4831 = vunpack.c.l.b16 %v4624
        %v4832 = vunpack.c.h.b16 %v4624
        %v4833 = vunpack.c.l.b16 %v4625
        %v4834 = vunpack.c.h.b16 %v4625
        %v4835 = vunpack.c.l.b16 %v4626
        %v4836 = vunpack.c.h.b16 %v4626
        %v4837 = vunpack.c.l.b16 %v4627
        %v4838 = vunpack.c.h.b16 %v4627
        %v4839 = vunpack.c.l.b16 %v4628
        %v4840 = vunpack.c.h.b16 %v4628
        %v4841 = vunpack.c.l.b16 %v4629
        %v4842 = vunpack.c.h.b16 %v4629
        %v4843 = vunpack.c.l.b16 %v4630
        %v4844 = vunpack.c.h.b16 %v4630
        %v4845 = vunpack.c.l.b16 %v4631
        %v4846 = vunpack.c.h.b16 %v4631
        %v4847 = vunpack.c.l.b16 %v4632
        %v4848 = vunpack.c.h.b16 %v4632
        %v4849 = vunpack.c.l.b16 %v4633
        %v4850 = vunpack.c.h.b16 %v4633
        %v4851 = vunpack.c.l.b16 %v4634
        %v4852 = vunpack.c.h.b16 %v4634
        %v4853 = vunpack.c.l.b16 %v4635
        %v4854 = vunpack.c.h.b16 %v4635
        %v4855 = vunpack.c.l.b16 %v4636
        %v4856 = vunpack.c.h.b16 %v4636
        %v4857 = vunpack.c.l.b16 %v4637
        %v4858 = vunpack.c.h.b16 %v4637
        %v4859 = vunpack.c.l.b16 %v4638
        %v4860 = vunpack.c.h.b16 %v4638
        %v4861 = vunpack.c.l.b16 %v4639
        %v4862 = vunpack.c.h.b16 %v4639
        %v4863 = vunpack.c.l.b16 %v4640
        %v4864 = vunpack.c.h.b16 %v4640
        %v4865 = vunpack.c.l.b16 %v4641
        %v4866 = vunpack.c.h.b16 %v4641
        %v4867 = vunpack.c.l.b16 %v4642
        %v4868 = vunpack.c.h.b16 %v4642
        %v4869 = vunpack.c.l.b16 %v4643
        %v4870 = vunpack.c.h.b16 %v4643
        %v4871 = vunpack.c.l.b16 %v4644
        %v4872 = vunpack.c.h.b16 %v4644
        %v4873 = vunpack.c.l.b16 %v4645
        %v4874 = vunpack.c.h.b16 %v4645
        %v4875 = vunpack.c.l.b16 %v4646
        %v4876 = vunpack.c.h.b16 %v4646
        %v4877 = vunpack.c.l.b16 %v4647
        %v4878 = vunpack.c.h.b16 %v4647
        %v4879 = vunpack.c.l.b16 %v4648
        %v4880 = vunpack.c.h.b16 %v4648
        %v4881 = vunpack.c.l.b16 %v4649
        %v4882 = vunpack.c.h.b16 %v4649
        %v4883 = vunpack.c.l.b16 %v4650
        %v4884 = vunpack.c.h.b16 %v4650
        %v4885 = vunpack.c.l.b16 %v4651
        %v4886 = vunpack.c.h.b16 %v4651
        %v4887 = vunpack.c.l.b16 %v4652
        %v4888 = vunpack.c.h.b16 %v4652
        %v4889 = vunpack.c.l.b16 %v4653
        %v4890 = vunpack.c.h.b16 %v4653
        %v4891 = vunpack.c.l.b16 %v4654
        %v4892 = vunpack.c.h.b16 %v4654
        %v4893 = vunpack.c.l.b16 %v4655
        %v4894 = vunpack.c.h.b16 %v4655
        %v4895 = vunpack.c.l.b16 %v4656
        %v4896 = vunpack.c.h.b16 %v4656
        %v4897 = vunpack.c.l.b16 %v4657
        %v4898 = vunpack.c.h.b16 %v4657
        %v4899 = vunpack.c.l.b16 %v4658
        %v4900 = vunpack.c.h.b16 %v4658
        %v4901 = vunpack.c.l.b16 %v4659
        %v4902 = vunpack.c.h.b16 %v4659
        %v4903 = vunpack.c.l.b16 %v4660
        %v4904 = vunpack.c.h.b16 %v4660
        %v4905 = vunpack.c.l.b16 %v4661
        %v4906 = vunpack.c.h.b16 %v4661
        %v4907 = vunpack.c.l.b16 %v4662
        %v4908 = vunpack.c.h.b16 %v4662
        %v4909 = vunpack.c.l.b16 %v4663
        %v4910 = vunpack.c.h.b16 %v4663
        %v4911 = vunpack.c.l.b16 %v4664
        %v4912 = vunpack.c.h.b16 %v4664
        %v4913 = vunpack.c.l.b16 %v4665
        %v4914 = vunpack.c.h.b16 %v4665
        %v4915 = vunpack.c.l.b16 %v4666
        %v4916 = vunpack.c.h.b16 %v4666
        %v4917 = vunpack.c.l.b16 %v4667
        %v4918 = vunpack.c.h.b16 %v4667
        %v4919 = vunpack.c.l.b16 %v4668
        %v4920 = vunpack.c.h.b16 %v4668
        %v4921 = vunpack.c.l.b16 %v4669
        %v4922 = vunpack.c.h.b16 %v4669
        %v4923 = vunpack.c.l.b16 %v4670
        %v4924 = vunpack.c.h.b16 %v4670
        %v4925 = vunpack.c.l.b16 %v4671
        %v4926 = vunpack.c.h.b16 %v4671
        %v4927 = vunpack.c.l.b16 %v4672
        %v4928 = vunpack.c.h.b16 %v4672
        %v4929 = vunpack.c.l.b16 %v4673
        %v4930 = vunpack.c.h.b16 %v4673
        %v4931 = vunpack.c.l.b16 %v4674
        %v4932 = vunpack.c.h.b16 %v4674
        %v4933 = vunpack.c.l.b16 %v4675
        %v4934 = vunpack.c.h.b16 %v4675
        %v4935 = vunpack.c.l.b16 %v4676
        %v4936 = vunpack.c.h.b16 %v4676
        %v4937 = vunpack.c.l.b16 %v4677
        %v4938 = vunpack.c.h.b16 %v4677
        %v4939 = vunpack.c.l.b16 %v4678
        %v4940 = vunpack.c.h.b16 %v4678
        %v4941 = vunpack.c.l.b16 %v4679
        %v4942 = vunpack.c.h.b16 %v4679
        %v4943 = vunpack.c.l.b16 %v4680
        %v4944 = vunpack.c.h.b16 %v4680
        %v4945 = vunpack.c.l.b16 %v4681
        %v4946 = vunpack.c.h.b16 %v4681
        %v4947 = vunpack.c.l.b16 %v4682
        %v4948 = vunpack.c.h.b16 %v4682
        %v4949 = vunpack.c.l.b16 %v4683
        %v4950 = vunpack.c.h.b16 %v4683
        %v4951 = vunpack.c.l.b16 %v4684
        %v4952 = vunpack.c.h.b16 %v4684
        %v4953 = vunpack.c.l.b16 %v4685
        %v4954 = vunpack.c.h.b16 %v4685
        %v4955 = vunpack.c.l.b16 %v4686
        %v4956 = vunpack.c.h.b16 %v4686
        %v4957 = vunpack.c.l.b16 %v4687
        %v4958 = vunpack.c.h.b16 %v4687
        %v4959 = vunpack.c.l.b16 %v4688
        %v4960 = vunpack.c.h.b16 %v4688
        %v4961 = vunpack.c.l.b16 %v4689
        %v4962 = vunpack.c.h.b16 %v4689
        %v4963 = vunpack.c.l.b16 %v4690
        %v4964 = vunpack.c.h.b16 %v4690
        %v4965 = vunpack.c.l.b16 %v4691
        %v4966 = vunpack.c.h.b16 %v4691
        %v4967 = vunpack.c.l.b16 %v4692
        %v4968 = vunpack.c.h.b16 %v4692
        %v4969 = vunpack.c.l.b16 %v4693
        %v4970 = vunpack.c.h.b16 %v4693
        %v4971 = vunpack.c.l.b16 %v4694
        %v4972 = vunpack.c.h.b16 %v4694
        %v4973 = vpack.c.b16 %v4833, %v4829
        %v4974 = vpack.c.b16 %v4834, %v4830
        %v4975 = vpack.c.b16 %v4835, %v4831
        %v4976 = vpack.c.b16 %v4836, %v4832
        %v4977 = vpack.c.b16 %v4841, %v4837
        %v4978 = vpack.c.b16 %v4842, %v4838
        %v4979 = vpack.c.b16 %v4843, %v4839
        %v4980 = vpack.c.b16 %v4844, %v4840
        %v4981 = vpack.c.b16 %v4849, %v4845
        %v4982 = vpack.c.b16 %v4850, %v4846
        %v4983 = vpack.c.b16 %v4851, %v4847
        %v4984 = vpack.c.b16 %v4852, %v4848
        %v4985 = vpack.c.b16 %v4857, %v4853
        %v4986 = vpack.c.b16 %v4858, %v4854
        %v4987 = vpack.c.b16 %v4859, %v4855
        %v4988 = vpack.c.b16 %v4860, %v4856
        %v4989 = vpack.c.b16 %v4865, %v4861
        %v4990 = vpack.c.b16 %v4866, %v4862
        %v4991 = vpack.c.b16 %v4867, %v4863
        %v4992 = vpack.c.b16 %v4868, %v4864
        %v4993 = vpack.c.b16 %v4873, %v4869
        %v4994 = vpack.c.b16 %v4874, %v4870
        %v4995 = vpack.c.b16 %v4875, %v4871
        %v4996 = vpack.c.b16 %v4876, %v4872
        %v4997 = vpack.c.b16 %v4881, %v4877
        %v4998 = vpack.c.b16 %v4882, %v4878
        %v4999 = vpack.c.b16 %v4883, %v4879
        %v5000 = vpack.c.b16 %v4884, %v4880
        %v5001 = vpack.c.b16 %v4889, %v4885
        %v5002 = vpack.c.b16 %v4890, %v4886
        %v5003 = vpack.c.b16 %v4891, %v4887
        %v5004 = vpack.c.b16 %v4892, %v4888
        %v5005 = vpack.c.b16 %v4897, %v4893
        %v5006 = vpack.c.b16 %v4898, %v4894
        %v5007 = vpack.c.b16 %v4899, %v4895
        %v5008 = vpack.c.b16 %v4900, %v4896
        %v5009 = vpack.c.b16 %v4905, %v4901
        %v5010 = vpack.c.b16 %v4906, %v4902
        %v5011 = vpack.c.b16 %v4907, %v4903
        %v5012 = vpack.c.b16 %v4908, %v4904
        %v5013 = vpack.c.b16 %v4913, %v4909
        %v5014 = vpack.c.b16 %v4914, %v4910
        %v5015 = vpack.c.b16 %v4915, %v4911
        %v5016 = vpack.c.b16 %v4916, %v4912
        %v5017 = vpack.c.b16 %v4921, %v4917
        %v5018 = vpack.c.b16 %v4922, %v4918
        %v5019 = vpack.c.b16 %v4923, %v4919
        %v5020 = vpack.c.b16 %v4924, %v4920
        %v5021 = vpack.c.b16 %v4929, %v4925
        %v5022 = vpack.c.b16 %v4930, %v4926
        %v5023 = vpack.c.b16 %v4931, %v4927
        %v5024 = vpack.c.b16 %v4932, %v4928
        %v5025 = vpack.c.b16 %v4937, %v4933
        %v5026 = vpack.c.b16 %v4938, %v4934
        %v5027 = vpack.c.b16 %v4939, %v4935
        %v5028 = vpack.c.b16 %v4940, %v4936
        %v5029 = vpack.c.b16 %v4945, %v4941
        %v5030 = vpack.c.b16 %v4946, %v4942
        %v5031 = vpack.c.b16 %v4947, %v4943
        %v5032 = vpack.c.b16 %v4948, %v4944
        %v5033 = vpack.c.b16 %v4953, %v4949
        %v5034 = vpack.c.b16 %v4954, %v4950
        %v5035 = vpack.c.b16 %v4955, %v4951
        %v5036 = vpack.c.b16 %v4956, %v4952
        %v5037 = vpack.c.b16 %v4961, %v4957
        %v5038 = vpack.c.b16 %v4962, %v4958
        %v5039 = vpack.c.b16 %v4963, %v4959
        %v5040 = vpack.c.b16 %v4964, %v4960
        %v5041 = vpack.c.b16 %v4969, %v4965
        %v5042 = vpack.c.b16 %v4970, %v4966
        %v5043 = vpack.c.b16 %v4971, %v4967
        %v5044 = vpack.c.b16 %v4972, %v4968
        %v5118 = vsel %vm766, %v4754, 0
        %5120 = vmatprep.subr.bf16.mxu0 %v4974
        %5121 = vmatpush1.bf16.msra.mxu0 %v4973
        %5122 = vmatprep.subr.bf16.mxu0 %v4978
        %5123 = vmatpush1.bf16.msra.mxu0 %v4977
        %5124 = vmatprep.subr.bf16.mxu0 %v4982
        %5125 = vmatpush1.bf16.msra.mxu0 %v4981
        %5126 = vmatprep.subr.bf16.mxu0 %v4986
        %5127 = vmatpush1.bf16.msra.mxu0 %v4985
        %5128 = vmatprep.subr.bf16.mxu0 %v4990
        %5129 = vmatpush1.bf16.msra.mxu0 %v4989
        %5130 = vmatprep.subr.bf16.mxu0 %v4994
        %5131 = vmatpush1.bf16.msra.mxu0 %v4993
        %5132 = vmatprep.subr.bf16.mxu0 %v4998
        %5133 = vmatpush1.bf16.msra.mxu0 %v4997
        %5134 = vmatprep.subr.bf16.mxu0 %v5002
        %5135 = vmatpush1.bf16.msra.mxu0 %v5001
        %5136 = vmatprep.subr.bf16.mxu0 %v5006
        %5137 = vmatpush1.bf16.msra.mxu0 %v5005
        %5138 = vmatprep.subr.bf16.mxu0 %v5010
        %5139 = vmatpush1.bf16.msra.mxu0 %v5009
        %5140 = vmatprep.subr.bf16.mxu0 %v5014
        %5141 = vmatpush1.bf16.msra.mxu0 %v5013
        %5142 = vmatprep.subr.bf16.mxu0 %v5018
        %5143 = vmatpush1.bf16.msra.mxu0 %v5017
        %5144 = vmatprep.subr.bf16.mxu0 %v5022
        %5145 = vmatpush1.bf16.msra.mxu0 %v5021
        %5146 = vmatprep.subr.bf16.mxu0 %v5026
        %5147 = vmatpush1.bf16.msra.mxu0 %v5025
        %5148 = vmatprep.subr.bf16.mxu0 %v5030
        %5149 = vmatpush1.bf16.msra.mxu0 %v5029
        %5150 = vmatprep.subr.bf16.mxu0 %v5034
        %5151 = vmatpush1.bf16.msra.mxu0 %v5033
        %5152 = vmatprep.mubr.bf16.mxu0 %v4741
        %5153 = vmatmul.mubr.bf16.gmra.mrb[0].mxu0 %v4728
        %v5154 = vpop.f32.mrb[0].mxu0
        %v5155 = vadd.f32 0.0, %v5154
        %v5156 = vpop.f32.mrb[0].mxu0
        %v5157 = vadd.f32 0.0, %v5156
        %v5158 = vpop.f32.mrb[0].mxu0
        %v5159 = vadd.f32 0.0, %v5158
        %v5160 = vpop.f32.mrb[0].mxu0
        %v5161 = vadd.f32 0.0, %v5160
        %5162 = vdwg.mxu0
        %5163 = vmatprep.subr.bf16.mxu0 %v5038
        %5164 = vmatpush1.bf16.msra.mxu0 %v5037
        %5165 = vmatprep.subr.bf16.mxu0 %v5042
        %5166 = vmatpush1.bf16.msra.mxu0 %v5041
        %5167 = vmatprep.subr.bf16.mxu0 0
        %5168 = vmatpush1.bf16.msra.mxu0 0
        %5169 = vmatprep.subr.bf16.mxu0 0
        %5170 = vmatpush1.bf16.msra.mxu0 0
        %5171 = vmatprep.subr.bf16.mxu0 0
        %5172 = vmatpush1.bf16.msra.mxu0 0
        %5173 = vmatprep.subr.bf16.mxu0 0
        %5174 = vmatpush1.bf16.msra.mxu0 0
        %5175 = vmatprep.subr.bf16.mxu0 0
        %5176 = vmatpush1.bf16.msra.mxu0 0
        %5177 = vmatprep.subr.bf16.mxu0 0
        %5178 = vmatpush1.bf16.msra.mxu0 0
        %5179 = vmatprep.subr.bf16.mxu0 0
        %5180 = vmatpush1.bf16.msra.mxu0 0
        %5181 = vmatprep.subr.bf16.mxu0 0
        %5182 = vmatpush1.bf16.msra.mxu0 0
        %5183 = vmatprep.subr.bf16.mxu0 0
        %5184 = vmatpush1.bf16.msra.mxu0 0
        %5185 = vmatprep.subr.bf16.mxu0 0
        %5186 = vmatpush1.bf16.msra.mxu0 0
        %5187 = vmatprep.subr.bf16.mxu0 0
        %5188 = vmatpush1.bf16.msra.mxu0 0
        %5189 = vmatprep.subr.bf16.mxu0 0
        %5190 = vmatpush1.bf16.msra.mxu0 0
        %5191 = vmatprep.subr.bf16.mxu0 0
        %5192 = vmatpush1.bf16.msra.mxu0 0
        %5193 = vmatprep.subr.bf16.mxu0 0
        %5194 = vmatpush1.bf16.msra.mxu0 0
        %5195 = vmatprep.mubr.bf16.mxu0 0
        %5196 = vmatmul.mubr.bf16.gmra.mrb[0].mxu0 %v5118
        %v5197 = vpop.f32.mrb[0].mxu0
        %v5198 = vadd.f32 %v5155, %v5197
        %v5199 = vpop.f32.mrb[0].mxu0
        %v5200 = vadd.f32 %v5157, %v5199
        %v5201 = vpop.f32.mrb[0].mxu0
        %v5202 = vadd.f32 %v5159, %v5201
        %v5203 = vpop.f32.mrb[0].mxu0
        %v5204 = vadd.f32 %v5161, %v5203
        %5205 = vdwg.mxu0
        %5206 = vmatprep.subr.bf16.mxu0 %v4976
        %5207 = vmatpush1.bf16.msra.mxu0 %v4975
        %5208 = vmatprep.subr.bf16.mxu0 %v4980
        %5209 = vmatpush1.bf16.msra.mxu0 %v4979
        %5210 = vmatprep.subr.bf16.mxu0 %v4984
        %5211 = vmatpush1.bf16.msra.mxu0 %v4983
        %5212 = vmatprep.subr.bf16.mxu0 %v4988
        %5213 = vmatpush1.bf16.msra.mxu0 %v4987
        %5214 = vmatprep.subr.bf16.mxu0 %v4992
        %5215 = vmatpush1.bf16.msra.mxu0 %v4991
        %5216 = vmatprep.subr.bf16.mxu0 %v4996
        %5217 = vmatpush1.bf16.msra.mxu0 %v4995
        %5218 = vmatprep.subr.bf16.mxu0 %v5000
        %5219 = vmatpush1.bf16.msra.mxu0 %v4999
        %5220 = vmatprep.subr.bf16.mxu0 %v5004
        %5221 = vmatpush1.bf16.msra.mxu0 %v5003
        %5222 = vmatprep.subr.bf16.mxu0 %v5008
        %5223 = vmatpush1.bf16.msra.mxu0 %v5007
        %5224 = vmatprep.subr.bf16.mxu0 %v5012
        %5225 = vmatpush1.bf16.msra.mxu0 %v5011
        %5226 = vmatprep.subr.bf16.mxu0 %v5016
        %5227 = vmatpush1.bf16.msra.mxu0 %v5015
        %5228 = vmatprep.subr.bf16.mxu0 %v5020
        %5229 = vmatpush1.bf16.msra.mxu0 %v5019
        %5230 = vmatprep.subr.bf16.mxu0 %v5024
        %5231 = vmatpush1.bf16.msra.mxu0 %v5023
        %5232 = vmatprep.subr.bf16.mxu0 %v5028
        %5233 = vmatpush1.bf16.msra.mxu0 %v5027
        %5234 = vmatprep.subr.bf16.mxu0 %v5032
        %5235 = vmatpush1.bf16.msra.mxu0 %v5031
        %5236 = vmatprep.subr.bf16.mxu0 %v5036
        %5237 = vmatpush1.bf16.msra.mxu0 %v5035
        %5238 = vmatprep.mubr.bf16.mxu0 %v4741
        %5239 = vmatmul.mubr.bf16.gmra.mrb[0].mxu0 %v4728
        %v5240 = vpop.f32.mrb[0].mxu0
        %v5241 = vadd.f32 0.0, %v5240
        %v5242 = vpop.f32.mrb[0].mxu0
        %v5243 = vadd.f32 0.0, %v5242
        %v5244 = vpop.f32.mrb[0].mxu0
        %v5245 = vadd.f32 0.0, %v5244
        %v5246 = vpop.f32.mrb[0].mxu0
        %v5247 = vadd.f32 0.0, %v5246
        %5248 = vdwg.mxu0
        %5249 = vmatprep.subr.bf16.mxu0 %v5040
        %5250 = vmatpush1.bf16.msra.mxu0 %v5039
        %5251 = vmatprep.subr.bf16.mxu0 %v5044
        %5252 = vmatpush1.bf16.msra.mxu0 %v5043
        %5253 = vmatprep.subr.bf16.mxu0 0
        %5254 = vmatpush1.bf16.msra.mxu0 0
        %5255 = vmatprep.subr.bf16.mxu0 0
        %5256 = vmatpush1.bf16.msra.mxu0 0
        %5257 = vmatprep.subr.bf16.mxu0 0
        %5258 = vmatpush1.bf16.msra.mxu0 0
        %5259 = vmatprep.subr.bf16.mxu0 0
        %5260 = vmatpush1.bf16.msra.mxu0 0
        %5261 = vmatprep.subr.bf16.mxu0 0
        %5262 = vmatpush1.bf16.msra.mxu0 0
        %5263 = vmatprep.subr.bf16.mxu0 0
        %5264 = vmatpush1.bf16.msra.mxu0 0
        %5265 = vmatprep.subr.bf16.mxu0 0
        %5266 = vmatpush1.bf16.msra.mxu0 0
        %5267 = vmatprep.subr.bf16.mxu0 0
        %5268 = vmatpush1.bf16.msra.mxu0 0
        %5269 = vmatprep.subr.bf16.mxu0 0
        %5270 = vmatpush1.bf16.msra.mxu0 0
        %5271 = vmatprep.subr.bf16.mxu0 0
        %5272 = vmatpush1.bf16.msra.mxu0 0
        %5273 = vmatprep.subr.bf16.mxu0 0
        %5274 = vmatpush1.bf16.msra.mxu0 0
        %5275 = vmatprep.subr.bf16.mxu0 0
        %5276 = vmatpush1.bf16.msra.mxu0 0
        %5277 = vmatprep.subr.bf16.mxu0 0
        %5278 = vmatpush1.bf16.msra.mxu0 0
        %5279 = vmatprep.subr.bf16.mxu0 0
        %5280 = vmatpush1.bf16.msra.mxu0 0
        %5281 = vmatprep.mubr.bf16.mxu0 0
        %5282 = vmatmul.mubr.bf16.gmra.mrb[0].mxu0 %v5118
        %v5283 = vpop.f32.mrb[0].mxu0
        %v5284 = vadd.f32 %v5241, %v5283
        %v5285 = vpop.f32.mrb[0].mxu0
        %v5286 = vadd.f32 %v5243, %v5285
        %v5287 = vpop.f32.mrb[0].mxu0
        %v5288 = vadd.f32 %v5245, %v5287
        %v5289 = vpop.f32.mrb[0].mxu0
        %v5290 = vadd.f32 %v5247, %v5289
        %5291 = vdwg.mxu0
        %v5292 = vadd.f32 %v4608, %v5198
        %v5293 = vadd.f32 %v4609, %v5200
        %v5294 = vadd.f32 %v4610, %v5284
        %v5295 = vadd.f32 %v4611, %v5286
        %v5296 = vadd.f32 %v4612, %v5202
        %v5297 = vadd.f32 %v4613, %v5204
        %v5298 = vadd.f32 %v4614, %v5288
        %v5299 = vadd.f32 %v4615, %v5290
        %v5300 = vld [vmem:[#allocation3] sm:$0xcc]
        %v5301 = vld [vmem:[#allocation3 + $0x8] sm:$0xc]
        %s5302 = scalar_lea.vmem [#allocation16], 2304
        %v5303 = vld [vmem:[%s5302] sm:$0xff]
        %v5304 = vld [vmem:[%s5302 + $0x8] sm:$0xff]
        %v5305 = vld [vmem:[%s5302 + $0x10] sm:$0xff]
        %v5306 = vld [vmem:[%s5302 + $0x18] sm:$0xff]
        %v5307 = vld [vmem:[%s5302 + $0x20] sm:$0xff]
        %v5308 = vld [vmem:[%s5302 + $0x28] sm:$0xff]
        %v5309 = vld [vmem:[%s5302 + $0x30] sm:$0xff]
        %v5310 = vld [vmem:[%s5302 + $0x38] sm:$0xff]
        %v5311 = vld [vmem:[%s5302 + $0x40] sm:$0xff]
        %v5312 = vld [vmem:[%s5302 + $0x48] sm:$0xff]
        %v5313 = vld [vmem:[%s5302 + $0x50] sm:$0xff]
        %v5314 = vld [vmem:[%s5302 + $0x58] sm:$0xff]
        %v5315 = vld [vmem:[%s5302 + $0x60] sm:$0xff]
        %v5316 = vld [vmem:[%s5302 + $0x68] sm:$0xff]
        %v5317 = vld [vmem:[%s5302 + $0x70] sm:$0xff]
        %v5318 = vld [vmem:[%s5302 + $0x78] sm:$0xff]
        %v5319 = vld [vmem:[%s5302 + $0x80] sm:$0xff]
        %v5320 = vld [vmem:[%s5302 + $0x88] sm:$0xff]
        %v5321 = vld [vmem:[%s5302 + $0x90] sm:$0xff]
        %v5322 = vld [vmem:[%s5302 + $0x98] sm:$0xff]
        %v5323 = vld [vmem:[%s5302 + $0xa0] sm:$0xff]
        %v5324 = vld [vmem:[%s5302 + $0xa8] sm:$0xff]
        %v5325 = vld [vmem:[%s5302 + $0xb0] sm:$0xff]
        %v5326 = vld [vmem:[%s5302 + $0xb8] sm:$0xff]
        %v5327 = vld [vmem:[%s5302 + $0xc0] sm:$0xff]
        %v5328 = vld [vmem:[%s5302 + $0xc8] sm:$0xff]
        %v5329 = vld [vmem:[%s5302 + $0xd0] sm:$0xff]
        %v5330 = vld [vmem:[%s5302 + $0xd8] sm:$0xff]
        %v5331 = vld [vmem:[%s5302 + $0xe0] sm:$0xff]
        %v5332 = vld [vmem:[%s5302 + $0xe8] sm:$0xff]
        %v5333 = vld [vmem:[%s5302 + $0xf0] sm:$0xff]
        %v5334 = vld [vmem:[%s5302 + $0xf8] sm:$0xff]
        %v5335 = vld [vmem:[%s5302 + $0x100] sm:$0xff]
        %v5336 = vld [vmem:[%s5302 + $0x108] sm:$0xff]
        %v5337 = vld [vmem:[%s5302 + $0x110] sm:$0xff]
        %v5338 = vld [vmem:[%s5302 + $0x118] sm:$0xff]
        %v5339 = vld [vmem:[%s5302 + $0x120] sm:$0xff]
        %v5340 = vld [vmem:[%s5302 + $0x128] sm:$0xff]
        %v5341 = vld [vmem:[%s5302 + $0x130] sm:$0xff]
        %v5342 = vld [vmem:[%s5302 + $0x138] sm:$0xff]
        %v5343 = vld [vmem:[%s5302 + $0x140] sm:$0xff]
        %v5344 = vld [vmem:[%s5302 + $0x148] sm:$0xff]
        %v5345 = vld [vmem:[%s5302 + $0x150] sm:$0xff]
        %v5346 = vld [vmem:[%s5302 + $0x158] sm:$0xff]
        %v5347 = vld [vmem:[%s5302 + $0x160] sm:$0xff]
        %v5348 = vld [vmem:[%s5302 + $0x168] sm:$0xff]
        %v5349 = vld [vmem:[%s5302 + $0x170] sm:$0xff]
        %v5350 = vld [vmem:[%s5302 + $0x178] sm:$0xff]
        %v5351 = vld [vmem:[%s5302 + $0x180] sm:$0xff]
        %v5352 = vld [vmem:[%s5302 + $0x188] sm:$0xff]
        %v5353 = vld [vmem:[%s5302 + $0x190] sm:$0xff]
        %v5354 = vld [vmem:[%s5302 + $0x198] sm:$0xff]
        %v5355 = vld [vmem:[%s5302 + $0x1a0] sm:$0xff]
        %v5356 = vld [vmem:[%s5302 + $0x1a8] sm:$0xff]
        %v5357 = vld [vmem:[%s5302 + $0x1b0] sm:$0xff]
        %v5358 = vld [vmem:[%s5302 + $0x1b8] sm:$0xff]
        %v5359 = vld [vmem:[%s5302 + $0x1c0] sm:$0xff]
        %v5360 = vld [vmem:[%s5302 + $0x1c8] sm:$0xff]
        %v5361 = vld [vmem:[%s5302 + $0x1d0] sm:$0xff]
        %v5362 = vld [vmem:[%s5302 + $0x1d8] sm:$0xff]
        %v5363 = vld [vmem:[%s5302 + $0x1e0] sm:$0xff]
        %v5364 = vld [vmem:[%s5302 + $0x1e8] sm:$0xff]
        %v5365 = vld [vmem:[%s5302 + $0x1f0] sm:$0xff]
        %v5366 = vld [vmem:[%s5302 + $0x1f8] sm:$0xff]
        %v5367 = vld [vmem:[%s5302 + $0x200] sm:$0xff]
        %v5368 = vld [vmem:[%s5302 + $0x208] sm:$0xff]
        %v5369 = vld [vmem:[%s5302 + $0x210] sm:$0xff]
        %v5370 = vld [vmem:[%s5302 + $0x218] sm:$0xff]
        %v5371 = vld [vmem:[%s5302 + $0x220] sm:$0xff]
        %v5372 = vld [vmem:[%s5302 + $0x228] sm:$0xff]
        %v5373 = vld [vmem:[%s5302 + $0x230] sm:$0xff]
        %v5374 = vld [vmem:[%s5302 + $0x238] sm:$0xff]
        %v5377 = vunpack.c.l.b16 %v5300
        %v5378 = vunpack.c.h.b16 %v5300
        %v5379 = vunpack.c.l.b16 %v5301
        %v5380 = vpack.c.b16 %v4704, %v5377
        %v5381 = vpack.c.b16 %v4705, %v5378
        %v5382 = vpack.c.b16 %v4706, %v5379
        %v5383 = vrot.slane %v5380, 2
        %v5384 = vrot.slane %v4713, 2
        %v5385 = vsel %vm1522, %v5383, %v5384
        %v5386 = vrot.slane %v5381, 2
        %v5387 = vrot.slane %v4714, 2
        %v5388 = vsel %vm1522, %v5386, %v5387
        %v5389 = vrot.slane %v5382, 2
        %v5390 = vrot.slane %v4715, 2
        %v5391 = vsel %vm1522, %v5389, %v5390
        %v5466 = vunpack.c.l.b16 %v5303
        %v5467 = vunpack.c.h.b16 %v5303
        %v5468 = vunpack.c.l.b16 %v5304
        %v5469 = vunpack.c.h.b16 %v5304
        %v5470 = vunpack.c.l.b16 %v5305
        %v5471 = vunpack.c.h.b16 %v5305
        %v5472 = vunpack.c.l.b16 %v5306
        %v5473 = vunpack.c.h.b16 %v5306
        %v5474 = vunpack.c.l.b16 %v5307
        %v5475 = vunpack.c.h.b16 %v5307
        %v5476 = vunpack.c.l.b16 %v5308
        %v5477 = vunpack.c.h.b16 %v5308
        %v5478 = vunpack.c.l.b16 %v5309
        %v5479 = vunpack.c.h.b16 %v5309
        %v5480 = vunpack.c.l.b16 %v5310
        %v5481 = vunpack.c.h.b16 %v5310
        %v5482 = vunpack.c.l.b16 %v5311
        %v5483 = vunpack.c.h.b16 %v5311
        %v5484 = vunpack.c.l.b16 %v5312
        %v5485 = vunpack.c.h.b16 %v5312
        %v5486 = vunpack.c.l.b16 %v5313
        %v5487 = vunpack.c.h.b16 %v5313
        %v5488 = vunpack.c.l.b16 %v5314
        %v5489 = vunpack.c.h.b16 %v5314
        %v5490 = vunpack.c.l.b16 %v5315
        %v5491 = vunpack.c.h.b16 %v5315
        %v5492 = vunpack.c.l.b16 %v5316
        %v5493 = vunpack.c.h.b16 %v5316
        %v5494 = vunpack.c.l.b16 %v5317
        %v5495 = vunpack.c.h.b16 %v5317
        %v5496 = vunpack.c.l.b16 %v5318
        %v5497 = vunpack.c.h.b16 %v5318
        %v5498 = vunpack.c.l.b16 %v5319
        %v5499 = vunpack.c.h.b16 %v5319
        %v5500 = vunpack.c.l.b16 %v5320
        %v5501 = vunpack.c.h.b16 %v5320
        %v5502 = vunpack.c.l.b16 %v5321
        %v5503 = vunpack.c.h.b16 %v5321
        %v5504 = vunpack.c.l.b16 %v5322
        %v5505 = vunpack.c.h.b16 %v5322
        %v5506 = vunpack.c.l.b16 %v5323
        %v5507 = vunpack.c.h.b16 %v5323
        %v5508 = vunpack.c.l.b16 %v5324
        %v5509 = vunpack.c.h.b16 %v5324
        %v5510 = vunpack.c.l.b16 %v5325
        %v5511 = vunpack.c.h.b16 %v5325
        %v5512 = vunpack.c.l.b16 %v5326
        %v5513 = vunpack.c.h.b16 %v5326
        %v5514 = vunpack.c.l.b16 %v5327
        %v5515 = vunpack.c.h.b16 %v5327
        %v5516 = vunpack.c.l.b16 %v5328
        %v5517 = vunpack.c.h.b16 %v5328
        %v5518 = vunpack.c.l.b16 %v5329
        %v5519 = vunpack.c.h.b16 %v5329
        %v5520 = vunpack.c.l.b16 %v5330
        %v5521 = vunpack.c.h.b16 %v5330
        %v5522 = vunpack.c.l.b16 %v5331
        %v5523 = vunpack.c.h.b16 %v5331
        %v5524 = vunpack.c.l.b16 %v5332
        %v5525 = vunpack.c.h.b16 %v5332
        %v5526 = vunpack.c.l.b16 %v5333
        %v5527 = vunpack.c.h.b16 %v5333
        %v5528 = vunpack.c.l.b16 %v5334
        %v5529 = vunpack.c.h.b16 %v5334
        %v5530 = vunpack.c.l.b16 %v5335
        %v5531 = vunpack.c.h.b16 %v5335
        %v5532 = vunpack.c.l.b16 %v5336
        %v5533 = vunpack.c.h.b16 %v5336
        %v5534 = vunpack.c.l.b16 %v5337
        %v5535 = vunpack.c.h.b16 %v5337
        %v5536 = vunpack.c.l.b16 %v5338
        %v5537 = vunpack.c.h.b16 %v5338
        %v5538 = vunpack.c.l.b16 %v5339
        %v5539 = vunpack.c.h.b16 %v5339
        %v5540 = vunpack.c.l.b16 %v5340
        %v5541 = vunpack.c.h.b16 %v5340
        %v5542 = vunpack.c.l.b16 %v5341
        %v5543 = vunpack.c.h.b16 %v5341
        %v5544 = vunpack.c.l.b16 %v5342
        %v5545 = vunpack.c.h.b16 %v5342
        %v5546 = vunpack.c.l.b16 %v5343
        %v5547 = vunpack.c.h.b16 %v5343
        %v5548 = vunpack.c.l.b16 %v5344
        %v5549 = vunpack.c.h.b16 %v5344
        %v5550 = vunpack.c.l.b16 %v5345
        %v5551 = vunpack.c.h.b16 %v5345
        %v5552 = vunpack.c.l.b16 %v5346
        %v5553 = vunpack.c.h.b16 %v5346
        %v5554 = vunpack.c.l.b16 %v5347
        %v5555 = vunpack.c.h.b16 %v5347
        %v5556 = vunpack.c.l.b16 %v5348
        %v5557 = vunpack.c.h.b16 %v5348
        %v5558 = vunpack.c.l.b16 %v5349
        %v5559 = vunpack.c.h.b16 %v5349
        %v5560 = vunpack.c.l.b16 %v5350
        %v5561 = vunpack.c.h.b16 %v5350
        %v5562 = vunpack.c.l.b16 %v5351
        %v5563 = vunpack.c.h.b16 %v5351
        %v5564 = vunpack.c.l.b16 %v5352
        %v5565 = vunpack.c.h.b16 %v5352
        %v5566 = vunpack.c.l.b16 %v5353
        %v5567 = vunpack.c.h.b16 %v5353
        %v5568 = vunpack.c.l.b16 %v5354
        %v5569 = vunpack.c.h.b16 %v5354
        %v5570 = vunpack.c.l.b16 %v5355
        %v5571 = vunpack.c.h.b16 %v5355
        %v5572 = vunpack.c.l.b16 %v5356
        %v5573 = vunpack.c.h.b16 %v5356
        %v5574 = vunpack.c.l.b16 %v5357
        %v5575 = vunpack.c.h.b16 %v5357
        %v5576 = vunpack.c.l.b16 %v5358
        %v5577 = vunpack.c.h.b16 %v5358
        %v5578 = vunpack.c.l.b16 %v5359
        %v5579 = vunpack.c.h.b16 %v5359
        %v5580 = vunpack.c.l.b16 %v5360
        %v5581 = vunpack.c.h.b16 %v5360
        %v5582 = vunpack.c.l.b16 %v5361
        %v5583 = vunpack.c.h.b16 %v5361
        %v5584 = vunpack.c.l.b16 %v5362
        %v5585 = vunpack.c.h.b16 %v5362
        %v5586 = vunpack.c.l.b16 %v5363
        %v5587 = vunpack.c.h.b16 %v5363
        %v5588 = vunpack.c.l.b16 %v5364
        %v5589 = vunpack.c.h.b16 %v5364
        %v5590 = vunpack.c.l.b16 %v5365
        %v5591 = vunpack.c.h.b16 %v5365
        %v5592 = vunpack.c.l.b16 %v5366
        %v5593 = vunpack.c.h.b16 %v5366
        %v5594 = vunpack.c.l.b16 %v5367
        %v5595 = vunpack.c.h.b16 %v5367
        %v5596 = vunpack.c.l.b16 %v5368
        %v5597 = vunpack.c.h.b16 %v5368
        %v5598 = vunpack.c.l.b16 %v5369
        %v5599 = vunpack.c.h.b16 %v5369
        %v5600 = vunpack.c.l.b16 %v5370
        %v5601 = vunpack.c.h.b16 %v5370
        %v5602 = vunpack.c.l.b16 %v5371
        %v5603 = vunpack.c.h.b16 %v5371
        %v5604 = vunpack.c.l.b16 %v5372
        %v5605 = vunpack.c.h.b16 %v5372
        %v5606 = vunpack.c.l.b16 %v5373
        %v5607 = vunpack.c.h.b16 %v5373
        %v5608 = vunpack.c.l.b16 %v5374
        %v5609 = vunpack.c.h.b16 %v5374
        %v5610 = vpack.c.b16 %v5470, %v5466
        %v5611 = vpack.c.b16 %v5471, %v5467
        %v5612 = vpack.c.b16 %v5472, %v5468
        %v5613 = vpack.c.b16 %v5473, %v5469
        %v5614 = vpack.c.b16 %v5478, %v5474
        %v5615 = vpack.c.b16 %v5479, %v5475
        %v5616 = vpack.c.b16 %v5480, %v5476
        %v5617 = vpack.c.b16 %v5481, %v5477
        %v5618 = vpack.c.b16 %v5486, %v5482
        %v5619 = vpack.c.b16 %v5487, %v5483
        %v5620 = vpack.c.b16 %v5488, %v5484
        %v5621 = vpack.c.b16 %v5489, %v5485
        %v5622 = vpack.c.b16 %v5494, %v5490
        %v5623 = vpack.c.b16 %v5495, %v5491
        %v5624 = vpack.c.b16 %v5496, %v5492
        %v5625 = vpack.c.b16 %v5497, %v5493
        %v5626 = vpack.c.b16 %v5502, %v5498
        %v5627 = vpack.c.b16 %v5503, %v5499
        %v5628 = vpack.c.b16 %v5504, %v5500
        %v5629 = vpack.c.b16 %v5505, %v5501
        %v5630 = vpack.c.b16 %v5510, %v5506
        %v5631 = vpack.c.b16 %v5511, %v5507
        %v5632 = vpack.c.b16 %v5512, %v5508
        %v5633 = vpack.c.b16 %v5513, %v5509
        %v5634 = vpack.c.b16 %v5518, %v5514
        %v5635 = vpack.c.b16 %v5519, %v5515
        %v5636 = vpack.c.b16 %v5520, %v5516
        %v5637 = vpack.c.b16 %v5521, %v5517
        %v5638 = vpack.c.b16 %v5526, %v5522
        %v5639 = vpack.c.b16 %v5527, %v5523
        %v5640 = vpack.c.b16 %v5528, %v5524
        %v5641 = vpack.c.b16 %v5529, %v5525
        %v5642 = vpack.c.b16 %v5534, %v5530
        %v5643 = vpack.c.b16 %v5535, %v5531
        %v5644 = vpack.c.b16 %v5536, %v5532
        %v5645 = vpack.c.b16 %v5537, %v5533
        %v5646 = vpack.c.b16 %v5542, %v5538
        %v5647 = vpack.c.b16 %v5543, %v5539
        %v5648 = vpack.c.b16 %v5544, %v5540
        %v5649 = vpack.c.b16 %v5545, %v5541
        %v5650 = vpack.c.b16 %v5550, %v5546
        %v5651 = vpack.c.b16 %v5551, %v5547
        %v5652 = vpack.c.b16 %v5552, %v5548
        %v5653 = vpack.c.b16 %v5553, %v5549
        %v5654 = vpack.c.b16 %v5558, %v5554
        %v5655 = vpack.c.b16 %v5559, %v5555
        %v5656 = vpack.c.b16 %v5560, %v5556
        %v5657 = vpack.c.b16 %v5561, %v5557
        %v5658 = vpack.c.b16 %v5566, %v5562
        %v5659 = vpack.c.b16 %v5567, %v5563
        %v5660 = vpack.c.b16 %v5568, %v5564
        %v5661 = vpack.c.b16 %v5569, %v5565
        %v5662 = vpack.c.b16 %v5574, %v5570
        %v5663 = vpack.c.b16 %v5575, %v5571
        %v5664 = vpack.c.b16 %v5576, %v5572
        %v5665 = vpack.c.b16 %v5577, %v5573
        %v5666 = vpack.c.b16 %v5582, %v5578
        %v5667 = vpack.c.b16 %v5583, %v5579
        %v5668 = vpack.c.b16 %v5584, %v5580
        %v5669 = vpack.c.b16 %v5585, %v5581
        %v5670 = vpack.c.b16 %v5590, %v5586
        %v5671 = vpack.c.b16 %v5591, %v5587
        %v5672 = vpack.c.b16 %v5592, %v5588
        %v5673 = vpack.c.b16 %v5593, %v5589
        %v5674 = vpack.c.b16 %v5598, %v5594
        %v5675 = vpack.c.b16 %v5599, %v5595
        %v5676 = vpack.c.b16 %v5600, %v5596
        %v5677 = vpack.c.b16 %v5601, %v5597
        %v5678 = vpack.c.b16 %v5606, %v5602
        %v5679 = vpack.c.b16 %v5607, %v5603
        %v5680 = vpack.c.b16 %v5608, %v5604
        %v5681 = vpack.c.b16 %v5609, %v5605
        %v5755 = vsel %vm766, %v5391, 0
        %5757 = vmatprep.subr.bf16.mxu0 %v5611
        %5758 = vmatpush1.bf16.msra.mxu0 %v5610
        %5759 = vmatprep.subr.bf16.mxu0 %v5615
        %5760 = vmatpush1.bf16.msra.mxu0 %v5614
        %5761 = vmatprep.subr.bf16.mxu0 %v5619
        %5762 = vmatpush1.bf16.msra.mxu0 %v5618
        %5763 = vmatprep.subr.bf16.mxu0 %v5623
        %5764 = vmatpush1.bf16.msra.mxu0 %v5622
        %5765 = vmatprep.subr.bf16.mxu0 %v5627
        %5766 = vmatpush1.bf16.msra.mxu0 %v5626
        %5767 = vmatprep.subr.bf16.mxu0 %v5631
        %5768 = vmatpush1.bf16.msra.mxu0 %v5630
        %5769 = vmatprep.subr.bf16.mxu0 %v5635
        %5770 = vmatpush1.bf16.msra.mxu0 %v5634
        %5771 = vmatprep.subr.bf16.mxu0 %v5639
        %5772 = vmatpush1.bf16.msra.mxu0 %v5638
        %5773 = vmatprep.subr.bf16.mxu0 %v5643
        %5774 = vmatpush1.bf16.msra.mxu0 %v5642
        %5775 = vmatprep.subr.bf16.mxu0 %v5647
        %5776 = vmatpush1.bf16.msra.mxu0 %v5646
        %5777 = vmatprep.subr.bf16.mxu0 %v5651
        %5778 = vmatpush1.bf16.msra.mxu0 %v5650
        %5779 = vmatprep.subr.bf16.mxu0 %v5655
        %5780 = vmatpush1.bf16.msra.mxu0 %v5654
        %5781 = vmatprep.subr.bf16.mxu0 %v5659
        %5782 = vmatpush1.bf16.msra.mxu0 %v5658
        %5783 = vmatprep.subr.bf16.mxu0 %v5663
        %5784 = vmatpush1.bf16.msra.mxu0 %v5662
        %5785 = vmatprep.subr.bf16.mxu0 %v5667
        %5786 = vmatpush1.bf16.msra.mxu0 %v5666
        %5787 = vmatprep.subr.bf16.mxu0 %v5671
        %5788 = vmatpush1.bf16.msra.mxu0 %v5670
        %5789 = vmatprep.mubr.bf16.mxu0 %v5388
        %5790 = vmatmul.mubr.bf16.gmra.mrb[0].mxu0 %v5385
        %v5791 = vpop.f32.mrb[0].mxu0
        %v5792 = vadd.f32 0.0, %v5791
        %v5793 = vpop.f32.mrb[0].mxu0
        %v5794 = vadd.f32 0.0, %v5793
        %v5795 = vpop.f32.mrb[0].mxu0
        %v5796 = vadd.f32 0.0, %v5795
        %v5797 = vpop.f32.mrb[0].mxu0
        %v5798 = vadd.f32 0.0, %v5797
        %5799 = vdwg.mxu0
        %5800 = vmatprep.subr.bf16.mxu0 %v5675
        %5801 = vmatpush1.bf16.msra.mxu0 %v5674
        %5802 = vmatprep.subr.bf16.mxu0 %v5679
        %5803 = vmatpush1.bf16.msra.mxu0 %v5678
        %5804 = vmatprep.subr.bf16.mxu0 0
        %5805 = vmatpush1.bf16.msra.mxu0 0
        %5806 = vmatprep.subr.bf16.mxu0 0
        %5807 = vmatpush1.bf16.msra.mxu0 0
        %5808 = vmatprep.subr.bf16.mxu0 0
        %5809 = vmatpush1.bf16.msra.mxu0 0
        %5810 = vmatprep.subr.bf16.mxu0 0
        %5811 = vmatpush1.bf16.msra.mxu0 0
        %5812 = vmatprep.subr.bf16.mxu0 0
        %5813 = vmatpush1.bf16.msra.mxu0 0
        %5814 = vmatprep.subr.bf16.mxu0 0
        %5815 = vmatpush1.bf16.msra.mxu0 0
        %5816 = vmatprep.subr.bf16.mxu0 0
        %5817 = vmatpush1.bf16.msra.mxu0 0
        %5818 = vmatprep.subr.bf16.mxu0 0
        %5819 = vmatpush1.bf16.msra.mxu0 0
        %5820 = vmatprep.subr.bf16.mxu0 0
        %5821 = vmatpush1.bf16.msra.mxu0 0
        %5822 = vmatprep.subr.bf16.mxu0 0
        %5823 = vmatpush1.bf16.msra.mxu0 0
        %5824 = vmatprep.subr.bf16.mxu0 0
        %5825 = vmatpush1.bf16.msra.mxu0 0
        %5826 = vmatprep.subr.bf16.mxu0 0
        %5827 = vmatpush1.bf16.msra.mxu0 0
        %5828 = vmatprep.subr.bf16.mxu0 0
        %5829 = vmatpush1.bf16.msra.mxu0 0
        %5830 = vmatprep.subr.bf16.mxu0 0
        %5831 = vmatpush1.bf16.msra.mxu0 0
        %5832 = vmatprep.mubr.bf16.mxu0 0
        %5833 = vmatmul.mubr.bf16.gmra.mrb[0].mxu0 %v5755
        %v5834 = vpop.f32.mrb[0].mxu0
        %v5835 = vadd.f32 %v5792, %v5834
        %v5836 = vpop.f32.mrb[0].mxu0
        %v5837 = vadd.f32 %v5794, %v5836
        %v5838 = vpop.f32.mrb[0].mxu0
        %v5839 = vadd.f32 %v5796, %v5838
        %v5840 = vpop.f32.mrb[0].mxu0
        %v5841 = vadd.f32 %v5798, %v5840
        %5842 = vdwg.mxu0
        %5843 = vmatprep.subr.bf16.mxu0 %v5613
        %5844 = vmatpush1.bf16.msra.mxu0 %v5612
        %5845 = vmatprep.subr.bf16.mxu0 %v5617
        %5846 = vmatpush1.bf16.msra.mxu0 %v5616
        %5847 = vmatprep.subr.bf16.mxu0 %v5621
        %5848 = vmatpush1.bf16.msra.mxu0 %v5620
        %5849 = vmatprep.subr.bf16.mxu0 %v5625
        %5850 = vmatpush1.bf16.msra.mxu0 %v5624
        %5851 = vmatprep.subr.bf16.mxu0 %v5629
        %5852 = vmatpush1.bf16.msra.mxu0 %v5628
        %5853 = vmatprep.subr.bf16.mxu0 %v5633
        %5854 = vmatpush1.bf16.msra.mxu0 %v5632
        %5855 = vmatprep.subr.bf16.mxu0 %v5637
        %5856 = vmatpush1.bf16.msra.mxu0 %v5636
        %5857 = vmatprep.subr.bf16.mxu0 %v5641
        %5858 = vmatpush1.bf16.msra.mxu0 %v5640
        %5859 = vmatprep.subr.bf16.mxu0 %v5645
        %5860 = vmatpush1.bf16.msra.mxu0 %v5644
        %5861 = vmatprep.subr.bf16.mxu0 %v5649
        %5862 = vmatpush1.bf16.msra.mxu0 %v5648
        %5863 = vmatprep.subr.bf16.mxu0 %v5653
        %5864 = vmatpush1.bf16.msra.mxu0 %v5652
        %5865 = vmatprep.subr.bf16.mxu0 %v5657
        %5866 = vmatpush1.bf16.msra.mxu0 %v5656
        %5867 = vmatprep.subr.bf16.mxu0 %v5661
        %5868 = vmatpush1.bf16.msra.mxu0 %v5660
        %5869 = vmatprep.subr.bf16.mxu0 %v5665
        %5870 = vmatpush1.bf16.msra.mxu0 %v5664
        %5871 = vmatprep.subr.bf16.mxu0 %v5669
        %5872 = vmatpush1.bf16.msra.mxu0 %v5668
        %5873 = vmatprep.subr.bf16.mxu0 %v5673
        %5874 = vmatpush1.bf16.msra.mxu0 %v5672
        %5875 = vmatprep.mubr.bf16.mxu0 %v5388
        %5876 = vmatmul.mubr.bf16.gmra.mrb[0].mxu0 %v5385
        %v5877 = vpop.f32.mrb[0].mxu0
        %v5878 = vadd.f32 0.0, %v5877
        %v5879 = vpop.f32.mrb[0].mxu0
        %v5880 = vadd.f32 0.0, %v5879
        %v5881 = vpop.f32.mrb[0].mxu0
        %v5882 = vadd.f32 0.0, %v5881
        %v5883 = vpop.f32.mrb[0].mxu0
        %v5884 = vadd.f32 0.0, %v5883
        %5885 = vdwg.mxu0
        %5886 = vmatprep.subr.bf16.mxu0 %v5677
        %5887 = vmatpush1.bf16.msra.mxu0 %v5676
        %5888 = vmatprep.subr.bf16.mxu0 %v5681
        %5889 = vmatpush1.bf16.msra.mxu0 %v5680
        %5890 = vmatprep.subr.bf16.mxu0 0
        %5891 = vmatpush1.bf16.msra.mxu0 0
        %5892 = vmatprep.subr.bf16.mxu0 0
        %5893 = vmatpush1.bf16.msra.mxu0 0
        %5894 = vmatprep.subr.bf16.mxu0 0
        %5895 = vmatpush1.bf16.msra.mxu0 0
        %5896 = vmatprep.subr.bf16.mxu0 0
        %5897 = vmatpush1.bf16.msra.mxu0 0
        %5898 = vmatprep.subr.bf16.mxu0 0
        %5899 = vmatpush1.bf16.msra.mxu0 0
        %5900 = vmatprep.subr.bf16.mxu0 0
        %5901 = vmatpush1.bf16.msra.mxu0 0
        %5902 = vmatprep.subr.bf16.mxu0 0
        %5903 = vmatpush1.bf16.msra.mxu0 0
        %5904 = vmatprep.subr.bf16.mxu0 0
        %5905 = vmatpush1.bf16.msra.mxu0 0
        %5906 = vmatprep.subr.bf16.mxu0 0
        %5907 = vmatpush1.bf16.msra.mxu0 0
        %5908 = vmatprep.subr.bf16.mxu0 0
        %5909 = vmatpush1.bf16.msra.mxu0 0
        %5910 = vmatprep.subr.bf16.mxu0 0
        %5911 = vmatpush1.bf16.msra.mxu0 0
        %5912 = vmatprep.subr.bf16.mxu0 0
        %5913 = vmatpush1.bf16.msra.mxu0 0
        %5914 = vmatprep.subr.bf16.mxu0 0
        %5915 = vmatpush1.bf16.msra.mxu0 0
        %5916 = vmatprep.subr.bf16.mxu0 0
        %5917 = vmatpush1.bf16.msra.mxu0 0
        %5918 = vmatprep.mubr.bf16.mxu0 0
        %5919 = vmatmul.mubr.bf16.gmra.mrb[0].mxu0 %v5755
        %v5920 = vpop.f32.mrb[0].mxu0
        %v5921 = vadd.f32 %v5878, %v5920
        %v5922 = vpop.f32.mrb[0].mxu0
        %v5923 = vadd.f32 %v5880, %v5922
        %v5924 = vpop.f32.mrb[0].mxu0
        %v5925 = vadd.f32 %v5882, %v5924
        %v5926 = vpop.f32.mrb[0].mxu0
        %v5927 = vadd.f32 %v5884, %v5926
        %5928 = vdwg.mxu0
        %v5929 = vadd.f32 %v5292, %v5835
        %v5930 = vadd.f32 %v5293, %v5837
        %v5931 = vadd.f32 %v5294, %v5921
        %v5932 = vadd.f32 %v5295, %v5923
        %v5933 = vadd.f32 %v5296, %v5839
        %v5934 = vadd.f32 %v5297, %v5841
        %v5935 = vadd.f32 %v5298, %v5925
        %v5936 = vadd.f32 %v5299, %v5927
        %v5937 = vld [vmem:[#allocation18] sm:$0xf]
        %v5939 = vlaneseq
        %v5940 = vshrl.u32 %v5939, 7
        %v5941 = vsub.s32 0, %v5940
        %v5942 = vrot.slane %v5937, %v5941
        %v5943 = vlaneseq
        %v5944 = vshrl.u32 %v5943, 7
        %v5945 = vsub.s32 1, %v5944
        %v5946 = vrot.slane %v5937, %v5945
        %v5947 = vlaneseq
        %v5948 = vshrl.u32 %v5947, 7
        %v5949 = vsub.s32 2, %v5948
        %v5950 = vrot.slane %v5937, %v5949
        %v5951 = vlaneseq
        %v5952 = vshrl.u32 %v5951, 7
        %v5953 = vsub.s32 3, %v5952
        %v5954 = vrot.slane %v5937, %v5953
        %v5959 = vmul.f32 %v5929, %v5942
        %v5960 = vmul.f32 %v5930, %v5946
        %v5961 = vmul.f32 %v5931, %v5950
        %v5962 = vmul.f32 %v5932, %v5954
        %v5963 = vmul.f32 %v5933, %v5942
        %v5964 = vmul.f32 %v5934, %v5946
        %v5965 = vmul.f32 %v5935, %v5950
        %v5966 = vmul.f32 %v5936, %v5954
        %v5967 = vld [vmem:[#allocation19] sm:$0xf]
        %v5969 = vlaneseq
        %v5970 = vshrl.u32 %v5969, 7
        %v5971 = vsub.s32 0, %v5970
        %v5972 = vrot.slane %v5967, %v5971
        %v5973 = vlaneseq
        %v5974 = vshrl.u32 %v5973, 7
        %v5975 = vsub.s32 1, %v5974
        %v5976 = vrot.slane %v5967, %v5975
        %v5977 = vlaneseq
        %v5978 = vshrl.u32 %v5977, 7
        %v5979 = vsub.s32 2, %v5978
        %v5980 = vrot.slane %v5967, %v5979
        %v5981 = vlaneseq
        %v5982 = vshrl.u32 %v5981, 7
        %v5983 = vsub.s32 3, %v5982
        %v5984 = vrot.slane %v5967, %v5983
        %v5989 = vadd.f32 %v5959, %v5972
        %v5990 = vadd.f32 %v5960, %v5976
        %v5991 = vadd.f32 %v5961, %v5980
        %v5992 = vadd.f32 %v5962, %v5984
        %v5993 = vadd.f32 %v5963, %v5972
        %v5994 = vadd.f32 %v5964, %v5976
        %v5995 = vadd.f32 %v5965, %v5980
        %v5996 = vadd.f32 %v5966, %v5984
        %v5997 = vmax.f32 %v5989, 0.0
        %v5998 = vmax.f32 %v5990, 0.0
        %v5999 = vmax.f32 %v5991, 0.0
        %v6000 = vmax.f32 %v5992, 0.0
        %v6001 = vmax.f32 %v5993, 0.0
        %v6002 = vmax.f32 %v5994, 0.0
        %v6003 = vmax.f32 %v5995, 0.0
        %v6004 = vmax.f32 %v5996, 0.0
        %v6005 = vld [vmem:[#allocation21] sm:$0x7f]
        %vm6006 = vcmask 113664
        %v6008 = vsel %vm6006, %v6005, 0
        %vm6010 = vcmask 1045504
        %v6012 = vsel %vm6010, %v6001, 0
        %v6015 = vsel %vm6010, %v6002, 0
        %v6018 = vsel %vm6010, %v6003, 0
        %v6021 = vsel %vm6010, %v6004, 0
        %6023 = vmatprep.subr.mxu0 %v5998
        %6024 = vmatpush1.msra.mxu0 %v5997
        %6025 = vmatprep.subr.mxu0 %v6015
        %6026 = vmatpush1.msra.mxu0 %v6012
        %6027 = vmatprep.subr.mxu0 0.0
        %6028 = vmatpush1.msra.mxu0 0.0
        %6029 = vmatprep.subr.mxu0 0.0
        %6030 = vmatpush1.msra.mxu0 0.0
        %6031 = vmatprep.subr.mxu0 0.0
        %6032 = vmatpush1.msra.mxu0 0.0
        %6033 = vmatprep.subr.mxu0 0.0
        %6034 = vmatpush1.msra.mxu0 0.0
        %6035 = vmatprep.subr.mxu0 0.0
        %6036 = vmatpush1.msra.mxu0 0.0
        %6037 = vmatprep.subr.mxu0 0.0
        %6038 = vmatpush1.msra.mxu0 0.0
        %6039 = vmatprep.subr.mxu0 0.0
        %6040 = vmatpush1.msra.mxu0 0.0
        %6041 = vmatprep.subr.mxu0 0.0
        %6042 = vmatpush1.msra.mxu0 0.0
        %6043 = vmatprep.subr.mxu0 0.0
        %6044 = vmatpush1.msra.mxu0 0.0
        %6045 = vmatprep.subr.mxu0 0.0
        %6046 = vmatpush1.msra.mxu0 0.0
        %6047 = vmatprep.subr.mxu0 0.0
        %6048 = vmatpush1.msra.mxu0 0.0
        %6049 = vmatprep.subr.mxu0 0.0
        %6050 = vmatpush1.msra.mxu0 0.0
        %6051 = vmatprep.subr.mxu0 0.0
        %6052 = vmatpush1.msra.mxu0 0.0
        %6053 = vmatprep.subr.mxu0 0.0
        %6054 = vmatpush1.msra.mxu0 0.0
        %6055 = vmatprep.subr.mxu0 0.0
        %6056 = vmatpush1.msra.mxu0 0.0
        %6057 = vmatprep.subr.mxu0 0.0
        %6058 = vmatpush1.msra.mxu0 0.0
        %6059 = vmatprep.subr.mxu0 0.0
        %6060 = vmatpush1.msra.mxu0 0.0
        %6061 = vmatprep.subr.mxu0 0.0
        %6062 = vmatpush1.msra.mxu0 0.0
        %6063 = vmatprep.subr.mxu0 0.0
        %6064 = vmatpush1.msra.mxu0 0.0
        %6065 = vmatprep.subr.mxu0 0.0
        %6066 = vmatpush1.msra.mxu0 0.0
        %6067 = vmatprep.subr.mxu0 0.0
        %6068 = vmatpush1.msra.mxu0 0.0
        %6069 = vmatprep.subr.mxu0 0.0
        %6070 = vmatpush1.msra.mxu0 0.0
        %6071 = vmatprep.subr.mxu0 0.0
        %6072 = vmatpush1.msra.mxu0 0.0
        %6073 = vmatprep.subr.mxu0 0.0
        %6074 = vmatpush1.msra.mxu0 0.0
        %6075 = vmatprep.subr.mxu0 0.0
        %6076 = vmatpush1.msra.mxu0 0.0
        %6077 = vmatprep.subr.mxu0 0.0
        %6078 = vmatpush1.msra.mxu0 0.0
        %6079 = vmatprep.subr.mxu0 0.0
        %6080 = vmatpush1.msra.mxu0 0.0
        %6081 = vmatprep.subr.mxu0 0.0
        %6082 = vmatpush1.msra.mxu0 0.0
        %6083 = vmatprep.subr.mxu0 0.0
        %6084 = vmatpush1.msra.mxu0 0.0
        %6085 = vmatprep.subr.mxu0 0.0
        %6086 = vmatpush1.msra.mxu0 0.0
        %6087 = vmatprep.mubr.f32.mxu0 0.0
        %6088 = vmatmul.mubr.f32.gmra.mrb[0].mxu0 %v6008
        %v6089 = vpop.f32.mrb[0].mxu0
        %v6090 = vadd.f32 0.0, %v6089
        %v6091 = vpop.f32.mrb[0].mxu0
        %v6092 = vadd.f32 0.0, %v6091
        %6093 = vdwg.mxu0
        %6094 = vmatprep.subr.mxu0 %v6000
        %6095 = vmatpush1.msra.mxu0 %v5999
        %6096 = vmatprep.subr.mxu0 %v6021
        %6097 = vmatpush1.msra.mxu0 %v6018
        %6098 = vmatprep.subr.mxu0 0.0
        %6099 = vmatpush1.msra.mxu0 0.0
        %6100 = vmatprep.subr.mxu0 0.0
        %6101 = vmatpush1.msra.mxu0 0.0
        %6102 = vmatprep.subr.mxu0 0.0
        %6103 = vmatpush1.msra.mxu0 0.0
        %6104 = vmatprep.subr.mxu0 0.0
        %6105 = vmatpush1.msra.mxu0 0.0
        %6106 = vmatprep.subr.mxu0 0.0
        %6107 = vmatpush1.msra.mxu0 0.0
        %6108 = vmatprep.subr.mxu0 0.0
        %6109 = vmatpush1.msra.mxu0 0.0
        %6110 = vmatprep.subr.mxu0 0.0
        %6111 = vmatpush1.msra.mxu0 0.0
        %6112 = vmatprep.subr.mxu0 0.0
        %6113 = vmatpush1.msra.mxu0 0.0
        %6114 = vmatprep.subr.mxu0 0.0
        %6115 = vmatpush1.msra.mxu0 0.0
        %6116 = vmatprep.subr.mxu0 0.0
        %6117 = vmatpush1.msra.mxu0 0.0
        %6118 = vmatprep.subr.mxu0 0.0
        %6119 = vmatpush1.msra.mxu0 0.0
        %6120 = vmatprep.subr.mxu0 0.0
        %6121 = vmatpush1.msra.mxu0 0.0
        %6122 = vmatprep.subr.mxu0 0.0
        %6123 = vmatpush1.msra.mxu0 0.0
        %6124 = vmatprep.subr.mxu0 0.0
        %6125 = vmatpush1.msra.mxu0 0.0
        %6126 = vmatprep.subr.mxu0 0.0
        %6127 = vmatpush1.msra.mxu0 0.0
        %6128 = vmatprep.subr.mxu0 0.0
        %6129 = vmatpush1.msra.mxu0 0.0
        %6130 = vmatprep.subr.mxu0 0.0
        %6131 = vmatpush1.msra.mxu0 0.0
        %6132 = vmatprep.subr.mxu0 0.0
        %6133 = vmatpush1.msra.mxu0 0.0
        %6134 = vmatprep.subr.mxu0 0.0
        %6135 = vmatpush1.msra.mxu0 0.0
        %6136 = vmatprep.subr.mxu0 0.0
        %6137 = vmatpush1.msra.mxu0 0.0
        %6138 = vmatprep.subr.mxu0 0.0
        %6139 = vmatpush1.msra.mxu0 0.0
        %6140 = vmatprep.subr.mxu0 0.0
        %6141 = vmatpush1.msra.mxu0 0.0
        %6142 = vmatprep.subr.mxu0 0.0
        %6143 = vmatpush1.msra.mxu0 0.0
        %6144 = vmatprep.subr.mxu0 0.0
        %6145 = vmatpush1.msra.mxu0 0.0
        %6146 = vmatprep.subr.mxu0 0.0
        %6147 = vmatpush1.msra.mxu0 0.0
        %6148 = vmatprep.subr.mxu0 0.0
        %6149 = vmatpush1.msra.mxu0 0.0
        %6150 = vmatprep.subr.mxu0 0.0
        %6151 = vmatpush1.msra.mxu0 0.0
        %6152 = vmatprep.subr.mxu0 0.0
        %6153 = vmatpush1.msra.mxu0 0.0
        %6154 = vmatprep.subr.mxu0 0.0
        %6155 = vmatpush1.msra.mxu0 0.0
        %6156 = vmatprep.subr.mxu0 0.0
        %6157 = vmatpush1.msra.mxu0 0.0
        %6158 = vmatprep.mubr.f32.mxu0 0.0
        %6159 = vmatmul.mubr.f32.gmra.mrb[0].mxu0 %v6008
        %v6160 = vpop.f32.mrb[0].mxu0
        %v6161 = vadd.f32 0.0, %v6160
        %v6162 = vpop.f32.mrb[0].mxu0
        %v6163 = vadd.f32 0.0, %v6162
        %6164 = vdwg.mxu0
        %v6165 = vld [vmem:[#allocation22] sm:$0x7f]
        %v6167 = vsel %vm6006, %v6165, 0
        %6169 = vmatprep.subr.mxu0 %v5998
        %6170 = vmatpush1.msra.mxu0 %v5997
        %6171 = vmatprep.subr.mxu0 %v6015
        %6172 = vmatpush1.msra.mxu0 %v6012
        %6173 = vmatprep.subr.mxu0 0.0
        %6174 = vmatpush1.msra.mxu0 0.0
        %6175 = vmatprep.subr.mxu0 0.0
        %6176 = vmatpush1.msra.mxu0 0.0
        %6177 = vmatprep.subr.mxu0 0.0
        %6178 = vmatpush1.msra.mxu0 0.0
        %6179 = vmatprep.subr.mxu0 0.0
        %6180 = vmatpush1.msra.mxu0 0.0
        %6181 = vmatprep.subr.mxu0 0.0
        %6182 = vmatpush1.msra.mxu0 0.0
        %6183 = vmatprep.subr.mxu0 0.0
        %6184 = vmatpush1.msra.mxu0 0.0
        %6185 = vmatprep.subr.mxu0 0.0
        %6186 = vmatpush1.msra.mxu0 0.0
        %6187 = vmatprep.subr.mxu0 0.0
        %6188 = vmatpush1.msra.mxu0 0.0
        %6189 = vmatprep.subr.mxu0 0.0
        %6190 = vmatpush1.msra.mxu0 0.0
        %6191 = vmatprep.subr.mxu0 0.0
        %6192 = vmatpush1.msra.mxu0 0.0
        %6193 = vmatprep.subr.mxu0 0.0
        %6194 = vmatpush1.msra.mxu0 0.0
        %6195 = vmatprep.subr.mxu0 0.0
        %6196 = vmatpush1.msra.mxu0 0.0
        %6197 = vmatprep.subr.mxu0 0.0
        %6198 = vmatpush1.msra.mxu0 0.0
        %6199 = vmatprep.subr.mxu0 0.0
        %6200 = vmatpush1.msra.mxu0 0.0
        %6201 = vmatprep.subr.mxu0 0.0
        %6202 = vmatpush1.msra.mxu0 0.0
        %6203 = vmatprep.subr.mxu0 0.0
        %6204 = vmatpush1.msra.mxu0 0.0
        %6205 = vmatprep.subr.mxu0 0.0
        %6206 = vmatpush1.msra.mxu0 0.0
        %6207 = vmatprep.subr.mxu0 0.0
        %6208 = vmatpush1.msra.mxu0 0.0
        %6209 = vmatprep.subr.mxu0 0.0
        %6210 = vmatpush1.msra.mxu0 0.0
        %6211 = vmatprep.subr.mxu0 0.0
        %6212 = vmatpush1.msra.mxu0 0.0
        %6213 = vmatprep.subr.mxu0 0.0
        %6214 = vmatpush1.msra.mxu0 0.0
        %6215 = vmatprep.subr.mxu0 0.0
        %6216 = vmatpush1.msra.mxu0 0.0
        %6217 = vmatprep.subr.mxu0 0.0
        %6218 = vmatpush1.msra.mxu0 0.0
        %6219 = vmatprep.subr.mxu0 0.0
        %6220 = vmatpush1.msra.mxu0 0.0
        %6221 = vmatprep.subr.mxu0 0.0
        %6222 = vmatpush1.msra.mxu0 0.0
        %6223 = vmatprep.subr.mxu0 0.0
        %6224 = vmatpush1.msra.mxu0 0.0
        %6225 = vmatprep.subr.mxu0 0.0
        %6226 = vmatpush1.msra.mxu0 0.0
        %6227 = vmatprep.subr.mxu0 0.0
        %6228 = vmatpush1.msra.mxu0 0.0
        %6229 = vmatprep.subr.mxu0 0.0
        %6230 = vmatpush1.msra.mxu0 0.0
        %6231 = vmatprep.subr.mxu0 0.0
        %6232 = vmatpush1.msra.mxu0 0.0
        %6233 = vmatprep.mubr.f32.mxu0 0.0
        %6234 = vmatmul.mubr.f32.gmra.mrb[0].mxu0 %v6167
        %v6235 = vpop.f32.mrb[0].mxu0
        %v6236 = vadd.f32 0.0, %v6235
        %v6237 = vpop.f32.mrb[0].mxu0
        %v6238 = vadd.f32 0.0, %v6237
        %6239 = vdwg.mxu0
        %6240 = vmatprep.subr.mxu0 %v6000
        %6241 = vmatpush1.msra.mxu0 %v5999
        %6242 = vmatprep.subr.mxu0 %v6021
        %6243 = vmatpush1.msra.mxu0 %v6018
        %6244 = vmatprep.subr.mxu0 0.0
        %6245 = vmatpush1.msra.mxu0 0.0
        %6246 = vmatprep.subr.mxu0 0.0
        %6247 = vmatpush1.msra.mxu0 0.0
        %6248 = vmatprep.subr.mxu0 0.0
        %6249 = vmatpush1.msra.mxu0 0.0
        %6250 = vmatprep.subr.mxu0 0.0
        %6251 = vmatpush1.msra.mxu0 0.0
        %6252 = vmatprep.subr.mxu0 0.0
        %6253 = vmatpush1.msra.mxu0 0.0
        %6254 = vmatprep.subr.mxu0 0.0
        %6255 = vmatpush1.msra.mxu0 0.0
        %6256 = vmatprep.subr.mxu0 0.0
        %6257 = vmatpush1.msra.mxu0 0.0
        %6258 = vmatprep.subr.mxu0 0.0
        %6259 = vmatpush1.msra.mxu0 0.0
        %6260 = vmatprep.subr.mxu0 0.0
        %6261 = vmatpush1.msra.mxu0 0.0
        %6262 = vmatprep.subr.mxu0 0.0
        %6263 = vmatpush1.msra.mxu0 0.0
        %6264 = vmatprep.subr.mxu0 0.0
        %6265 = vmatpush1.msra.mxu0 0.0
        %6266 = vmatprep.subr.mxu0 0.0
        %6267 = vmatpush1.msra.mxu0 0.0
        %6268 = vmatprep.subr.mxu0 0.0
        %6269 = vmatpush1.msra.mxu0 0.0
        %6270 = vmatprep.subr.mxu0 0.0
        %6271 = vmatpush1.msra.mxu0 0.0
        %6272 = vmatprep.subr.mxu0 0.0
        %6273 = vmatpush1.msra.mxu0 0.0
        %6274 = vmatprep.subr.mxu0 0.0
        %6275 = vmatpush1.msra.mxu0 0.0
        %6276 = vmatprep.subr.mxu0 0.0
        %6277 = vmatpush1.msra.mxu0 0.0
        %6278 = vmatprep.subr.mxu0 0.0
        %6279 = vmatpush1.msra.mxu0 0.0
        %6280 = vmatprep.subr.mxu0 0.0
        %6281 = vmatpush1.msra.mxu0 0.0
        %6282 = vmatprep.subr.mxu0 0.0
        %6283 = vmatpush1.msra.mxu0 0.0
        %6284 = vmatprep.subr.mxu0 0.0
        %6285 = vmatpush1.msra.mxu0 0.0
        %6286 = vmatprep.subr.mxu0 0.0
        %6287 = vmatpush1.msra.mxu0 0.0
        %6288 = vmatprep.subr.mxu0 0.0
        %6289 = vmatpush1.msra.mxu0 0.0
        %6290 = vmatprep.subr.mxu0 0.0
        %6291 = vmatpush1.msra.mxu0 0.0
        %6292 = vmatprep.subr.mxu0 0.0
        %6293 = vmatpush1.msra.mxu0 0.0
        %6294 = vmatprep.subr.mxu0 0.0
        %6295 = vmatpush1.msra.mxu0 0.0
        %6296 = vmatprep.subr.mxu0 0.0
        %6297 = vmatpush1.msra.mxu0 0.0
        %6298 = vmatprep.subr.mxu0 0.0
        %6299 = vmatpush1.msra.mxu0 0.0
        %6300 = vmatprep.subr.mxu0 0.0
        %6301 = vmatpush1.msra.mxu0 0.0
        %6302 = vmatprep.subr.mxu0 0.0
        %6303 = vmatpush1.msra.mxu0 0.0
        %6304 = vmatprep.mubr.f32.mxu0 0.0
        %6305 = vmatmul.mubr.f32.gmra.mrb[0].mxu0 %v6167
        %v6306 = vpop.f32.mrb[0].mxu0
        %v6307 = vadd.f32 0.0, %v6306
        %v6308 = vpop.f32.mrb[0].mxu0
        %v6309 = vadd.f32 0.0, %v6308
        %6310 = vdwg.mxu0
        %v6311 = vmax.f32 %v6090, %v6236
        %v6312 = vmax.f32 %v6092, %v6238
        %v6313 = vmax.f32 %v6161, %v6307
        %v6314 = vmax.f32 %v6163, %v6309
        %v6315 = vld [vmem:[#allocation24] sm:$0xff]
        %v6316 = vld [vmem:[#allocation24 + $0x8] sm:$0xff]
        %v6317 = vld [vmem:[#allocation24 + $0x10] sm:$0xff]
        %v6318 = vld [vmem:[#allocation24 + $0x18] sm:$0xff]
        %v6319 = vld [vmem:[#allocation24 + $0x20] sm:$0xff]
        %v6320 = vld [vmem:[#allocation24 + $0x28] sm:$0xff]
        %v6321 = vld [vmem:[#allocation24 + $0x30] sm:$0xff]
        %v6322 = vld [vmem:[#allocation24 + $0x38] sm:$0xff]
        %v6323 = vld [vmem:[#allocation24 + $0x40] sm:$0xff]
        %v6324 = vld [vmem:[#allocation24 + $0x48] sm:$0xff]
        %v6325 = vld [vmem:[#allocation24 + $0x50] sm:$0xff]
        %v6326 = vld [vmem:[#allocation24 + $0x58] sm:$0xff]
        %v6327 = vld [vmem:[#allocation24 + $0x60] sm:$0xff]
        %v6328 = vld [vmem:[#allocation24 + $0x68] sm:$0xff]
        %v6329 = vld [vmem:[#allocation24 + $0x70] sm:$0xff]
        %v6330 = vld [vmem:[#allocation24 + $0x78] sm:$0xff]
        %v6331 = vld [vmem:[#allocation24 + $0x80] sm:$0xff]
        %v6332 = vld [vmem:[#allocation24 + $0x88] sm:$0xff]
        %v6333 = vld [vmem:[#allocation24 + $0x90] sm:$0xff]
        %v6334 = vld [vmem:[#allocation24 + $0x98] sm:$0xff]
        %v6335 = vld [vmem:[#allocation24 + $0xa0] sm:$0xff]
        %v6336 = vld [vmem:[#allocation24 + $0xa8] sm:$0xff]
        %v6337 = vld [vmem:[#allocation24 + $0xb0] sm:$0xff]
        %v6338 = vld [vmem:[#allocation24 + $0xb8] sm:$0xff]
        %v6339 = vld [vmem:[#allocation24 + $0xc0] sm:$0xff]
        %v6340 = vld [vmem:[#allocation24 + $0xc8] sm:$0xff]
        %v6341 = vld [vmem:[#allocation24 + $0xd0] sm:$0xff]
        %v6342 = vld [vmem:[#allocation24 + $0xd8] sm:$0xff]
        %v6343 = vld [vmem:[#allocation24 + $0xe0] sm:$0xff]
        %v6344 = vld [vmem:[#allocation24 + $0xe8] sm:$0xff]
        %v6345 = vld [vmem:[#allocation24 + $0xf0] sm:$0xff]
        %v6346 = vld [vmem:[#allocation24 + $0xf8] sm:$0xff]
        %v6347 = vld [vmem:[#allocation24 + $0x100] sm:$0xff]
        %v6348 = vld [vmem:[#allocation24 + $0x108] sm:$0xff]
        %v6349 = vld [vmem:[#allocation24 + $0x110] sm:$0xff]
        %v6350 = vld [vmem:[#allocation24 + $0x118] sm:$0xff]
        %v6351 = vld [vmem:[#allocation24 + $0x120] sm:$0xff]
        %v6352 = vld [vmem:[#allocation24 + $0x128] sm:$0xff]
        %v6353 = vld [vmem:[#allocation24 + $0x130] sm:$0xff]
        %v6354 = vld [vmem:[#allocation24 + $0x138] sm:$0xff]
        %v6355 = vld [vmem:[#allocation24 + $0x140] sm:$0xff]
        %v6356 = vld [vmem:[#allocation24 + $0x148] sm:$0xff]
        %v6357 = vld [vmem:[#allocation24 + $0x150] sm:$0xff]
        %v6358 = vld [vmem:[#allocation24 + $0x158] sm:$0xff]
        %v6359 = vld [vmem:[#allocation24 + $0x160] sm:$0xff]
        %v6360 = vld [vmem:[#allocation24 + $0x168] sm:$0xff]
        %v6361 = vld [vmem:[#allocation24 + $0x170] sm:$0xff]
        %v6362 = vld [vmem:[#allocation24 + $0x178] sm:$0xff]
        %v6363 = vld [vmem:[#allocation24 + $0x180] sm:$0xff]
        %v6364 = vld [vmem:[#allocation24 + $0x188] sm:$0xff]
        %v6365 = vld [vmem:[#allocation24 + $0x190] sm:$0xff]
        %v6366 = vld [vmem:[#allocation24 + $0x198] sm:$0xff]
        %v6367 = vld [vmem:[#allocation24 + $0x1a0] sm:$0xff]
        %v6368 = vld [vmem:[#allocation24 + $0x1a8] sm:$0xff]
        %v6369 = vld [vmem:[#allocation24 + $0x1b0] sm:$0xff]
        %v6370 = vld [vmem:[#allocation24 + $0x1b8] sm:$0xff]
        %v6371 = vld [vmem:[#allocation24 + $0x1c0] sm:$0xff]
        %v6372 = vld [vmem:[#allocation24 + $0x1c8] sm:$0xff]
        %v6373 = vld [vmem:[#allocation24 + $0x1d0] sm:$0xff]
        %v6374 = vld [vmem:[#allocation24 + $0x1d8] sm:$0xff]
        %v6375 = vld [vmem:[#allocation24 + $0x1e0] sm:$0xff]
        %v6376 = vld [vmem:[#allocation24 + $0x1e8] sm:$0xff]
        %v6377 = vld [vmem:[#allocation24 + $0x1f0] sm:$0xff]
        %v6378 = vld [vmem:[#allocation24 + $0x1f8] sm:$0xff]
        %v6379 = vld [vmem:[#allocation24 + $0x200] sm:$0xff]
        %v6380 = vld [vmem:[#allocation24 + $0x208] sm:$0xff]
        %v6381 = vld [vmem:[#allocation24 + $0x210] sm:$0xff]
        %v6382 = vld [vmem:[#allocation24 + $0x218] sm:$0xff]
        %v6383 = vld [vmem:[#allocation24 + $0x220] sm:$0xff]
        %v6384 = vld [vmem:[#allocation24 + $0x228] sm:$0xff]
        %v6385 = vld [vmem:[#allocation24 + $0x230] sm:$0xff]
        %v6386 = vld [vmem:[#allocation24 + $0x238] sm:$0xff]
        %v6387 = vld [vmem:[#allocation24 + $0x240] sm:$0xff]
        %v6388 = vld [vmem:[#allocation24 + $0x248] sm:$0xff]
        %v6389 = vld [vmem:[#allocation24 + $0x250] sm:$0xff]
        %v6390 = vld [vmem:[#allocation24 + $0x258] sm:$0xff]
        %v6391 = vld [vmem:[#allocation24 + $0x260] sm:$0xff]
        %v6392 = vld [vmem:[#allocation24 + $0x268] sm:$0xff]
        %v6393 = vld [vmem:[#allocation24 + $0x270] sm:$0xff]
        %v6394 = vld [vmem:[#allocation24 + $0x278] sm:$0xff]
        %v6395 = vld [vmem:[#allocation24 + $0x280] sm:$0xff]
        %v6396 = vld [vmem:[#allocation24 + $0x288] sm:$0xff]
        %v6397 = vld [vmem:[#allocation24 + $0x290] sm:$0xff]
        %v6398 = vld [vmem:[#allocation24 + $0x298] sm:$0xff]
        %v6399 = vld [vmem:[#allocation24 + $0x2a0] sm:$0xff]
        %v6400 = vld [vmem:[#allocation24 + $0x2a8] sm:$0xff]
        %v6401 = vld [vmem:[#allocation24 + $0x2b0] sm:$0xff]
        %v6402 = vld [vmem:[#allocation24 + $0x2b8] sm:$0xff]
        %v6403 = vld [vmem:[#allocation24 + $0x2c0] sm:$0xff]
        %v6404 = vld [vmem:[#allocation24 + $0x2c8] sm:$0xff]
        %v6405 = vld [vmem:[#allocation24 + $0x2d0] sm:$0xff]
        %v6406 = vld [vmem:[#allocation24 + $0x2d8] sm:$0xff]
        %v6407 = vld [vmem:[#allocation24 + $0x2e0] sm:$0xff]
        %v6408 = vld [vmem:[#allocation24 + $0x2e8] sm:$0xff]
        %v6409 = vld [vmem:[#allocation24 + $0x2f0] sm:$0xff]
        %v6410 = vld [vmem:[#allocation24 + $0x2f8] sm:$0xff]
        %v6411 = vld [vmem:[#allocation24 + $0x300] sm:$0xff]
        %v6412 = vld [vmem:[#allocation24 + $0x308] sm:$0xff]
        %v6413 = vld [vmem:[#allocation24 + $0x310] sm:$0xff]
        %v6414 = vld [vmem:[#allocation24 + $0x318] sm:$0xff]
        %v6415 = vld [vmem:[#allocation24 + $0x320] sm:$0xff]
        %v6416 = vld [vmem:[#allocation24 + $0x328] sm:$0xff]
        %v6417 = vld [vmem:[#allocation24 + $0x330] sm:$0xff]
        %v6418 = vld [vmem:[#allocation24 + $0x338] sm:$0xff]
        %v6419 = vld [vmem:[#allocation24 + $0x340] sm:$0xff]
        %v6420 = vld [vmem:[#allocation24 + $0x348] sm:$0xff]
        %v6421 = vld [vmem:[#allocation24 + $0x350] sm:$0xff]
        %v6422 = vld [vmem:[#allocation24 + $0x358] sm:$0xff]
        %v6423 = vld [vmem:[#allocation24 + $0x360] sm:$0xff]
        %v6424 = vld [vmem:[#allocation24 + $0x368] sm:$0xff]
        %v6425 = vld [vmem:[#allocation24 + $0x370] sm:$0xff]
        %v6426 = vld [vmem:[#allocation24 + $0x378] sm:$0xff]
        %v6428 = vsel %vm2244, %v6314, 0
        %6430 = vmatprep.subr.mxu0 %v6316
        %6431 = vmatpush1.msra.mxu0 %v6315
        %6432 = vmatprep.subr.mxu0 %v6318
        %6433 = vmatpush1.msra.mxu0 %v6317
        %6434 = vmatprep.subr.mxu0 %v6320
        %6435 = vmatpush1.msra.mxu0 %v6319
        %6436 = vmatprep.subr.mxu0 %v6322
        %6437 = vmatpush1.msra.mxu0 %v6321
        %6438 = vmatprep.subr.mxu0 %v6324
        %6439 = vmatpush1.msra.mxu0 %v6323
        %6440 = vmatprep.subr.mxu0 %v6326
        %6441 = vmatpush1.msra.mxu0 %v6325
        %6442 = vmatprep.subr.mxu0 %v6328
        %6443 = vmatpush1.msra.mxu0 %v6327
        %6444 = vmatprep.subr.mxu0 %v6330
        %6445 = vmatpush1.msra.mxu0 %v6329
        %6446 = vmatprep.subr.mxu0 %v6332
        %6447 = vmatpush1.msra.mxu0 %v6331
        %6448 = vmatprep.subr.mxu0 %v6334
        %6449 = vmatpush1.msra.mxu0 %v6333
        %6450 = vmatprep.subr.mxu0 %v6336
        %6451 = vmatpush1.msra.mxu0 %v6335
        %6452 = vmatprep.subr.mxu0 %v6338
        %6453 = vmatpush1.msra.mxu0 %v6337
        %6454 = vmatprep.subr.mxu0 %v6340
        %6455 = vmatpush1.msra.mxu0 %v6339
        %6456 = vmatprep.subr.mxu0 %v6342
        %6457 = vmatpush1.msra.mxu0 %v6341
        %6458 = vmatprep.subr.mxu0 %v6344
        %6459 = vmatpush1.msra.mxu0 %v6343
        %6460 = vmatprep.subr.mxu0 %v6346
        %6461 = vmatpush1.msra.mxu0 %v6345
        %6462 = vmatprep.subr.mxu0 %v6348
        %6463 = vmatpush1.msra.mxu0 %v6347
        %6464 = vmatprep.subr.mxu0 %v6350
        %6465 = vmatpush1.msra.mxu0 %v6349
        %6466 = vmatprep.subr.mxu0 %v6352
        %6467 = vmatpush1.msra.mxu0 %v6351
        %6468 = vmatprep.subr.mxu0 %v6354
        %6469 = vmatpush1.msra.mxu0 %v6353
        %6470 = vmatprep.subr.mxu0 %v6356
        %6471 = vmatpush1.msra.mxu0 %v6355
        %6472 = vmatprep.subr.mxu0 %v6358
        %6473 = vmatpush1.msra.mxu0 %v6357
        %6474 = vmatprep.subr.mxu0 %v6360
        %6475 = vmatpush1.msra.mxu0 %v6359
        %6476 = vmatprep.subr.mxu0 %v6362
        %6477 = vmatpush1.msra.mxu0 %v6361
        %6478 = vmatprep.subr.mxu0 %v6364
        %6479 = vmatpush1.msra.mxu0 %v6363
        %6480 = vmatprep.subr.mxu0 %v6366
        %6481 = vmatpush1.msra.mxu0 %v6365
        %6482 = vmatprep.subr.mxu0 %v6368
        %6483 = vmatpush1.msra.mxu0 %v6367
        %6484 = vmatprep.subr.mxu0 %v6370
        %6485 = vmatpush1.msra.mxu0 %v6369
        %6486 = vmatprep.subr.mxu0 %v6372
        %6487 = vmatpush1.msra.mxu0 %v6371
        %6488 = vmatprep.subr.mxu0 %v6374
        %6489 = vmatpush1.msra.mxu0 %v6373
        %6490 = vmatprep.subr.mxu0 %v6376
        %6491 = vmatpush1.msra.mxu0 %v6375
        %6492 = vmatprep.subr.mxu0 %v6378
        %6493 = vmatpush1.msra.mxu0 %v6377
        %6494 = vmatprep.mubr.f32.mxu0 %v6312
        %6495 = vmatmul.mubr.f32.gmra.mrb[0].mxu0 %v6311
        %v6496 = vpop.f32.mrb[0].mxu0
        %v6497 = vadd.f32 0.0, %v6496
        %v6498 = vpop.f32.mrb[0].mxu0
        %v6499 = vadd.f32 0.0, %v6498
        %6500 = vdwg.mxu0
        %6501 = vmatprep.subr.mxu0 %v6380
        %6502 = vmatpush1.msra.mxu0 %v6379
        %6503 = vmatprep.subr.mxu0 %v6382
        %6504 = vmatpush1.msra.mxu0 %v6381
        %6505 = vmatprep.subr.mxu0 %v6384
        %6506 = vmatpush1.msra.mxu0 %v6383
        %6507 = vmatprep.subr.mxu0 %v6386
        %6508 = vmatpush1.msra.mxu0 %v6385
        %6509 = vmatprep.subr.mxu0 %v6388
        %6510 = vmatpush1.msra.mxu0 %v6387
        %6511 = vmatprep.subr.mxu0 %v6390
        %6512 = vmatpush1.msra.mxu0 %v6389
        %6513 = vmatprep.subr.mxu0 %v6392
        %6514 = vmatpush1.msra.mxu0 %v6391
        %6515 = vmatprep.subr.mxu0 %v6394
        %6516 = vmatpush1.msra.mxu0 %v6393
        %6517 = vmatprep.subr.mxu0 %v6396
        %6518 = vmatpush1.msra.mxu0 %v6395
        %6519 = vmatprep.subr.mxu0 %v6398
        %6520 = vmatpush1.msra.mxu0 %v6397
        %6521 = vmatprep.subr.mxu0 %v6400
        %6522 = vmatpush1.msra.mxu0 %v6399
        %6523 = vmatprep.subr.mxu0 %v6402
        %6524 = vmatpush1.msra.mxu0 %v6401
        %6525 = vmatprep.subr.mxu0 %v6404
        %6526 = vmatpush1.msra.mxu0 %v6403
        %6527 = vmatprep.subr.mxu0 %v6406
        %6528 = vmatpush1.msra.mxu0 %v6405
        %6529 = vmatprep.subr.mxu0 %v6408
        %6530 = vmatpush1.msra.mxu0 %v6407
        %6531 = vmatprep.subr.mxu0 %v6410
        %6532 = vmatpush1.msra.mxu0 %v6409
        %6533 = vmatprep.subr.mxu0 %v6412
        %6534 = vmatpush1.msra.mxu0 %v6411
        %6535 = vmatprep.subr.mxu0 %v6414
        %6536 = vmatpush1.msra.mxu0 %v6413
        %6537 = vmatprep.subr.mxu0 %v6416
        %6538 = vmatpush1.msra.mxu0 %v6415
        %6539 = vmatprep.subr.mxu0 %v6418
        %6540 = vmatpush1.msra.mxu0 %v6417
        %6541 = vmatprep.subr.mxu0 %v6420
        %6542 = vmatpush1.msra.mxu0 %v6419
        %6543 = vmatprep.subr.mxu0 %v6422
        %6544 = vmatpush1.msra.mxu0 %v6421
        %6545 = vmatprep.subr.mxu0 %v6424
        %6546 = vmatpush1.msra.mxu0 %v6423
        %6547 = vmatprep.subr.mxu0 %v6426
        %6548 = vmatpush1.msra.mxu0 %v6425
        %6549 = vmatprep.subr.mxu0 0.0
        %6550 = vmatpush1.msra.mxu0 0.0
        %6551 = vmatprep.subr.mxu0 0.0
        %6552 = vmatpush1.msra.mxu0 0.0
        %6553 = vmatprep.subr.mxu0 0.0
        %6554 = vmatpush1.msra.mxu0 0.0
        %6555 = vmatprep.subr.mxu0 0.0
        %6556 = vmatpush1.msra.mxu0 0.0
        %6557 = vmatprep.subr.mxu0 0.0
        %6558 = vmatpush1.msra.mxu0 0.0
        %6559 = vmatprep.subr.mxu0 0.0
        %6560 = vmatpush1.msra.mxu0 0.0
        %6561 = vmatprep.subr.mxu0 0.0
        %6562 = vmatpush1.msra.mxu0 0.0
        %6563 = vmatprep.subr.mxu0 0.0
        %6564 = vmatpush1.msra.mxu0 0.0
        %6565 = vmatprep.mubr.f32.mxu0 %v6428
        %6566 = vmatmul.mubr.f32.gmra.mrb[0].mxu0 %v6313
        %v6567 = vpop.f32.mrb[0].mxu0
        %v6568 = vadd.f32 %v6497, %v6567
        %v6569 = vpop.f32.mrb[0].mxu0
        %v6570 = vadd.f32 %v6499, %v6569
        %6571 = vdwg.mxu0
        %v6572 = vld [vmem:[#allocation25] sm:$0xff]
        %v6573 = vld [vmem:[#allocation25 + $0x8] sm:$0xff]
        %v6574 = vld [vmem:[#allocation25 + $0x10] sm:$0xff]
        %v6575 = vld [vmem:[#allocation25 + $0x18] sm:$0xff]
        %v6576 = vld [vmem:[#allocation25 + $0x20] sm:$0xff]
        %v6577 = vld [vmem:[#allocation25 + $0x28] sm:$0xff]
        %v6578 = vld [vmem:[#allocation25 + $0x30] sm:$0xff]
        %v6579 = vld [vmem:[#allocation25 + $0x38] sm:$0xff]
        %v6580 = vld [vmem:[#allocation25 + $0x40] sm:$0xff]
        %v6581 = vld [vmem:[#allocation25 + $0x48] sm:$0xff]
        %v6582 = vld [vmem:[#allocation25 + $0x50] sm:$0xff]
        %v6583 = vld [vmem:[#allocation25 + $0x58] sm:$0xff]
        %v6584 = vld [vmem:[#allocation25 + $0x60] sm:$0xff]
        %v6585 = vld [vmem:[#allocation25 + $0x68] sm:$0xff]
        %v6586 = vld [vmem:[#allocation25 + $0x70] sm:$0xff]
        %v6587 = vld [vmem:[#allocation25 + $0x78] sm:$0xff]
        %v6588 = vld [vmem:[#allocation25 + $0x80] sm:$0xff]
        %v6589 = vld [vmem:[#allocation25 + $0x88] sm:$0xff]
        %v6590 = vld [vmem:[#allocation25 + $0x90] sm:$0xff]
        %v6591 = vld [vmem:[#allocation25 + $0x98] sm:$0xff]
        %v6592 = vld [vmem:[#allocation25 + $0xa0] sm:$0xff]
        %v6593 = vld [vmem:[#allocation25 + $0xa8] sm:$0xff]
        %v6594 = vld [vmem:[#allocation25 + $0xb0] sm:$0xff]
        %v6595 = vld [vmem:[#allocation25 + $0xb8] sm:$0xff]
        %v6596 = vld [vmem:[#allocation25 + $0xc0] sm:$0xff]
        %v6597 = vld [vmem:[#allocation25 + $0xc8] sm:$0xff]
        %v6598 = vld [vmem:[#allocation25 + $0xd0] sm:$0xff]
        %v6599 = vld [vmem:[#allocation25 + $0xd8] sm:$0xff]
        %v6600 = vld [vmem:[#allocation25 + $0xe0] sm:$0xff]
        %v6601 = vld [vmem:[#allocation25 + $0xe8] sm:$0xff]
        %v6602 = vld [vmem:[#allocation25 + $0xf0] sm:$0xff]
        %v6603 = vld [vmem:[#allocation25 + $0xf8] sm:$0xff]
        %v6604 = vld [vmem:[#allocation25 + $0x100] sm:$0xff]
        %v6605 = vld [vmem:[#allocation25 + $0x108] sm:$0xff]
        %v6606 = vld [vmem:[#allocation25 + $0x110] sm:$0xff]
        %v6607 = vld [vmem:[#allocation25 + $0x118] sm:$0xff]
        %v6608 = vld [vmem:[#allocation25 + $0x120] sm:$0xff]
        %v6609 = vld [vmem:[#allocation25 + $0x128] sm:$0xff]
        %v6610 = vld [vmem:[#allocation25 + $0x130] sm:$0xff]
        %v6611 = vld [vmem:[#allocation25 + $0x138] sm:$0xff]
        %v6612 = vld [vmem:[#allocation25 + $0x140] sm:$0xff]
        %v6613 = vld [vmem:[#allocation25 + $0x148] sm:$0xff]
        %v6614 = vld [vmem:[#allocation25 + $0x150] sm:$0xff]
        %v6615 = vld [vmem:[#allocation25 + $0x158] sm:$0xff]
        %v6616 = vld [vmem:[#allocation25 + $0x160] sm:$0xff]
        %v6617 = vld [vmem:[#allocation25 + $0x168] sm:$0xff]
        %v6618 = vld [vmem:[#allocation25 + $0x170] sm:$0xff]
        %v6619 = vld [vmem:[#allocation25 + $0x178] sm:$0xff]
        %v6620 = vld [vmem:[#allocation25 + $0x180] sm:$0xff]
        %v6621 = vld [vmem:[#allocation25 + $0x188] sm:$0xff]
        %v6622 = vld [vmem:[#allocation25 + $0x190] sm:$0xff]
        %v6623 = vld [vmem:[#allocation25 + $0x198] sm:$0xff]
        %v6624 = vld [vmem:[#allocation25 + $0x1a0] sm:$0xff]
        %v6625 = vld [vmem:[#allocation25 + $0x1a8] sm:$0xff]
        %v6626 = vld [vmem:[#allocation25 + $0x1b0] sm:$0xff]
        %v6627 = vld [vmem:[#allocation25 + $0x1b8] sm:$0xff]
        %v6628 = vld [vmem:[#allocation25 + $0x1c0] sm:$0xff]
        %v6629 = vld [vmem:[#allocation25 + $0x1c8] sm:$0xff]
        %v6630 = vld [vmem:[#allocation25 + $0x1d0] sm:$0xff]
        %v6631 = vld [vmem:[#allocation25 + $0x1d8] sm:$0xff]
        %v6632 = vld [vmem:[#allocation25 + $0x1e0] sm:$0xff]
        %v6633 = vld [vmem:[#allocation25 + $0x1e8] sm:$0xff]
        %v6634 = vld [vmem:[#allocation25 + $0x1f0] sm:$0xff]
        %v6635 = vld [vmem:[#allocation25 + $0x1f8] sm:$0xff]
        %v6636 = vld [vmem:[#allocation25 + $0x200] sm:$0xff]
        %v6637 = vld [vmem:[#allocation25 + $0x208] sm:$0xff]
        %v6638 = vld [vmem:[#allocation25 + $0x210] sm:$0xff]
        %v6639 = vld [vmem:[#allocation25 + $0x218] sm:$0xff]
        %v6640 = vld [vmem:[#allocation25 + $0x220] sm:$0xff]
        %v6641 = vld [vmem:[#allocation25 + $0x228] sm:$0xff]
        %v6642 = vld [vmem:[#allocation25 + $0x230] sm:$0xff]
        %v6643 = vld [vmem:[#allocation25 + $0x238] sm:$0xff]
        %v6644 = vld [vmem:[#allocation25 + $0x240] sm:$0xff]
        %v6645 = vld [vmem:[#allocation25 + $0x248] sm:$0xff]
        %v6646 = vld [vmem:[#allocation25 + $0x250] sm:$0xff]
        %v6647 = vld [vmem:[#allocation25 + $0x258] sm:$0xff]
        %v6648 = vld [vmem:[#allocation25 + $0x260] sm:$0xff]
        %v6649 = vld [vmem:[#allocation25 + $0x268] sm:$0xff]
        %v6650 = vld [vmem:[#allocation25 + $0x270] sm:$0xff]
        %v6651 = vld [vmem:[#allocation25 + $0x278] sm:$0xff]
        %v6652 = vld [vmem:[#allocation25 + $0x280] sm:$0xff]
        %v6653 = vld [vmem:[#allocation25 + $0x288] sm:$0xff]
        %v6654 = vld [vmem:[#allocation25 + $0x290] sm:$0xff]
        %v6655 = vld [vmem:[#allocation25 + $0x298] sm:$0xff]
        %v6656 = vld [vmem:[#allocation25 + $0x2a0] sm:$0xff]
        %v6657 = vld [vmem:[#allocation25 + $0x2a8] sm:$0xff]
        %v6658 = vld [vmem:[#allocation25 + $0x2b0] sm:$0xff]
        %v6659 = vld [vmem:[#allocation25 + $0x2b8] sm:$0xff]
        %v6660 = vld [vmem:[#allocation25 + $0x2c0] sm:$0xff]
        %v6661 = vld [vmem:[#allocation25 + $0x2c8] sm:$0xff]
        %v6662 = vld [vmem:[#allocation25 + $0x2d0] sm:$0xff]
        %v6663 = vld [vmem:[#allocation25 + $0x2d8] sm:$0xff]
        %v6664 = vld [vmem:[#allocation25 + $0x2e0] sm:$0xff]
        %v6665 = vld [vmem:[#allocation25 + $0x2e8] sm:$0xff]
        %v6666 = vld [vmem:[#allocation25 + $0x2f0] sm:$0xff]
        %v6667 = vld [vmem:[#allocation25 + $0x2f8] sm:$0xff]
        %v6668 = vld [vmem:[#allocation25 + $0x300] sm:$0xff]
        %v6669 = vld [vmem:[#allocation25 + $0x308] sm:$0xff]
        %v6670 = vld [vmem:[#allocation25 + $0x310] sm:$0xff]
        %v6671 = vld [vmem:[#allocation25 + $0x318] sm:$0xff]
        %v6672 = vld [vmem:[#allocation25 + $0x320] sm:$0xff]
        %v6673 = vld [vmem:[#allocation25 + $0x328] sm:$0xff]
        %v6674 = vld [vmem:[#allocation25 + $0x330] sm:$0xff]
        %v6675 = vld [vmem:[#allocation25 + $0x338] sm:$0xff]
        %v6676 = vld [vmem:[#allocation25 + $0x340] sm:$0xff]
        %v6677 = vld [vmem:[#allocation25 + $0x348] sm:$0xff]
        %v6678 = vld [vmem:[#allocation25 + $0x350] sm:$0xff]
        %v6679 = vld [vmem:[#allocation25 + $0x358] sm:$0xff]
        %v6680 = vld [vmem:[#allocation25 + $0x360] sm:$0xff]
        %v6681 = vld [vmem:[#allocation25 + $0x368] sm:$0xff]
        %v6682 = vld [vmem:[#allocation25 + $0x370] sm:$0xff]
        %v6683 = vld [vmem:[#allocation25 + $0x378] sm:$0xff]
        %6684 = vmatprep.subr.mxu0 %v6573
        %6685 = vmatpush1.msra.mxu0 %v6572
        %6686 = vmatprep.subr.mxu0 %v6575
        %6687 = vmatpush1.msra.mxu0 %v6574
        %6688 = vmatprep.subr.mxu0 %v6577
        %6689 = vmatpush1.msra.mxu0 %v6576
        %6690 = vmatprep.subr.mxu0 %v6579
        %6691 = vmatpush1.msra.mxu0 %v6578
        %6692 = vmatprep.subr.mxu0 %v6581
        %6693 = vmatpush1.msra.mxu0 %v6580
        %6694 = vmatprep.subr.mxu0 %v6583
        %6695 = vmatpush1.msra.mxu0 %v6582
        %6696 = vmatprep.subr.mxu0 %v6585
        %6697 = vmatpush1.msra.mxu0 %v6584
        %6698 = vmatprep.subr.mxu0 %v6587
        %6699 = vmatpush1.msra.mxu0 %v6586
        %6700 = vmatprep.subr.mxu0 %v6589
        %6701 = vmatpush1.msra.mxu0 %v6588
        %6702 = vmatprep.subr.mxu0 %v6591
        %6703 = vmatpush1.msra.mxu0 %v6590
        %6704 = vmatprep.subr.mxu0 %v6593
        %6705 = vmatpush1.msra.mxu0 %v6592
        %6706 = vmatprep.subr.mxu0 %v6595
        %6707 = vmatpush1.msra.mxu0 %v6594
        %6708 = vmatprep.subr.mxu0 %v6597
        %6709 = vmatpush1.msra.mxu0 %v6596
        %6710 = vmatprep.subr.mxu0 %v6599
        %6711 = vmatpush1.msra.mxu0 %v6598
        %6712 = vmatprep.subr.mxu0 %v6601
        %6713 = vmatpush1.msra.mxu0 %v6600
        %6714 = vmatprep.subr.mxu0 %v6603
        %6715 = vmatpush1.msra.mxu0 %v6602
        %6716 = vmatprep.subr.mxu0 %v6605
        %6717 = vmatpush1.msra.mxu0 %v6604
        %6718 = vmatprep.subr.mxu0 %v6607
        %6719 = vmatpush1.msra.mxu0 %v6606
        %6720 = vmatprep.subr.mxu0 %v6609
        %6721 = vmatpush1.msra.mxu0 %v6608
        %6722 = vmatprep.subr.mxu0 %v6611
        %6723 = vmatpush1.msra.mxu0 %v6610
        %6724 = vmatprep.subr.mxu0 %v6613
        %6725 = vmatpush1.msra.mxu0 %v6612
        %6726 = vmatprep.subr.mxu0 %v6615
        %6727 = vmatpush1.msra.mxu0 %v6614
        %6728 = vmatprep.subr.mxu0 %v6617
        %6729 = vmatpush1.msra.mxu0 %v6616
        %6730 = vmatprep.subr.mxu0 %v6619
        %6731 = vmatpush1.msra.mxu0 %v6618
        %6732 = vmatprep.subr.mxu0 %v6621
        %6733 = vmatpush1.msra.mxu0 %v6620
        %6734 = vmatprep.subr.mxu0 %v6623
        %6735 = vmatpush1.msra.mxu0 %v6622
        %6736 = vmatprep.subr.mxu0 %v6625
        %6737 = vmatpush1.msra.mxu0 %v6624
        %6738 = vmatprep.subr.mxu0 %v6627
        %6739 = vmatpush1.msra.mxu0 %v6626
        %6740 = vmatprep.subr.mxu0 %v6629
        %6741 = vmatpush1.msra.mxu0 %v6628
        %6742 = vmatprep.subr.mxu0 %v6631
        %6743 = vmatpush1.msra.mxu0 %v6630
        %6744 = vmatprep.subr.mxu0 %v6633
        %6745 = vmatpush1.msra.mxu0 %v6632
        %6746 = vmatprep.subr.mxu0 %v6635
        %6747 = vmatpush1.msra.mxu0 %v6634
        %6748 = vmatprep.mubr.f32.mxu0 %v6312
        %6749 = vmatmul.mubr.f32.gmra.mrb[0].mxu0 %v6311
        %v6750 = vpop.f32.mrb[0].mxu0
        %v6751 = vadd.f32 0.0, %v6750
        %v6752 = vpop.f32.mrb[0].mxu0
        %v6753 = vadd.f32 0.0, %v6752
        %6754 = vdwg.mxu0
        %6755 = vmatprep.subr.mxu0 %v6637
        %6756 = vmatpush1.msra.mxu0 %v6636
        %6757 = vmatprep.subr.mxu0 %v6639
        %6758 = vmatpush1.msra.mxu0 %v6638
        %6759 = vmatprep.subr.mxu0 %v6641
        %6760 = vmatpush1.msra.mxu0 %v6640
        %6761 = vmatprep.subr.mxu0 %v6643
        %6762 = vmatpush1.msra.mxu0 %v6642
        %6763 = vmatprep.subr.mxu0 %v6645
        %6764 = vmatpush1.msra.mxu0 %v6644
        %6765 = vmatprep.subr.mxu0 %v6647
        %6766 = vmatpush1.msra.mxu0 %v6646
        %6767 = vmatprep.subr.mxu0 %v6649
        %6768 = vmatpush1.msra.mxu0 %v6648
        %6769 = vmatprep.subr.mxu0 %v6651
        %6770 = vmatpush1.msra.mxu0 %v6650
        %6771 = vmatprep.subr.mxu0 %v6653
        %6772 = vmatpush1.msra.mxu0 %v6652
        %6773 = vmatprep.subr.mxu0 %v6655
        %6774 = vmatpush1.msra.mxu0 %v6654
        %6775 = vmatprep.subr.mxu0 %v6657
        %6776 = vmatpush1.msra.mxu0 %v6656
        %6777 = vmatprep.subr.mxu0 %v6659
        %6778 = vmatpush1.msra.mxu0 %v6658
        %6779 = vmatprep.subr.mxu0 %v6661
        %6780 = vmatpush1.msra.mxu0 %v6660
        %6781 = vmatprep.subr.mxu0 %v6663
        %6782 = vmatpush1.msra.mxu0 %v6662
        %6783 = vmatprep.subr.mxu0 %v6665
        %6784 = vmatpush1.msra.mxu0 %v6664
        %6785 = vmatprep.subr.mxu0 %v6667
        %6786 = vmatpush1.msra.mxu0 %v6666
        %6787 = vmatprep.subr.mxu0 %v6669
        %6788 = vmatpush1.msra.mxu0 %v6668
        %6789 = vmatprep.subr.mxu0 %v6671
        %6790 = vmatpush1.msra.mxu0 %v6670
        %6791 = vmatprep.subr.mxu0 %v6673
        %6792 = vmatpush1.msra.mxu0 %v6672
        %6793 = vmatprep.subr.mxu0 %v6675
        %6794 = vmatpush1.msra.mxu0 %v6674
        %6795 = vmatprep.subr.mxu0 %v6677
        %6796 = vmatpush1.msra.mxu0 %v6676
        %6797 = vmatprep.subr.mxu0 %v6679
        %6798 = vmatpush1.msra.mxu0 %v6678
        %6799 = vmatprep.subr.mxu0 %v6681
        %6800 = vmatpush1.msra.mxu0 %v6680
        %6801 = vmatprep.subr.mxu0 %v6683
        %6802 = vmatpush1.msra.mxu0 %v6682
        %6803 = vmatprep.subr.mxu0 0.0
        %6804 = vmatpush1.msra.mxu0 0.0
        %6805 = vmatprep.subr.mxu0 0.0
        %6806 = vmatpush1.msra.mxu0 0.0
        %6807 = vmatprep.subr.mxu0 0.0
        %6808 = vmatpush1.msra.mxu0 0.0
        %6809 = vmatprep.subr.mxu0 0.0
        %6810 = vmatpush1.msra.mxu0 0.0
        %6811 = vmatprep.subr.mxu0 0.0
        %6812 = vmatpush1.msra.mxu0 0.0
        %6813 = vmatprep.subr.mxu0 0.0
        %6814 = vmatpush1.msra.mxu0 0.0
        %6815 = vmatprep.subr.mxu0 0.0
        %6816 = vmatpush1.msra.mxu0 0.0
        %6817 = vmatprep.subr.mxu0 0.0
        %6818 = vmatpush1.msra.mxu0 0.0
        %6819 = vmatprep.mubr.f32.mxu0 %v6428
        %6820 = vmatmul.mubr.f32.gmra.mrb[0].mxu0 %v6313
        %v6821 = vpop.f32.mrb[0].mxu0
        %v6822 = vadd.f32 %v6751, %v6821
        %v6823 = vpop.f32.mrb[0].mxu0
        %v6824 = vadd.f32 %v6753, %v6823
        %6825 = vdwg.mxu0
        %v6826 = vmax.f32 %v6568, %v6822
        %v6827 = vmax.f32 %v6570, %v6824
        %v6828 = vpack.c.bf16 %v6826, %v6826
        %v6829 = vpack.c.bf16 %v6827, %v6827
        %v6830 = vld [vmem:[#allocation27] sm:$0xff]
        %v6831 = vld [vmem:[#allocation27 + $0x8] sm:$0xff]
        %v6832 = vld [vmem:[#allocation27 + $0x10] sm:$0xff]
        %v6833 = vld [vmem:[#allocation27 + $0x18] sm:$0xf]
        %v6834 = vld [vmem:[#allocation27 + $0x1c] sm:$0xff]
        %v6835 = vld [vmem:[#allocation27 + $0x24] sm:$0xff]
        %v6836 = vld [vmem:[#allocation27 + $0x2c] sm:$0xff]
        %v6837 = vld [vmem:[#allocation27 + $0x34] sm:$0xf]
        %v6838 = vld [vmem:[#allocation27 + $0x38] sm:$0xff]
        %v6839 = vld [vmem:[#allocation27 + $0x40] sm:$0xff]
        %v6840 = vld [vmem:[#allocation27 + $0x48] sm:$0xff]
        %v6841 = vld [vmem:[#allocation27 + $0x50] sm:$0xf]
        %v6842 = vld [vmem:[#allocation27 + $0x54] sm:$0xff]
        %v6843 = vld [vmem:[#allocation27 + $0x5c] sm:$0xff]
        %v6844 = vld [vmem:[#allocation27 + $0x64] sm:$0xff]
        %v6845 = vld [vmem:[#allocation27 + $0x6c] sm:$0xf]
        %v6846 = vld [vmem:[#allocation27 + $0x70] sm:$0xff]
        %v6847 = vld [vmem:[#allocation27 + $0x78] sm:$0xff]
        %v6848 = vld [vmem:[#allocation27 + $0x80] sm:$0xff]
        %v6849 = vld [vmem:[#allocation27 + $0x88] sm:$0xf]
        %v6850 = vld [vmem:[#allocation27 + $0x8c] sm:$0xff]
        %v6851 = vld [vmem:[#allocation27 + $0x94] sm:$0xff]
        %v6852 = vld [vmem:[#allocation27 + $0x9c] sm:$0xff]
        %v6853 = vld [vmem:[#allocation27 + $0xa4] sm:$0xf]
        %v6854 = vld [vmem:[#allocation27 + $0xa8] sm:$0xff]
        %v6855 = vld [vmem:[#allocation27 + $0xb0] sm:$0xff]
        %v6856 = vld [vmem:[#allocation27 + $0xb8] sm:$0xff]
        %v6857 = vld [vmem:[#allocation27 + $0xc0] sm:$0xf]
        %v6858 = vld [vmem:[#allocation27 + $0xc4] sm:$0xff]
        %v6859 = vld [vmem:[#allocation27 + $0xcc] sm:$0xff]
        %v6860 = vld [vmem:[#allocation27 + $0xd4] sm:$0xff]
        %v6861 = vld [vmem:[#allocation27 + $0xdc] sm:$0xf]
        %v6862 = vld [vmem:[#allocation27 + $0xe0] sm:$0xff]
        %v6863 = vld [vmem:[#allocation27 + $0xe8] sm:$0xff]
        %v6864 = vld [vmem:[#allocation27 + $0xf0] sm:$0xff]
        %v6865 = vld [vmem:[#allocation27 + $0xf8] sm:$0xf]
        %v6866 = vld [vmem:[#allocation27 + $0xfc] sm:$0xff]
        %v6867 = vld [vmem:[#allocation27 + $0x104] sm:$0xff]
        %v6868 = vld [vmem:[#allocation27 + $0x10c] sm:$0xff]
        %v6869 = vld [vmem:[#allocation27 + $0x114] sm:$0xf]
        %v6870 = vld [vmem:[#allocation27 + $0x118] sm:$0xff]
        %v6871 = vld [vmem:[#allocation27 + $0x120] sm:$0xff]
        %v6872 = vld [vmem:[#allocation27 + $0x128] sm:$0xff]
        %v6873 = vld [vmem:[#allocation27 + $0x130] sm:$0xf]
        %v6874 = vld [vmem:[#allocation27 + $0x134] sm:$0xff]
        %v6875 = vld [vmem:[#allocation27 + $0x13c] sm:$0xff]
        %v6876 = vld [vmem:[#allocation27 + $0x144] sm:$0xff]
        %v6877 = vld [vmem:[#allocation27 + $0x14c] sm:$0xf]
        %v6878 = vld [vmem:[#allocation27 + $0x150] sm:$0xff]
        %v6879 = vld [vmem:[#allocation27 + $0x158] sm:$0xff]
        %v6880 = vld [vmem:[#allocation27 + $0x160] sm:$0xff]
        %v6881 = vld [vmem:[#allocation27 + $0x168] sm:$0xf]
        %v6882 = vld [vmem:[#allocation27 + $0x16c] sm:$0xff]
        %v6883 = vld [vmem:[#allocation27 + $0x174] sm:$0xff]
        %v6884 = vld [vmem:[#allocation27 + $0x17c] sm:$0xff]
        %v6885 = vld [vmem:[#allocation27 + $0x184] sm:$0xf]
        %v6886 = vld [vmem:[#allocation27 + $0x188] sm:$0xff]
        %v6887 = vld [vmem:[#allocation27 + $0x190] sm:$0xff]
        %v6888 = vld [vmem:[#allocation27 + $0x198] sm:$0xff]
        %v6889 = vld [vmem:[#allocation27 + $0x1a0] sm:$0xf]
        %v6890 = vld [vmem:[#allocation27 + $0x1a4] sm:$0xff]
        %v6891 = vld [vmem:[#allocation27 + $0x1ac] sm:$0xff]
        %v6892 = vld [vmem:[#allocation27 + $0x1b4] sm:$0xff]
        %v6893 = vld [vmem:[#allocation27 + $0x1bc] sm:$0xf]
        %v6894 = vld [vmem:[#allocation27 + $0x1c0] sm:$0xff]
        %v6895 = vld [vmem:[#allocation27 + $0x1c8] sm:$0xff]
        %v6896 = vld [vmem:[#allocation27 + $0x1d0] sm:$0xff]
        %v6897 = vld [vmem:[#allocation27 + $0x1d8] sm:$0xf]
        %v6898 = vld [vmem:[#allocation27 + $0x1dc] sm:$0xff]
        %v6899 = vld [vmem:[#allocation27 + $0x1e4] sm:$0xff]
        %v6900 = vld [vmem:[#allocation27 + $0x1ec] sm:$0xff]
        %v6901 = vld [vmem:[#allocation27 + $0x1f4] sm:$0xf]
        %v6902 = vld [vmem:[#allocation27 + $0x1f8] sm:$0xff]
        %v6903 = vld [vmem:[#allocation27 + $0x200] sm:$0xff]
        %v6904 = vld [vmem:[#allocation27 + $0x208] sm:$0xff]
        %v6905 = vld [vmem:[#allocation27 + $0x210] sm:$0xf]
        %v6906 = vld [vmem:[#allocation27 + $0x214] sm:$0xff]
        %v6907 = vld [vmem:[#allocation27 + $0x21c] sm:$0xff]
        %v6908 = vld [vmem:[#allocation27 + $0x224] sm:$0xff]
        %v6909 = vld [vmem:[#allocation27 + $0x22c] sm:$0xf]
        %v6910 = vld [vmem:[#allocation27 + $0x230] sm:$0xff]
        %v6911 = vld [vmem:[#allocation27 + $0x238] sm:$0xff]
        %v6912 = vld [vmem:[#allocation27 + $0x240] sm:$0xff]
        %v6913 = vld [vmem:[#allocation27 + $0x248] sm:$0xf]
        %v6914 = vld [vmem:[#allocation27 + $0x24c] sm:$0xff]
        %v6915 = vld [vmem:[#allocation27 + $0x254] sm:$0xff]
        %v6916 = vld [vmem:[#allocation27 + $0x25c] sm:$0xff]
        %v6917 = vld [vmem:[#allocation27 + $0x264] sm:$0xf]
        %v6918 = vld [vmem:[#allocation27 + $0x268] sm:$0xff]
        %v6919 = vld [vmem:[#allocation27 + $0x270] sm:$0xff]
        %v6920 = vld [vmem:[#allocation27 + $0x278] sm:$0xff]
        %v6921 = vld [vmem:[#allocation27 + $0x280] sm:$0xf]
        %v6922 = vld [vmem:[#allocation27 + $0x284] sm:$0xff]
        %v6923 = vld [vmem:[#allocation27 + $0x28c] sm:$0xff]
        %v6924 = vld [vmem:[#allocation27 + $0x294] sm:$0xff]
        %v6925 = vld [vmem:[#allocation27 + $0x29c] sm:$0xf]
        %v6926 = vld [vmem:[#allocation27 + $0x2a0] sm:$0xff]
        %v6927 = vld [vmem:[#allocation27 + $0x2a8] sm:$0xff]
        %v6928 = vld [vmem:[#allocation27 + $0x2b0] sm:$0xff]
        %v6929 = vld [vmem:[#allocation27 + $0x2b8] sm:$0xf]
        %v6930 = vld [vmem:[#allocation27 + $0x2bc] sm:$0xff]
        %v6931 = vld [vmem:[#allocation27 + $0x2c4] sm:$0xff]
        %v6932 = vld [vmem:[#allocation27 + $0x2cc] sm:$0xff]
        %v6933 = vld [vmem:[#allocation27 + $0x2d4] sm:$0xf]
        %v6934 = vld [vmem:[#allocation27 + $0x2d8] sm:$0xff]
        %v6935 = vld [vmem:[#allocation27 + $0x2e0] sm:$0xff]
        %v6936 = vld [vmem:[#allocation27 + $0x2e8] sm:$0xff]
        %v6937 = vld [vmem:[#allocation27 + $0x2f0] sm:$0xf]
        %v6938 = vld [vmem:[#allocation27 + $0x2f4] sm:$0xff]
        %v6939 = vld [vmem:[#allocation27 + $0x2fc] sm:$0xff]
        %v6940 = vld [vmem:[#allocation27 + $0x304] sm:$0xff]
        %v6941 = vld [vmem:[#allocation27 + $0x30c] sm:$0xf]
        %v7054 = vunpack.c.l.b16 %v6830
        %v7055 = vunpack.c.h.b16 %v6830
        %v7056 = vunpack.c.l.b16 %v6831
        %v7057 = vunpack.c.h.b16 %v6831
        %v7058 = vunpack.c.l.b16 %v6832
        %v7059 = vunpack.c.h.b16 %v6832
        %v7060 = vunpack.c.l.b16 %v6833
        %v7061 = vunpack.c.l.b16 %v6834
        %v7062 = vunpack.c.h.b16 %v6834
        %v7063 = vunpack.c.l.b16 %v6835
        %v7064 = vunpack.c.h.b16 %v6835
        %v7065 = vunpack.c.l.b16 %v6836
        %v7066 = vunpack.c.h.b16 %v6836
        %v7067 = vunpack.c.l.b16 %v6837
        %v7068 = vunpack.c.l.b16 %v6838
        %v7069 = vunpack.c.h.b16 %v6838
        %v7070 = vunpack.c.l.b16 %v6839
        %v7071 = vunpack.c.h.b16 %v6839
        %v7072 = vunpack.c.l.b16 %v6840
        %v7073 = vunpack.c.h.b16 %v6840
        %v7074 = vunpack.c.l.b16 %v6841
        %v7075 = vunpack.c.l.b16 %v6842
        %v7076 = vunpack.c.h.b16 %v6842
        %v7077 = vunpack.c.l.b16 %v6843
        %v7078 = vunpack.c.h.b16 %v6843
        %v7079 = vunpack.c.l.b16 %v6844
        %v7080 = vunpack.c.h.b16 %v6844
        %v7081 = vunpack.c.l.b16 %v6845
        %v7082 = vunpack.c.l.b16 %v6846
        %v7083 = vunpack.c.h.b16 %v6846
        %v7084 = vunpack.c.l.b16 %v6847
        %v7085 = vunpack.c.h.b16 %v6847
        %v7086 = vunpack.c.l.b16 %v6848
        %v7087 = vunpack.c.h.b16 %v6848
        %v7088 = vunpack.c.l.b16 %v6849
        %v7089 = vunpack.c.l.b16 %v6850
        %v7090 = vunpack.c.h.b16 %v6850
        %v7091 = vunpack.c.l.b16 %v6851
        %v7092 = vunpack.c.h.b16 %v6851
        %v7093 = vunpack.c.l.b16 %v6852
        %v7094 = vunpack.c.h.b16 %v6852
        %v7095 = vunpack.c.l.b16 %v6853
        %v7096 = vunpack.c.l.b16 %v6854
        %v7097 = vunpack.c.h.b16 %v6854
        %v7098 = vunpack.c.l.b16 %v6855
        %v7099 = vunpack.c.h.b16 %v6855
        %v7100 = vunpack.c.l.b16 %v6856
        %v7101 = vunpack.c.h.b16 %v6856
        %v7102 = vunpack.c.l.b16 %v6857
        %v7103 = vunpack.c.l.b16 %v6858
        %v7104 = vunpack.c.h.b16 %v6858
        %v7105 = vunpack.c.l.b16 %v6859
        %v7106 = vunpack.c.h.b16 %v6859
        %v7107 = vunpack.c.l.b16 %v6860
        %v7108 = vunpack.c.h.b16 %v6860
        %v7109 = vunpack.c.l.b16 %v6861
        %v7110 = vunpack.c.l.b16 %v6862
        %v7111 = vunpack.c.h.b16 %v6862
        %v7112 = vunpack.c.l.b16 %v6863
        %v7113 = vunpack.c.h.b16 %v6863
        %v7114 = vunpack.c.l.b16 %v6864
        %v7115 = vunpack.c.h.b16 %v6864
        %v7116 = vunpack.c.l.b16 %v6865
        %v7117 = vunpack.c.l.b16 %v6866
        %v7118 = vunpack.c.h.b16 %v6866
        %v7119 = vunpack.c.l.b16 %v6867
        %v7120 = vunpack.c.h.b16 %v6867
        %v7121 = vunpack.c.l.b16 %v6868
        %v7122 = vunpack.c.h.b16 %v6868
        %v7123 = vunpack.c.l.b16 %v6869
        %v7124 = vunpack.c.l.b16 %v6870
        %v7125 = vunpack.c.h.b16 %v6870
        %v7126 = vunpack.c.l.b16 %v6871
        %v7127 = vunpack.c.h.b16 %v6871
        %v7128 = vunpack.c.l.b16 %v6872
        %v7129 = vunpack.c.h.b16 %v6872
        %v7130 = vunpack.c.l.b16 %v6873
        %v7131 = vunpack.c.l.b16 %v6874
        %v7132 = vunpack.c.h.b16 %v6874
        %v7133 = vunpack.c.l.b16 %v6875
        %v7134 = vunpack.c.h.b16 %v6875
        %v7135 = vunpack.c.l.b16 %v6876
        %v7136 = vunpack.c.h.b16 %v6876
        %v7137 = vunpack.c.l.b16 %v6877
        %v7138 = vunpack.c.l.b16 %v6878
        %v7139 = vunpack.c.h.b16 %v6878
        %v7140 = vunpack.c.l.b16 %v6879
        %v7141 = vunpack.c.h.b16 %v6879
        %v7142 = vunpack.c.l.b16 %v6880
        %v7143 = vunpack.c.h.b16 %v6880
        %v7144 = vunpack.c.l.b16 %v6881
        %v7145 = vunpack.c.l.b16 %v6882
        %v7146 = vunpack.c.h.b16 %v6882
        %v7147 = vunpack.c.l.b16 %v6883
        %v7148 = vunpack.c.h.b16 %v6883
        %v7149 = vunpack.c.l.b16 %v6884
        %v7150 = vunpack.c.h.b16 %v6884
        %v7151 = vunpack.c.l.b16 %v6885
        %v7152 = vunpack.c.l.b16 %v6886
        %v7153 = vunpack.c.h.b16 %v6886
        %v7154 = vunpack.c.l.b16 %v6887
        %v7155 = vunpack.c.h.b16 %v6887
        %v7156 = vunpack.c.l.b16 %v6888
        %v7157 = vunpack.c.h.b16 %v6888
        %v7158 = vunpack.c.l.b16 %v6889
        %v7159 = vunpack.c.l.b16 %v6890
        %v7160 = vunpack.c.h.b16 %v6890
        %v7161 = vunpack.c.l.b16 %v6891
        %v7162 = vunpack.c.h.b16 %v6891
        %v7163 = vunpack.c.l.b16 %v6892
        %v7164 = vunpack.c.h.b16 %v6892
        %v7165 = vunpack.c.l.b16 %v6893
        %v7166 = vunpack.c.l.b16 %v6894
        %v7167 = vunpack.c.h.b16 %v6894
        %v7168 = vunpack.c.l.b16 %v6895
        %v7169 = vunpack.c.h.b16 %v6895
        %v7170 = vunpack.c.l.b16 %v6896
        %v7171 = vunpack.c.h.b16 %v6896
        %v7172 = vunpack.c.l.b16 %v6897
        %v7173 = vunpack.c.l.b16 %v6898
        %v7174 = vunpack.c.h.b16 %v6898
        %v7175 = vunpack.c.l.b16 %v6899
        %v7176 = vunpack.c.h.b16 %v6899
        %v7177 = vunpack.c.l.b16 %v6900
        %v7178 = vunpack.c.h.b16 %v6900
        %v7179 = vunpack.c.l.b16 %v6901
        %v7180 = vunpack.c.l.b16 %v6902
        %v7181 = vunpack.c.h.b16 %v6902
        %v7182 = vunpack.c.l.b16 %v6903
        %v7183 = vunpack.c.h.b16 %v6903
        %v7184 = vunpack.c.l.b16 %v6904
        %v7185 = vunpack.c.h.b16 %v6904
        %v7186 = vunpack.c.l.b16 %v6905
        %v7187 = vunpack.c.l.b16 %v6906
        %v7188 = vunpack.c.h.b16 %v6906
        %v7189 = vunpack.c.l.b16 %v6907
        %v7190 = vunpack.c.h.b16 %v6907
        %v7191 = vunpack.c.l.b16 %v6908
        %v7192 = vunpack.c.h.b16 %v6908
        %v7193 = vunpack.c.l.b16 %v6909
        %v7194 = vunpack.c.l.b16 %v6910
        %v7195 = vunpack.c.h.b16 %v6910
        %v7196 = vunpack.c.l.b16 %v6911
        %v7197 = vunpack.c.h.b16 %v6911
        %v7198 = vunpack.c.l.b16 %v6912
        %v7199 = vunpack.c.h.b16 %v6912
        %v7200 = vunpack.c.l.b16 %v6913
        %v7201 = vunpack.c.l.b16 %v6914
        %v7202 = vunpack.c.h.b16 %v6914
        %v7203 = vunpack.c.l.b16 %v6915
        %v7204 = vunpack.c.h.b16 %v6915
        %v7205 = vunpack.c.l.b16 %v6916
        %v7206 = vunpack.c.h.b16 %v6916
        %v7207 = vunpack.c.l.b16 %v6917
        %v7208 = vunpack.c.l.b16 %v6918
        %v7209 = vunpack.c.h.b16 %v6918
        %v7210 = vunpack.c.l.b16 %v6919
        %v7211 = vunpack.c.h.b16 %v6919
        %v7212 = vunpack.c.l.b16 %v6920
        %v7213 = vunpack.c.h.b16 %v6920
        %v7214 = vunpack.c.l.b16 %v6921
        %v7215 = vunpack.c.l.b16 %v6922
        %v7216 = vunpack.c.h.b16 %v6922
        %v7217 = vunpack.c.l.b16 %v6923
        %v7218 = vunpack.c.h.b16 %v6923
        %v7219 = vunpack.c.l.b16 %v6924
        %v7220 = vunpack.c.h.b16 %v6924
        %v7221 = vunpack.c.l.b16 %v6925
        %v7222 = vunpack.c.l.b16 %v6926
        %v7223 = vunpack.c.h.b16 %v6926
        %v7224 = vunpack.c.l.b16 %v6927
        %v7225 = vunpack.c.h.b16 %v6927
        %v7226 = vunpack.c.l.b16 %v6928
        %v7227 = vunpack.c.h.b16 %v6928
        %v7228 = vunpack.c.l.b16 %v6929
        %v7229 = vunpack.c.l.b16 %v6930
        %v7230 = vunpack.c.h.b16 %v6930
        %v7231 = vunpack.c.l.b16 %v6931
        %v7232 = vunpack.c.h.b16 %v6931
        %v7233 = vunpack.c.l.b16 %v6932
        %v7234 = vunpack.c.h.b16 %v6932
        %v7235 = vunpack.c.l.b16 %v6933
        %v7236 = vunpack.c.l.b16 %v6934
        %v7237 = vunpack.c.h.b16 %v6934
        %v7238 = vunpack.c.l.b16 %v6935
        %v7239 = vunpack.c.h.b16 %v6935
        %v7240 = vunpack.c.l.b16 %v6936
        %v7241 = vunpack.c.h.b16 %v6936
        %v7242 = vunpack.c.l.b16 %v6937
        %v7243 = vunpack.c.l.b16 %v6938
        %v7244 = vunpack.c.h.b16 %v6938
        %v7245 = vunpack.c.l.b16 %v6939
        %v7246 = vunpack.c.h.b16 %v6939
        %v7247 = vunpack.c.l.b16 %v6940
        %v7248 = vunpack.c.h.b16 %v6940
        %v7249 = vunpack.c.l.b16 %v6941
        %v7250 = vpack.c.b16 %v7061, %v7054
        %v7251 = vpack.c.b16 %v7062, %v7055
        %v7252 = vpack.c.b16 %v7063, %v7056
        %v7253 = vpack.c.b16 %v7064, %v7057
        %v7254 = vpack.c.b16 %v7065, %v7058
        %v7255 = vpack.c.b16 %v7066, %v7059
        %v7256 = vpack.c.b16 %v7067, %v7060
        %v7257 = vpack.c.b16 %v7075, %v7068
        %v7258 = vpack.c.b16 %v7076, %v7069
        %v7259 = vpack.c.b16 %v7077, %v7070
        %v7260 = vpack.c.b16 %v7078, %v7071
        %v7261 = vpack.c.b16 %v7079, %v7072
        %v7262 = vpack.c.b16 %v7080, %v7073
        %v7263 = vpack.c.b16 %v7081, %v7074
        %v7264 = vpack.c.b16 %v7089, %v7082
        %v7265 = vpack.c.b16 %v7090, %v7083
        %v7266 = vpack.c.b16 %v7091, %v7084
        %v7267 = vpack.c.b16 %v7092, %v7085
        %v7268 = vpack.c.b16 %v7093, %v7086
        %v7269 = vpack.c.b16 %v7094, %v7087
        %v7270 = vpack.c.b16 %v7095, %v7088
        %v7271 = vpack.c.b16 %v7103, %v7096
        %v7272 = vpack.c.b16 %v7104, %v7097
        %v7273 = vpack.c.b16 %v7105, %v7098
        %v7274 = vpack.c.b16 %v7106, %v7099
        %v7275 = vpack.c.b16 %v7107, %v7100
        %v7276 = vpack.c.b16 %v7108, %v7101
        %v7277 = vpack.c.b16 %v7109, %v7102
        %v7278 = vpack.c.b16 %v7117, %v7110
        %v7279 = vpack.c.b16 %v7118, %v7111
        %v7280 = vpack.c.b16 %v7119, %v7112
        %v7281 = vpack.c.b16 %v7120, %v7113
        %v7282 = vpack.c.b16 %v7121, %v7114
        %v7283 = vpack.c.b16 %v7122, %v7115
        %v7284 = vpack.c.b16 %v7123, %v7116
        %v7285 = vpack.c.b16 %v7131, %v7124
        %v7286 = vpack.c.b16 %v7132, %v7125
        %v7287 = vpack.c.b16 %v7133, %v7126
        %v7288 = vpack.c.b16 %v7134, %v7127
        %v7289 = vpack.c.b16 %v7135, %v7128
        %v7290 = vpack.c.b16 %v7136, %v7129
        %v7291 = vpack.c.b16 %v7137, %v7130
        %v7292 = vpack.c.b16 %v7145, %v7138
        %v7293 = vpack.c.b16 %v7146, %v7139
        %v7294 = vpack.c.b16 %v7147, %v7140
        %v7295 = vpack.c.b16 %v7148, %v7141
        %v7296 = vpack.c.b16 %v7149, %v7142
        %v7297 = vpack.c.b16 %v7150, %v7143
        %v7298 = vpack.c.b16 %v7151, %v7144
        %v7299 = vpack.c.b16 %v7159, %v7152
        %v7300 = vpack.c.b16 %v7160, %v7153
        %v7301 = vpack.c.b16 %v7161, %v7154
        %v7302 = vpack.c.b16 %v7162, %v7155
        %v7303 = vpack.c.b16 %v7163, %v7156
        %v7304 = vpack.c.b16 %v7164, %v7157
        %v7305 = vpack.c.b16 %v7165, %v7158
        %v7306 = vpack.c.b16 %v7173, %v7166
        %v7307 = vpack.c.b16 %v7174, %v7167
        %v7308 = vpack.c.b16 %v7175, %v7168
        %v7309 = vpack.c.b16 %v7176, %v7169
        %v7310 = vpack.c.b16 %v7177, %v7170
        %v7311 = vpack.c.b16 %v7178, %v7171
        %v7312 = vpack.c.b16 %v7179, %v7172
        %v7313 = vpack.c.b16 %v7187, %v7180
        %v7314 = vpack.c.b16 %v7188, %v7181
        %v7315 = vpack.c.b16 %v7189, %v7182
        %v7316 = vpack.c.b16 %v7190, %v7183
        %v7317 = vpack.c.b16 %v7191, %v7184
        %v7318 = vpack.c.b16 %v7192, %v7185
        %v7319 = vpack.c.b16 %v7193, %v7186
        %v7320 = vpack.c.b16 %v7201, %v7194
        %v7321 = vpack.c.b16 %v7202, %v7195
        %v7322 = vpack.c.b16 %v7203, %v7196
        %v7323 = vpack.c.b16 %v7204, %v7197
        %v7324 = vpack.c.b16 %v7205, %v7198
        %v7325 = vpack.c.b16 %v7206, %v7199
        %v7326 = vpack.c.b16 %v7207, %v7200
        %v7327 = vpack.c.b16 %v7215, %v7208
        %v7328 = vpack.c.b16 %v7216, %v7209
        %v7329 = vpack.c.b16 %v7217, %v7210
        %v7330 = vpack.c.b16 %v7218, %v7211
        %v7331 = vpack.c.b16 %v7219, %v7212
        %v7332 = vpack.c.b16 %v7220, %v7213
        %v7333 = vpack.c.b16 %v7221, %v7214
        %v7334 = vpack.c.b16 %v7229, %v7222
        %v7335 = vpack.c.b16 %v7230, %v7223
        %v7336 = vpack.c.b16 %v7231, %v7224
        %v7337 = vpack.c.b16 %v7232, %v7225
        %v7338 = vpack.c.b16 %v7233, %v7226
        %v7339 = vpack.c.b16 %v7234, %v7227
        %v7340 = vpack.c.b16 %v7235, %v7228
        %v7341 = vpack.c.b16 %v7243, %v7236
        %v7342 = vpack.c.b16 %v7244, %v7237
        %v7343 = vpack.c.b16 %v7245, %v7238
        %v7344 = vpack.c.b16 %v7246, %v7239
        %v7345 = vpack.c.b16 %v7247, %v7240
        %v7346 = vpack.c.b16 %v7248, %v7241
        %v7347 = vpack.c.b16 %v7249, %v7242
        %vm7446 = vcmask 785408
        %v7448 = vsel %vm7446, %v6829, 0
        %7450 = vmatprep.subr.bf16.mxu0 %v7251
        %7451 = vmatpush1.bf16.msra.mxu0 %v7250
        %7452 = vmatprep.subr.bf16.mxu0 %v7258
        %7453 = vmatpush1.bf16.msra.mxu0 %v7257
        %7454 = vmatprep.subr.bf16.mxu0 %v7265
        %7455 = vmatpush1.bf16.msra.mxu0 %v7264
        %7456 = vmatprep.subr.bf16.mxu0 %v7272
        %7457 = vmatpush1.bf16.msra.mxu0 %v7271
        %7458 = vmatprep.subr.bf16.mxu0 %v7279
        %7459 = vmatpush1.bf16.msra.mxu0 %v7278
        %7460 = vmatprep.subr.bf16.mxu0 %v7286
        %7461 = vmatpush1.bf16.msra.mxu0 %v7285
        %7462 = vmatprep.subr.bf16.mxu0 %v7293
        %7463 = vmatpush1.bf16.msra.mxu0 %v7292
        %7464 = vmatprep.subr.bf16.mxu0 %v7300
        %7465 = vmatpush1.bf16.msra.mxu0 %v7299
        %7466 = vmatprep.subr.bf16.mxu0 %v7307
        %7467 = vmatpush1.bf16.msra.mxu0 %v7306
        %7468 = vmatprep.subr.bf16.mxu0 %v7314
        %7469 = vmatpush1.bf16.msra.mxu0 %v7313
        %7470 = vmatprep.subr.bf16.mxu0 %v7321
        %7471 = vmatpush1.bf16.msra.mxu0 %v7320
        %7472 = vmatprep.subr.bf16.mxu0 %v7328
        %7473 = vmatpush1.bf16.msra.mxu0 %v7327
        %7474 = vmatprep.subr.bf16.mxu0 %v7335
        %7475 = vmatpush1.bf16.msra.mxu0 %v7334
        %7476 = vmatprep.subr.bf16.mxu0 %v7342
        %7477 = vmatpush1.bf16.msra.mxu0 %v7341
        %7478 = vmatprep.subr.bf16.mxu0 0
        %7479 = vmatpush1.bf16.msra.mxu0 0
        %7480 = vmatprep.subr.bf16.mxu0 0
        %7481 = vmatpush1.bf16.msra.mxu0 0
        %7482 = vmatprep.mubr.bf16.mxu0 %v7448
        %7483 = vmatmul.mubr.bf16.gmra.mrb[0].mxu0 %v6828
        %v7484 = vpop.f32.mrb[0].mxu0
        %v7485 = vadd.f32 0.0, %v7484
        %v7486 = vpop.f32.mrb[0].mxu0
        %v7487 = vadd.f32 0.0, %v7486
        %v7488 = vpop.f32.mrb[0].mxu0
        %v7489 = vpop.f32.mrb[0].mxu0
        %7490 = vdwg.mxu0
        %7491 = vmatprep.subr.bf16.mxu0 %v7253
        %7492 = vmatpush1.bf16.msra.mxu0 %v7252
        %7493 = vmatprep.subr.bf16.mxu0 %v7260
        %7494 = vmatpush1.bf16.msra.mxu0 %v7259
        %7495 = vmatprep.subr.bf16.mxu0 %v7267
        %7496 = vmatpush1.bf16.msra.mxu0 %v7266
        %7497 = vmatprep.subr.bf16.mxu0 %v7274
        %7498 = vmatpush1.bf16.msra.mxu0 %v7273
        %7499 = vmatprep.subr.bf16.mxu0 %v7281
        %7500 = vmatpush1.bf16.msra.mxu0 %v7280
        %7501 = vmatprep.subr.bf16.mxu0 %v7288
        %7502 = vmatpush1.bf16.msra.mxu0 %v7287
        %7503 = vmatprep.subr.bf16.mxu0 %v7295
        %7504 = vmatpush1.bf16.msra.mxu0 %v7294
        %7505 = vmatprep.subr.bf16.mxu0 %v7302
        %7506 = vmatpush1.bf16.msra.mxu0 %v7301
        %7507 = vmatprep.subr.bf16.mxu0 %v7309
        %7508 = vmatpush1.bf16.msra.mxu0 %v7308
        %7509 = vmatprep.subr.bf16.mxu0 %v7316
        %7510 = vmatpush1.bf16.msra.mxu0 %v7315
        %7511 = vmatprep.subr.bf16.mxu0 %v7323
        %7512 = vmatpush1.bf16.msra.mxu0 %v7322
        %7513 = vmatprep.subr.bf16.mxu0 %v7330
        %7514 = vmatpush1.bf16.msra.mxu0 %v7329
        %7515 = vmatprep.subr.bf16.mxu0 %v7337
        %7516 = vmatpush1.bf16.msra.mxu0 %v7336
        %7517 = vmatprep.subr.bf16.mxu0 %v7344
        %7518 = vmatpush1.bf16.msra.mxu0 %v7343
        %7519 = vmatprep.subr.bf16.mxu0 0
        %7520 = vmatpush1.bf16.msra.mxu0 0
        %7521 = vmatprep.subr.bf16.mxu0 0
        %7522 = vmatpush1.bf16.msra.mxu0 0
        %7523 = vmatprep.mubr.bf16.mxu0 %v7448
        %7524 = vmatmul.mubr.bf16.gmra.mrb[0].mxu0 %v6828
        %v7525 = vpop.f32.mrb[0].mxu0
        %v7526 = vadd.f32 0.0, %v7525
        %v7527 = vpop.f32.mrb[0].mxu0
        %v7528 = vadd.f32 0.0, %v7527
        %v7529 = vpop.f32.mrb[0].mxu0
        %v7530 = vpop.f32.mrb[0].mxu0
        %7531 = vdwg.mxu0
        %7532 = vmatprep.subr.bf16.mxu0 %v7255
        %7533 = vmatpush1.bf16.msra.mxu0 %v7254
        %7534 = vmatprep.subr.bf16.mxu0 %v7262
        %7535 = vmatpush1.bf16.msra.mxu0 %v7261
        %7536 = vmatprep.subr.bf16.mxu0 %v7269
        %7537 = vmatpush1.bf16.msra.mxu0 %v7268
        %7538 = vmatprep.subr.bf16.mxu0 %v7276
        %7539 = vmatpush1.bf16.msra.mxu0 %v7275
        %7540 = vmatprep.subr.bf16.mxu0 %v7283
        %7541 = vmatpush1.bf16.msra.mxu0 %v7282
        %7542 = vmatprep.subr.bf16.mxu0 %v7290
        %7543 = vmatpush1.bf16.msra.mxu0 %v7289
        %7544 = vmatprep.subr.bf16.mxu0 %v7297
        %7545 = vmatpush1.bf16.msra.mxu0 %v7296
        %7546 = vmatprep.subr.bf16.mxu0 %v7304
        %7547 = vmatpush1.bf16.msra.mxu0 %v7303
        %7548 = vmatprep.subr.bf16.mxu0 %v7311
        %7549 = vmatpush1.bf16.msra.mxu0 %v7310
        %7550 = vmatprep.subr.bf16.mxu0 %v7318
        %7551 = vmatpush1.bf16.msra.mxu0 %v7317
        %7552 = vmatprep.subr.bf16.mxu0 %v7325
        %7553 = vmatpush1.bf16.msra.mxu0 %v7324
        %7554 = vmatprep.subr.bf16.mxu0 %v7332
        %7555 = vmatpush1.bf16.msra.mxu0 %v7331
        %7556 = vmatprep.subr.bf16.mxu0 %v7339
        %7557 = vmatpush1.bf16.msra.mxu0 %v7338
        %7558 = vmatprep.subr.bf16.mxu0 %v7346
        %7559 = vmatpush1.bf16.msra.mxu0 %v7345
        %7560 = vmatprep.subr.bf16.mxu0 0
        %7561 = vmatpush1.bf16.msra.mxu0 0
        %7562 = vmatprep.subr.bf16.mxu0 0
        %7563 = vmatpush1.bf16.msra.mxu0 0
        %7564 = vmatprep.mubr.bf16.mxu0 %v7448
        %7565 = vmatmul.mubr.bf16.gmra.mrb[0].mxu0 %v6828
        %v7566 = vpop.f32.mrb[0].mxu0
        %v7567 = vadd.f32 0.0, %v7566
        %v7568 = vpop.f32.mrb[0].mxu0
        %v7569 = vadd.f32 0.0, %v7568
        %v7570 = vpop.f32.mrb[0].mxu0
        %v7571 = vpop.f32.mrb[0].mxu0
        %7572 = vdwg.mxu0
        %7573 = vmatprep.subr.bf16.mxu0 0
        %7574 = vmatpush1.bf16.msra.mxu0 %v7256
        %7575 = vmatprep.subr.bf16.mxu0 0
        %7576 = vmatpush1.bf16.msra.mxu0 %v7263
        %7577 = vmatprep.subr.bf16.mxu0 0
        %7578 = vmatpush1.bf16.msra.mxu0 %v7270
        %7579 = vmatprep.subr.bf16.mxu0 0
        %7580 = vmatpush1.bf16.msra.mxu0 %v7277
        %7581 = vmatprep.subr.bf16.mxu0 0
        %7582 = vmatpush1.bf16.msra.mxu0 %v7284
        %7583 = vmatprep.subr.bf16.mxu0 0
        %7584 = vmatpush1.bf16.msra.mxu0 %v7291
        %7585 = vmatprep.subr.bf16.mxu0 0
        %7586 = vmatpush1.bf16.msra.mxu0 %v7298
        %7587 = vmatprep.subr.bf16.mxu0 0
        %7588 = vmatpush1.bf16.msra.mxu0 %v7305
        %7589 = vmatprep.subr.bf16.mxu0 0
        %7590 = vmatpush1.bf16.msra.mxu0 %v7312
        %7591 = vmatprep.subr.bf16.mxu0 0
        %7592 = vmatpush1.bf16.msra.mxu0 %v7319
        %7593 = vmatprep.subr.bf16.mxu0 0
        %7594 = vmatpush1.bf16.msra.mxu0 %v7326
        %7595 = vmatprep.subr.bf16.mxu0 0
        %7596 = vmatpush1.bf16.msra.mxu0 %v7333
        %7597 = vmatprep.subr.bf16.mxu0 0
        %7598 = vmatpush1.bf16.msra.mxu0 %v7340
        %7599 = vmatprep.subr.bf16.mxu0 0
        %7600 = vmatpush1.bf16.msra.mxu0 %v7347
        %7601 = vmatprep.subr.bf16.mxu0 0
        %7602 = vmatpush1.bf16.msra.mxu0 0
        %7603 = vmatprep.subr.bf16.mxu0 0
        %7604 = vmatpush1.bf16.msra.mxu0 0
        %7605 = vmatprep.mubr.bf16.mxu0 %v7448
        %7606 = vmatmul.mubr.bf16.gmra.mrb[0].mxu0 %v6828
        %v7607 = vpop.f32.mrb[0].mxu0
        %v7608 = vadd.f32 0.0, %v7607
        %v7609 = vpop.f32.mrb[0].mxu0
        %v7610 = vpop.f32.mrb[0].mxu0
        %v7611 = vpop.f32.mrb[0].mxu0
        %7612 = vdwg.mxu0
        %v7613 = vld [vmem:[#allocation28] sm:$0x1]
        %v7614 = vadd.f32 %v7613, %v7485
        %v7617 = vunpack.c.l.s4 1966171168
        %v7618 = vunpack.c.0.s8 %v7617
        %v7619 = vlaneseq
        %v7620 = vshrl.u32 %v7619, 7
        %v7621 = vsub.s32 %v7618, %v7620
        %v7622 = vrot.slane %v7487, %v7621
        %v7623 = vcombine.high %v7622, %v7622
        %v7625 = vunpack.c.l.s4 1966171168
        %v7626 = vunpack.c.0.s8 %v7625
        %v7627 = vlaneseq
        %v7628 = vshrl.u32 %v7627, 7
        %v7629 = vsub.s32 %v7626, %v7628
        %v7630 = vrot.slane %v7623, %v7629
        %v7632 = vadd.f32 %v7614, %v7630
        %v7635 = vunpack.c.l.s4 1966171168
        %v7636 = vunpack.c.0.s8 %v7635
        %v7637 = vlaneseq
        %v7638 = vshrl.u32 %v7637, 7
        %v7639 = vsub.s32 %v7636, %v7638
        %v7640 = vrot.slane %v7526, %v7639
        %v7642 = vunpack.c.l.s4 1966171168
        %v7643 = vunpack.c.0.s8 %v7642
        %v7644 = vlaneseq
        %v7645 = vshrl.u32 %v7644, 7
        %v7646 = vsub.s32 %v7643, %v7645
        %v7647 = vrot.slane %v7640, %v7646
        %v7648 = vcombine.high %v7647, %v7647
        %v7650 = vadd.f32 %v7632, %v7648
        %v7653 = vunpack.c.l.s4 1966171168
        %v7654 = vunpack.c.0.s8 %v7653
        %v7655 = vlaneseq
        %v7656 = vshrl.u32 %v7655, 7
        %v7657 = vsub.s32 %v7654, %v7656
        %v7658 = vrot.slane %v7528, %v7657
        %v7659 = vcombine.high %v7658, %v7658
        %v7661 = vunpack.c.l.s4 1966171168
        %v7662 = vunpack.c.0.s8 %v7661
        %v7663 = vlaneseq
        %v7664 = vshrl.u32 %v7663, 7
        %v7665 = vsub.s32 %v7662, %v7664
        %v7666 = vrot.slane %v7659, %v7665
        %v7667 = vcombine.high %v7666, %v7666
        %v7669 = vadd.f32 %v7650, %v7667
        %v7671 = vcombine.high %v7567, %v7567
        %v7673 = vunpack.c.l.s4 1966171168
        %v7674 = vunpack.c.0.s8 %v7673
        %v7675 = vlaneseq
        %v7676 = vshrl.u32 %v7675, 7
        %v7677 = vsub.s32 %v7674, %v7676
        %v7678 = vrot.slane %v7671, %v7677
        %v7680 = vunpack.c.l.s4 1966171168
        %v7681 = vunpack.c.0.s8 %v7680
        %v7682 = vlaneseq
        %v7683 = vshrl.u32 %v7682, 7
        %v7684 = vsub.s32 %v7681, %v7683
        %v7685 = vrot.slane %v7678, %v7684
        %v7687 = vadd.f32 %v7669, %v7685
        %v7689 = vcombine.high %v7569, %v7569
        %v7691 = vunpack.c.l.s4 1966171168
        %v7692 = vunpack.c.0.s8 %v7691
        %v7693 = vlaneseq
        %v7694 = vshrl.u32 %v7693, 7
        %v7695 = vsub.s32 %v7692, %v7694
        %v7696 = vrot.slane %v7689, %v7695
        %v7697 = vcombine.high %v7696, %v7696
        %v7699 = vunpack.c.l.s4 1966171168
        %v7700 = vunpack.c.0.s8 %v7699
        %v7701 = vlaneseq
        %v7702 = vshrl.u32 %v7701, 7
        %v7703 = vsub.s32 %v7700, %v7702
        %v7704 = vrot.slane %v7697, %v7703
        %v7706 = vadd.f32 %v7687, %v7704
        %v7708 = vcombine.high %v7608, %v7608
        %v7710 = vunpack.c.l.s4 1966171168
        %v7711 = vunpack.c.0.s8 %v7710
        %v7712 = vlaneseq
        %v7713 = vshrl.u32 %v7712, 7
        %v7714 = vsub.s32 %v7711, %v7713
        %v7715 = vrot.slane %v7708, %v7714
        %v7717 = vunpack.c.l.s4 1966171168
        %v7718 = vunpack.c.0.s8 %v7717
        %v7719 = vlaneseq
        %v7720 = vshrl.u32 %v7719, 7
        %v7721 = vsub.s32 %v7718, %v7720
        %v7722 = vrot.slane %v7715, %v7721
        %v7723 = vcombine.high %v7722, %v7722
        %v7725 = vadd.f32 %v7706, %v7723
        %7726 = vst [vmem:[%s759] sm:$0x1] %v7725
        %s7727 = sand.u32 %s410, 1
        %s7728 = scalar_lea.sflag [#allocation6], %s7727
        %s7729 = sand.u32 %s410, 1
        %s7730 = scalar_lea.vmem [#allocation30], %s7729
        // Predicated region
        $region153: #{_lambda_.1} parent=87 // pred_check
          %p7731 = pneg %p420
        $region154: #{_lambda_.1} parent=87 // pred_check_branch
          %7733 = sbr.rel (%p7731) target = $region156
        $region155: #{_lambda_.1} parent=87 // pred_region
          %s7735 = ssub.s32 16, 16
          %7736 = vsyncadd %s7728, %s7735
          %s7737 = smul.addr %s40, 16
          %s7738 = scalar_lea.hbm %s17, %s7737
          %s7740 = sshll.u32 %s7730, 4
          %s7741 = int_to_ptr.vmem [resolvable:$true] %s7740
          %7743 = dma.vmem_to_hbm [thread:$0]  %s7741, 16, %s7738, %s7728
        $region156: #{_lambda_.1} parent=87 // pred_fallthru
          _
      $region88: #{_lambda_.1} parent=5 // pred_fallthru
        _
      %p7744 = scmp.le.s32.totalorder 2, %s35
      // Predicated region
      $region157: #{_lambda_.1} parent=5 // pred_check
        %p7745 = pneg %p7744
      $region158: #{_lambda_.1} parent=5 // pred_check_branch
        %7747 = sbr.rel (%p7745) target = $region160
      $region159: #{_lambda_.1} parent=5 // pred_region
        %s7748 = ssub.s32 %s35, 2
        // Predicated region
        $region161: #{_lambda_.1} parent=159 // pred_check
          %p7749 = pneg %p426
        $region162: #{_lambda_.1} parent=159 // pred_check_branch
          %7751 = sbr.rel (%p7749) target = $region164
        $region163: #{_lambda_.1} parent=159 // pred_region
          %s7752 = sand.u32 %s411, 1
          %s7753 = scalar_lea.sflag [#allocation6], %s7752
          %s7754 = sand.u32 %s411, 1
          %s7755 = scalar_lea.vmem [#allocation30], %s7754
          %7756 = dma.done %s7753, 16
        $region164: #{_lambda_.1} parent=159 // pred_fallthru
          _
      $region160: #{_lambda_.1} parent=5 // pred_fallthru
        _
    $region6: #{_lambda_.1} parent=1 // loop_footer
      %s39 = sadd.s32 1, %s35
    $region7: #{_lambda_.1} parent=1 // loop_footer_branch
      %34 = sbr.rel target = $region3
    $region8: #{_lambda_.1} parent=1 // loop_exit
      _
    %7757 = vsyncpa [#allocation5], 1
    %s7758 = scalar_lea.sflag [#allocation5], 1
    %7759 = vsyncpa %s7758, 1
    %7760 = vsyncpa [#allocation8], 1
    %7761 = vsyncpa [#allocation11], 1
    %7762 = vsyncpa [#allocation14], 1
    %7763 = vsyncpa [#allocation17], 1
    %7764 = vsyncpa [#allocation20], 1
    %7765 = vsyncpa [#allocation23], 1
    %7766 = vsyncpa [#allocation26], 1
    %7767 = vsyncpa [#allocation29], 1
    %7768 = vsyncpa [#allocation6], 1
    %s7769 = scalar_lea.sflag [#allocation6], 1
    %7770 = vsyncpa %s7769, 1

</llo_original>
